<compile_context>
chip_gen: v5e
topology: v5e:2x2
jax: 0.10.0
libtpu: 0.0.40
codegen_flags: <defaults>
</compile_context>

<pallas_src>
import math
from functools import partial

import jax
import jax.numpy as jnp
from jax.experimental import pallas as pl
from jax.experimental.pallas import tpu as pltpu

VMEM_LIMIT = 32 * 1024 * 1024  # safe on v5e/v6e (128 MiB) and v7x (64 MiB physical)


def _round_up(x, m):
    return (x + m - 1) // m * m


# ---------------------------------------------------------------------------
# Fused transformer-stack kernel (all layers, VMEM-resident weights)
# ---------------------------------------------------------------------------

def _vip_stack_kernel(x_ref, seg_ref,
                      wqkv_ref, bqkv_ref, wo_ref, bo_ref, ln1g_ref, ln1b_ref,
                      w1_ref, b1_ref, w2_ref, b2_ref, ln2g_ref, ln2b_ref,
                      o_ref, *, depth, D, scale, eps, ff_dim, ff_chunk):
    L, tnb, Dp = x_ref.shape                         # L = image batch = attention axis

    seg = seg_ref[...]                               # (Dp, Dp) bf16, hoisted constant
    lane = jax.lax.broadcasted_iota(jnp.int32, (1, Dp), 1)
    dmask = lane < D
    inv_d = 1.0 / D

    def layernorm(y, gamma, beta):
        # LayerNorm over the true D lanes only (biased variance, PyTorch eps).
        ym = jnp.where(dmask, y, 0.0)
        mean = jnp.sum(ym, axis=-1, keepdims=True) * inv_d
        diff = jnp.where(dmask, y - mean, 0.0)
        var = jnp.sum(diff * diff, axis=-1, keepdims=True) * inv_d
        return diff * jax.lax.rsqrt(var + eps) * gamma + beta

    # Stack the L images' token tiles into one (L*tnb, Dp) row block so every
    # matmul feeds the MXU with all rows at once (batched QKV / out-proj).
    x = jnp.concatenate([x_ref[a] for a in range(L)], axis=0)     # (R, Dp) f32

    for li in range(depth):
        # ---- self-attention (mixes over the L image axis; batch_first=False) ----
        qkv = jnp.dot(x.astype(jnp.bfloat16), wqkv_ref[li],
                      preferred_element_type=jnp.float32) + bqkv_ref[li]
        q = qkv[:, 0:Dp] * scale
        k = qkv[:, Dp:2 * Dp]
        v = qkv[:, 2 * Dp:3 * Dp]

        # All L*L per-head score reductions in ONE bf16 seg matmul: seg is the
        # block-diagonal per-head sum+broadcast matrix (keeps the dh=8 contraction
        # off the MXU's K=8/N=2 path and avoids f32-emulated MXU passes).
        prods = []
        for a in range(L):
            qa = q[a * tnb:(a + 1) * tnb]
            for b in range(L):
                prods.append((qa * k[b * tnb:(b + 1) * tnb]).astype(jnp.bfloat16))
        scores = jnp.dot(jnp.concatenate(prods, axis=0), seg,
                         preferred_element_type=jnp.float32)      # (L*L*tnb, Dp)

        # Softmax over the L source images + PV on the VPU (head-broadcast lanes).
        attn_rows = []
        for a in range(L):
            s_ab = [scores[(a * L + b) * tnb:(a * L + b + 1) * tnb] for b in range(L)]
            smax = s_ab[0]
            for b in range(1, L):
                smax = jnp.maximum(smax, s_ab[b])
            es = [jnp.exp(s - smax) for s in s_ab]
            den = es[0]
            for b in range(1, L):
                den = den + es[b]
            acc = es[0] * v[0:tnb]
            for b in range(1, L):
                acc = acc + es[b] * v[b * tnb:(b + 1) * tnb]
            attn_rows.append(acc * pl.reciprocal(den, approx=True))
        attn = jnp.concatenate(attn_rows, axis=0)                 # (R, Dp) f32

        # ---- out-proj + residual + LN1 (one batched matmul over all rows) ----
        proj = jnp.dot(attn.astype(jnp.bfloat16), wo_ref[li],
                       preferred_element_type=jnp.float32) + bo_ref[li]
        x = layernorm(proj + x, ln1g_ref[li], ln1b_ref[li])

        # ---- FFN (relu), chunked over ff_dim to bound vreg pressure ----
        xb = x.astype(jnp.bfloat16)
        y = x + b2_ref[li]
        for c0 in range(0, ff_dim, ff_chunk):
            h = jnp.dot(xb, w1_ref[li, :, c0:c0 + ff_chunk],
                        preferred_element_type=jnp.float32)
            h = jnp.maximum(h + b1_ref[li, :, c0:c0 + ff_chunk], 0.0)
            y = y + jnp.dot(h.astype(jnp.bfloat16), w2_ref[li, c0:c0 + ff_chunk, :],
                            preferred_element_type=jnp.float32)
        x = layernorm(y, ln2g_ref[li], ln2b_ref[li])

    for a in range(L):
        o_ref[a] = x[a * tnb:(a + 1) * tnb].astype(o_ref.dtype)


def transformer_stack(x, stack, seg, *, D, scale, eps=1e-5, ff_chunk=512):
    L, Nbp, Dp = x.shape
    depth = stack["wqkv"].shape[0]
    F = stack["w1"].shape[-1]
    ff_chunk = min(ff_chunk, F)
    assert F % ff_chunk == 0

    # 2-step parallel grid over the (independent) token axis -> both TensorCores do
    # work on v7x; on v5e/v6e the second step costs ~0.35 us (weights stay resident
    # since their block index never changes).
    tnb = Nbp // 2 if (Nbp % 16 == 0 and Nbp >= 16) else Nbp
    grid = (Nbp // tnb,)

    args = (x, seg, stack["wqkv"], stack["bqkv"], stack["wo"], stack["bo"],
            stack["ln1_g"], stack["ln1_b"], stack["w1"], stack["b1"],
            stack["w2"], stack["b2"], stack["ln2_g"], stack["ln2_b"])

    def _full_spec(a):
        return pl.BlockSpec(a.shape, lambda i: (0,) * a.ndim)

    in_specs = [pl.BlockSpec((L, tnb, Dp), lambda i: (0, i, 0))]
    in_specs += [_full_spec(a) for a in args[1:]]

    # advisory cost estimate on true (unpadded) model dims
    R = L * Nbp
    flops = depth * (2 * R * D * 3 * D + 2 * (L * L * Nbp) * D * D
                     + 2 * R * D * D + 4 * R * D * F)
    trans = depth * L * L * Nbp * D
    w_bytes = sum(int(a.size) * a.dtype.itemsize for a in args[1:])
    bytes_acc = w_bytes + 2 * int(x.size) * x.dtype.itemsize

    return pl.pallas_call(
        partial(_vip_stack_kernel, depth=depth, D=D, scale=scale, eps=eps,
                ff_dim=F, ff_chunk=ff_chunk),
        out_shape=jax.ShapeDtypeStruct((L, Nbp, Dp), x.dtype),
        grid_spec=pltpu.PrefetchScalarGridSpec(
            num_scalar_prefetch=0,
            grid=grid,
            in_specs=in_specs,
            out_specs=pl.BlockSpec((L, tnb, Dp), lambda i: (0, i, 0)),
        ),
        compiler_params=pltpu.CompilerParams(
            dimension_semantics=("parallel",),
            vmem_limit_bytes=VMEM_LIMIT,
        ),
        cost_estimate=pl.CostEstimate(
            flops=int(flops), transcendentals=int(trans),
            bytes_accessed=int(bytes_acc)),
    )(*args)


# ---------------------------------------------------------------------------
# Parameters (deterministic synthetic init; shapes match the PyTorch module,
# zero-padded on the model dim to Dp lanes; per-layer weights stacked on depth)
# ---------------------------------------------------------------------------

def init_params(key, *, img_size, patch_size, num_classes, dim, depth, heads,
                ff_dim, dpad):
    num_patches = (img_size // patch_size) ** 2
    C = 3
    D, Dp = dim, dpad
    dh = D // heads
    ks = jax.random.split(key, 4 + depth)

    def lin(k, fan_in, fan_out):
        kw, kb = jax.random.split(k)
        w = jax.random.normal(kw, (fan_in, fan_out), jnp.float32) / jnp.sqrt(fan_in)
        b = jax.random.normal(kb, (fan_out,), jnp.float32) * 0.01
        return w, b

    # Conv2d(3, dim, kernel=patch, stride=patch, bias=False) as a (C*p*p, Dp) matmul.
    conv_w = jax.random.normal(ks[0], (D, C, patch_size, patch_size), jnp.float32)
    conv_w = conv_w / jnp.sqrt(C * patch_size * patch_size)
    patch_w = conv_w.reshape(D, C * patch_size * patch_size).T
    patch_w = jnp.zeros((C * patch_size * patch_size, Dp), jnp.float32).at[:, :D].set(patch_w)

    cls_token = jnp.zeros((1, 1, Dp), jnp.float32).at[:, :, :D].set(
        jax.random.normal(ks[1], (1, 1, D), jnp.float32))
    pos_embed = jnp.zeros((1, num_patches + 1, Dp), jnp.float32).at[:, :, :D].set(
        jax.random.normal(ks[2], (1, num_patches + 1, D), jnp.float32))

    # Block-diagonal per-head sum+broadcast matrix, hoisted out of the kernel.
    ri = jnp.arange(Dp)[:, None]
    ci = jnp.arange(Dp)[None, :]
    seg = ((ri // dh == ci // dh) & (ri < D) & (ci < D)).astype(jnp.bfloat16)

    wqkv, bqkv, wo, bo, w1, b1, w2, b2 = [], [], [], [], [], [], [], []
    ln1g, ln1b, ln2g, ln2b = [], [], [], []
    for l in range(depth):
        lk = jax.random.split(ks[3 + l], 4)
        in_w, in_b = lin(lk[0], D, 3 * D)        # MHA in_proj (q|k|v)
        out_w, out_b = lin(lk[1], D, D)          # MHA out_proj
        ff1_w, ff1_b = lin(lk[2], D, ff_dim)     # feed-forward 1 (relu)
        ff2_w, ff2_b = lin(lk[3], ff_dim, D)     # feed-forward 2

        wq = jnp.zeros((Dp, 3 * Dp), jnp.float32)
        bq = jnp.zeros((1, 3 * Dp), jnp.float32)
        for s in range(3):  # q, k, v each padded to a 128-aligned lane slot
            wq = wq.at[:D, s * Dp:s * Dp + D].set(in_w[:, s * D:(s + 1) * D])
            bq = bq.at[0, s * Dp:s * Dp + D].set(in_b[s * D:(s + 1) * D])
        wqkv.append(wq); bqkv.append(bq)
        wo.append(jnp.zeros((Dp, Dp), jnp.float32).at[:D, :D].set(out_w))
        bo.append(jnp.zeros((1, Dp), jnp.float32).at[0, :D].set(out_b))
        w1.append(jnp.zeros((Dp, ff_dim), jnp.float32).at[:D, :].set(ff1_w))
        b1.append(ff1_b.reshape(1, ff_dim))
        w2.append(jnp.zeros((ff_dim, Dp), jnp.float32).at[:, :D].set(ff2_w))
        b2.append(jnp.zeros((1, Dp), jnp.float32).at[0, :D].set(ff2_b))
        ln1g.append(jnp.zeros((1, Dp), jnp.float32).at[0, :D].set(1.0))
        ln1b.append(jnp.zeros((1, Dp), jnp.float32))
        ln2g.append(jnp.zeros((1, Dp), jnp.float32).at[0, :D].set(1.0))
        ln2b.append(jnp.zeros((1, Dp), jnp.float32))

    stack = {
        "wqkv": jnp.stack(wqkv).astype(jnp.bfloat16), "bqkv": jnp.stack(bqkv),
        "wo": jnp.stack(wo).astype(jnp.bfloat16), "bo": jnp.stack(bo),
        "ln1_g": jnp.stack(ln1g), "ln1_b": jnp.stack(ln1b),
        "w1": jnp.stack(w1).astype(jnp.bfloat16), "b1": jnp.stack(b1),
        "w2": jnp.stack(w2).astype(jnp.bfloat16), "b2": jnp.stack(b2),
        "ln2_g": jnp.stack(ln2g), "ln2_b": jnp.stack(ln2b),
    }

    fc_w, fc_b = lin(jax.random.fold_in(key, 1234), D, num_classes)
    fc_wp = jnp.zeros((Dp, num_classes), jnp.float32).at[:D, :].set(fc_w)

    return {"patch_w": patch_w, "cls_token": cls_token, "pos_embed": pos_embed,
            "seg": seg, "stack": stack, "fc_w": fc_wp, "fc_b": fc_b}


# ---------------------------------------------------------------------------
# Forward pass
# ---------------------------------------------------------------------------

def vision_permutator_forward(params, x, *, patch_size, heads, dim):
    B, C, H, W = x.shape
    p = patch_size
    D = dim
    Dp = params["pos_embed"].shape[-1]
    Hp, Wp = H // p, W // p
    n_patches = Hp * Wp
    dh = D // heads
    scale = 1.0 / math.sqrt(dh)

    # ---- patch embedding: Conv2d(stride=kernel) == patch extraction + matmul ----
    # Tiny grid-(1,1,1) matmul -> plain XLA per perf review (a Pallas call here is
    # pure launch/padding overhead).
    patches = x.reshape(B, C, Hp, p, Wp, p)
    patches = patches.transpose(0, 2, 4, 1, 3, 5).reshape(B * n_patches, C * p * p)
    emb = jnp.dot(patches, params["patch_w"], preferred_element_type=jnp.float32)
    emb = emb.reshape(B, n_patches, Dp)

    # ---- cls token + positional embedding (plain JAX glue) ----
    cls = jnp.broadcast_to(params["cls_token"], (B, 1, Dp))
    xx = jnp.concatenate([cls, emb], axis=1) + params["pos_embed"]   # (B, Nb, Dp)
    Nb = n_patches + 1

    # Pad the token axis (attention's independent axis under batch_first=False) to a
    # multiple of 16 so the fused kernel can run a 2-step parallel grid; padded
    # tokens never mix with real ones and are dropped below.
    Nbp = _round_up(Nb, 16)
    if Nbp != Nb:
        xx = jnp.pad(xx, ((0, 0), (0, Nbp - Nb), (0, 0)))

    # TODO(synk): dropout in TransformerEncoderLayer has no inference-time effect
    # (eval semantics); it is intentionally omitted.
    xx = transformer_stack(xx, params["stack"], params["seg"], D=D, scale=scale)

    # ---- classification head: fc(x[:, 0]) — tiny matmul, left to XLA ----
    cls_out = xx[:, 0, :]                                            # (B, Dp)
    logits = jnp.dot(cls_out, params["fc_w"],
                     preferred_element_type=jnp.float32) + params["fc_b"]
    return logits


# ---------------------------------------------------------------------------
# Main
# ---------------------------------------------------------------------------

if __name__ == "__main__":
    cfg = dict(img_size=16, patch_size=4, num_classes=10, dim=32, depth=2, heads=4)
    ff_dim = 2048   # PyTorch TransformerEncoderLayer default dim_feedforward
    DPAD = 128      # lane-padded model dim

    key = jax.random.PRNGKey(0)
    pkey, xkey = jax.random.split(key)
    params = init_params(pkey, **cfg, ff_dim=ff_dim, dpad=DPAD)

    x = jax.random.normal(xkey, (2, 3, cfg["img_size"], cfg["img_size"]), jnp.float32)

    fwd = jax.jit(partial(vision_permutator_forward,
                          patch_size=cfg["patch_size"], heads=cfg["heads"],
                          dim=cfg["dim"]))
    out = jax.block_until_ready(fwd(params, x))
    assert out.shape == (2, cfg["num_classes"]), out.shape
    assert bool(jnp.all(jnp.isfinite(out)))
    print("KERNEL_OK")
</pallas_src>

<mosaic_0001>
module attributes {stable_mosaic.version = 11 : i64} {
  func.func @_vip_stack_kernel(%arg0: i32, %arg1: memref<2x16x128xf32, #tpu.memory_space<vmem>>, %arg2: memref<128x128xbf16, #tpu.memory_space<vmem>>, %arg3: memref<2x128x384xbf16, #tpu.memory_space<vmem>>, %arg4: memref<2x1x384xf32, #tpu.memory_space<vmem>>, %arg5: memref<2x128x128xbf16, #tpu.memory_space<vmem>>, %arg6: memref<2x1x128xf32, #tpu.memory_space<vmem>>, %arg7: memref<2x1x128xf32, #tpu.memory_space<vmem>>, %arg8: memref<2x1x128xf32, #tpu.memory_space<vmem>>, %arg9: memref<2x128x2048xbf16, #tpu.memory_space<vmem>>, %arg10: memref<2x1x2048xf32, #tpu.memory_space<vmem>>, %arg11: memref<2x2048x128xbf16, #tpu.memory_space<vmem>>, %arg12: memref<2x1x128xf32, #tpu.memory_space<vmem>>, %arg13: memref<2x1x128xf32, #tpu.memory_space<vmem>>, %arg14: memref<2x1x128xf32, #tpu.memory_space<vmem>>, %arg15: memref<2x16x128xf32, #tpu.memory_space<vmem>>) attributes {dimension_semantics = [#tpu.dimension_semantics<parallel>], iteration_bounds = array<i64: 2>, scalar_prefetch = 0 : i64, scratch_operands = 0 : i64, tpu.core_type = #tpu.core_type<tc>, window_params = [{transform_indices = @transform_0, window_bounds = array<i64: 2, 16, 128>}, {pipeline_mode = #tpu.pipeline_mode<synchronous>, transform_indices = @transform_1, window_bounds = array<i64: 128, 128>}, {pipeline_mode = #tpu.pipeline_mode<synchronous>, transform_indices = @transform_2, window_bounds = array<i64: 2, 128, 384>}, {pipeline_mode = #tpu.pipeline_mode<synchronous>, transform_indices = @transform_3, window_bounds = array<i64: 2, 1, 384>}, {pipeline_mode = #tpu.pipeline_mode<synchronous>, transform_indices = @transform_4, window_bounds = array<i64: 2, 128, 128>}, {pipeline_mode = #tpu.pipeline_mode<synchronous>, transform_indices = @transform_5, window_bounds = array<i64: 2, 1, 128>}, {pipeline_mode = #tpu.pipeline_mode<synchronous>, transform_indices = @transform_6, window_bounds = array<i64: 2, 1, 128>}, {pipeline_mode = #tpu.pipeline_mode<synchronous>, transform_indices = @transform_7, window_bounds = array<i64: 2, 1, 128>}, {pipeline_mode = #tpu.pipeline_mode<synchronous>, transform_indices = @transform_8, window_bounds = array<i64: 2, 128, 2048>}, {pipeline_mode = #tpu.pipeline_mode<synchronous>, transform_indices = @transform_9, window_bounds = array<i64: 2, 1, 2048>}, {pipeline_mode = #tpu.pipeline_mode<synchronous>, transform_indices = @transform_10, window_bounds = array<i64: 2, 2048, 128>}, {pipeline_mode = #tpu.pipeline_mode<synchronous>, transform_indices = @transform_11, window_bounds = array<i64: 2, 1, 128>}, {pipeline_mode = #tpu.pipeline_mode<synchronous>, transform_indices = @transform_12, window_bounds = array<i64: 2, 1, 128>}, {pipeline_mode = #tpu.pipeline_mode<synchronous>, transform_indices = @transform_13, window_bounds = array<i64: 2, 1, 128>}, {transform_indices = @transform_14, window_bounds = array<i64: 2, 16, 128>}]} {
    %c0 = arith.constant 0 : index
    %c0_0 = arith.constant 0 : index
    %0 = vector.load %arg2[%c0, %c0_0] : memref<128x128xbf16, #tpu.memory_space<vmem>>, vector<128x128xbf16>
    %1 = tpu.iota {dimensions = array<i32: 1>} : vector<1x128xi32>
    %c32_i32 = arith.constant 32 : i32
    %2 = vector.broadcast %c32_i32 : i32 to vector<1x128xi32>
    %3 = arith.cmpi slt, %1, %2 : vector<1x128xi32>
    %c0_1 = arith.constant 0 : index
    %c0_2 = arith.constant 0 : index
    %c0_3 = arith.constant 0 : index
    %4 = vector.load %arg1[%c0_1, %c0_2, %c0_3] : memref<2x16x128xf32, #tpu.memory_space<vmem>>, vector<1x16x128xf32>
    %5 = vector.shape_cast %4 : vector<1x16x128xf32> to vector<16x128xf32>
    %c1 = arith.constant 1 : index
    %c0_4 = arith.constant 0 : index
    %c0_5 = arith.constant 0 : index
    %6 = vector.load %arg1[%c1, %c0_4, %c0_5] : memref<2x16x128xf32, #tpu.memory_space<vmem>>, vector<1x16x128xf32>
    %7 = vector.shape_cast %6 : vector<1x16x128xf32> to vector<16x128xf32>
    %8 = tpu.concatenate %5, %7 in 0 : vector<16x128xf32>, vector<16x128xf32> -> vector<32x128xf32>
    %9 = arith.truncf %8 : vector<32x128xf32> to vector<32x128xbf16>
    %c0_6 = arith.constant 0 : index
    %c0_7 = arith.constant 0 : index
    %c0_8 = arith.constant 0 : index
    %10 = vector.load %arg3[%c0_6, %c0_7, %c0_8] : memref<2x128x384xbf16, #tpu.memory_space<vmem>>, vector<1x128x384xbf16>
    %11 = vector.shape_cast %10 : vector<1x128x384xbf16> to vector<128x384xbf16>
    %cst = arith.constant dense<0.000000e+00> : vector<32x384xf32>
    %12 = tpu.matmul %9, %11, %cst {dimension_numbers = #tpu.dot_dimension_numbers<[1], [0], [0], [1], [0, 0, 1, 1], [], []>} : vector<32x128xbf16>, vector<128x384xbf16>, vector<32x384xf32> -> vector<32x384xf32>
    %c0_9 = arith.constant 0 : index
    %c0_10 = arith.constant 0 : index
    %c0_11 = arith.constant 0 : index
    %13 = vector.load %arg4[%c0_9, %c0_10, %c0_11] : memref<2x1x384xf32, #tpu.memory_space<vmem>>, vector<1x1x384xf32>
    %14 = vector.shape_cast %13 : vector<1x1x384xf32> to vector<1x384xf32>
    %15 = vector.broadcast %14 : vector<1x384xf32> to vector<32x384xf32>
    %16 = arith.addf %12, %15 : vector<32x384xf32>
    %17 = vector.extract_strided_slice %16 {offsets = [0, 0], sizes = [32, 128], strides = [1, 1]} : vector<32x384xf32> to vector<32x128xf32>
    %cst_12 = arith.constant 0.353553385 : f32
    %18 = vector.broadcast %cst_12 : f32 to vector<32x128xf32>
    %19 = arith.mulf %17, %18 : vector<32x128xf32>
    %20 = vector.extract_strided_slice %16 {offsets = [0, 128], sizes = [32, 128], strides = [1, 1]} : vector<32x384xf32> to vector<32x128xf32>
    %21 = vector.extract_strided_slice %16 {offsets = [0, 256], sizes = [32, 128], strides = [1, 1]} : vector<32x384xf32> to vector<32x128xf32>
    %22 = vector.extract_strided_slice %19 {offsets = [0, 0], sizes = [16, 128], strides = [1, 1]} : vector<32x128xf32> to vector<16x128xf32>
    %23 = vector.extract_strided_slice %20 {offsets = [0, 0], sizes = [16, 128], strides = [1, 1]} : vector<32x128xf32> to vector<16x128xf32>
    %24 = arith.mulf %22, %23 : vector<16x128xf32>
    %25 = arith.truncf %24 : vector<16x128xf32> to vector<16x128xbf16>
    %26 = vector.extract_strided_slice %20 {offsets = [16, 0], sizes = [16, 128], strides = [1, 1]} : vector<32x128xf32> to vector<16x128xf32>
    %27 = arith.mulf %22, %26 : vector<16x128xf32>
    %28 = arith.truncf %27 : vector<16x128xf32> to vector<16x128xbf16>
    %29 = vector.extract_strided_slice %19 {offsets = [16, 0], sizes = [16, 128], strides = [1, 1]} : vector<32x128xf32> to vector<16x128xf32>
    %30 = vector.extract_strided_slice %20 {offsets = [0, 0], sizes = [16, 128], strides = [1, 1]} : vector<32x128xf32> to vector<16x128xf32>
    %31 = arith.mulf %29, %30 : vector<16x128xf32>
    %32 = arith.truncf %31 : vector<16x128xf32> to vector<16x128xbf16>
    %33 = vector.extract_strided_slice %20 {offsets = [16, 0], sizes = [16, 128], strides = [1, 1]} : vector<32x128xf32> to vector<16x128xf32>
    %34 = arith.mulf %29, %33 : vector<16x128xf32>
    %35 = arith.truncf %34 : vector<16x128xf32> to vector<16x128xbf16>
    %36 = tpu.concatenate %25, %28, %32, %35 in 0 : vector<16x128xbf16>, vector<16x128xbf16>, vector<16x128xbf16>, vector<16x128xbf16> -> vector<64x128xbf16>
    %cst_13 = arith.constant dense<0.000000e+00> : vector<64x128xf32>
    %37 = tpu.matmul %36, %0, %cst_13 {dimension_numbers = #tpu.dot_dimension_numbers<[1], [0], [0], [1], [0, 0, 1, 1], [], []>} : vector<64x128xbf16>, vector<128x128xbf16>, vector<64x128xf32> -> vector<64x128xf32>
    %38 = vector.extract_strided_slice %37 {offsets = [0, 0], sizes = [16, 128], strides = [1, 1]} : vector<64x128xf32> to vector<16x128xf32>
    %39 = vector.extract_strided_slice %37 {offsets = [16, 0], sizes = [16, 128], strides = [1, 1]} : vector<64x128xf32> to vector<16x128xf32>
    %40 = arith.maximumf %38, %39 : vector<16x128xf32>
    %41 = arith.subf %38, %40 : vector<16x128xf32>
    %42 = math.exp %41 : vector<16x128xf32>
    %43 = arith.subf %39, %40 : vector<16x128xf32>
    %44 = math.exp %43 : vector<16x128xf32>
    %45 = arith.addf %42, %44 : vector<16x128xf32>
    %46 = vector.extract_strided_slice %21 {offsets = [0, 0], sizes = [16, 128], strides = [1, 1]} : vector<32x128xf32> to vector<16x128xf32>
    %47 = arith.mulf %42, %46 : vector<16x128xf32>
    %48 = vector.extract_strided_slice %21 {offsets = [16, 0], sizes = [16, 128], strides = [1, 1]} : vector<32x128xf32> to vector<16x128xf32>
    %49 = arith.mulf %44, %48 : vector<16x128xf32>
    %50 = arith.addf %47, %49 : vector<16x128xf32>
    %51 = tpu.reciprocal %45 {approx = true} : vector<16x128xf32> -> vector<16x128xf32>
    %52 = arith.mulf %50, %51 : vector<16x128xf32>
    %53 = vector.extract_strided_slice %37 {offsets = [32, 0], sizes = [16, 128], strides = [1, 1]} : vector<64x128xf32> to vector<16x128xf32>
    %54 = vector.extract_strided_slice %37 {offsets = [48, 0], sizes = [16, 128], strides = [1, 1]} : vector<64x128xf32> to vector<16x128xf32>
    %55 = arith.maximumf %53, %54 : vector<16x128xf32>
    %56 = arith.subf %53, %55 : vector<16x128xf32>
    %57 = math.exp %56 : vector<16x128xf32>
    %58 = arith.subf %54, %55 : vector<16x128xf32>
    %59 = math.exp %58 : vector<16x128xf32>
    %60 = arith.addf %57, %59 : vector<16x128xf32>
    %61 = vector.extract_strided_slice %21 {offsets = [0, 0], sizes = [16, 128], strides = [1, 1]} : vector<32x128xf32> to vector<16x128xf32>
    %62 = arith.mulf %57, %61 : vector<16x128xf32>
    %63 = vector.extract_strided_slice %21 {offsets = [16, 0], sizes = [16, 128], strides = [1, 1]} : vector<32x128xf32> to vector<16x128xf32>
    %64 = arith.mulf %59, %63 : vector<16x128xf32>
    %65 = arith.addf %62, %64 : vector<16x128xf32>
    %66 = tpu.reciprocal %60 {approx = true} : vector<16x128xf32> -> vector<16x128xf32>
    %67 = arith.mulf %65, %66 : vector<16x128xf32>
    %68 = tpu.concatenate %52, %67 in 0 : vector<16x128xf32>, vector<16x128xf32> -> vector<32x128xf32>
    %69 = arith.truncf %68 : vector<32x128xf32> to vector<32x128xbf16>
    %c0_14 = arith.constant 0 : index
    %c0_15 = arith.constant 0 : index
    %c0_16 = arith.constant 0 : index
    %70 = vector.load %arg5[%c0_14, %c0_15, %c0_16] : memref<2x128x128xbf16, #tpu.memory_space<vmem>>, vector<1x128x128xbf16>
    %71 = vector.shape_cast %70 : vector<1x128x128xbf16> to vector<128x128xbf16>
    %cst_17 = arith.constant dense<0.000000e+00> : vector<32x128xf32>
    %72 = tpu.matmul %69, %71, %cst_17 {dimension_numbers = #tpu.dot_dimension_numbers<[1], [0], [0], [1], [0, 0, 1, 1], [], []>} : vector<32x128xbf16>, vector<128x128xbf16>, vector<32x128xf32> -> vector<32x128xf32>
    %c0_18 = arith.constant 0 : index
    %c0_19 = arith.constant 0 : index
    %c0_20 = arith.constant 0 : index
    %73 = vector.load %arg6[%c0_18, %c0_19, %c0_20] : memref<2x1x128xf32, #tpu.memory_space<vmem>>, vector<1x1x128xf32>
    %74 = vector.shape_cast %73 : vector<1x1x128xf32> to vector<1x128xf32>
    %75 = vector.broadcast %74 : vector<1x128xf32> to vector<32x128xf32>
    %76 = arith.addf %72, %75 : vector<32x128xf32>
    %77 = arith.addf %76, %8 : vector<32x128xf32>
    %c0_21 = arith.constant 0 : index
    %c0_22 = arith.constant 0 : index
    %c0_23 = arith.constant 0 : index
    %78 = vector.load %arg7[%c0_21, %c0_22, %c0_23] : memref<2x1x128xf32, #tpu.memory_space<vmem>>, vector<1x1x128xf32>
    %79 = vector.shape_cast %78 : vector<1x1x128xf32> to vector<1x128xf32>
    %c0_24 = arith.constant 0 : index
    %c0_25 = arith.constant 0 : index
    %c0_26 = arith.constant 0 : index
    %80 = vector.load %arg8[%c0_24, %c0_25, %c0_26] : memref<2x1x128xf32, #tpu.memory_space<vmem>>, vector<1x1x128xf32>
    %81 = vector.shape_cast %80 : vector<1x1x128xf32> to vector<1x128xf32>
    %cst_27 = arith.constant 0.000000e+00 : f32
    %82 = vector.shape_cast %3 : vector<1x128xi1> to vector<1x128xi1>
    %83 = vector.broadcast %82 : vector<1x128xi1> to vector<32x128xi1>
    %84 = vector.broadcast %cst_27 : f32 to vector<32x128xf32>
    %85 = arith.select %83, %77, %84 : vector<32x128xi1>, vector<32x128xf32>
    %cst_28 = arith.constant dense<0.000000e+00> : vector<32xf32>
    %86 = vector.multi_reduction <add>, %85, %cst_28 [1] : vector<32x128xf32> to vector<32xf32>
    %87 = vector.shape_cast %86 : vector<32xf32> to vector<32x1xf32>
    %cst_29 = arith.constant 3.125000e-02 : f32
    %88 = vector.broadcast %cst_29 : f32 to vector<32x1xf32>
    %89 = arith.mulf %87, %88 : vector<32x1xf32>
    %90 = vector.broadcast %89 : vector<32x1xf32> to vector<32x128xf32>
    %91 = arith.subf %77, %90 : vector<32x128xf32>
    %cst_30 = arith.constant 0.000000e+00 : f32
    %92 = vector.shape_cast %3 : vector<1x128xi1> to vector<1x128xi1>
    %93 = vector.broadcast %92 : vector<1x128xi1> to vector<32x128xi1>
    %94 = vector.broadcast %cst_30 : f32 to vector<32x128xf32>
    %95 = arith.select %93, %91, %94 : vector<32x128xi1>, vector<32x128xf32>
    %96 = arith.mulf %95, %95 : vector<32x128xf32>
    %cst_31 = arith.constant dense<0.000000e+00> : vector<32xf32>
    %97 = vector.multi_reduction <add>, %96, %cst_31 [1] : vector<32x128xf32> to vector<32xf32>
    %98 = vector.shape_cast %97 : vector<32xf32> to vector<32x1xf32>
    %cst_32 = arith.constant 3.125000e-02 : f32
    %99 = vector.broadcast %cst_32 : f32 to vector<32x1xf32>
    %100 = arith.mulf %98, %99 : vector<32x1xf32>
    %cst_33 = arith.constant 9.99999974E-6 : f32
    %101 = vector.broadcast %cst_33 : f32 to vector<32x1xf32>
    %102 = arith.addf %100, %101 : vector<32x1xf32>
    %103 = math.rsqrt %102 : vector<32x1xf32>
    %104 = vector.broadcast %103 : vector<32x1xf32> to vector<32x128xf32>
    %105 = arith.mulf %95, %104 : vector<32x128xf32>
    %106 = vector.broadcast %79 : vector<1x128xf32> to vector<32x128xf32>
    %107 = arith.mulf %105, %106 : vector<32x128xf32>
    %108 = vector.broadcast %81 : vector<1x128xf32> to vector<32x128xf32>
    %109 = arith.addf %107, %108 : vector<32x128xf32>
    %110 = arith.truncf %109 : vector<32x128xf32> to vector<32x128xbf16>
    %c0_34 = arith.constant 0 : index
    %c0_35 = arith.constant 0 : index
    %c0_36 = arith.constant 0 : index
    %111 = vector.load %arg12[%c0_34, %c0_35, %c0_36] : memref<2x1x128xf32, #tpu.memory_space<vmem>>, vector<1x1x128xf32>
    %112 = vector.shape_cast %111 : vector<1x1x128xf32> to vector<1x128xf32>
    %113 = vector.broadcast %112 : vector<1x128xf32> to vector<32x128xf32>
    %114 = arith.addf %109, %113 : vector<32x128xf32>
    %c0_37 = arith.constant 0 : index
    %c0_38 = arith.constant 0 : index
    %c0_39 = arith.constant 0 : index
    %115 = vector.load %arg9[%c0_37, %c0_38, %c0_39] : memref<2x128x2048xbf16, #tpu.memory_space<vmem>>, vector<1x128x512xbf16>
    %116 = vector.shape_cast %115 : vector<1x128x512xbf16> to vector<128x512xbf16>
    %cst_40 = arith.constant dense<0.000000e+00> : vector<32x512xf32>
    %117 = tpu.matmul %110, %116, %cst_40 {dimension_numbers = #tpu.dot_dimension_numbers<[1], [0], [0], [1], [0, 0, 1, 1], [], []>} : vector<32x128xbf16>, vector<128x512xbf16>, vector<32x512xf32> -> vector<32x512xf32>
    %c0_41 = arith.constant 0 : index
    %c0_42 = arith.constant 0 : index
    %c0_43 = arith.constant 0 : index
    %118 = vector.load %arg10[%c0_41, %c0_42, %c0_43] : memref<2x1x2048xf32, #tpu.memory_space<vmem>>, vector<1x1x512xf32>
    %119 = vector.shape_cast %118 : vector<1x1x512xf32> to vector<1x512xf32>
    %120 = vector.broadcast %119 : vector<1x512xf32> to vector<32x512xf32>
    %121 = arith.addf %117, %120 : vector<32x512xf32>
    %cst_44 = arith.constant 0.000000e+00 : f32
    %122 = vector.broadcast %cst_44 : f32 to vector<32x512xf32>
    %123 = arith.maximumf %121, %122 : vector<32x512xf32>
    %124 = arith.truncf %123 : vector<32x512xf32> to vector<32x512xbf16>
    %c0_45 = arith.constant 0 : index
    %c0_46 = arith.constant 0 : index
    %c0_47 = arith.constant 0 : index
    %125 = vector.load %arg11[%c0_45, %c0_46, %c0_47] : memref<2x2048x128xbf16, #tpu.memory_space<vmem>>, vector<1x512x128xbf16>
    %126 = vector.shape_cast %125 : vector<1x512x128xbf16> to vector<512x128xbf16>
    %cst_48 = arith.constant dense<0.000000e+00> : vector<32x128xf32>
    %127 = tpu.matmul %124, %126, %cst_48 {dimension_numbers = #tpu.dot_dimension_numbers<[1], [0], [0], [1], [0, 0, 1, 1], [], []>} : vector<32x512xbf16>, vector<512x128xbf16>, vector<32x128xf32> -> vector<32x128xf32>
    %128 = arith.addf %114, %127 : vector<32x128xf32>
    %c0_49 = arith.constant 0 : index
    %c0_50 = arith.constant 0 : index
    %c512 = arith.constant 512 : index
    %129 = vector.load %arg9[%c0_49, %c0_50, %c512] : memref<2x128x2048xbf16, #tpu.memory_space<vmem>>, vector<1x128x512xbf16>
    %130 = vector.shape_cast %129 : vector<1x128x512xbf16> to vector<128x512xbf16>
    %cst_51 = arith.constant dense<0.000000e+00> : vector<32x512xf32>
    %131 = tpu.matmul %110, %130, %cst_51 {dimension_numbers = #tpu.dot_dimension_numbers<[1], [0], [0], [1], [0, 0, 1, 1], [], []>} : vector<32x128xbf16>, vector<128x512xbf16>, vector<32x512xf32> -> vector<32x512xf32>
    %c0_52 = arith.constant 0 : index
    %c0_53 = arith.constant 0 : index
    %c512_54 = arith.constant 512 : index
    %132 = vector.load %arg10[%c0_52, %c0_53, %c512_54] : memref<2x1x2048xf32, #tpu.memory_space<vmem>>, vector<1x1x512xf32>
    %133 = vector.shape_cast %132 : vector<1x1x512xf32> to vector<1x512xf32>
    %134 = vector.broadcast %133 : vector<1x512xf32> to vector<32x512xf32>
    %135 = arith.addf %131, %134 : vector<32x512xf32>
    %cst_55 = arith.constant 0.000000e+00 : f32
    %136 = vector.broadcast %cst_55 : f32 to vector<32x512xf32>
    %137 = arith.maximumf %135, %136 : vector<32x512xf32>
    %138 = arith.truncf %137 : vector<32x512xf32> to vector<32x512xbf16>
    %c0_56 = arith.constant 0 : index
    %c512_57 = arith.constant 512 : index
    %c0_58 = arith.constant 0 : index
    %139 = vector.load %arg11[%c0_56, %c512_57, %c0_58] : memref<2x2048x128xbf16, #tpu.memory_space<vmem>>, vector<1x512x128xbf16>
    %140 = vector.shape_cast %139 : vector<1x512x128xbf16> to vector<512x128xbf16>
    %cst_59 = arith.constant dense<0.000000e+00> : vector<32x128xf32>
    %141 = tpu.matmul %138, %140, %cst_59 {dimension_numbers = #tpu.dot_dimension_numbers<[1], [0], [0], [1], [0, 0, 1, 1], [], []>} : vector<32x512xbf16>, vector<512x128xbf16>, vector<32x128xf32> -> vector<32x128xf32>
    %142 = arith.addf %128, %141 : vector<32x128xf32>
    %c0_60 = arith.constant 0 : index
    %c0_61 = arith.constant 0 : index
    %c1024 = arith.constant 1024 : index
    %143 = vector.load %arg9[%c0_60, %c0_61, %c1024] : memref<2x128x2048xbf16, #tpu.memory_space<vmem>>, vector<1x128x512xbf16>
    %144 = vector.shape_cast %143 : vector<1x128x512xbf16> to vector<128x512xbf16>
    %cst_62 = arith.constant dense<0.000000e+00> : vector<32x512xf32>
    %145 = tpu.matmul %110, %144, %cst_62 {dimension_numbers = #tpu.dot_dimension_numbers<[1], [0], [0], [1], [0, 0, 1, 1], [], []>} : vector<32x128xbf16>, vector<128x512xbf16>, vector<32x512xf32> -> vector<32x512xf32>
    %c0_63 = arith.constant 0 : index
    %c0_64 = arith.constant 0 : index
    %c1024_65 = arith.constant 1024 : index
    %146 = vector.load %arg10[%c0_63, %c0_64, %c1024_65] : memref<2x1x2048xf32, #tpu.memory_space<vmem>>, vector<1x1x512xf32>
    %147 = vector.shape_cast %146 : vector<1x1x512xf32> to vector<1x512xf32>
    %148 = vector.broadcast %147 : vector<1x512xf32> to vector<32x512xf32>
    %149 = arith.addf %145, %148 : vector<32x512xf32>
    %cst_66 = arith.constant 0.000000e+00 : f32
    %150 = vector.broadcast %cst_66 : f32 to vector<32x512xf32>
    %151 = arith.maximumf %149, %150 : vector<32x512xf32>
    %152 = arith.truncf %151 : vector<32x512xf32> to vector<32x512xbf16>
    %c0_67 = arith.constant 0 : index
    %c1024_68 = arith.constant 1024 : index
    %c0_69 = arith.constant 0 : index
    %153 = vector.load %arg11[%c0_67, %c1024_68, %c0_69] : memref<2x2048x128xbf16, #tpu.memory_space<vmem>>, vector<1x512x128xbf16>
    %154 = vector.shape_cast %153 : vector<1x512x128xbf16> to vector<512x128xbf16>
    %cst_70 = arith.constant dense<0.000000e+00> : vector<32x128xf32>
    %155 = tpu.matmul %152, %154, %cst_70 {dimension_numbers = #tpu.dot_dimension_numbers<[1], [0], [0], [1], [0, 0, 1, 1], [], []>} : vector<32x512xbf16>, vector<512x128xbf16>, vector<32x128xf32> -> vector<32x128xf32>
    %156 = arith.addf %142, %155 : vector<32x128xf32>
    %c0_71 = arith.constant 0 : index
    %c0_72 = arith.constant 0 : index
    %c1536 = arith.constant 1536 : index
    %157 = vector.load %arg9[%c0_71, %c0_72, %c1536] : memref<2x128x2048xbf16, #tpu.memory_space<vmem>>, vector<1x128x512xbf16>
    %158 = vector.shape_cast %157 : vector<1x128x512xbf16> to vector<128x512xbf16>
    %cst_73 = arith.constant dense<0.000000e+00> : vector<32x512xf32>
    %159 = tpu.matmul %110, %158, %cst_73 {dimension_numbers = #tpu.dot_dimension_numbers<[1], [0], [0], [1], [0, 0, 1, 1], [], []>} : vector<32x128xbf16>, vector<128x512xbf16>, vector<32x512xf32> -> vector<32x512xf32>
    %c0_74 = arith.constant 0 : index
    %c0_75 = arith.constant 0 : index
    %c1536_76 = arith.constant 1536 : index
    %160 = vector.load %arg10[%c0_74, %c0_75, %c1536_76] : memref<2x1x2048xf32, #tpu.memory_space<vmem>>, vector<1x1x512xf32>
    %161 = vector.shape_cast %160 : vector<1x1x512xf32> to vector<1x512xf32>
    %162 = vector.broadcast %161 : vector<1x512xf32> to vector<32x512xf32>
    %163 = arith.addf %159, %162 : vector<32x512xf32>
    %cst_77 = arith.constant 0.000000e+00 : f32
    %164 = vector.broadcast %cst_77 : f32 to vector<32x512xf32>
    %165 = arith.maximumf %163, %164 : vector<32x512xf32>
    %166 = arith.truncf %165 : vector<32x512xf32> to vector<32x512xbf16>
    %c0_78 = arith.constant 0 : index
    %c1536_79 = arith.constant 1536 : index
    %c0_80 = arith.constant 0 : index
    %167 = vector.load %arg11[%c0_78, %c1536_79, %c0_80] : memref<2x2048x128xbf16, #tpu.memory_space<vmem>>, vector<1x512x128xbf16>
    %168 = vector.shape_cast %167 : vector<1x512x128xbf16> to vector<512x128xbf16>
    %cst_81 = arith.constant dense<0.000000e+00> : vector<32x128xf32>
    %169 = tpu.matmul %166, %168, %cst_81 {dimension_numbers = #tpu.dot_dimension_numbers<[1], [0], [0], [1], [0, 0, 1, 1], [], []>} : vector<32x512xbf16>, vector<512x128xbf16>, vector<32x128xf32> -> vector<32x128xf32>
    %170 = arith.addf %156, %169 : vector<32x128xf32>
    %c0_82 = arith.constant 0 : index
    %c0_83 = arith.constant 0 : index
    %c0_84 = arith.constant 0 : index
    %171 = vector.load %arg13[%c0_82, %c0_83, %c0_84] : memref<2x1x128xf32, #tpu.memory_space<vmem>>, vector<1x1x128xf32>
    %172 = vector.shape_cast %171 : vector<1x1x128xf32> to vector<1x128xf32>
    %c0_85 = arith.constant 0 : index
    %c0_86 = arith.constant 0 : index
    %c0_87 = arith.constant 0 : index
    %173 = vector.load %arg14[%c0_85, %c0_86, %c0_87] : memref<2x1x128xf32, #tpu.memory_space<vmem>>, vector<1x1x128xf32>
    %174 = vector.shape_cast %173 : vector<1x1x128xf32> to vector<1x128xf32>
    %cst_88 = arith.constant 0.000000e+00 : f32
    %175 = vector.shape_cast %3 : vector<1x128xi1> to vector<1x128xi1>
    %176 = vector.broadcast %175 : vector<1x128xi1> to vector<32x128xi1>
    %177 = vector.broadcast %cst_88 : f32 to vector<32x128xf32>
    %178 = arith.select %176, %170, %177 : vector<32x128xi1>, vector<32x128xf32>
    %cst_89 = arith.constant dense<0.000000e+00> : vector<32xf32>
    %179 = vector.multi_reduction <add>, %178, %cst_89 [1] : vector<32x128xf32> to vector<32xf32>
    %180 = vector.shape_cast %179 : vector<32xf32> to vector<32x1xf32>
    %cst_90 = arith.constant 3.125000e-02 : f32
    %181 = vector.broadcast %cst_90 : f32 to vector<32x1xf32>
    %182 = arith.mulf %180, %181 : vector<32x1xf32>
    %183 = vector.broadcast %182 : vector<32x1xf32> to vector<32x128xf32>
    %184 = arith.subf %170, %183 : vector<32x128xf32>
    %cst_91 = arith.constant 0.000000e+00 : f32
    %185 = vector.shape_cast %3 : vector<1x128xi1> to vector<1x128xi1>
    %186 = vector.broadcast %185 : vector<1x128xi1> to vector<32x128xi1>
    %187 = vector.broadcast %cst_91 : f32 to vector<32x128xf32>
    %188 = arith.select %186, %184, %187 : vector<32x128xi1>, vector<32x128xf32>
    %189 = arith.mulf %188, %188 : vector<32x128xf32>
    %cst_92 = arith.constant dense<0.000000e+00> : vector<32xf32>
    %190 = vector.multi_reduction <add>, %189, %cst_92 [1] : vector<32x128xf32> to vector<32xf32>
    %191 = vector.shape_cast %190 : vector<32xf32> to vector<32x1xf32>
    %cst_93 = arith.constant 3.125000e-02 : f32
    %192 = vector.broadcast %cst_93 : f32 to vector<32x1xf32>
    %193 = arith.mulf %191, %192 : vector<32x1xf32>
    %cst_94 = arith.constant 9.99999974E-6 : f32
    %194 = vector.broadcast %cst_94 : f32 to vector<32x1xf32>
    %195 = arith.addf %193, %194 : vector<32x1xf32>
    %196 = math.rsqrt %195 : vector<32x1xf32>
    %197 = vector.broadcast %196 : vector<32x1xf32> to vector<32x128xf32>
    %198 = arith.mulf %188, %197 : vector<32x128xf32>
    %199 = vector.broadcast %172 : vector<1x128xf32> to vector<32x128xf32>
    %200 = arith.mulf %198, %199 : vector<32x128xf32>
    %201 = vector.broadcast %174 : vector<1x128xf32> to vector<32x128xf32>
    %202 = arith.addf %200, %201 : vector<32x128xf32>
    %203 = arith.truncf %202 : vector<32x128xf32> to vector<32x128xbf16>
    %c1_95 = arith.constant 1 : index
    %c0_96 = arith.constant 0 : index
    %c0_97 = arith.constant 0 : index
    %204 = vector.load %arg3[%c1_95, %c0_96, %c0_97] : memref<2x128x384xbf16, #tpu.memory_space<vmem>>, vector<1x128x384xbf16>
    %205 = vector.shape_cast %204 : vector<1x128x384xbf16> to vector<128x384xbf16>
    %cst_98 = arith.constant dense<0.000000e+00> : vector<32x384xf32>
    %206 = tpu.matmul %203, %205, %cst_98 {dimension_numbers = #tpu.dot_dimension_numbers<[1], [0], [0], [1], [0, 0, 1, 1], [], []>} : vector<32x128xbf16>, vector<128x384xbf16>, vector<32x384xf32> -> vector<32x384xf32>
    %c1_99 = arith.constant 1 : index
    %c0_100 = arith.constant 0 : index
    %c0_101 = arith.constant 0 : index
    %207 = vector.load %arg4[%c1_99, %c0_100, %c0_101] : memref<2x1x384xf32, #tpu.memory_space<vmem>>, vector<1x1x384xf32>
    %208 = vector.shape_cast %207 : vector<1x1x384xf32> to vector<1x384xf32>
    %209 = vector.broadcast %208 : vector<1x384xf32> to vector<32x384xf32>
    %210 = arith.addf %206, %209 : vector<32x384xf32>
    %211 = vector.extract_strided_slice %210 {offsets = [0, 0], sizes = [32, 128], strides = [1, 1]} : vector<32x384xf32> to vector<32x128xf32>
    %cst_102 = arith.constant 0.353553385 : f32
    %212 = vector.broadcast %cst_102 : f32 to vector<32x128xf32>
    %213 = arith.mulf %211, %212 : vector<32x128xf32>
    %214 = vector.extract_strided_slice %210 {offsets = [0, 128], sizes = [32, 128], strides = [1, 1]} : vector<32x384xf32> to vector<32x128xf32>
    %215 = vector.extract_strided_slice %210 {offsets = [0, 256], sizes = [32, 128], strides = [1, 1]} : vector<32x384xf32> to vector<32x128xf32>
    %216 = vector.extract_strided_slice %213 {offsets = [0, 0], sizes = [16, 128], strides = [1, 1]} : vector<32x128xf32> to vector<16x128xf32>
    %217 = vector.extract_strided_slice %214 {offsets = [0, 0], sizes = [16, 128], strides = [1, 1]} : vector<32x128xf32> to vector<16x128xf32>
    %218 = arith.mulf %216, %217 : vector<16x128xf32>
    %219 = arith.truncf %218 : vector<16x128xf32> to vector<16x128xbf16>
    %220 = vector.extract_strided_slice %214 {offsets = [16, 0], sizes = [16, 128], strides = [1, 1]} : vector<32x128xf32> to vector<16x128xf32>
    %221 = arith.mulf %216, %220 : vector<16x128xf32>
    %222 = arith.truncf %221 : vector<16x128xf32> to vector<16x128xbf16>
    %223 = vector.extract_strided_slice %213 {offsets = [16, 0], sizes = [16, 128], strides = [1, 1]} : vector<32x128xf32> to vector<16x128xf32>
    %224 = vector.extract_strided_slice %214 {offsets = [0, 0], sizes = [16, 128], strides = [1, 1]} : vector<32x128xf32> to vector<16x128xf32>
    %225 = arith.mulf %223, %224 : vector<16x128xf32>
    %226 = arith.truncf %225 : vector<16x128xf32> to vector<16x128xbf16>
    %227 = vector.extract_strided_slice %214 {offsets = [16, 0], sizes = [16, 128], strides = [1, 1]} : vector<32x128xf32> to vector<16x128xf32>
    %228 = arith.mulf %223, %227 : vector<16x128xf32>
    %229 = arith.truncf %228 : vector<16x128xf32> to vector<16x128xbf16>
    %230 = tpu.concatenate %219, %222, %226, %229 in 0 : vector<16x128xbf16>, vector<16x128xbf16>, vector<16x128xbf16>, vector<16x128xbf16> -> vector<64x128xbf16>
    %cst_103 = arith.constant dense<0.000000e+00> : vector<64x128xf32>
    %231 = tpu.matmul %230, %0, %cst_103 {dimension_numbers = #tpu.dot_dimension_numbers<[1], [0], [0], [1], [0, 0, 1, 1], [], []>} : vector<64x128xbf16>, vector<128x128xbf16>, vector<64x128xf32> -> vector<64x128xf32>
    %232 = vector.extract_strided_slice %231 {offsets = [0, 0], sizes = [16, 128], strides = [1, 1]} : vector<64x128xf32> to vector<16x128xf32>
    %233 = vector.extract_strided_slice %231 {offsets = [16, 0], sizes = [16, 128], strides = [1, 1]} : vector<64x128xf32> to vector<16x128xf32>
    %234 = arith.maximumf %232, %233 : vector<16x128xf32>
    %235 = arith.subf %232, %234 : vector<16x128xf32>
    %236 = math.exp %235 : vector<16x128xf32>
    %237 = arith.subf %233, %234 : vector<16x128xf32>
    %238 = math.exp %237 : vector<16x128xf32>
    %239 = arith.addf %236, %238 : vector<16x128xf32>
    %240 = vector.extract_strided_slice %215 {offsets = [0, 0], sizes = [16, 128], strides = [1, 1]} : vector<32x128xf32> to vector<16x128xf32>
    %241 = arith.mulf %236, %240 : vector<16x128xf32>
    %242 = vector.extract_strided_slice %215 {offsets = [16, 0], sizes = [16, 128], strides = [1, 1]} : vector<32x128xf32> to vector<16x128xf32>
    %243 = arith.mulf %238, %242 : vector<16x128xf32>
    %244 = arith.addf %241, %243 : vector<16x128xf32>
    %245 = tpu.reciprocal %239 {approx = true} : vector<16x128xf32> -> vector<16x128xf32>
    %246 = arith.mulf %244, %245 : vector<16x128xf32>
    %247 = vector.extract_strided_slice %231 {offsets = [32, 0], sizes = [16, 128], strides = [1, 1]} : vector<64x128xf32> to vector<16x128xf32>
    %248 = vector.extract_strided_slice %231 {offsets = [48, 0], sizes = [16, 128], strides = [1, 1]} : vector<64x128xf32> to vector<16x128xf32>
    %249 = arith.maximumf %247, %248 : vector<16x128xf32>
    %250 = arith.subf %247, %249 : vector<16x128xf32>
    %251 = math.exp %250 : vector<16x128xf32>
    %252 = arith.subf %248, %249 : vector<16x128xf32>
    %253 = math.exp %252 : vector<16x128xf32>
    %254 = arith.addf %251, %253 : vector<16x128xf32>
    %255 = vector.extract_strided_slice %215 {offsets = [0, 0], sizes = [16, 128], strides = [1, 1]} : vector<32x128xf32> to vector<16x128xf32>
    %256 = arith.mulf %251, %255 : vector<16x128xf32>
    %257 = vector.extract_strided_slice %215 {offsets = [16, 0], sizes = [16, 128], strides = [1, 1]} : vector<32x128xf32> to vector<16x128xf32>
    %258 = arith.mulf %253, %257 : vector<16x128xf32>
    %259 = arith.addf %256, %258 : vector<16x128xf32>
    %260 = tpu.reciprocal %254 {approx = true} : vector<16x128xf32> -> vector<16x128xf32>
    %261 = arith.mulf %259, %260 : vector<16x128xf32>
    %262 = tpu.concatenate %246, %261 in 0 : vector<16x128xf32>, vector<16x128xf32> -> vector<32x128xf32>
    %263 = arith.truncf %262 : vector<32x128xf32> to vector<32x128xbf16>
    %c1_104 = arith.constant 1 : index
    %c0_105 = arith.constant 0 : index
    %c0_106 = arith.constant 0 : index
    %264 = vector.load %arg5[%c1_104, %c0_105, %c0_106] : memref<2x128x128xbf16, #tpu.memory_space<vmem>>, vector<1x128x128xbf16>
    %265 = vector.shape_cast %264 : vector<1x128x128xbf16> to vector<128x128xbf16>
    %cst_107 = arith.constant dense<0.000000e+00> : vector<32x128xf32>
    %266 = tpu.matmul %263, %265, %cst_107 {dimension_numbers = #tpu.dot_dimension_numbers<[1], [0], [0], [1], [0, 0, 1, 1], [], []>} : vector<32x128xbf16>, vector<128x128xbf16>, vector<32x128xf32> -> vector<32x128xf32>
    %c1_108 = arith.constant 1 : index
    %c0_109 = arith.constant 0 : index
    %c0_110 = arith.constant 0 : index
    %267 = vector.load %arg6[%c1_108, %c0_109, %c0_110] : memref<2x1x128xf32, #tpu.memory_space<vmem>>, vector<1x1x128xf32>
    %268 = vector.shape_cast %267 : vector<1x1x128xf32> to vector<1x128xf32>
    %269 = vector.broadcast %268 : vector<1x128xf32> to vector<32x128xf32>
    %270 = arith.addf %266, %269 : vector<32x128xf32>
    %271 = arith.addf %270, %202 : vector<32x128xf32>
    %c1_111 = arith.constant 1 : index
    %c0_112 = arith.constant 0 : index
    %c0_113 = arith.constant 0 : index
    %272 = vector.load %arg7[%c1_111, %c0_112, %c0_113] : memref<2x1x128xf32, #tpu.memory_space<vmem>>, vector<1x1x128xf32>
    %273 = vector.shape_cast %272 : vector<1x1x128xf32> to vector<1x128xf32>
    %c1_114 = arith.constant 1 : index
    %c0_115 = arith.constant 0 : index
    %c0_116 = arith.constant 0 : index
    %274 = vector.load %arg8[%c1_114, %c0_115, %c0_116] : memref<2x1x128xf32, #tpu.memory_space<vmem>>, vector<1x1x128xf32>
    %275 = vector.shape_cast %274 : vector<1x1x128xf32> to vector<1x128xf32>
    %cst_117 = arith.constant 0.000000e+00 : f32
    %276 = vector.shape_cast %3 : vector<1x128xi1> to vector<1x128xi1>
    %277 = vector.broadcast %276 : vector<1x128xi1> to vector<32x128xi1>
    %278 = vector.broadcast %cst_117 : f32 to vector<32x128xf32>
    %279 = arith.select %277, %271, %278 : vector<32x128xi1>, vector<32x128xf32>
    %cst_118 = arith.constant dense<0.000000e+00> : vector<32xf32>
    %280 = vector.multi_reduction <add>, %279, %cst_118 [1] : vector<32x128xf32> to vector<32xf32>
    %281 = vector.shape_cast %280 : vector<32xf32> to vector<32x1xf32>
    %cst_119 = arith.constant 3.125000e-02 : f32
    %282 = vector.broadcast %cst_119 : f32 to vector<32x1xf32>
    %283 = arith.mulf %281, %282 : vector<32x1xf32>
    %284 = vector.broadcast %283 : vector<32x1xf32> to vector<32x128xf32>
    %285 = arith.subf %271, %284 : vector<32x128xf32>
    %cst_120 = arith.constant 0.000000e+00 : f32
    %286 = vector.shape_cast %3 : vector<1x128xi1> to vector<1x128xi1>
    %287 = vector.broadcast %286 : vector<1x128xi1> to vector<32x128xi1>
    %288 = vector.broadcast %cst_120 : f32 to vector<32x128xf32>
    %289 = arith.select %287, %285, %288 : vector<32x128xi1>, vector<32x128xf32>
    %290 = arith.mulf %289, %289 : vector<32x128xf32>
    %cst_121 = arith.constant dense<0.000000e+00> : vector<32xf32>
    %291 = vector.multi_reduction <add>, %290, %cst_121 [1] : vector<32x128xf32> to vector<32xf32>
    %292 = vector.shape_cast %291 : vector<32xf32> to vector<32x1xf32>
    %cst_122 = arith.constant 3.125000e-02 : f32
    %293 = vector.broadcast %cst_122 : f32 to vector<32x1xf32>
    %294 = arith.mulf %292, %293 : vector<32x1xf32>
    %cst_123 = arith.constant 9.99999974E-6 : f32
    %295 = vector.broadcast %cst_123 : f32 to vector<32x1xf32>
    %296 = arith.addf %294, %295 : vector<32x1xf32>
    %297 = math.rsqrt %296 : vector<32x1xf32>
    %298 = vector.broadcast %297 : vector<32x1xf32> to vector<32x128xf32>
    %299 = arith.mulf %289, %298 : vector<32x128xf32>
    %300 = vector.broadcast %273 : vector<1x128xf32> to vector<32x128xf32>
    %301 = arith.mulf %299, %300 : vector<32x128xf32>
    %302 = vector.broadcast %275 : vector<1x128xf32> to vector<32x128xf32>
    %303 = arith.addf %301, %302 : vector<32x128xf32>
    %304 = arith.truncf %303 : vector<32x128xf32> to vector<32x128xbf16>
    %c1_124 = arith.constant 1 : index
    %c0_125 = arith.constant 0 : index
    %c0_126 = arith.constant 0 : index
    %305 = vector.load %arg12[%c1_124, %c0_125, %c0_126] : memref<2x1x128xf32, #tpu.memory_space<vmem>>, vector<1x1x128xf32>
    %306 = vector.shape_cast %305 : vector<1x1x128xf32> to vector<1x128xf32>
    %307 = vector.broadcast %306 : vector<1x128xf32> to vector<32x128xf32>
    %308 = arith.addf %303, %307 : vector<32x128xf32>
    %c1_127 = arith.constant 1 : index
    %c0_128 = arith.constant 0 : index
    %c0_129 = arith.constant 0 : index
    %309 = vector.load %arg9[%c1_127, %c0_128, %c0_129] : memref<2x128x2048xbf16, #tpu.memory_space<vmem>>, vector<1x128x512xbf16>
    %310 = vector.shape_cast %309 : vector<1x128x512xbf16> to vector<128x512xbf16>
    %cst_130 = arith.constant dense<0.000000e+00> : vector<32x512xf32>
    %311 = tpu.matmul %304, %310, %cst_130 {dimension_numbers = #tpu.dot_dimension_numbers<[1], [0], [0], [1], [0, 0, 1, 1], [], []>} : vector<32x128xbf16>, vector<128x512xbf16>, vector<32x512xf32> -> vector<32x512xf32>
    %c1_131 = arith.constant 1 : index
    %c0_132 = arith.constant 0 : index
    %c0_133 = arith.constant 0 : index
    %312 = vector.load %arg10[%c1_131, %c0_132, %c0_133] : memref<2x1x2048xf32, #tpu.memory_space<vmem>>, vector<1x1x512xf32>
    %313 = vector.shape_cast %312 : vector<1x1x512xf32> to vector<1x512xf32>
    %314 = vector.broadcast %313 : vector<1x512xf32> to vector<32x512xf32>
    %315 = arith.addf %311, %314 : vector<32x512xf32>
    %cst_134 = arith.constant 0.000000e+00 : f32
    %316 = vector.broadcast %cst_134 : f32 to vector<32x512xf32>
    %317 = arith.maximumf %315, %316 : vector<32x512xf32>
    %318 = arith.truncf %317 : vector<32x512xf32> to vector<32x512xbf16>
    %c1_135 = arith.constant 1 : index
    %c0_136 = arith.constant 0 : index
    %c0_137 = arith.constant 0 : index
    %319 = vector.load %arg11[%c1_135, %c0_136, %c0_137] : memref<2x2048x128xbf16, #tpu.memory_space<vmem>>, vector<1x512x128xbf16>
    %320 = vector.shape_cast %319 : vector<1x512x128xbf16> to vector<512x128xbf16>
    %cst_138 = arith.constant dense<0.000000e+00> : vector<32x128xf32>
    %321 = tpu.matmul %318, %320, %cst_138 {dimension_numbers = #tpu.dot_dimension_numbers<[1], [0], [0], [1], [0, 0, 1, 1], [], []>} : vector<32x512xbf16>, vector<512x128xbf16>, vector<32x128xf32> -> vector<32x128xf32>
    %322 = arith.addf %308, %321 : vector<32x128xf32>
    %c1_139 = arith.constant 1 : index
    %c0_140 = arith.constant 0 : index
    %c512_141 = arith.constant 512 : index
    %323 = vector.load %arg9[%c1_139, %c0_140, %c512_141] : memref<2x128x2048xbf16, #tpu.memory_space<vmem>>, vector<1x128x512xbf16>
    %324 = vector.shape_cast %323 : vector<1x128x512xbf16> to vector<128x512xbf16>
    %cst_142 = arith.constant dense<0.000000e+00> : vector<32x512xf32>
    %325 = tpu.matmul %304, %324, %cst_142 {dimension_numbers = #tpu.dot_dimension_numbers<[1], [0], [0], [1], [0, 0, 1, 1], [], []>} : vector<32x128xbf16>, vector<128x512xbf16>, vector<32x512xf32> -> vector<32x512xf32>
    %c1_143 = arith.constant 1 : index
    %c0_144 = arith.constant 0 : index
    %c512_145 = arith.constant 512 : index
    %326 = vector.load %arg10[%c1_143, %c0_144, %c512_145] : memref<2x1x2048xf32, #tpu.memory_space<vmem>>, vector<1x1x512xf32>
    %327 = vector.shape_cast %326 : vector<1x1x512xf32> to vector<1x512xf32>
    %328 = vector.broadcast %327 : vector<1x512xf32> to vector<32x512xf32>
    %329 = arith.addf %325, %328 : vector<32x512xf32>
    %cst_146 = arith.constant 0.000000e+00 : f32
    %330 = vector.broadcast %cst_146 : f32 to vector<32x512xf32>
    %331 = arith.maximumf %329, %330 : vector<32x512xf32>
    %332 = arith.truncf %331 : vector<32x512xf32> to vector<32x512xbf16>
    %c1_147 = arith.constant 1 : index
    %c512_148 = arith.constant 512 : index
    %c0_149 = arith.constant 0 : index
    %333 = vector.load %arg11[%c1_147, %c512_148, %c0_149] : memref<2x2048x128xbf16, #tpu.memory_space<vmem>>, vector<1x512x128xbf16>
    %334 = vector.shape_cast %333 : vector<1x512x128xbf16> to vector<512x128xbf16>
    %cst_150 = arith.constant dense<0.000000e+00> : vector<32x128xf32>
    %335 = tpu.matmul %332, %334, %cst_150 {dimension_numbers = #tpu.dot_dimension_numbers<[1], [0], [0], [1], [0, 0, 1, 1], [], []>} : vector<32x512xbf16>, vector<512x128xbf16>, vector<32x128xf32> -> vector<32x128xf32>
    %336 = arith.addf %322, %335 : vector<32x128xf32>
    %c1_151 = arith.constant 1 : index
    %c0_152 = arith.constant 0 : index
    %c1024_153 = arith.constant 1024 : index
    %337 = vector.load %arg9[%c1_151, %c0_152, %c1024_153] : memref<2x128x2048xbf16, #tpu.memory_space<vmem>>, vector<1x128x512xbf16>
    %338 = vector.shape_cast %337 : vector<1x128x512xbf16> to vector<128x512xbf16>
    %cst_154 = arith.constant dense<0.000000e+00> : vector<32x512xf32>
    %339 = tpu.matmul %304, %338, %cst_154 {dimension_numbers = #tpu.dot_dimension_numbers<[1], [0], [0], [1], [0, 0, 1, 1], [], []>} : vector<32x128xbf16>, vector<128x512xbf16>, vector<32x512xf32> -> vector<32x512xf32>
    %c1_155 = arith.constant 1 : index
    %c0_156 = arith.constant 0 : index
    %c1024_157 = arith.constant 1024 : index
    %340 = vector.load %arg10[%c1_155, %c0_156, %c1024_157] : memref<2x1x2048xf32, #tpu.memory_space<vmem>>, vector<1x1x512xf32>
    %341 = vector.shape_cast %340 : vector<1x1x512xf32> to vector<1x512xf32>
    %342 = vector.broadcast %341 : vector<1x512xf32> to vector<32x512xf32>
    %343 = arith.addf %339, %342 : vector<32x512xf32>
    %cst_158 = arith.constant 0.000000e+00 : f32
    %344 = vector.broadcast %cst_158 : f32 to vector<32x512xf32>
    %345 = arith.maximumf %343, %344 : vector<32x512xf32>
    %346 = arith.truncf %345 : vector<32x512xf32> to vector<32x512xbf16>
    %c1_159 = arith.constant 1 : index
    %c1024_160 = arith.constant 1024 : index
    %c0_161 = arith.constant 0 : index
    %347 = vector.load %arg11[%c1_159, %c1024_160, %c0_161] : memref<2x2048x128xbf16, #tpu.memory_space<vmem>>, vector<1x512x128xbf16>
    %348 = vector.shape_cast %347 : vector<1x512x128xbf16> to vector<512x128xbf16>
    %cst_162 = arith.constant dense<0.000000e+00> : vector<32x128xf32>
    %349 = tpu.matmul %346, %348, %cst_162 {dimension_numbers = #tpu.dot_dimension_numbers<[1], [0], [0], [1], [0, 0, 1, 1], [], []>} : vector<32x512xbf16>, vector<512x128xbf16>, vector<32x128xf32> -> vector<32x128xf32>
    %350 = arith.addf %336, %349 : vector<32x128xf32>
    %c1_163 = arith.constant 1 : index
    %c0_164 = arith.constant 0 : index
    %c1536_165 = arith.constant 1536 : index
    %351 = vector.load %arg9[%c1_163, %c0_164, %c1536_165] : memref<2x128x2048xbf16, #tpu.memory_space<vmem>>, vector<1x128x512xbf16>
    %352 = vector.shape_cast %351 : vector<1x128x512xbf16> to vector<128x512xbf16>
    %cst_166 = arith.constant dense<0.000000e+00> : vector<32x512xf32>
    %353 = tpu.matmul %304, %352, %cst_166 {dimension_numbers = #tpu.dot_dimension_numbers<[1], [0], [0], [1], [0, 0, 1, 1], [], []>} : vector<32x128xbf16>, vector<128x512xbf16>, vector<32x512xf32> -> vector<32x512xf32>
    %c1_167 = arith.constant 1 : index
    %c0_168 = arith.constant 0 : index
    %c1536_169 = arith.constant 1536 : index
    %354 = vector.load %arg10[%c1_167, %c0_168, %c1536_169] : memref<2x1x2048xf32, #tpu.memory_space<vmem>>, vector<1x1x512xf32>
    %355 = vector.shape_cast %354 : vector<1x1x512xf32> to vector<1x512xf32>
    %356 = vector.broadcast %355 : vector<1x512xf32> to vector<32x512xf32>
    %357 = arith.addf %353, %356 : vector<32x512xf32>
    %cst_170 = arith.constant 0.000000e+00 : f32
    %358 = vector.broadcast %cst_170 : f32 to vector<32x512xf32>
    %359 = arith.maximumf %357, %358 : vector<32x512xf32>
    %360 = arith.truncf %359 : vector<32x512xf32> to vector<32x512xbf16>
    %c1_171 = arith.constant 1 : index
    %c1536_172 = arith.constant 1536 : index
    %c0_173 = arith.constant 0 : index
    %361 = vector.load %arg11[%c1_171, %c1536_172, %c0_173] : memref<2x2048x128xbf16, #tpu.memory_space<vmem>>, vector<1x512x128xbf16>
    %362 = vector.shape_cast %361 : vector<1x512x128xbf16> to vector<512x128xbf16>
    %cst_174 = arith.constant dense<0.000000e+00> : vector<32x128xf32>
    %363 = tpu.matmul %360, %362, %cst_174 {dimension_numbers = #tpu.dot_dimension_numbers<[1], [0], [0], [1], [0, 0, 1, 1], [], []>} : vector<32x512xbf16>, vector<512x128xbf16>, vector<32x128xf32> -> vector<32x128xf32>
    %364 = arith.addf %350, %363 : vector<32x128xf32>
    %c1_175 = arith.constant 1 : index
    %c0_176 = arith.constant 0 : index
    %c0_177 = arith.constant 0 : index
    %365 = vector.load %arg13[%c1_175, %c0_176, %c0_177] : memref<2x1x128xf32, #tpu.memory_space<vmem>>, vector<1x1x128xf32>
    %366 = vector.shape_cast %365 : vector<1x1x128xf32> to vector<1x128xf32>
    %c1_178 = arith.constant 1 : index
    %c0_179 = arith.constant 0 : index
    %c0_180 = arith.constant 0 : index
    %367 = vector.load %arg14[%c1_178, %c0_179, %c0_180] : memref<2x1x128xf32, #tpu.memory_space<vmem>>, vector<1x1x128xf32>
    %368 = vector.shape_cast %367 : vector<1x1x128xf32> to vector<1x128xf32>
    %cst_181 = arith.constant 0.000000e+00 : f32
    %369 = vector.shape_cast %3 : vector<1x128xi1> to vector<1x128xi1>
    %370 = vector.broadcast %369 : vector<1x128xi1> to vector<32x128xi1>
    %371 = vector.broadcast %cst_181 : f32 to vector<32x128xf32>
    %372 = arith.select %370, %364, %371 : vector<32x128xi1>, vector<32x128xf32>
    %cst_182 = arith.constant dense<0.000000e+00> : vector<32xf32>
    %373 = vector.multi_reduction <add>, %372, %cst_182 [1] : vector<32x128xf32> to vector<32xf32>
    %374 = vector.shape_cast %373 : vector<32xf32> to vector<32x1xf32>
    %cst_183 = arith.constant 3.125000e-02 : f32
    %375 = vector.broadcast %cst_183 : f32 to vector<32x1xf32>
    %376 = arith.mulf %374, %375 : vector<32x1xf32>
    %377 = vector.broadcast %376 : vector<32x1xf32> to vector<32x128xf32>
    %378 = arith.subf %364, %377 : vector<32x128xf32>
    %cst_184 = arith.constant 0.000000e+00 : f32
    %379 = vector.shape_cast %3 : vector<1x128xi1> to vector<1x128xi1>
    %380 = vector.broadcast %379 : vector<1x128xi1> to vector<32x128xi1>
    %381 = vector.broadcast %cst_184 : f32 to vector<32x128xf32>
    %382 = arith.select %380, %378, %381 : vector<32x128xi1>, vector<32x128xf32>
    %383 = arith.mulf %382, %382 : vector<32x128xf32>
    %cst_185 = arith.constant dense<0.000000e+00> : vector<32xf32>
    %384 = vector.multi_reduction <add>, %383, %cst_185 [1] : vector<32x128xf32> to vector<32xf32>
    %385 = vector.shape_cast %384 : vector<32xf32> to vector<32x1xf32>
    %cst_186 = arith.constant 3.125000e-02 : f32
    %386 = vector.broadcast %cst_186 : f32 to vector<32x1xf32>
    %387 = arith.mulf %385, %386 : vector<32x1xf32>
    %cst_187 = arith.constant 9.99999974E-6 : f32
    %388 = vector.broadcast %cst_187 : f32 to vector<32x1xf32>
    %389 = arith.addf %387, %388 : vector<32x1xf32>
    %390 = math.rsqrt %389 : vector<32x1xf32>
    %391 = vector.broadcast %390 : vector<32x1xf32> to vector<32x128xf32>
    %392 = arith.mulf %382, %391 : vector<32x128xf32>
    %393 = vector.broadcast %366 : vector<1x128xf32> to vector<32x128xf32>
    %394 = arith.mulf %392, %393 : vector<32x128xf32>
    %395 = vector.broadcast %368 : vector<1x128xf32> to vector<32x128xf32>
    %396 = arith.addf %394, %395 : vector<32x128xf32>
    %397 = vector.extract_strided_slice %396 {offsets = [0, 0], sizes = [16, 128], strides = [1, 1]} : vector<32x128xf32> to vector<16x128xf32>
    %c0_188 = arith.constant 0 : index
    %c0_189 = arith.constant 0 : index
    %c0_190 = arith.constant 0 : index
    %398 = vector.load %arg15[%c0_188, %c0_189, %c0_190] : memref<2x16x128xf32, #tpu.memory_space<vmem>>, vector<1x16x128xf32>
    %399 = vector.shape_cast %398 : vector<1x16x128xf32> to vector<16x128xf32>
    %400 = vector.shape_cast %397 : vector<16x128xf32> to vector<1x16x128xf32>
    tpu.vector_store %arg15[%c0_188, %c0_189, %c0_190], %400 {strides = array<i32>} : memref<2x16x128xf32, #tpu.memory_space<vmem>>, vector<1x16x128xf32>,
    %401 = vector.extract_strided_slice %396 {offsets = [16, 0], sizes = [16, 128], strides = [1, 1]} : vector<32x128xf32> to vector<16x128xf32>
    %c1_191 = arith.constant 1 : index
    %c0_192 = arith.constant 0 : index
    %c0_193 = arith.constant 0 : index
    %402 = vector.load %arg15[%c1_191, %c0_192, %c0_193] : memref<2x16x128xf32, #tpu.memory_space<vmem>>, vector<1x16x128xf32>
    %403 = vector.shape_cast %402 : vector<1x16x128xf32> to vector<16x128xf32>
    %404 = vector.shape_cast %401 : vector<16x128xf32> to vector<1x16x128xf32>
    tpu.vector_store %arg15[%c1_191, %c0_192, %c0_193], %404 {strides = array<i32>} : memref<2x16x128xf32, #tpu.memory_space<vmem>>, vector<1x16x128xf32>,
    return
  }
  func.func @transform_0(%arg0: i32) -> (i32, i32, i32) {
    %c0_i32 = arith.constant 0 : i32
    %c0_i32_0 = arith.constant 0 : i32
    %c0_i32_1 = arith.constant 0 : i32
    return %c0_i32, %arg0, %c0_i32_0 : i32, i32, i32
  }
  func.func @transform_1(%arg0: i32) -> (i32, i32) {
    %c0_i32 = arith.constant 0 : i32
    %c0_i32_0 = arith.constant 0 : i32
    %c0_i32_1 = arith.constant 0 : i32
    return %c0_i32, %c0_i32_0 : i32, i32
  }
  func.func @transform_2(%arg0: i32) -> (i32, i32, i32) {
    %c0_i32 = arith.constant 0 : i32
    %c0_i32_0 = arith.constant 0 : i32
    %c0_i32_1 = arith.constant 0 : i32
    %c0_i32_2 = arith.constant 0 : i32
    return %c0_i32, %c0_i32_0, %c0_i32_1 : i32, i32, i32
  }
  func.func @transform_3(%arg0: i32) -> (i32, i32, i32) {
    %c0_i32 = arith.constant 0 : i32
    %c0_i32_0 = arith.constant 0 : i32
    %c0_i32_1 = arith.constant 0 : i32
    %c0_i32_2 = arith.constant 0 : i32
    return %c0_i32, %c0_i32_0, %c0_i32_1 : i32, i32, i32
  }
  func.func @transform_4(%arg0: i32) -> (i32, i32, i32) {
    %c0_i32 = arith.constant 0 : i32
    %c0_i32_0 = arith.constant 0 : i32
    %c0_i32_1 = arith.constant 0 : i32
    %c0_i32_2 = arith.constant 0 : i32
    return %c0_i32, %c0_i32_0, %c0_i32_1 : i32, i32, i32
  }
  func.func @transform_5(%arg0: i32) -> (i32, i32, i32) {
    %c0_i32 = arith.constant 0 : i32
    %c0_i32_0 = arith.constant 0 : i32
    %c0_i32_1 = arith.constant 0 : i32
    %c0_i32_2 = arith.constant 0 : i32
    return %c0_i32, %c0_i32_0, %c0_i32_1 : i32, i32, i32
  }
  func.func @transform_6(%arg0: i32) -> (i32, i32, i32) {
    %c0_i32 = arith.constant 0 : i32
    %c0_i32_0 = arith.constant 0 : i32
    %c0_i32_1 = arith.constant 0 : i32
    %c0_i32_2 = arith.constant 0 : i32
    return %c0_i32, %c0_i32_0, %c0_i32_1 : i32, i32, i32
  }
  func.func @transform_7(%arg0: i32) -> (i32, i32, i32) {
    %c0_i32 = arith.constant 0 : i32
    %c0_i32_0 = arith.constant 0 : i32
    %c0_i32_1 = arith.constant 0 : i32
    %c0_i32_2 = arith.constant 0 : i32
    return %c0_i32, %c0_i32_0, %c0_i32_1 : i32, i32, i32
  }
  func.func @transform_8(%arg0: i32) -> (i32, i32, i32) {
    %c0_i32 = arith.constant 0 : i32
    %c0_i32_0 = arith.constant 0 : i32
    %c0_i32_1 = arith.constant 0 : i32
    %c0_i32_2 = arith.constant 0 : i32
    return %c0_i32, %c0_i32_0, %c0_i32_1 : i32, i32, i32
  }
  func.func @transform_9(%arg0: i32) -> (i32, i32, i32) {
    %c0_i32 = arith.constant 0 : i32
    %c0_i32_0 = arith.constant 0 : i32
    %c0_i32_1 = arith.constant 0 : i32
    %c0_i32_2 = arith.constant 0 : i32
    return %c0_i32, %c0_i32_0, %c0_i32_1 : i32, i32, i32
  }
  func.func @transform_10(%arg0: i32) -> (i32, i32, i32) {
    %c0_i32 = arith.constant 0 : i32
    %c0_i32_0 = arith.constant 0 : i32
    %c0_i32_1 = arith.constant 0 : i32
    %c0_i32_2 = arith.constant 0 : i32
    return %c0_i32, %c0_i32_0, %c0_i32_1 : i32, i32, i32
  }
  func.func @transform_11(%arg0: i32) -> (i32, i32, i32) {
    %c0_i32 = arith.constant 0 : i32
    %c0_i32_0 = arith.constant 0 : i32
    %c0_i32_1 = arith.constant 0 : i32
    %c0_i32_2 = arith.constant 0 : i32
    return %c0_i32, %c0_i32_0, %c0_i32_1 : i32, i32, i32
  }
  func.func @transform_12(%arg0: i32) -> (i32, i32, i32) {
    %c0_i32 = arith.constant 0 : i32
    %c0_i32_0 = arith.constant 0 : i32
    %c0_i32_1 = arith.constant 0 : i32
    %c0_i32_2 = arith.constant 0 : i32
    return %c0_i32, %c0_i32_0, %c0_i32_1 : i32, i32, i32
  }
  func.func @transform_13(%arg0: i32) -> (i32, i32, i32) {
    %c0_i32 = arith.constant 0 : i32
    %c0_i32_0 = arith.constant 0 : i32
    %c0_i32_1 = arith.constant 0 : i32
    %c0_i32_2 = arith.constant 0 : i32
    return %c0_i32, %c0_i32_0, %c0_i32_1 : i32, i32, i32
  }
  func.func @transform_14(%arg0: i32) -> (i32, i32, i32) {
    %c0_i32 = arith.constant 0 : i32
    %c0_i32_0 = arith.constant 0 : i32
    %c0_i32_1 = arith.constant 0 : i32
    return %c0_i32, %arg0, %c0_i32_0 : i32, i32, i32
  }
}

</mosaic_0001>

<llo_original>
// kernel: vision_permutator_forward.1
$region0: #{vision_permutator_forward.1}
  #allocation0 [shape = 'u32[]', space=smem, size = 0x4, offset = 0x4, fixed_abs, tag = 'smem constant byte address 0x4 - core index']
  #allocation1 [shape = 'u32[72,128]{1,0:T(1,128)}', space=vmem, size = 0x9000, scoped, tag = 'internal scratch']
  %s0 = inlined_call_operand.vmem [shape: f32[2,32,128], index: 0, kind: input, shape index: {}]
  %s1 = inlined_call_operand.vmem [shape: bf16[128,128], index: 1, kind: input, shape index: {}]
  %s2 = inlined_call_operand.vmem [shape: bf16[2,128,384], index: 2, kind: input, shape index: {}]
  %s3 = inlined_call_operand.vmem [shape: f32[2,1,384], index: 3, kind: input, shape index: {}]
  %s4 = inlined_call_operand.vmem [shape: bf16[2,128,128], index: 4, kind: input, shape index: {}]
  %s5 = inlined_call_operand.vmem [shape: f32[2,1,128], index: 5, kind: input, shape index: {}]
  %s6 = inlined_call_operand.vmem [shape: f32[2,1,128], index: 6, kind: input, shape index: {}]
  %s7 = inlined_call_operand.vmem [shape: f32[2,1,128], index: 7, kind: input, shape index: {}]
  %s8 = inlined_call_operand.hbm [shape: bf16[2,128,2048], index: 8, kind: input, shape index: {}]
  %s9 = inlined_call_operand.vmem [shape: f32[2,1,2048], index: 9, kind: input, shape index: {}]
  %s10 = inlined_call_operand.hbm [shape: bf16[2,2048,128], index: 10, kind: input, shape index: {}]
  %s11 = inlined_call_operand.vmem [shape: f32[2,1,128], index: 11, kind: input, shape index: {}]
  %s12 = inlined_call_operand.vmem [shape: f32[2,1,128], index: 12, kind: input, shape index: {}]
  %s13 = inlined_call_operand.vmem [shape: f32[2,1,128], index: 13, kind: input, shape index: {}]
  %s14 = inlined_call_operand.vmem [shape: f32[2,32,128], index: 14, kind: output, shape index: {}]
  %s15 = sld [smem:[#allocation0]]
  $region169: #{vision_permutator_forward.1} parent=0
    _
  %s17 = ssub.s32 1, %s15
  %s18 = scalar_select 0, %s17, %s15
  $region1: #{vision_permutator_forward.1} parent=0
    #allocation2 [shape = 'u8[32768]{0}', space=vmem, size = 0x8000, scoped, tag = 'input window, operand 0']
    #allocation3 [shape = 'u8[1048576]{0}', space=vmem, size = 0x100000, scoped, tag = 'input window, operand 8, single buffered']
    #allocation4 [shape = 's32[2]{0}', space=sflag, size = 0x8, scoped, tag = 'scoped memory for vision_permutator_forward.1']
    #allocation5 [shape = 'u8[1048576]{0}', space=vmem, size = 0x100000, scoped, tag = 'input window, operand 10, single buffered']
    #allocation6 [shape = 's32[1]{0}', space=sflag, size = 0x4, scoped, tag = 'scoped memory for vision_permutator_forward.1']
    #allocation7 [shape = 'u8[32768]{0}', space=vmem, size = 0x8000, scoped, tag = 'output window, operand 0']
    %19 = vsyncpa [#allocation4], 0
    %20 = vsyncpa [#allocation6], 0
    loop: start=0, step=1, limit=4
    $region2: #{vision_permutator_forward.1} parent=1 // loop_pre_header
      _
    $region3: #{vision_permutator_forward.1} parent=1 // loop_header
      %s22 = sphi 0, %s26
      %p23 = scmp.ge.s32.totalorder %s22, 4
      %s32 = sphi 0, %s34
      %s35 = sphi 0, %s32
      %s36 = sphi 0, %s35
      %s52 = sphi 0, %s36
      %s56 = sphi 0, %s56
      %s58 = sphi 0, %s56
      %s59 = sphi 0, %s58
      %s73 = sphi 0, %s59
      %s77 = sphi 0, %s77
      %s79 = sphi 0, %s77
      %s80 = sphi 0, %s79
      %s94 = sphi 0, %s80
      %s98 = sphi 0, %s98
      %s100 = sphi 0, %s98
      %s101 = sphi 0, %s100
      %s115 = sphi 0, %s101
      %s119 = sphi 0, %s119
      %s121 = sphi 0, %s119
      %s122 = sphi 0, %s121
      %s136 = sphi 0, %s122
      %s140 = sphi 0, %s140
      %s142 = sphi 0, %s140
      %s143 = sphi 0, %s142
      %s157 = sphi 0, %s143
      %s161 = sphi 0, %s161
      %s163 = sphi 0, %s161
      %s164 = sphi 0, %s163
      %s178 = sphi 0, %s164
      %s182 = sphi 0, %s182
      %s184 = sphi 0, %s182
      %s185 = sphi 0, %s184
      %s199 = sphi 0, %s185
      %s203 = sphi 0, %s203
      %s205 = sphi 0, %s203
      %s206 = sphi 0, %s205
      %s220 = sphi 0, %s206
      %s224 = sphi 0, %s224
      %s226 = sphi 0, %s224
      %s227 = sphi 0, %s226
      %s241 = sphi 0, %s227
      %s245 = sphi 0, %s245
      %s247 = sphi 0, %s245
      %s248 = sphi 0, %s247
      %s262 = sphi 0, %s248
      %s266 = sphi 0, %s266
      %s268 = sphi 0, %s266
      %s269 = sphi 0, %s268
      %s283 = sphi 0, %s269
      %s287 = sphi 0, %s287
      %s289 = sphi 0, %s287
      %s290 = sphi 0, %s289
      %s304 = sphi 0, %s290
      %s308 = sphi 0, %s308
      %s310 = sphi 0, %s308
      %s311 = sphi 0, %s310
      %s325 = sphi 0, %s311
      %s331 = sphi 0, %s333
      %s334 = sphi 0, %s331
      %s335 = sphi 0, %s334
      %s351 = sphi 0, %s335
    $region4: #{vision_permutator_forward.1} parent=1 // loop_header_branch
      %25 = sbr.rel (%p23) target = $region8
    $region5: #{vision_permutator_forward.1} parent=1 // loop_body
      %s27 = ssub.s32 %s22, 1
      %s28 = ssub.s32 %s22, 2
      %s29 = sadd.s32 %s22, 1
      %s30 = ssub.s32 %s22, %s29
      %p31 = scmp.eq.s32.totalorder %s30, 0
      %s33 = sadd.s32 %s32, 1
      %s34 = scalar_select %p31, %s32, %s33
      %p37 = pneg %p31
      %p38 = scmp.eq.s32.totalorder %s22, 1
      %p39 = por %p37, %p38
      %p40 = scmp.ne.s32.totalorder %s32, %s35
      %p41 = scmp.eq.s32.totalorder %s22, 0
      %p42 = por %p40, %p41
      %p43 = scmp.ne.s32.totalorder %s32, %s35
      %p44 = scmp.eq.s32.totalorder %s27, 1
      %p45 = por %p43, %p44
      %p46 = scmp.ne.s32.totalorder %s35, %s36
      %p47 = scmp.eq.s32.totalorder %s27, 0
      %p48 = por %p46, %p47
      %p49 = scmp.ne.s32.totalorder %s35, %s36
      %p50 = scmp.eq.s32.totalorder %s28, 1
      %p51 = por %p49, %p50
      %p53 = scmp.ne.s32.totalorder %s36, %s52
      %p54 = scmp.eq.s32.totalorder %s28, 0
      %p55 = por %p53, %p54
      %s57 = sadd.s32 %s56, 1
      %p60 = scmp.eq.s32.totalorder %s22, 1
      %p61 = scmp.ne.s32.totalorder %s56, %s58
      %p62 = scmp.eq.s32.totalorder %s22, 0
      %p63 = por %p61, %p62
      %p64 = scmp.ne.s32.totalorder %s56, %s58
      %p65 = scmp.eq.s32.totalorder %s27, 1
      %p66 = por %p64, %p65
      %p67 = scmp.ne.s32.totalorder %s58, %s59
      %p68 = scmp.eq.s32.totalorder %s27, 0
      %p69 = por %p67, %p68
      %p70 = scmp.ne.s32.totalorder %s58, %s59
      %p71 = scmp.eq.s32.totalorder %s28, 1
      %p72 = por %p70, %p71
      %p74 = scmp.ne.s32.totalorder %s59, %s73
      %p75 = scmp.eq.s32.totalorder %s28, 0
      %p76 = por %p74, %p75
      %s78 = sadd.s32 %s77, 1
      %p81 = scmp.eq.s32.totalorder %s22, 1
      %p82 = scmp.ne.s32.totalorder %s77, %s79
      %p83 = scmp.eq.s32.totalorder %s22, 0
      %p84 = por %p82, %p83
      %p85 = scmp.ne.s32.totalorder %s77, %s79
      %p86 = scmp.eq.s32.totalorder %s27, 1
      %p87 = por %p85, %p86
      %p88 = scmp.ne.s32.totalorder %s79, %s80
      %p89 = scmp.eq.s32.totalorder %s27, 0
      %p90 = por %p88, %p89
      %p91 = scmp.ne.s32.totalorder %s79, %s80
      %p92 = scmp.eq.s32.totalorder %s28, 1
      %p93 = por %p91, %p92
      %p95 = scmp.ne.s32.totalorder %s80, %s94
      %p96 = scmp.eq.s32.totalorder %s28, 0
      %p97 = por %p95, %p96
      %s99 = sadd.s32 %s98, 1
      %p102 = scmp.eq.s32.totalorder %s22, 1
      %p103 = scmp.ne.s32.totalorder %s98, %s100
      %p104 = scmp.eq.s32.totalorder %s22, 0
      %p105 = por %p103, %p104
      %p106 = scmp.ne.s32.totalorder %s98, %s100
      %p107 = scmp.eq.s32.totalorder %s27, 1
      %p108 = por %p106, %p107
      %p109 = scmp.ne.s32.totalorder %s100, %s101
      %p110 = scmp.eq.s32.totalorder %s27, 0
      %p111 = por %p109, %p110
      %p112 = scmp.ne.s32.totalorder %s100, %s101
      %p113 = scmp.eq.s32.totalorder %s28, 1
      %p114 = por %p112, %p113
      %p116 = scmp.ne.s32.totalorder %s101, %s115
      %p117 = scmp.eq.s32.totalorder %s28, 0
      %p118 = por %p116, %p117
      %s120 = sadd.s32 %s119, 1
      %p123 = scmp.eq.s32.totalorder %s22, 1
      %p124 = scmp.ne.s32.totalorder %s119, %s121
      %p125 = scmp.eq.s32.totalorder %s22, 0
      %p126 = por %p124, %p125
      %p127 = scmp.ne.s32.totalorder %s119, %s121
      %p128 = scmp.eq.s32.totalorder %s27, 1
      %p129 = por %p127, %p128
      %p130 = scmp.ne.s32.totalorder %s121, %s122
      %p131 = scmp.eq.s32.totalorder %s27, 0
      %p132 = por %p130, %p131
      %p133 = scmp.ne.s32.totalorder %s121, %s122
      %p134 = scmp.eq.s32.totalorder %s28, 1
      %p135 = por %p133, %p134
      %p137 = scmp.ne.s32.totalorder %s122, %s136
      %p138 = scmp.eq.s32.totalorder %s28, 0
      %p139 = por %p137, %p138
      %s141 = sadd.s32 %s140, 1
      %p144 = scmp.eq.s32.totalorder %s22, 1
      %p145 = scmp.ne.s32.totalorder %s140, %s142
      %p146 = scmp.eq.s32.totalorder %s22, 0
      %p147 = por %p145, %p146
      %p148 = scmp.ne.s32.totalorder %s140, %s142
      %p149 = scmp.eq.s32.totalorder %s27, 1
      %p150 = por %p148, %p149
      %p151 = scmp.ne.s32.totalorder %s142, %s143
      %p152 = scmp.eq.s32.totalorder %s27, 0
      %p153 = por %p151, %p152
      %p154 = scmp.ne.s32.totalorder %s142, %s143
      %p155 = scmp.eq.s32.totalorder %s28, 1
      %p156 = por %p154, %p155
      %p158 = scmp.ne.s32.totalorder %s143, %s157
      %p159 = scmp.eq.s32.totalorder %s28, 0
      %p160 = por %p158, %p159
      %s162 = sadd.s32 %s161, 1
      %p165 = scmp.eq.s32.totalorder %s22, 1
      %p166 = scmp.ne.s32.totalorder %s161, %s163
      %p167 = scmp.eq.s32.totalorder %s22, 0
      %p168 = por %p166, %p167
      %p169 = scmp.ne.s32.totalorder %s161, %s163
      %p170 = scmp.eq.s32.totalorder %s27, 1
      %p171 = por %p169, %p170
      %p172 = scmp.ne.s32.totalorder %s163, %s164
      %p173 = scmp.eq.s32.totalorder %s27, 0
      %p174 = por %p172, %p173
      %p175 = scmp.ne.s32.totalorder %s163, %s164
      %p176 = scmp.eq.s32.totalorder %s28, 1
      %p177 = por %p175, %p176
      %p179 = scmp.ne.s32.totalorder %s164, %s178
      %p180 = scmp.eq.s32.totalorder %s28, 0
      %p181 = por %p179, %p180
      %s183 = sadd.s32 %s182, 1
      %p186 = scmp.eq.s32.totalorder %s22, 1
      %p187 = scmp.ne.s32.totalorder %s182, %s184
      %p188 = scmp.eq.s32.totalorder %s22, 0
      %p189 = por %p187, %p188
      %p190 = scmp.ne.s32.totalorder %s182, %s184
      %p191 = scmp.eq.s32.totalorder %s27, 1
      %p192 = por %p190, %p191
      %p193 = scmp.ne.s32.totalorder %s184, %s185
      %p194 = scmp.eq.s32.totalorder %s27, 0
      %p195 = por %p193, %p194
      %p196 = scmp.ne.s32.totalorder %s184, %s185
      %p197 = scmp.eq.s32.totalorder %s28, 1
      %p198 = por %p196, %p197
      %p200 = scmp.ne.s32.totalorder %s185, %s199
      %p201 = scmp.eq.s32.totalorder %s28, 0
      %p202 = por %p200, %p201
      %s204 = sadd.s32 %s203, 1
      %p207 = scmp.eq.s32.totalorder %s22, 1
      %p208 = scmp.ne.s32.totalorder %s203, %s205
      %p209 = scmp.eq.s32.totalorder %s22, 0
      %p210 = por %p208, %p209
      %p211 = scmp.ne.s32.totalorder %s203, %s205
      %p212 = scmp.eq.s32.totalorder %s27, 1
      %p213 = por %p211, %p212
      %p214 = scmp.ne.s32.totalorder %s205, %s206
      %p215 = scmp.eq.s32.totalorder %s27, 0
      %p216 = por %p214, %p215
      %p217 = scmp.ne.s32.totalorder %s205, %s206
      %p218 = scmp.eq.s32.totalorder %s28, 1
      %p219 = por %p217, %p218
      %p221 = scmp.ne.s32.totalorder %s206, %s220
      %p222 = scmp.eq.s32.totalorder %s28, 0
      %p223 = por %p221, %p222
      %s225 = sadd.s32 %s224, 1
      %p228 = scmp.eq.s32.totalorder %s22, 1
      %p229 = scmp.ne.s32.totalorder %s224, %s226
      %p230 = scmp.eq.s32.totalorder %s22, 0
      %p231 = por %p229, %p230
      %p232 = scmp.ne.s32.totalorder %s224, %s226
      %p233 = scmp.eq.s32.totalorder %s27, 1
      %p234 = por %p232, %p233
      %p235 = scmp.ne.s32.totalorder %s226, %s227
      %p236 = scmp.eq.s32.totalorder %s27, 0
      %p237 = por %p235, %p236
      %p238 = scmp.ne.s32.totalorder %s226, %s227
      %p239 = scmp.eq.s32.totalorder %s28, 1
      %p240 = por %p238, %p239
      %p242 = scmp.ne.s32.totalorder %s227, %s241
      %p243 = scmp.eq.s32.totalorder %s28, 0
      %p244 = por %p242, %p243
      %s246 = sadd.s32 %s245, 1
      %p249 = scmp.eq.s32.totalorder %s22, 1
      %p250 = scmp.ne.s32.totalorder %s245, %s247
      %p251 = scmp.eq.s32.totalorder %s22, 0
      %p252 = por %p250, %p251
      %p253 = scmp.ne.s32.totalorder %s245, %s247
      %p254 = scmp.eq.s32.totalorder %s27, 1
      %p255 = por %p253, %p254
      %p256 = scmp.ne.s32.totalorder %s247, %s248
      %p257 = scmp.eq.s32.totalorder %s27, 0
      %p258 = por %p256, %p257
      %p259 = scmp.ne.s32.totalorder %s247, %s248
      %p260 = scmp.eq.s32.totalorder %s28, 1
      %p261 = por %p259, %p260
      %p263 = scmp.ne.s32.totalorder %s248, %s262
      %p264 = scmp.eq.s32.totalorder %s28, 0
      %p265 = por %p263, %p264
      %s267 = sadd.s32 %s266, 1
      %p270 = scmp.eq.s32.totalorder %s22, 1
      %p271 = scmp.ne.s32.totalorder %s266, %s268
      %p272 = scmp.eq.s32.totalorder %s22, 0
      %p273 = por %p271, %p272
      %p274 = scmp.ne.s32.totalorder %s266, %s268
      %p275 = scmp.eq.s32.totalorder %s27, 1
      %p276 = por %p274, %p275
      %p277 = scmp.ne.s32.totalorder %s268, %s269
      %p278 = scmp.eq.s32.totalorder %s27, 0
      %p279 = por %p277, %p278
      %p280 = scmp.ne.s32.totalorder %s268, %s269
      %p281 = scmp.eq.s32.totalorder %s28, 1
      %p282 = por %p280, %p281
      %p284 = scmp.ne.s32.totalorder %s269, %s283
      %p285 = scmp.eq.s32.totalorder %s28, 0
      %p286 = por %p284, %p285
      %s288 = sadd.s32 %s287, 1
      %p291 = scmp.eq.s32.totalorder %s22, 1
      %p292 = scmp.ne.s32.totalorder %s287, %s289
      %p293 = scmp.eq.s32.totalorder %s22, 0
      %p294 = por %p292, %p293
      %p295 = scmp.ne.s32.totalorder %s287, %s289
      %p296 = scmp.eq.s32.totalorder %s27, 1
      %p297 = por %p295, %p296
      %p298 = scmp.ne.s32.totalorder %s289, %s290
      %p299 = scmp.eq.s32.totalorder %s27, 0
      %p300 = por %p298, %p299
      %p301 = scmp.ne.s32.totalorder %s289, %s290
      %p302 = scmp.eq.s32.totalorder %s28, 1
      %p303 = por %p301, %p302
      %p305 = scmp.ne.s32.totalorder %s290, %s304
      %p306 = scmp.eq.s32.totalorder %s28, 0
      %p307 = por %p305, %p306
      %s309 = sadd.s32 %s308, 1
      %p312 = scmp.eq.s32.totalorder %s22, 1
      %p313 = scmp.ne.s32.totalorder %s308, %s310
      %p314 = scmp.eq.s32.totalorder %s22, 0
      %p315 = por %p313, %p314
      %p316 = scmp.ne.s32.totalorder %s308, %s310
      %p317 = scmp.eq.s32.totalorder %s27, 1
      %p318 = por %p316, %p317
      %p319 = scmp.ne.s32.totalorder %s310, %s311
      %p320 = scmp.eq.s32.totalorder %s27, 0
      %p321 = por %p319, %p320
      %p322 = scmp.ne.s32.totalorder %s310, %s311
      %p323 = scmp.eq.s32.totalorder %s28, 1
      %p324 = por %p322, %p323
      %p326 = scmp.ne.s32.totalorder %s311, %s325
      %p327 = scmp.eq.s32.totalorder %s28, 0
      %p328 = por %p326, %p327
      %s329 = ssub.s32 %s22, %s29
      %p330 = scmp.eq.s32.totalorder %s329, 0
      %s332 = sadd.s32 %s331, 1
      %s333 = scalar_select %p330, %s331, %s332
      %p336 = pneg %p330
      %p337 = scmp.eq.s32.totalorder %s22, 1
      %p338 = por %p336, %p337
      %p339 = scmp.ne.s32.totalorder %s331, %s334
      %p340 = scmp.eq.s32.totalorder %s22, 0
      %p341 = por %p339, %p340
      %p342 = scmp.ne.s32.totalorder %s331, %s334
      %p343 = scmp.eq.s32.totalorder %s27, 1
      %p344 = por %p342, %p343
      %p345 = scmp.ne.s32.totalorder %s334, %s335
      %p346 = scmp.eq.s32.totalorder %s27, 0
      %p347 = por %p345, %p346
      %p348 = scmp.ne.s32.totalorder %s334, %s335
      %p349 = scmp.eq.s32.totalorder %s28, 1
      %p350 = por %p348, %p349
      %p352 = scmp.ne.s32.totalorder %s335, %s351
      %p353 = scmp.eq.s32.totalorder %s28, 0
      %p354 = por %p352, %p353
      %p355 = scmp.le.s32.totalorder 1, %s22
      %p356 = scmp.lt.s32.totalorder %s22, 3
      %p357 = pnand %p355, %p356
      %p358 = pneg %p357
      // Predicated region
      $region9: #{vision_permutator_forward.1} parent=5 // pred_check
        _
      $region10: #{vision_permutator_forward.1} parent=5 // pred_check_branch
        %360 = sbr.rel (%p357) target = $region12
      $region11: #{vision_permutator_forward.1} parent=5 // pred_region
        %s361 = ssub.s32 %s22, 1
        // Predicated region
        $region13: #{vision_permutator_forward.1} parent=11 // pred_check
          %p362 = pneg %p69
        $region14: #{vision_permutator_forward.1} parent=11 // pred_check_branch
          %364 = sbr.rel (%p362) target = $region16
        $region15: #{vision_permutator_forward.1} parent=11 // pred_region
          _
        $region16: #{vision_permutator_forward.1} parent=11 // pred_fallthru
          _
        // Predicated region
        $region17: #{vision_permutator_forward.1} parent=11 // pred_check
          %p365 = pneg %p90
        $region18: #{vision_permutator_forward.1} parent=11 // pred_check_branch
          %367 = sbr.rel (%p365) target = $region20
        $region19: #{vision_permutator_forward.1} parent=11 // pred_region
          _
        $region20: #{vision_permutator_forward.1} parent=11 // pred_fallthru
          _
        // Predicated region
        $region21: #{vision_permutator_forward.1} parent=11 // pred_check
          %p368 = pneg %p111
        $region22: #{vision_permutator_forward.1} parent=11 // pred_check_branch
          %370 = sbr.rel (%p368) target = $region24
        $region23: #{vision_permutator_forward.1} parent=11 // pred_region
          _
        $region24: #{vision_permutator_forward.1} parent=11 // pred_fallthru
          _
        // Predicated region
        $region25: #{vision_permutator_forward.1} parent=11 // pred_check
          %p371 = pneg %p132
        $region26: #{vision_permutator_forward.1} parent=11 // pred_check_branch
          %373 = sbr.rel (%p371) target = $region28
        $region27: #{vision_permutator_forward.1} parent=11 // pred_region
          _
        $region28: #{vision_permutator_forward.1} parent=11 // pred_fallthru
          _
        // Predicated region
        $region29: #{vision_permutator_forward.1} parent=11 // pred_check
          %p374 = pneg %p153
        $region30: #{vision_permutator_forward.1} parent=11 // pred_check_branch
          %376 = sbr.rel (%p374) target = $region32
        $region31: #{vision_permutator_forward.1} parent=11 // pred_region
          _
        $region32: #{vision_permutator_forward.1} parent=11 // pred_fallthru
          _
        // Predicated region
        $region33: #{vision_permutator_forward.1} parent=11 // pred_check
          %p377 = pneg %p174
        $region34: #{vision_permutator_forward.1} parent=11 // pred_check_branch
          %379 = sbr.rel (%p377) target = $region36
        $region35: #{vision_permutator_forward.1} parent=11 // pred_region
          _
        $region36: #{vision_permutator_forward.1} parent=11 // pred_fallthru
          _
        // Predicated region
        $region37: #{vision_permutator_forward.1} parent=11 // pred_check
          %p380 = pneg %p195
        $region38: #{vision_permutator_forward.1} parent=11 // pred_check_branch
          %382 = sbr.rel (%p380) target = $region40
        $region39: #{vision_permutator_forward.1} parent=11 // pred_region
          _
        $region40: #{vision_permutator_forward.1} parent=11 // pred_fallthru
          _
        // Predicated region
        $region41: #{vision_permutator_forward.1} parent=11 // pred_check
          %p383 = pneg %p216
        $region42: #{vision_permutator_forward.1} parent=11 // pred_check_branch
          %385 = sbr.rel (%p383) target = $region44
        $region43: #{vision_permutator_forward.1} parent=11 // pred_region
          %387 = vsyncadd [#allocation4], 0
          %s388 = sshll.u32 %s8, 4
          %s389 = int_to_ptr.hbm [resolvable:$true] %s388
          %s390 = sshll.u32 [#allocation3], 4
          %s391 = int_to_ptr.vmem [resolvable:$true] %s390
          %396 = dma.hbm_to_vmem [thread:$0]  %s389, 32768, %s391, [#allocation4], 1024, 1024, 64
        $region44: #{vision_permutator_forward.1} parent=11 // pred_fallthru
          _
        // Predicated region
        $region45: #{vision_permutator_forward.1} parent=11 // pred_check
          %p397 = pneg %p237
        $region46: #{vision_permutator_forward.1} parent=11 // pred_check_branch
          %399 = sbr.rel (%p397) target = $region48
        $region47: #{vision_permutator_forward.1} parent=11 // pred_region
          _
        $region48: #{vision_permutator_forward.1} parent=11 // pred_fallthru
          _
        // Predicated region
        $region49: #{vision_permutator_forward.1} parent=11 // pred_check
          %p400 = pneg %p258
        $region50: #{vision_permutator_forward.1} parent=11 // pred_check_branch
          %402 = sbr.rel (%p400) target = $region52
        $region51: #{vision_permutator_forward.1} parent=11 // pred_region
          %404 = vsyncadd [#allocation6], 0
          %s405 = sshll.u32 %s10, 4
          %s406 = int_to_ptr.hbm [resolvable:$true] %s405
          %s407 = sshll.u32 [#allocation5], 4
          %s408 = int_to_ptr.vmem [resolvable:$true] %s407
          %413 = dma.hbm_to_vmem [thread:$0]  %s406, 32768, %s408, [#allocation6], 64, 64, 4
        $region52: #{vision_permutator_forward.1} parent=11 // pred_fallthru
          _
        // Predicated region
        $region53: #{vision_permutator_forward.1} parent=11 // pred_check
          %p414 = pneg %p279
        $region54: #{vision_permutator_forward.1} parent=11 // pred_check_branch
          %416 = sbr.rel (%p414) target = $region56
        $region55: #{vision_permutator_forward.1} parent=11 // pred_region
          _
        $region56: #{vision_permutator_forward.1} parent=11 // pred_fallthru
          _
        // Predicated region
        $region57: #{vision_permutator_forward.1} parent=11 // pred_check
          %p417 = pneg %p300
        $region58: #{vision_permutator_forward.1} parent=11 // pred_check_branch
          %419 = sbr.rel (%p417) target = $region60
        $region59: #{vision_permutator_forward.1} parent=11 // pred_region
          _
        $region60: #{vision_permutator_forward.1} parent=11 // pred_fallthru
          _
        // Predicated region
        $region61: #{vision_permutator_forward.1} parent=11 // pred_check
          %p420 = pneg %p321
        $region62: #{vision_permutator_forward.1} parent=11 // pred_check_branch
          %422 = sbr.rel (%p420) target = $region64
        $region63: #{vision_permutator_forward.1} parent=11 // pred_region
          _
        $region64: #{vision_permutator_forward.1} parent=11 // pred_fallthru
          _
      $region12: #{vision_permutator_forward.1} parent=5 // pred_fallthru
        _
      %p423 = scmp.lt.s32.totalorder %s22, 2
      // Predicated region
      $region65: #{vision_permutator_forward.1} parent=5 // pred_check
        %p424 = pneg %p423
      $region66: #{vision_permutator_forward.1} parent=5 // pred_check_branch
        %426 = sbr.rel (%p424) target = $region68
      $region67: #{vision_permutator_forward.1} parent=5 // pred_region
        // Predicated region
        $region69: #{vision_permutator_forward.1} parent=67 // pred_check
          %p427 = pneg %p42
        $region70: #{vision_permutator_forward.1} parent=67 // pred_check_branch
          %429 = sbr.rel (%p427) target = $region72
        $region71: #{vision_permutator_forward.1} parent=67 // pred_region
          %s430 = sand.u32 %s32, 1
          %s431 = sand.u32 %s32, 1
          %s432 = smul.addr %s431, 32
          %s433 = scalar_lea.vmem [#allocation2], %s432
          %s434 = smul.u32 2, %s22
          %s435 = smul.addr %s434, 8
          %s436 = scalar_lea.vmem %s0, %s435
          // Predicated region
          $region73: #{vision_permutator_forward.1} parent=71 // pred_check
            _
          $region74: #{vision_permutator_forward.1} parent=71 // pred_check_branch
            %438 = sbr.rel (0) target = $region76
          $region75: #{vision_permutator_forward.1} parent=71 // pred_region
            // Predicated region
            $region77: #{vision_permutator_forward.1} parent=75 // pred_check
              _
            $region78: #{vision_permutator_forward.1} parent=75 // pred_check_branch
              %440 = sbr.rel (0) target = $region80
            $region79: #{vision_permutator_forward.1} parent=75 // pred_region
              // Predicated region
              $region92: #{vision_permutator_forward.1} parent=79 // pred_check
                _
              $region93: #{vision_permutator_forward.1} parent=79 // pred_check_branch
                %462 = sbr.rel (0) target = $region95
              $region94: #{vision_permutator_forward.1} parent=79 // pred_region
                loop: start=0, step=1, limit=1
                $region96: #{vision_permutator_forward.1} parent=94 // loop_pre_header
                  _
                $region97: #{vision_permutator_forward.1} parent=94 // loop_header
                  %s464 = sphi 0, %s468
                  %p465 = scmp.ge.s32.totalorder %s464, 1
                  %s469 = sphi %s436, %s436
                  %s470 = sphi %s433, %s433
                $region98: #{vision_permutator_forward.1} parent=94 // loop_header_branch
                  %467 = sbr.rel (%p465) target = $region102
                $region99: #{vision_permutator_forward.1} parent=94 // loop_body
                  %v471 = vld [vmem:[%s469] sm:$0xff]
                  %472 = vst [vmem:[%s470] sm:$0xff] %v471
                  %v473 = vld [vmem:[%s469 + $0x8] sm:$0xff]
                  %474 = vst [vmem:[%s470 + $0x8] sm:$0xff] %v473
                  %v475 = vld [vmem:[%s469 + $0x20] sm:$0xff]
                  %476 = vst [vmem:[%s470 + $0x10] sm:$0xff] %v475
                  %v477 = vld [vmem:[%s469 + $0x28] sm:$0xff]
                  %478 = vst [vmem:[%s470 + $0x18] sm:$0xff] %v477
                $region100: #{vision_permutator_forward.1} parent=94 // loop_footer
                  %s468 = sadd.s32 1, %s464
                $region101: #{vision_permutator_forward.1} parent=94 // loop_footer_branch
                  %463 = sbr.rel target = $region97
                $region102: #{vision_permutator_forward.1} parent=94 // loop_exit
                  _
              $region95: #{vision_permutator_forward.1} parent=79 // pred_fallthru
                _
              // Predicated region
              $region103: #{vision_permutator_forward.1} parent=79 // pred_check
                _
              $region104: #{vision_permutator_forward.1} parent=79 // pred_check_branch
                %480 = sbr.rel target = $region106
              $region105: #{vision_permutator_forward.1} parent=79 // pred_region
                _
              $region106: #{vision_permutator_forward.1} parent=79 // pred_fallthru
                _
            $region80: #{vision_permutator_forward.1} parent=75 // pred_fallthru
              _
            // Predicated region
            $region81: #{vision_permutator_forward.1} parent=75 // pred_check
              _
            $region82: #{vision_permutator_forward.1} parent=75 // pred_check_branch
              %442 = sbr.rel target = $region84
            $region83: #{vision_permutator_forward.1} parent=75 // pred_region
              %s444 = ssub.s32 256, 1
              loop: start=0, step=1, limit=1
              $region85: #{vision_permutator_forward.1} parent=83 // loop_pre_header
                _
              $region86: #{vision_permutator_forward.1} parent=83 // loop_header
                %s446 = sphi 0, %s450
                %p447 = scmp.ge.s32.totalorder %s446, 1
                %s451 = sphi %s436, %s436
                %s452 = sphi %s433, %s433
              $region87: #{vision_permutator_forward.1} parent=83 // loop_header_branch
                %449 = sbr.rel (%p447) target = $region91
              $region88: #{vision_permutator_forward.1} parent=83 // loop_body
                %v453 = vld [vmem:[%s451] sm:%s444]
                %454 = vst [vmem:[%s452] sm:%s444] %v453
                %v455 = vld [vmem:[%s451 + $0x8] sm:%s444]
                %456 = vst [vmem:[%s452 + $0x8] sm:%s444] %v455
                %v457 = vld [vmem:[%s451 + $0x20] sm:%s444]
                %458 = vst [vmem:[%s452 + $0x10] sm:%s444] %v457
                %v459 = vld [vmem:[%s451 + $0x28] sm:%s444]
                %460 = vst [vmem:[%s452 + $0x18] sm:%s444] %v459
              $region89: #{vision_permutator_forward.1} parent=83 // loop_footer
                %s450 = sadd.s32 1, %s446
              $region90: #{vision_permutator_forward.1} parent=83 // loop_footer_branch
                %445 = sbr.rel target = $region86
              $region91: #{vision_permutator_forward.1} parent=83 // loop_exit
                _
            $region84: #{vision_permutator_forward.1} parent=75 // pred_fallthru
              _
          $region76: #{vision_permutator_forward.1} parent=71 // pred_fallthru
            _
          %481 = vnop
        $region72: #{vision_permutator_forward.1} parent=67 // pred_fallthru
          _
      $region68: #{vision_permutator_forward.1} parent=5 // pred_fallthru
        _
      %p482 = scmp.le.s32.totalorder 1, %s22
      %p483 = scmp.lt.s32.totalorder %s22, 3
      %p484 = pnand %p482, %p483
      %p485 = pneg %p484
      // Predicated region
      $region107: #{vision_permutator_forward.1} parent=5 // pred_check
        _
      $region108: #{vision_permutator_forward.1} parent=5 // pred_check_branch
        %487 = sbr.rel (%p484) target = $region110
      $region109: #{vision_permutator_forward.1} parent=5 // pred_region
        %s488 = ssub.s32 %s22, 1
        %s489 = sand.u32 %s35, 1
        %s490 = sand.u32 %s35, 1
        %s491 = smul.addr %s490, 32
        %s492 = scalar_lea.vmem [#allocation2], %s491
        // Predicated region
        $region111: #{vision_permutator_forward.1} parent=109 // pred_check
          %p493 = pneg %p48
        $region112: #{vision_permutator_forward.1} parent=109 // pred_check_branch
          %495 = sbr.rel (%p493) target = $region114
        $region113: #{vision_permutator_forward.1} parent=109 // pred_region
          _
        $region114: #{vision_permutator_forward.1} parent=109 // pred_fallthru
          _
        // Predicated region
        $region115: #{vision_permutator_forward.1} parent=109 // pred_check
          %p496 = pneg %p216
        $region116: #{vision_permutator_forward.1} parent=109 // pred_check_branch
          %498 = sbr.rel (%p496) target = $region118
        $region117: #{vision_permutator_forward.1} parent=109 // pred_region
          %500 = dma.done [#allocation4], 32768
        $region118: #{vision_permutator_forward.1} parent=109 // pred_fallthru
          _
        // Predicated region
        $region119: #{vision_permutator_forward.1} parent=109 // pred_check
          %p501 = pneg %p258
        $region120: #{vision_permutator_forward.1} parent=109 // pred_check_branch
          %503 = sbr.rel (%p501) target = $region122
        $region121: #{vision_permutator_forward.1} parent=109 // pred_region
          %505 = dma.done [#allocation6], 32768
        $region122: #{vision_permutator_forward.1} parent=109 // pred_fallthru
          _
        %s506 = sand.u32 %s35, 1
        %s507 = sand.u32 %s35, 1
        %s508 = smul.addr %s507, 32
        %s509 = scalar_lea.vmem [#allocation2], %s508
        %p510 = pneg %p48
        %p511 = pneg %p45
        %p512 = pneg %p69
        %p513 = pneg %p66
        %p514 = pneg %p90
        %p515 = pneg %p87
        %p516 = pneg %p111
        %p517 = pneg %p108
        %p518 = pneg %p132
        %p519 = pneg %p129
        %p520 = pneg %p153
        %p521 = pneg %p150
        %p522 = pneg %p174
        %p523 = pneg %p171
        %p524 = pneg %p195
        %p525 = pneg %p192
        %p526 = pneg %p216
        %p527 = pneg %p213
        %p528 = pneg %p237
        %p529 = pneg %p234
        %p530 = pneg %p258
        %p531 = pneg %p255
        %p532 = pneg %p279
        %p533 = pneg %p276
        %p534 = pneg %p300
        %p535 = pneg %p297
        %p536 = pneg %p321
        %p537 = pneg %p318
        %p538 = pneg %p347
        %p539 = pneg %p344
        %s540 = sand.u32 %s334, 1
        %s541 = sand.u32 %s334, 1
        %s542 = smul.addr %s541, 32
        %s543 = scalar_lea.vmem [#allocation7], %s542
        %s544 = smul.u32 2, %s27
        %s545 = smul.u32 2, %s27
        %v546 = vld [vmem:[%s1] sm:$0xf]
        %v547 = vld [vmem:[%s1 + $0x4] sm:$0xf]
        %v548 = vld [vmem:[%s1 + $0x8] sm:$0xf]
        %v549 = vld [vmem:[%s1 + $0xc] sm:$0xf]
        %v550 = vld [vmem:[%s1 + $0x10] sm:$0xf]
        %v551 = vld [vmem:[%s1 + $0x14] sm:$0xf]
        %v552 = vld [vmem:[%s1 + $0x18] sm:$0xf]
        %v553 = vld [vmem:[%s1 + $0x1c] sm:$0xf]
        %v554 = vld [vmem:[%s1 + $0x20] sm:$0xf]
        %v555 = vld [vmem:[%s1 + $0x24] sm:$0xf]
        %v556 = vld [vmem:[%s1 + $0x28] sm:$0xf]
        %v557 = vld [vmem:[%s1 + $0x2c] sm:$0xf]
        %v558 = vld [vmem:[%s1 + $0x30] sm:$0xf]
        %v559 = vld [vmem:[%s1 + $0x34] sm:$0xf]
        %v560 = vld [vmem:[%s1 + $0x38] sm:$0xf]
        %v561 = vld [vmem:[%s1 + $0x3c] sm:$0xf]
        %v562 = vlaneseq
        %v563 = vand.u32 %v562, 127
        %vm564 = vcmp.lt.s32.totalorder %v563, 32
        %v565 = vld [vmem:[%s492] sm:$0xff]
        %v566 = vld [vmem:[%s492 + $0x8] sm:$0xff]
        %s567 = scalar_lea.vmem %s492, 16 [#allocation2]
        %v568 = vld [vmem:[%s567] sm:$0xff]
        %v569 = vld [vmem:[%s567 + $0x8] sm:$0xff]
        %v570 = vpack.c.bf16 %v566, %v565
        %v571 = vpack.c.bf16 %v569, %v568
        %v572 = vld [vmem:[%s2] sm:$0xff]
        %v573 = vld [vmem:[%s2 + $0x8] sm:$0xf]
        %v574 = vld [vmem:[%s2 + $0xc] sm:$0xff]
        %v575 = vld [vmem:[%s2 + $0x14] sm:$0xf]
        %v576 = vld [vmem:[%s2 + $0x18] sm:$0xff]
        %v577 = vld [vmem:[%s2 + $0x20] sm:$0xf]
        %v578 = vld [vmem:[%s2 + $0x24] sm:$0xff]
        %v579 = vld [vmem:[%s2 + $0x2c] sm:$0xf]
        %v580 = vld [vmem:[%s2 + $0x30] sm:$0xff]
        %v581 = vld [vmem:[%s2 + $0x38] sm:$0xf]
        %v582 = vld [vmem:[%s2 + $0x3c] sm:$0xff]
        %v583 = vld [vmem:[%s2 + $0x44] sm:$0xf]
        %v584 = vld [vmem:[%s2 + $0x48] sm:$0xff]
        %v585 = vld [vmem:[%s2 + $0x50] sm:$0xf]
        %v586 = vld [vmem:[%s2 + $0x54] sm:$0xff]
        %v587 = vld [vmem:[%s2 + $0x5c] sm:$0xf]
        %v588 = vld [vmem:[%s2 + $0x60] sm:$0xff]
        %v589 = vld [vmem:[%s2 + $0x68] sm:$0xf]
        %v590 = vld [vmem:[%s2 + $0x6c] sm:$0xff]
        %v591 = vld [vmem:[%s2 + $0x74] sm:$0xf]
        %v592 = vld [vmem:[%s2 + $0x78] sm:$0xff]
        %v593 = vld [vmem:[%s2 + $0x80] sm:$0xf]
        %v594 = vld [vmem:[%s2 + $0x84] sm:$0xff]
        %v595 = vld [vmem:[%s2 + $0x8c] sm:$0xf]
        %v596 = vld [vmem:[%s2 + $0x90] sm:$0xff]
        %v597 = vld [vmem:[%s2 + $0x98] sm:$0xf]
        %v598 = vld [vmem:[%s2 + $0x9c] sm:$0xff]
        %v599 = vld [vmem:[%s2 + $0xa4] sm:$0xf]
        %v600 = vld [vmem:[%s2 + $0xa8] sm:$0xff]
        %v601 = vld [vmem:[%s2 + $0xb0] sm:$0xf]
        %v602 = vld [vmem:[%s2 + $0xb4] sm:$0xff]
        %v603 = vld [vmem:[%s2 + $0xbc] sm:$0xf]
        %v604 = vld [vmem:[%s3] sm:$0x7]
        %v606 = vperm.slane %v604, 0
        %v607 = vperm.slane %v604, 1
        %v608 = vperm.slane %v604, 2
        %v644 = vunpack.c.l.b16 %v572
        %v645 = vunpack.c.h.b16 %v572
        %v646 = vunpack.c.l.b16 %v573
        %v647 = vunpack.c.l.b16 %v574
        %v648 = vunpack.c.h.b16 %v574
        %v649 = vunpack.c.l.b16 %v575
        %v650 = vunpack.c.l.b16 %v576
        %v651 = vunpack.c.h.b16 %v576
        %v652 = vunpack.c.l.b16 %v577
        %v653 = vunpack.c.l.b16 %v578
        %v654 = vunpack.c.h.b16 %v578
        %v655 = vunpack.c.l.b16 %v579
        %v656 = vunpack.c.l.b16 %v580
        %v657 = vunpack.c.h.b16 %v580
        %v658 = vunpack.c.l.b16 %v581
        %v659 = vunpack.c.l.b16 %v582
        %v660 = vunpack.c.h.b16 %v582
        %v661 = vunpack.c.l.b16 %v583
        %v662 = vunpack.c.l.b16 %v584
        %v663 = vunpack.c.h.b16 %v584
        %v664 = vunpack.c.l.b16 %v585
        %v665 = vunpack.c.l.b16 %v586
        %v666 = vunpack.c.h.b16 %v586
        %v667 = vunpack.c.l.b16 %v587
        %v668 = vunpack.c.l.b16 %v588
        %v669 = vunpack.c.h.b16 %v588
        %v670 = vunpack.c.l.b16 %v589
        %v671 = vunpack.c.l.b16 %v590
        %v672 = vunpack.c.h.b16 %v590
        %v673 = vunpack.c.l.b16 %v591
        %v674 = vunpack.c.l.b16 %v592
        %v675 = vunpack.c.h.b16 %v592
        %v676 = vunpack.c.l.b16 %v593
        %v677 = vunpack.c.l.b16 %v594
        %v678 = vunpack.c.h.b16 %v594
        %v679 = vunpack.c.l.b16 %v595
        %v680 = vunpack.c.l.b16 %v596
        %v681 = vunpack.c.h.b16 %v596
        %v682 = vunpack.c.l.b16 %v597
        %v683 = vunpack.c.l.b16 %v598
        %v684 = vunpack.c.h.b16 %v598
        %v685 = vunpack.c.l.b16 %v599
        %v686 = vunpack.c.l.b16 %v600
        %v687 = vunpack.c.h.b16 %v600
        %v688 = vunpack.c.l.b16 %v601
        %v689 = vunpack.c.l.b16 %v602
        %v690 = vunpack.c.h.b16 %v602
        %v691 = vunpack.c.l.b16 %v603
        %v692 = vpack.c.b16 %v647, %v644
        %v693 = vpack.c.b16 %v648, %v645
        %v694 = vpack.c.b16 %v649, %v646
        %v695 = vpack.c.b16 %v653, %v650
        %v696 = vpack.c.b16 %v654, %v651
        %v697 = vpack.c.b16 %v655, %v652
        %v698 = vpack.c.b16 %v659, %v656
        %v699 = vpack.c.b16 %v660, %v657
        %v700 = vpack.c.b16 %v661, %v658
        %v701 = vpack.c.b16 %v665, %v662
        %v702 = vpack.c.b16 %v666, %v663
        %v703 = vpack.c.b16 %v667, %v664
        %v704 = vpack.c.b16 %v671, %v668
        %v705 = vpack.c.b16 %v672, %v669
        %v706 = vpack.c.b16 %v673, %v670
        %v707 = vpack.c.b16 %v677, %v674
        %v708 = vpack.c.b16 %v678, %v675
        %v709 = vpack.c.b16 %v679, %v676
        %v710 = vpack.c.b16 %v683, %v680
        %v711 = vpack.c.b16 %v684, %v681
        %v712 = vpack.c.b16 %v685, %v682
        %v713 = vpack.c.b16 %v689, %v686
        %v714 = vpack.c.b16 %v690, %v687
        %v715 = vpack.c.b16 %v691, %v688
        %740 = vmatpush.bf16.msra.mxu0 %v713
        %741 = vmatpush.bf16.msra.mxu0 %v710
        %742 = vmatpush.bf16.msra.mxu0 %v707
        %743 = vmatpush.bf16.msra.mxu0 %v704
        %744 = vmatpush.bf16.msra.mxu0 %v701
        %745 = vmatpush.bf16.msra.mxu0 %v698
        %746 = vmatpush.bf16.msra.mxu0 %v695
        %747 = vmatpush.bf16.msra.mxu0 %v692
        %748 = vmatmul.bf16.gmra.mxu0 %v570
        %v749 = vpop.f32.mrf.mxu0
        %v750 = vadd.f32 %v606, %v749
        %v751 = vpop.f32.mrf.mxu0
        %v752 = vadd.f32 %v606, %v751
        %753 = vmatmul.bf16.gmra.mxu0 %v571
        %v754 = vpop.f32.mrf.mxu0
        %v755 = vadd.f32 %v606, %v754
        %v756 = vpop.f32.mrf.mxu0
        %v757 = vadd.f32 %v606, %v756
        %758 = vdwg.mxu0
        %759 = vmatpush.bf16.msra.mxu0 %v714
        %760 = vmatpush.bf16.msra.mxu0 %v711
        %761 = vmatpush.bf16.msra.mxu0 %v708
        %762 = vmatpush.bf16.msra.mxu0 %v705
        %763 = vmatpush.bf16.msra.mxu0 %v702
        %764 = vmatpush.bf16.msra.mxu0 %v699
        %765 = vmatpush.bf16.msra.mxu0 %v696
        %766 = vmatpush.bf16.msra.mxu0 %v693
        %767 = vmatmul.bf16.gmra.mxu0 %v570
        %v768 = vpop.f32.mrf.mxu0
        %v769 = vadd.f32 %v607, %v768
        %v770 = vpop.f32.mrf.mxu0
        %v771 = vadd.f32 %v607, %v770
        %772 = vmatmul.bf16.gmra.mxu0 %v571
        %v773 = vpop.f32.mrf.mxu0
        %v774 = vadd.f32 %v607, %v773
        %v775 = vpop.f32.mrf.mxu0
        %v776 = vadd.f32 %v607, %v775
        %777 = vdwg.mxu0
        %778 = vmatpush.bf16.msra.mxu0 %v715
        %779 = vmatpush.bf16.msra.mxu0 %v712
        %780 = vmatpush.bf16.msra.mxu0 %v709
        %781 = vmatpush.bf16.msra.mxu0 %v706
        %782 = vmatpush.bf16.msra.mxu0 %v703
        %783 = vmatpush.bf16.msra.mxu0 %v700
        %784 = vmatpush.bf16.msra.mxu0 %v697
        %785 = vmatpush.bf16.msra.mxu0 %v694
        %786 = vmatmul.bf16.gmra.mxu0 %v570
        %v787 = vpop.f32.mrf.mxu0
        %v788 = vadd.f32 %v608, %v787
        %v789 = vpop.f32.mrf.mxu0
        %v790 = vadd.f32 %v608, %v789
        %791 = vmatmul.bf16.gmra.mxu0 %v571
        %v792 = vpop.f32.mrf.mxu0
        %v793 = vadd.f32 %v608, %v792
        %v794 = vpop.f32.mrf.mxu0
        %v795 = vadd.f32 %v608, %v794
        %796 = vdwg.mxu0
        %v797 = vmul.f32 %v750, 0.35355338
        %v798 = vmul.f32 %v752, 0.35355338
        %v799 = vmul.f32 %v755, 0.35355338
        %v800 = vmul.f32 %v757, 0.35355338
        %v801 = vmul.f32 %v797, %v769
        %v802 = vmul.f32 %v798, %v771
        %v803 = vpack.c.bf16 %v801, %v801
        %v804 = vpack.c.bf16 %v802, %v802
        %v805 = vmul.f32 %v797, %v774
        %v806 = vmul.f32 %v798, %v776
        %v807 = vpack.c.bf16 %v805, %v805
        %v808 = vpack.c.bf16 %v806, %v806
        %v809 = vmul.f32 %v799, %v769
        %v810 = vmul.f32 %v800, %v771
        %v811 = vpack.c.bf16 %v809, %v809
        %v812 = vpack.c.bf16 %v810, %v810
        %v813 = vmul.f32 %v799, %v774
        %v814 = vmul.f32 %v800, %v776
        %v815 = vpack.c.bf16 %v813, %v813
        %v816 = vpack.c.bf16 %v814, %v814
        %v819 = vunpack.c.l.b16 %v803
        %v820 = vunpack.c.l.b16 %v804
        %v821 = vpack.c.b16 %v820, %v819
        %v825 = vunpack.c.l.b16 %v807
        %v826 = vunpack.c.l.b16 %v808
        %v827 = vpack.c.b16 %v826, %v825
        %v831 = vunpack.c.l.b16 %v811
        %v832 = vunpack.c.l.b16 %v812
        %v833 = vpack.c.b16 %v832, %v831
        %v837 = vunpack.c.l.b16 %v815
        %v838 = vunpack.c.l.b16 %v816
        %v839 = vpack.c.b16 %v838, %v837
        %v857 = vunpack.c.l.b16 %v546
        %v858 = vunpack.c.l.b16 %v547
        %v859 = vunpack.c.l.b16 %v548
        %v860 = vunpack.c.l.b16 %v549
        %v861 = vunpack.c.l.b16 %v550
        %v862 = vunpack.c.l.b16 %v551
        %v863 = vunpack.c.l.b16 %v552
        %v864 = vunpack.c.l.b16 %v553
        %v865 = vunpack.c.l.b16 %v554
        %v866 = vunpack.c.l.b16 %v555
        %v867 = vunpack.c.l.b16 %v556
        %v868 = vunpack.c.l.b16 %v557
        %v869 = vunpack.c.l.b16 %v558
        %v870 = vunpack.c.l.b16 %v559
        %v871 = vunpack.c.l.b16 %v560
        %v872 = vunpack.c.l.b16 %v561
        %v873 = vpack.c.b16 %v858, %v857
        %v874 = vpack.c.b16 %v860, %v859
        %v875 = vpack.c.b16 %v862, %v861
        %v876 = vpack.c.b16 %v864, %v863
        %v877 = vpack.c.b16 %v866, %v865
        %v878 = vpack.c.b16 %v868, %v867
        %v879 = vpack.c.b16 %v870, %v869
        %v880 = vpack.c.b16 %v872, %v871
        %889 = vmatpush.bf16.msra.mxu0 %v880
        %890 = vmatpush.bf16.msra.mxu0 %v879
        %891 = vmatpush.bf16.msra.mxu0 %v878
        %892 = vmatpush.bf16.msra.mxu0 %v877
        %893 = vmatpush.bf16.msra.mxu0 %v876
        %894 = vmatpush.bf16.msra.mxu0 %v875
        %895 = vmatpush.bf16.msra.mxu0 %v874
        %896 = vmatpush.bf16.msra.mxu0 %v873
        %897 = vmatmul.bf16.gmra.mxu0 %v821
        %v898 = vpop.f32.mrf.mxu0
        %v899 = vadd.f32 0.0, %v898
        %v900 = vpop.f32.mrf.mxu0
        %v901 = vadd.f32 0.0, %v900
        %902 = vmatmul.bf16.gmra.mxu0 %v827
        %v903 = vpop.f32.mrf.mxu0
        %v904 = vadd.f32 0.0, %v903
        %v905 = vpop.f32.mrf.mxu0
        %v906 = vadd.f32 0.0, %v905
        %907 = vmatmul.bf16.gmra.mxu0 %v833
        %v908 = vpop.f32.mrf.mxu0
        %v909 = vadd.f32 0.0, %v908
        %v910 = vpop.f32.mrf.mxu0
        %v911 = vadd.f32 0.0, %v910
        %912 = vmatmul.bf16.gmra.mxu0 %v839
        %v913 = vpop.f32.mrf.mxu0
        %v914 = vadd.f32 0.0, %v913
        %v915 = vpop.f32.mrf.mxu0
        %v916 = vadd.f32 0.0, %v915
        %917 = vdwg.mxu0
        %v918 = vmax.f32 %v899, %v904
        %v919 = vmax.f32 %v901, %v906
        %v920 = vsub.f32 %v899, %v918
        %v921 = vsub.f32 %v901, %v919
        %v922 = vmul.f32 %v920, 1.442695
        %v923 = vpow.pop %v922
        %v924 = vmul.f32 %v921, 1.442695
        %v925 = vpow.pop %v924
        %v926 = vsub.f32 %v904, %v918
        %v927 = vsub.f32 %v906, %v919
        %v928 = vmul.f32 %v926, 1.442695
        %v929 = vpow.pop %v928
        %v930 = vmul.f32 %v927, 1.442695
        %v931 = vpow.pop %v930
        %v932 = vadd.f32 %v923, %v929
        %v933 = vadd.f32 %v925, %v931
        %v934 = vmul.f32 %v923, %v788
        %v935 = vmul.f32 %v925, %v790
        %v936 = vmul.f32 %v929, %v793
        %v937 = vmul.f32 %v931, %v795
        %v938 = vadd.f32 %v934, %v936
        %v939 = vadd.f32 %v935, %v937
        %v940 = vrcp.pop %v932
        %v941 = vrcp.pop %v933
        %v942 = vmul.f32 %v938, %v940
        %v943 = vmul.f32 %v939, %v941
        %v944 = vmax.f32 %v909, %v914
        %v945 = vmax.f32 %v911, %v916
        %v946 = vsub.f32 %v909, %v944
        %v947 = vsub.f32 %v911, %v945
        %v948 = vmul.f32 %v946, 1.442695
        %v949 = vpow.pop %v948
        %v950 = vmul.f32 %v947, 1.442695
        %v951 = vpow.pop %v950
        %v952 = vsub.f32 %v914, %v944
        %v953 = vsub.f32 %v916, %v945
        %v954 = vmul.f32 %v952, 1.442695
        %v955 = vpow.pop %v954
        %v956 = vmul.f32 %v953, 1.442695
        %v957 = vpow.pop %v956
        %v958 = vadd.f32 %v949, %v955
        %v959 = vadd.f32 %v951, %v957
        %v960 = vmul.f32 %v949, %v788
        %v961 = vmul.f32 %v951, %v790
        %v962 = vmul.f32 %v955, %v793
        %v963 = vmul.f32 %v957, %v795
        %v964 = vadd.f32 %v960, %v962
        %v965 = vadd.f32 %v961, %v963
        %v966 = vrcp.pop %v958
        %v967 = vrcp.pop %v959
        %v968 = vmul.f32 %v964, %v966
        %v969 = vmul.f32 %v965, %v967
        %v970 = vpack.c.bf16 %v943, %v942
        %v971 = vpack.c.bf16 %v969, %v968
        %v972 = vld [vmem:[%s4] sm:$0xf]
        %v973 = vld [vmem:[%s4 + $0x4] sm:$0xf]
        %v974 = vld [vmem:[%s4 + $0x8] sm:$0xf]
        %v975 = vld [vmem:[%s4 + $0xc] sm:$0xf]
        %v976 = vld [vmem:[%s4 + $0x10] sm:$0xf]
        %v977 = vld [vmem:[%s4 + $0x14] sm:$0xf]
        %v978 = vld [vmem:[%s4 + $0x18] sm:$0xf]
        %v979 = vld [vmem:[%s4 + $0x1c] sm:$0xf]
        %v980 = vld [vmem:[%s4 + $0x20] sm:$0xf]
        %v981 = vld [vmem:[%s4 + $0x24] sm:$0xf]
        %v982 = vld [vmem:[%s4 + $0x28] sm:$0xf]
        %v983 = vld [vmem:[%s4 + $0x2c] sm:$0xf]
        %v984 = vld [vmem:[%s4 + $0x30] sm:$0xf]
        %v985 = vld [vmem:[%s4 + $0x34] sm:$0xf]
        %v986 = vld [vmem:[%s4 + $0x38] sm:$0xf]
        %v987 = vld [vmem:[%s4 + $0x3c] sm:$0xf]
        %v988 = vld [vmem:[%s5] sm:$0x1]
        %v990 = vperm.slane %v988, 0
        %v1008 = vunpack.c.l.b16 %v972
        %v1009 = vunpack.c.l.b16 %v973
        %v1010 = vunpack.c.l.b16 %v974
        %v1011 = vunpack.c.l.b16 %v975
        %v1012 = vunpack.c.l.b16 %v976
        %v1013 = vunpack.c.l.b16 %v977
        %v1014 = vunpack.c.l.b16 %v978
        %v1015 = vunpack.c.l.b16 %v979
        %v1016 = vunpack.c.l.b16 %v980
        %v1017 = vunpack.c.l.b16 %v981
        %v1018 = vunpack.c.l.b16 %v982
        %v1019 = vunpack.c.l.b16 %v983
        %v1020 = vunpack.c.l.b16 %v984
        %v1021 = vunpack.c.l.b16 %v985
        %v1022 = vunpack.c.l.b16 %v986
        %v1023 = vunpack.c.l.b16 %v987
        %v1024 = vpack.c.b16 %v1009, %v1008
        %v1025 = vpack.c.b16 %v1011, %v1010
        %v1026 = vpack.c.b16 %v1013, %v1012
        %v1027 = vpack.c.b16 %v1015, %v1014
        %v1028 = vpack.c.b16 %v1017, %v1016
        %v1029 = vpack.c.b16 %v1019, %v1018
        %v1030 = vpack.c.b16 %v1021, %v1020
        %v1031 = vpack.c.b16 %v1023, %v1022
        %1040 = vmatpush.bf16.msra.mxu0 %v1031
        %1041 = vmatpush.bf16.msra.mxu0 %v1030
        %1042 = vmatpush.bf16.msra.mxu0 %v1029
        %1043 = vmatpush.bf16.msra.mxu0 %v1028
        %1044 = vmatpush.bf16.msra.mxu0 %v1027
        %1045 = vmatpush.bf16.msra.mxu0 %v1026
        %1046 = vmatpush.bf16.msra.mxu0 %v1025
        %1047 = vmatpush.bf16.msra.mxu0 %v1024
        %1048 = vmatmul.bf16.gmra.mxu0 %v970
        %v1049 = vpop.f32.mrf.mxu0
        %v1050 = vadd.f32 %v990, %v1049
        %v1051 = vpop.f32.mrf.mxu0
        %v1052 = vadd.f32 %v990, %v1051
        %1053 = vmatmul.bf16.gmra.mxu0 %v971
        %v1054 = vpop.f32.mrf.mxu0
        %v1055 = vadd.f32 %v990, %v1054
        %v1056 = vpop.f32.mrf.mxu0
        %v1057 = vadd.f32 %v990, %v1056
        %1058 = vdwg.mxu0
        %v1059 = vadd.f32 %v1050, %v565
        %v1060 = vadd.f32 %v1052, %v566
        %v1061 = vadd.f32 %v1055, %v568
        %v1062 = vadd.f32 %v1057, %v569
        %v1063 = vld [vmem:[%s6] sm:$0x1]
        %v1064 = vld [vmem:[%s7] sm:$0x1]
        %v1065 = vsel %vm564, 1, 0
        %vm1066 = vcmp.eq.s32.totalorder %v1065, 1
        %v1067 = vsel %vm1066, %v1059, 0.0
        %v1068 = vsel %vm1066, %v1060, 0.0
        %v1069 = vsel %vm1066, %v1061, 0.0
        %v1070 = vsel %vm1066, %v1062, 0.0
        %1071 = vadd.xlane.f32.xlu0 %v1067
        %v1072 = vpop.xlane.xlu0 %1071
        %1073 = vadd.xlane.f32.xlu0 %v1068
        %v1074 = vpop.xlane.xlu0 %1073
        %1075 = vadd.xlane.f32.xlu0 %v1069
        %v1076 = vpop.xlane.xlu0 %1075
        %1077 = vadd.xlane.f32.xlu0 %v1070
        %v1078 = vpop.xlane.xlu0 %1077
        %v1079 = vmul.f32 %v1072, 0.03125
        %v1080 = vmul.f32 %v1074, 0.03125
        %v1081 = vmul.f32 %v1076, 0.03125
        %v1082 = vmul.f32 %v1078, 0.03125
        %v1083 = vsub.f32 %v1059, %v1079
        %v1084 = vsub.f32 %v1060, %v1080
        %v1085 = vsub.f32 %v1061, %v1081
        %v1086 = vsub.f32 %v1062, %v1082
        %v1087 = vsel %vm1066, %v1083, 0.0
        %v1088 = vsel %vm1066, %v1084, 0.0
        %v1089 = vsel %vm1066, %v1085, 0.0
        %v1090 = vsel %vm1066, %v1086, 0.0
        %v1091 = vmul.f32 %v1087, %v1087
        %v1092 = vmul.f32 %v1088, %v1088
        %v1093 = vmul.f32 %v1089, %v1089
        %v1094 = vmul.f32 %v1090, %v1090
        %1095 = vadd.xlane.f32.xlu0 %v1091
        %v1096 = vpop.xlane.xlu0 %1095
        %1097 = vadd.xlane.f32.xlu0 %v1092
        %v1098 = vpop.xlane.xlu0 %1097
        %1099 = vadd.xlane.f32.xlu0 %v1093
        %v1100 = vpop.xlane.xlu0 %1099
        %1101 = vadd.xlane.f32.xlu0 %v1094
        %v1102 = vpop.xlane.xlu0 %1101
        %v1103 = vmul.f32 %v1096, 0.03125
        %v1104 = vmul.f32 %v1098, 0.03125
        %v1105 = vmul.f32 %v1100, 0.03125
        %v1106 = vmul.f32 %v1102, 0.03125
        %v1107 = vadd.f32 %v1103, 1e-05
        %v1108 = vadd.f32 %v1104, 1e-05
        %v1109 = vadd.f32 %v1105, 1e-05
        %v1110 = vadd.f32 %v1106, 1e-05
        %v1111 = vrsqrt.pop %v1107
        %v1112 = vmul.f32 %v1111, %v1107
        %v1113 = vmul.f32 %v1112, %v1111
        %v1114 = vmul.f32 0.5, %v1113
        %v1115 = vsub.f32 1.5, %v1114
        %v1116 = vmul.f32 %v1111, %v1115
        %vm1117 = vweird.f32 %v1107
        %vm1118 = vweird.f32 %v1111
        %vm1119 = vmor %vm1117, %vm1118
        %v1120 = vsel %vm1119, %v1111, %v1116
        %v1121 = vrsqrt.pop %v1108
        %v1122 = vmul.f32 %v1121, %v1108
        %v1123 = vmul.f32 %v1122, %v1121
        %v1124 = vmul.f32 0.5, %v1123
        %v1125 = vsub.f32 1.5, %v1124
        %v1126 = vmul.f32 %v1121, %v1125
        %vm1127 = vweird.f32 %v1108
        %vm1128 = vweird.f32 %v1121
        %vm1129 = vmor %vm1127, %vm1128
        %v1130 = vsel %vm1129, %v1121, %v1126
        %v1131 = vrsqrt.pop %v1109
        %v1132 = vmul.f32 %v1131, %v1109
        %v1133 = vmul.f32 %v1132, %v1131
        %v1134 = vmul.f32 0.5, %v1133
        %v1135 = vsub.f32 1.5, %v1134
        %v1136 = vmul.f32 %v1131, %v1135
        %vm1137 = vweird.f32 %v1109
        %vm1138 = vweird.f32 %v1131
        %vm1139 = vmor %vm1137, %vm1138
        %v1140 = vsel %vm1139, %v1131, %v1136
        %v1141 = vrsqrt.pop %v1110
        %v1142 = vmul.f32 %v1141, %v1110
        %v1143 = vmul.f32 %v1142, %v1141
        %v1144 = vmul.f32 0.5, %v1143
        %v1145 = vsub.f32 1.5, %v1144
        %v1146 = vmul.f32 %v1141, %v1145
        %vm1147 = vweird.f32 %v1110
        %vm1148 = vweird.f32 %v1141
        %vm1149 = vmor %vm1147, %vm1148
        %v1150 = vsel %vm1149, %v1141, %v1146
        %v1151 = vmul.f32 %v1087, %v1120
        %v1152 = vmul.f32 %v1088, %v1130
        %v1153 = vmul.f32 %v1089, %v1140
        %v1154 = vmul.f32 %v1090, %v1150
        %v1156 = vperm.slane %v1063, 0
        %v1158 = vmul.f32 %v1151, %v1156
        %v1159 = vmul.f32 %v1152, %v1156
        %v1160 = vmul.f32 %v1153, %v1156
        %v1161 = vmul.f32 %v1154, %v1156
        %v1163 = vperm.slane %v1064, 0
        %v1165 = vadd.f32 %v1158, %v1163
        %v1166 = vadd.f32 %v1159, %v1163
        %v1167 = vadd.f32 %v1160, %v1163
        %v1168 = vadd.f32 %v1161, %v1163
        %v1169 = vpack.c.bf16 %v1166, %v1165
        %v1170 = vpack.c.bf16 %v1168, %v1167
        %v1171 = vld [vmem:[%s11] sm:$0x1]
        %v1173 = vperm.slane %v1171, 0
        %v1175 = vadd.f32 %v1165, %v1173
        %v1176 = vadd.f32 %v1166, %v1173
        %v1177 = vadd.f32 %v1167, %v1173
        %v1178 = vadd.f32 %v1168, %v1173
        %v1179 = vld [vmem:[#allocation3] sm:$0xff]
        %v1180 = vld [vmem:[#allocation3 + $0x8] sm:$0xff]
        %v1181 = vld [vmem:[#allocation3 + $0x40] sm:$0xff]
        %v1182 = vld [vmem:[#allocation3 + $0x48] sm:$0xff]
        %v1183 = vld [vmem:[#allocation3 + $0x80] sm:$0xff]
        %v1184 = vld [vmem:[#allocation3 + $0x88] sm:$0xff]
        %v1185 = vld [vmem:[#allocation3 + $0xc0] sm:$0xff]
        %v1186 = vld [vmem:[#allocation3 + $0xc8] sm:$0xff]
        %v1187 = vld [vmem:[#allocation3 + $0x100] sm:$0xff]
        %v1188 = vld [vmem:[#allocation3 + $0x108] sm:$0xff]
        %v1189 = vld [vmem:[#allocation3 + $0x140] sm:$0xff]
        %v1190 = vld [vmem:[#allocation3 + $0x148] sm:$0xff]
        %v1191 = vld [vmem:[#allocation3 + $0x180] sm:$0xff]
        %v1192 = vld [vmem:[#allocation3 + $0x188] sm:$0xff]
        %v1193 = vld [vmem:[#allocation3 + $0x1c0] sm:$0xff]
        %v1194 = vld [vmem:[#allocation3 + $0x1c8] sm:$0xff]
        %v1195 = vld [vmem:[#allocation3 + $0x200] sm:$0xff]
        %v1196 = vld [vmem:[#allocation3 + $0x208] sm:$0xff]
        %v1197 = vld [vmem:[#allocation3 + $0x240] sm:$0xff]
        %v1198 = vld [vmem:[#allocation3 + $0x248] sm:$0xff]
        %v1199 = vld [vmem:[#allocation3 + $0x280] sm:$0xff]
        %v1200 = vld [vmem:[#allocation3 + $0x288] sm:$0xff]
        %v1201 = vld [vmem:[#allocation3 + $0x2c0] sm:$0xff]
        %v1202 = vld [vmem:[#allocation3 + $0x2c8] sm:$0xff]
        %v1203 = vld [vmem:[#allocation3 + $0x300] sm:$0xff]
        %v1204 = vld [vmem:[#allocation3 + $0x308] sm:$0xff]
        %v1205 = vld [vmem:[#allocation3 + $0x340] sm:$0xff]
        %v1206 = vld [vmem:[#allocation3 + $0x348] sm:$0xff]
        %v1207 = vld [vmem:[#allocation3 + $0x380] sm:$0xff]
        %v1208 = vld [vmem:[#allocation3 + $0x388] sm:$0xff]
        %v1209 = vld [vmem:[#allocation3 + $0x3c0] sm:$0xff]
        %v1210 = vld [vmem:[#allocation3 + $0x3c8] sm:$0xff]
        %v1211 = vld [vmem:[%s9] sm:$0xf]
        %v1213 = vperm.slane %v1211, 0
        %v1214 = vperm.slane %v1211, 1
        %v1215 = vperm.slane %v1211, 2
        %v1216 = vperm.slane %v1211, 3
        %v1253 = vunpack.c.l.b16 %v1179
        %v1254 = vunpack.c.h.b16 %v1179
        %v1255 = vunpack.c.l.b16 %v1180
        %v1256 = vunpack.c.h.b16 %v1180
        %v1257 = vunpack.c.l.b16 %v1181
        %v1258 = vunpack.c.h.b16 %v1181
        %v1259 = vunpack.c.l.b16 %v1182
        %v1260 = vunpack.c.h.b16 %v1182
        %v1261 = vunpack.c.l.b16 %v1183
        %v1262 = vunpack.c.h.b16 %v1183
        %v1263 = vunpack.c.l.b16 %v1184
        %v1264 = vunpack.c.h.b16 %v1184
        %v1265 = vunpack.c.l.b16 %v1185
        %v1266 = vunpack.c.h.b16 %v1185
        %v1267 = vunpack.c.l.b16 %v1186
        %v1268 = vunpack.c.h.b16 %v1186
        %v1269 = vunpack.c.l.b16 %v1187
        %v1270 = vunpack.c.h.b16 %v1187
        %v1271 = vunpack.c.l.b16 %v1188
        %v1272 = vunpack.c.h.b16 %v1188
        %v1273 = vunpack.c.l.b16 %v1189
        %v1274 = vunpack.c.h.b16 %v1189
        %v1275 = vunpack.c.l.b16 %v1190
        %v1276 = vunpack.c.h.b16 %v1190
        %v1277 = vunpack.c.l.b16 %v1191
        %v1278 = vunpack.c.h.b16 %v1191
        %v1279 = vunpack.c.l.b16 %v1192
        %v1280 = vunpack.c.h.b16 %v1192
        %v1281 = vunpack.c.l.b16 %v1193
        %v1282 = vunpack.c.h.b16 %v1193
        %v1283 = vunpack.c.l.b16 %v1194
        %v1284 = vunpack.c.h.b16 %v1194
        %v1285 = vunpack.c.l.b16 %v1195
        %v1286 = vunpack.c.h.b16 %v1195
        %v1287 = vunpack.c.l.b16 %v1196
        %v1288 = vunpack.c.h.b16 %v1196
        %v1289 = vunpack.c.l.b16 %v1197
        %v1290 = vunpack.c.h.b16 %v1197
        %v1291 = vunpack.c.l.b16 %v1198
        %v1292 = vunpack.c.h.b16 %v1198
        %v1293 = vunpack.c.l.b16 %v1199
        %v1294 = vunpack.c.h.b16 %v1199
        %v1295 = vunpack.c.l.b16 %v1200
        %v1296 = vunpack.c.h.b16 %v1200
        %v1297 = vunpack.c.l.b16 %v1201
        %v1298 = vunpack.c.h.b16 %v1201
        %v1299 = vunpack.c.l.b16 %v1202
        %v1300 = vunpack.c.h.b16 %v1202
        %v1301 = vunpack.c.l.b16 %v1203
        %v1302 = vunpack.c.h.b16 %v1203
        %v1303 = vunpack.c.l.b16 %v1204
        %v1304 = vunpack.c.h.b16 %v1204
        %v1305 = vunpack.c.l.b16 %v1205
        %v1306 = vunpack.c.h.b16 %v1205
        %v1307 = vunpack.c.l.b16 %v1206
        %v1308 = vunpack.c.h.b16 %v1206
        %v1309 = vunpack.c.l.b16 %v1207
        %v1310 = vunpack.c.h.b16 %v1207
        %v1311 = vunpack.c.l.b16 %v1208
        %v1312 = vunpack.c.h.b16 %v1208
        %v1313 = vunpack.c.l.b16 %v1209
        %v1314 = vunpack.c.h.b16 %v1209
        %v1315 = vunpack.c.l.b16 %v1210
        %v1316 = vunpack.c.h.b16 %v1210
        %v1317 = vpack.c.b16 %v1257, %v1253
        %v1318 = vpack.c.b16 %v1258, %v1254
        %v1319 = vpack.c.b16 %v1259, %v1255
        %v1320 = vpack.c.b16 %v1260, %v1256
        %v1321 = vpack.c.b16 %v1265, %v1261
        %v1322 = vpack.c.b16 %v1266, %v1262
        %v1323 = vpack.c.b16 %v1267, %v1263
        %v1324 = vpack.c.b16 %v1268, %v1264
        %v1325 = vpack.c.b16 %v1273, %v1269
        %v1326 = vpack.c.b16 %v1274, %v1270
        %v1327 = vpack.c.b16 %v1275, %v1271
        %v1328 = vpack.c.b16 %v1276, %v1272
        %v1329 = vpack.c.b16 %v1281, %v1277
        %v1330 = vpack.c.b16 %v1282, %v1278
        %v1331 = vpack.c.b16 %v1283, %v1279
        %v1332 = vpack.c.b16 %v1284, %v1280
        %v1333 = vpack.c.b16 %v1289, %v1285
        %v1334 = vpack.c.b16 %v1290, %v1286
        %v1335 = vpack.c.b16 %v1291, %v1287
        %v1336 = vpack.c.b16 %v1292, %v1288
        %v1337 = vpack.c.b16 %v1297, %v1293
        %v1338 = vpack.c.b16 %v1298, %v1294
        %v1339 = vpack.c.b16 %v1299, %v1295
        %v1340 = vpack.c.b16 %v1300, %v1296
        %v1341 = vpack.c.b16 %v1305, %v1301
        %v1342 = vpack.c.b16 %v1306, %v1302
        %v1343 = vpack.c.b16 %v1307, %v1303
        %v1344 = vpack.c.b16 %v1308, %v1304
        %v1345 = vpack.c.b16 %v1313, %v1309
        %v1346 = vpack.c.b16 %v1314, %v1310
        %v1347 = vpack.c.b16 %v1315, %v1311
        %v1348 = vpack.c.b16 %v1316, %v1312
        %1381 = vmatpush.bf16.msra.mxu0 %v1345
        %1382 = vmatpush.bf16.msra.mxu0 %v1341
        %1383 = vmatpush.bf16.msra.mxu0 %v1337
        %1384 = vmatpush.bf16.msra.mxu0 %v1333
        %1385 = vmatpush.bf16.msra.mxu0 %v1329
        %1386 = vmatpush.bf16.msra.mxu0 %v1325
        %1387 = vmatpush.bf16.msra.mxu0 %v1321
        %1388 = vmatpush.bf16.msra.mxu0 %v1317
        %1389 = vmatmul.bf16.gmra.mxu0 %v1169
        %v1390 = vpop.f32.mrf.mxu0
        %v1391 = vadd.f32 %v1213, %v1390
        %v1392 = vpop.f32.mrf.mxu0
        %v1393 = vadd.f32 %v1213, %v1392
        %1394 = vmatmul.bf16.gmra.mxu0 %v1170
        %v1395 = vpop.f32.mrf.mxu0
        %v1396 = vadd.f32 %v1213, %v1395
        %v1397 = vpop.f32.mrf.mxu0
        %v1398 = vadd.f32 %v1213, %v1397
        %1399 = vdwg.mxu0
        %1400 = vmatpush.bf16.msra.mxu0 %v1346
        %1401 = vmatpush.bf16.msra.mxu0 %v1342
        %1402 = vmatpush.bf16.msra.mxu0 %v1338
        %1403 = vmatpush.bf16.msra.mxu0 %v1334
        %1404 = vmatpush.bf16.msra.mxu0 %v1330
        %1405 = vmatpush.bf16.msra.mxu0 %v1326
        %1406 = vmatpush.bf16.msra.mxu0 %v1322
        %1407 = vmatpush.bf16.msra.mxu0 %v1318
        %1408 = vmatmul.bf16.gmra.mxu0 %v1169
        %v1409 = vpop.f32.mrf.mxu0
        %v1410 = vadd.f32 %v1214, %v1409
        %v1411 = vpop.f32.mrf.mxu0
        %v1412 = vadd.f32 %v1214, %v1411
        %1413 = vmatmul.bf16.gmra.mxu0 %v1170
        %v1414 = vpop.f32.mrf.mxu0
        %v1415 = vadd.f32 %v1214, %v1414
        %v1416 = vpop.f32.mrf.mxu0
        %v1417 = vadd.f32 %v1214, %v1416
        %1418 = vdwg.mxu0
        %1419 = vmatpush.bf16.msra.mxu0 %v1347
        %1420 = vmatpush.bf16.msra.mxu0 %v1343
        %1421 = vmatpush.bf16.msra.mxu0 %v1339
        %1422 = vmatpush.bf16.msra.mxu0 %v1335
        %1423 = vmatpush.bf16.msra.mxu0 %v1331
        %1424 = vmatpush.bf16.msra.mxu0 %v1327
        %1425 = vmatpush.bf16.msra.mxu0 %v1323
        %1426 = vmatpush.bf16.msra.mxu0 %v1319
        %1427 = vmatmul.bf16.gmra.mxu0 %v1169
        %v1428 = vpop.f32.mrf.mxu0
        %v1429 = vadd.f32 %v1215, %v1428
        %v1430 = vpop.f32.mrf.mxu0
        %v1431 = vadd.f32 %v1215, %v1430
        %1432 = vmatmul.bf16.gmra.mxu0 %v1170
        %v1433 = vpop.f32.mrf.mxu0
        %v1434 = vadd.f32 %v1215, %v1433
        %v1435 = vpop.f32.mrf.mxu0
        %v1436 = vadd.f32 %v1215, %v1435
        %1437 = vdwg.mxu0
        %1438 = vmatpush.bf16.msra.mxu0 %v1348
        %1439 = vmatpush.bf16.msra.mxu0 %v1344
        %1440 = vmatpush.bf16.msra.mxu0 %v1340
        %1441 = vmatpush.bf16.msra.mxu0 %v1336
        %1442 = vmatpush.bf16.msra.mxu0 %v1332
        %1443 = vmatpush.bf16.msra.mxu0 %v1328
        %1444 = vmatpush.bf16.msra.mxu0 %v1324
        %1445 = vmatpush.bf16.msra.mxu0 %v1320
        %1446 = vmatmul.bf16.gmra.mxu0 %v1169
        %v1447 = vpop.f32.mrf.mxu0
        %v1448 = vadd.f32 %v1216, %v1447
        %v1449 = vpop.f32.mrf.mxu0
        %v1450 = vadd.f32 %v1216, %v1449
        %1451 = vmatmul.bf16.gmra.mxu0 %v1170
        %v1452 = vpop.f32.mrf.mxu0
        %v1453 = vadd.f32 %v1216, %v1452
        %v1454 = vpop.f32.mrf.mxu0
        %v1455 = vadd.f32 %v1216, %v1454
        %1456 = vdwg.mxu0
        %v1457 = vmax.f32 %v1391, 0.0
        %v1458 = vmax.f32 %v1410, 0.0
        %v1459 = vmax.f32 %v1429, 0.0
        %v1460 = vmax.f32 %v1448, 0.0
        %v1461 = vmax.f32 %v1393, 0.0
        %v1462 = vmax.f32 %v1412, 0.0
        %v1463 = vmax.f32 %v1431, 0.0
        %v1464 = vmax.f32 %v1450, 0.0
        %v1465 = vmax.f32 %v1396, 0.0
        %v1466 = vmax.f32 %v1415, 0.0
        %v1467 = vmax.f32 %v1434, 0.0
        %v1468 = vmax.f32 %v1453, 0.0
        %v1469 = vmax.f32 %v1398, 0.0
        %v1470 = vmax.f32 %v1417, 0.0
        %v1471 = vmax.f32 %v1436, 0.0
        %v1472 = vmax.f32 %v1455, 0.0
        %v1473 = vpack.c.bf16 %v1461, %v1457
        %v1474 = vpack.c.bf16 %v1462, %v1458
        %v1475 = vpack.c.bf16 %v1463, %v1459
        %v1476 = vpack.c.bf16 %v1464, %v1460
        %v1477 = vpack.c.bf16 %v1469, %v1465
        %v1478 = vpack.c.bf16 %v1470, %v1466
        %v1479 = vpack.c.bf16 %v1471, %v1467
        %v1480 = vpack.c.bf16 %v1472, %v1468
        %v1481 = vld [vmem:[#allocation5] sm:$0xf]
        %v1482 = vld [vmem:[#allocation5 + $0x4] sm:$0xf]
        %v1483 = vld [vmem:[#allocation5 + $0x8] sm:$0xf]
        %v1484 = vld [vmem:[#allocation5 + $0xc] sm:$0xf]
        %v1485 = vld [vmem:[#allocation5 + $0x10] sm:$0xf]
        %v1486 = vld [vmem:[#allocation5 + $0x14] sm:$0xf]
        %v1487 = vld [vmem:[#allocation5 + $0x18] sm:$0xf]
        %v1488 = vld [vmem:[#allocation5 + $0x1c] sm:$0xf]
        %v1489 = vld [vmem:[#allocation5 + $0x20] sm:$0xf]
        %v1490 = vld [vmem:[#allocation5 + $0x24] sm:$0xf]
        %v1491 = vld [vmem:[#allocation5 + $0x28] sm:$0xf]
        %v1492 = vld [vmem:[#allocation5 + $0x2c] sm:$0xf]
        %v1493 = vld [vmem:[#allocation5 + $0x30] sm:$0xf]
        %v1494 = vld [vmem:[#allocation5 + $0x34] sm:$0xf]
        %v1495 = vld [vmem:[#allocation5 + $0x38] sm:$0xf]
        %v1496 = vld [vmem:[#allocation5 + $0x3c] sm:$0xf]
        %v1497 = vld [vmem:[#allocation5 + $0x40] sm:$0xf]
        %v1498 = vld [vmem:[#allocation5 + $0x44] sm:$0xf]
        %v1499 = vld [vmem:[#allocation5 + $0x48] sm:$0xf]
        %v1500 = vld [vmem:[#allocation5 + $0x4c] sm:$0xf]
        %v1501 = vld [vmem:[#allocation5 + $0x50] sm:$0xf]
        %v1502 = vld [vmem:[#allocation5 + $0x54] sm:$0xf]
        %v1503 = vld [vmem:[#allocation5 + $0x58] sm:$0xf]
        %v1504 = vld [vmem:[#allocation5 + $0x5c] sm:$0xf]
        %v1505 = vld [vmem:[#allocation5 + $0x60] sm:$0xf]
        %v1506 = vld [vmem:[#allocation5 + $0x64] sm:$0xf]
        %v1507 = vld [vmem:[#allocation5 + $0x68] sm:$0xf]
        %v1508 = vld [vmem:[#allocation5 + $0x6c] sm:$0xf]
        %v1509 = vld [vmem:[#allocation5 + $0x70] sm:$0xf]
        %v1510 = vld [vmem:[#allocation5 + $0x74] sm:$0xf]
        %v1511 = vld [vmem:[#allocation5 + $0x78] sm:$0xf]
        %v1512 = vld [vmem:[#allocation5 + $0x7c] sm:$0xf]
        %v1513 = vld [vmem:[#allocation5 + $0x80] sm:$0xf]
        %v1514 = vld [vmem:[#allocation5 + $0x84] sm:$0xf]
        %v1515 = vld [vmem:[#allocation5 + $0x88] sm:$0xf]
        %v1516 = vld [vmem:[#allocation5 + $0x8c] sm:$0xf]
        %v1517 = vld [vmem:[#allocation5 + $0x90] sm:$0xf]
        %v1518 = vld [vmem:[#allocation5 + $0x94] sm:$0xf]
        %v1519 = vld [vmem:[#allocation5 + $0x98] sm:$0xf]
        %v1520 = vld [vmem:[#allocation5 + $0x9c] sm:$0xf]
        %v1521 = vld [vmem:[#allocation5 + $0xa0] sm:$0xf]
        %v1522 = vld [vmem:[#allocation5 + $0xa4] sm:$0xf]
        %v1523 = vld [vmem:[#allocation5 + $0xa8] sm:$0xf]
        %v1524 = vld [vmem:[#allocation5 + $0xac] sm:$0xf]
        %v1525 = vld [vmem:[#allocation5 + $0xb0] sm:$0xf]
        %v1526 = vld [vmem:[#allocation5 + $0xb4] sm:$0xf]
        %v1527 = vld [vmem:[#allocation5 + $0xb8] sm:$0xf]
        %v1528 = vld [vmem:[#allocation5 + $0xbc] sm:$0xf]
        %v1529 = vld [vmem:[#allocation5 + $0xc0] sm:$0xf]
        %v1530 = vld [vmem:[#allocation5 + $0xc4] sm:$0xf]
        %v1531 = vld [vmem:[#allocation5 + $0xc8] sm:$0xf]
        %v1532 = vld [vmem:[#allocation5 + $0xcc] sm:$0xf]
        %v1533 = vld [vmem:[#allocation5 + $0xd0] sm:$0xf]
        %v1534 = vld [vmem:[#allocation5 + $0xd4] sm:$0xf]
        %v1535 = vld [vmem:[#allocation5 + $0xd8] sm:$0xf]
        %v1536 = vld [vmem:[#allocation5 + $0xdc] sm:$0xf]
        %v1537 = vld [vmem:[#allocation5 + $0xe0] sm:$0xf]
        %v1538 = vld [vmem:[#allocation5 + $0xe4] sm:$0xf]
        %v1539 = vld [vmem:[#allocation5 + $0xe8] sm:$0xf]
        %v1540 = vld [vmem:[#allocation5 + $0xec] sm:$0xf]
        %v1541 = vld [vmem:[#allocation5 + $0xf0] sm:$0xf]
        %v1542 = vld [vmem:[#allocation5 + $0xf4] sm:$0xf]
        %v1543 = vld [vmem:[#allocation5 + $0xf8] sm:$0xf]
        %v1544 = vld [vmem:[#allocation5 + $0xfc] sm:$0xf]
        %v1609 = vunpack.c.l.b16 %v1481
        %v1610 = vunpack.c.l.b16 %v1482
        %v1611 = vunpack.c.l.b16 %v1483
        %v1612 = vunpack.c.l.b16 %v1484
        %v1613 = vunpack.c.l.b16 %v1485
        %v1614 = vunpack.c.l.b16 %v1486
        %v1615 = vunpack.c.l.b16 %v1487
        %v1616 = vunpack.c.l.b16 %v1488
        %v1617 = vunpack.c.l.b16 %v1489
        %v1618 = vunpack.c.l.b16 %v1490
        %v1619 = vunpack.c.l.b16 %v1491
        %v1620 = vunpack.c.l.b16 %v1492
        %v1621 = vunpack.c.l.b16 %v1493
        %v1622 = vunpack.c.l.b16 %v1494
        %v1623 = vunpack.c.l.b16 %v1495
        %v1624 = vunpack.c.l.b16 %v1496
        %v1625 = vunpack.c.l.b16 %v1497
        %v1626 = vunpack.c.l.b16 %v1498
        %v1627 = vunpack.c.l.b16 %v1499
        %v1628 = vunpack.c.l.b16 %v1500
        %v1629 = vunpack.c.l.b16 %v1501
        %v1630 = vunpack.c.l.b16 %v1502
        %v1631 = vunpack.c.l.b16 %v1503
        %v1632 = vunpack.c.l.b16 %v1504
        %v1633 = vunpack.c.l.b16 %v1505
        %v1634 = vunpack.c.l.b16 %v1506
        %v1635 = vunpack.c.l.b16 %v1507
        %v1636 = vunpack.c.l.b16 %v1508
        %v1637 = vunpack.c.l.b16 %v1509
        %v1638 = vunpack.c.l.b16 %v1510
        %v1639 = vunpack.c.l.b16 %v1511
        %v1640 = vunpack.c.l.b16 %v1512
        %v1641 = vunpack.c.l.b16 %v1513
        %v1642 = vunpack.c.l.b16 %v1514
        %v1643 = vunpack.c.l.b16 %v1515
        %v1644 = vunpack.c.l.b16 %v1516
        %v1645 = vunpack.c.l.b16 %v1517
        %v1646 = vunpack.c.l.b16 %v1518
        %v1647 = vunpack.c.l.b16 %v1519
        %v1648 = vunpack.c.l.b16 %v1520
        %v1649 = vunpack.c.l.b16 %v1521
        %v1650 = vunpack.c.l.b16 %v1522
        %v1651 = vunpack.c.l.b16 %v1523
        %v1652 = vunpack.c.l.b16 %v1524
        %v1653 = vunpack.c.l.b16 %v1525
        %v1654 = vunpack.c.l.b16 %v1526
        %v1655 = vunpack.c.l.b16 %v1527
        %v1656 = vunpack.c.l.b16 %v1528
        %v1657 = vunpack.c.l.b16 %v1529
        %v1658 = vunpack.c.l.b16 %v1530
        %v1659 = vunpack.c.l.b16 %v1531
        %v1660 = vunpack.c.l.b16 %v1532
        %v1661 = vunpack.c.l.b16 %v1533
        %v1662 = vunpack.c.l.b16 %v1534
        %v1663 = vunpack.c.l.b16 %v1535
        %v1664 = vunpack.c.l.b16 %v1536
        %v1665 = vunpack.c.l.b16 %v1537
        %v1666 = vunpack.c.l.b16 %v1538
        %v1667 = vunpack.c.l.b16 %v1539
        %v1668 = vunpack.c.l.b16 %v1540
        %v1669 = vunpack.c.l.b16 %v1541
        %v1670 = vunpack.c.l.b16 %v1542
        %v1671 = vunpack.c.l.b16 %v1543
        %v1672 = vunpack.c.l.b16 %v1544
        %v1673 = vpack.c.b16 %v1610, %v1609
        %v1674 = vpack.c.b16 %v1612, %v1611
        %v1675 = vpack.c.b16 %v1614, %v1613
        %v1676 = vpack.c.b16 %v1616, %v1615
        %v1677 = vpack.c.b16 %v1618, %v1617
        %v1678 = vpack.c.b16 %v1620, %v1619
        %v1679 = vpack.c.b16 %v1622, %v1621
        %v1680 = vpack.c.b16 %v1624, %v1623
        %v1681 = vpack.c.b16 %v1626, %v1625
        %v1682 = vpack.c.b16 %v1628, %v1627
        %v1683 = vpack.c.b16 %v1630, %v1629
        %v1684 = vpack.c.b16 %v1632, %v1631
        %v1685 = vpack.c.b16 %v1634, %v1633
        %v1686 = vpack.c.b16 %v1636, %v1635
        %v1687 = vpack.c.b16 %v1638, %v1637
        %v1688 = vpack.c.b16 %v1640, %v1639
        %v1689 = vpack.c.b16 %v1642, %v1641
        %v1690 = vpack.c.b16 %v1644, %v1643
        %v1691 = vpack.c.b16 %v1646, %v1645
        %v1692 = vpack.c.b16 %v1648, %v1647
        %v1693 = vpack.c.b16 %v1650, %v1649
        %v1694 = vpack.c.b16 %v1652, %v1651
        %v1695 = vpack.c.b16 %v1654, %v1653
        %v1696 = vpack.c.b16 %v1656, %v1655
        %v1697 = vpack.c.b16 %v1658, %v1657
        %v1698 = vpack.c.b16 %v1660, %v1659
        %v1699 = vpack.c.b16 %v1662, %v1661
        %v1700 = vpack.c.b16 %v1664, %v1663
        %v1701 = vpack.c.b16 %v1666, %v1665
        %v1702 = vpack.c.b16 %v1668, %v1667
        %v1703 = vpack.c.b16 %v1670, %v1669
        %v1704 = vpack.c.b16 %v1672, %v1671
        %1737 = vmatpush.bf16.msra.mxu0 %v1680
        %1738 = vmatpush.bf16.msra.mxu0 %v1679
        %1739 = vmatpush.bf16.msra.mxu0 %v1678
        %1740 = vmatpush.bf16.msra.mxu0 %v1677
        %1741 = vmatpush.bf16.msra.mxu0 %v1676
        %1742 = vmatpush.bf16.msra.mxu0 %v1675
        %1743 = vmatpush.bf16.msra.mxu0 %v1674
        %1744 = vmatpush.bf16.msra.mxu0 %v1673
        %1745 = vmatmul.bf16.gmra.mxu0 %v1473
        %v1746 = vpop.f32.mrf.mxu0
        %v1747 = vadd.f32 0.0, %v1746
        %v1748 = vpop.f32.mrf.mxu0
        %v1749 = vadd.f32 0.0, %v1748
        %1750 = vmatmul.bf16.gmra.mxu0 %v1477
        %v1751 = vpop.f32.mrf.mxu0
        %v1752 = vadd.f32 0.0, %v1751
        %v1753 = vpop.f32.mrf.mxu0
        %v1754 = vadd.f32 0.0, %v1753
        %1755 = vdwg.mxu0
        %1756 = vmatpush.bf16.msra.mxu0 %v1688
        %1757 = vmatpush.bf16.msra.mxu0 %v1687
        %1758 = vmatpush.bf16.msra.mxu0 %v1686
        %1759 = vmatpush.bf16.msra.mxu0 %v1685
        %1760 = vmatpush.bf16.msra.mxu0 %v1684
        %1761 = vmatpush.bf16.msra.mxu0 %v1683
        %1762 = vmatpush.bf16.msra.mxu0 %v1682
        %1763 = vmatpush.bf16.msra.mxu0 %v1681
        %1764 = vmatmul.bf16.gmra.mxu0 %v1474
        %v1765 = vpop.f32.mrf.mxu0
        %v1766 = vadd.f32 %v1747, %v1765
        %v1767 = vpop.f32.mrf.mxu0
        %v1768 = vadd.f32 %v1749, %v1767
        %1769 = vmatmul.bf16.gmra.mxu0 %v1478
        %v1770 = vpop.f32.mrf.mxu0
        %v1771 = vadd.f32 %v1752, %v1770
        %v1772 = vpop.f32.mrf.mxu0
        %v1773 = vadd.f32 %v1754, %v1772
        %1774 = vdwg.mxu0
        %1775 = vmatpush.bf16.msra.mxu0 %v1696
        %1776 = vmatpush.bf16.msra.mxu0 %v1695
        %1777 = vmatpush.bf16.msra.mxu0 %v1694
        %1778 = vmatpush.bf16.msra.mxu0 %v1693
        %1779 = vmatpush.bf16.msra.mxu0 %v1692
        %1780 = vmatpush.bf16.msra.mxu0 %v1691
        %1781 = vmatpush.bf16.msra.mxu0 %v1690
        %1782 = vmatpush.bf16.msra.mxu0 %v1689
        %1783 = vmatmul.bf16.gmra.mxu0 %v1475
        %v1784 = vpop.f32.mrf.mxu0
        %v1785 = vadd.f32 %v1766, %v1784
        %v1786 = vpop.f32.mrf.mxu0
        %v1787 = vadd.f32 %v1768, %v1786
        %1788 = vmatmul.bf16.gmra.mxu0 %v1479
        %v1789 = vpop.f32.mrf.mxu0
        %v1790 = vadd.f32 %v1771, %v1789
        %v1791 = vpop.f32.mrf.mxu0
        %v1792 = vadd.f32 %v1773, %v1791
        %1793 = vdwg.mxu0
        %1794 = vmatpush.bf16.msra.mxu0 %v1704
        %1795 = vmatpush.bf16.msra.mxu0 %v1703
        %1796 = vmatpush.bf16.msra.mxu0 %v1702
        %1797 = vmatpush.bf16.msra.mxu0 %v1701
        %1798 = vmatpush.bf16.msra.mxu0 %v1700
        %1799 = vmatpush.bf16.msra.mxu0 %v1699
        %1800 = vmatpush.bf16.msra.mxu0 %v1698
        %1801 = vmatpush.bf16.msra.mxu0 %v1697
        %1802 = vmatmul.bf16.gmra.mxu0 %v1476
        %v1803 = vpop.f32.mrf.mxu0
        %v1804 = vadd.f32 %v1785, %v1803
        %v1805 = vpop.f32.mrf.mxu0
        %v1806 = vadd.f32 %v1787, %v1805
        %1807 = vmatmul.bf16.gmra.mxu0 %v1480
        %v1808 = vpop.f32.mrf.mxu0
        %v1809 = vadd.f32 %v1790, %v1808
        %v1810 = vpop.f32.mrf.mxu0
        %v1811 = vadd.f32 %v1792, %v1810
        %1812 = vdwg.mxu0
        %v1813 = vadd.f32 %v1175, %v1804
        %v1814 = vadd.f32 %v1176, %v1806
        %v1815 = vadd.f32 %v1177, %v1809
        %v1816 = vadd.f32 %v1178, %v1811
        %v1817 = vld [vmem:[#allocation3 + $0x10] sm:$0xff]
        %v1818 = vld [vmem:[#allocation3 + $0x18] sm:$0xff]
        %v1819 = vld [vmem:[#allocation3 + $0x50] sm:$0xff]
        %v1820 = vld [vmem:[#allocation3 + $0x58] sm:$0xff]
        %v1821 = vld [vmem:[#allocation3 + $0x90] sm:$0xff]
        %v1822 = vld [vmem:[#allocation3 + $0x98] sm:$0xff]
        %v1823 = vld [vmem:[#allocation3 + $0xd0] sm:$0xff]
        %v1824 = vld [vmem:[#allocation3 + $0xd8] sm:$0xff]
        %v1825 = vld [vmem:[#allocation3 + $0x110] sm:$0xff]
        %v1826 = vld [vmem:[#allocation3 + $0x118] sm:$0xff]
        %v1827 = vld [vmem:[#allocation3 + $0x150] sm:$0xff]
        %v1828 = vld [vmem:[#allocation3 + $0x158] sm:$0xff]
        %v1829 = vld [vmem:[#allocation3 + $0x190] sm:$0xff]
        %v1830 = vld [vmem:[#allocation3 + $0x198] sm:$0xff]
        %v1831 = vld [vmem:[#allocation3 + $0x1d0] sm:$0xff]
        %v1832 = vld [vmem:[#allocation3 + $0x1d8] sm:$0xff]
        %v1833 = vld [vmem:[#allocation3 + $0x210] sm:$0xff]
        %v1834 = vld [vmem:[#allocation3 + $0x218] sm:$0xff]
        %v1835 = vld [vmem:[#allocation3 + $0x250] sm:$0xff]
        %v1836 = vld [vmem:[#allocation3 + $0x258] sm:$0xff]
        %v1837 = vld [vmem:[#allocation3 + $0x290] sm:$0xff]
        %v1838 = vld [vmem:[#allocation3 + $0x298] sm:$0xff]
        %v1839 = vld [vmem:[#allocation3 + $0x2d0] sm:$0xff]
        %v1840 = vld [vmem:[#allocation3 + $0x2d8] sm:$0xff]
        %v1841 = vld [vmem:[#allocation3 + $0x310] sm:$0xff]
        %v1842 = vld [vmem:[#allocation3 + $0x318] sm:$0xff]
        %v1843 = vld [vmem:[#allocation3 + $0x350] sm:$0xff]
        %v1844 = vld [vmem:[#allocation3 + $0x358] sm:$0xff]
        %v1845 = vld [vmem:[#allocation3 + $0x390] sm:$0xff]
        %v1846 = vld [vmem:[#allocation3 + $0x398] sm:$0xff]
        %v1847 = vld [vmem:[#allocation3 + $0x3d0] sm:$0xff]
        %v1848 = vld [vmem:[#allocation3 + $0x3d8] sm:$0xff]
        %v1849 = vld [vmem:[%s9 + $0x4] sm:$0xf]
        %v1851 = vperm.slane %v1849, 0
        %v1852 = vperm.slane %v1849, 1
        %v1853 = vperm.slane %v1849, 2
        %v1854 = vperm.slane %v1849, 3
        %v1891 = vunpack.c.l.b16 %v1817
        %v1892 = vunpack.c.h.b16 %v1817
        %v1893 = vunpack.c.l.b16 %v1818
        %v1894 = vunpack.c.h.b16 %v1818
        %v1895 = vunpack.c.l.b16 %v1819
        %v1896 = vunpack.c.h.b16 %v1819
        %v1897 = vunpack.c.l.b16 %v1820
        %v1898 = vunpack.c.h.b16 %v1820
        %v1899 = vunpack.c.l.b16 %v1821
        %v1900 = vunpack.c.h.b16 %v1821
        %v1901 = vunpack.c.l.b16 %v1822
        %v1902 = vunpack.c.h.b16 %v1822
        %v1903 = vunpack.c.l.b16 %v1823
        %v1904 = vunpack.c.h.b16 %v1823
        %v1905 = vunpack.c.l.b16 %v1824
        %v1906 = vunpack.c.h.b16 %v1824
        %v1907 = vunpack.c.l.b16 %v1825
        %v1908 = vunpack.c.h.b16 %v1825
        %v1909 = vunpack.c.l.b16 %v1826
        %v1910 = vunpack.c.h.b16 %v1826
        %v1911 = vunpack.c.l.b16 %v1827
        %v1912 = vunpack.c.h.b16 %v1827
        %v1913 = vunpack.c.l.b16 %v1828
        %v1914 = vunpack.c.h.b16 %v1828
        %v1915 = vunpack.c.l.b16 %v1829
        %v1916 = vunpack.c.h.b16 %v1829
        %v1917 = vunpack.c.l.b16 %v1830
        %v1918 = vunpack.c.h.b16 %v1830
        %v1919 = vunpack.c.l.b16 %v1831
        %v1920 = vunpack.c.h.b16 %v1831
        %v1921 = vunpack.c.l.b16 %v1832
        %v1922 = vunpack.c.h.b16 %v1832
        %v1923 = vunpack.c.l.b16 %v1833
        %v1924 = vunpack.c.h.b16 %v1833
        %v1925 = vunpack.c.l.b16 %v1834
        %v1926 = vunpack.c.h.b16 %v1834
        %v1927 = vunpack.c.l.b16 %v1835
        %v1928 = vunpack.c.h.b16 %v1835
        %v1929 = vunpack.c.l.b16 %v1836
        %v1930 = vunpack.c.h.b16 %v1836
        %v1931 = vunpack.c.l.b16 %v1837
        %v1932 = vunpack.c.h.b16 %v1837
        %v1933 = vunpack.c.l.b16 %v1838
        %v1934 = vunpack.c.h.b16 %v1838
        %v1935 = vunpack.c.l.b16 %v1839
        %v1936 = vunpack.c.h.b16 %v1839
        %v1937 = vunpack.c.l.b16 %v1840
        %v1938 = vunpack.c.h.b16 %v1840
        %v1939 = vunpack.c.l.b16 %v1841
        %v1940 = vunpack.c.h.b16 %v1841
        %v1941 = vunpack.c.l.b16 %v1842
        %v1942 = vunpack.c.h.b16 %v1842
        %v1943 = vunpack.c.l.b16 %v1843
        %v1944 = vunpack.c.h.b16 %v1843
        %v1945 = vunpack.c.l.b16 %v1844
        %v1946 = vunpack.c.h.b16 %v1844
        %v1947 = vunpack.c.l.b16 %v1845
        %v1948 = vunpack.c.h.b16 %v1845
        %v1949 = vunpack.c.l.b16 %v1846
        %v1950 = vunpack.c.h.b16 %v1846
        %v1951 = vunpack.c.l.b16 %v1847
        %v1952 = vunpack.c.h.b16 %v1847
        %v1953 = vunpack.c.l.b16 %v1848
        %v1954 = vunpack.c.h.b16 %v1848
        %v1955 = vpack.c.b16 %v1895, %v1891
        %v1956 = vpack.c.b16 %v1896, %v1892
        %v1957 = vpack.c.b16 %v1897, %v1893
        %v1958 = vpack.c.b16 %v1898, %v1894
        %v1959 = vpack.c.b16 %v1903, %v1899
        %v1960 = vpack.c.b16 %v1904, %v1900
        %v1961 = vpack.c.b16 %v1905, %v1901
        %v1962 = vpack.c.b16 %v1906, %v1902
        %v1963 = vpack.c.b16 %v1911, %v1907
        %v1964 = vpack.c.b16 %v1912, %v1908
        %v1965 = vpack.c.b16 %v1913, %v1909
        %v1966 = vpack.c.b16 %v1914, %v1910
        %v1967 = vpack.c.b16 %v1919, %v1915
        %v1968 = vpack.c.b16 %v1920, %v1916
        %v1969 = vpack.c.b16 %v1921, %v1917
        %v1970 = vpack.c.b16 %v1922, %v1918
        %v1971 = vpack.c.b16 %v1927, %v1923
        %v1972 = vpack.c.b16 %v1928, %v1924
        %v1973 = vpack.c.b16 %v1929, %v1925
        %v1974 = vpack.c.b16 %v1930, %v1926
        %v1975 = vpack.c.b16 %v1935, %v1931
        %v1976 = vpack.c.b16 %v1936, %v1932
        %v1977 = vpack.c.b16 %v1937, %v1933
        %v1978 = vpack.c.b16 %v1938, %v1934
        %v1979 = vpack.c.b16 %v1943, %v1939
        %v1980 = vpack.c.b16 %v1944, %v1940
        %v1981 = vpack.c.b16 %v1945, %v1941
        %v1982 = vpack.c.b16 %v1946, %v1942
        %v1983 = vpack.c.b16 %v1951, %v1947
        %v1984 = vpack.c.b16 %v1952, %v1948
        %v1985 = vpack.c.b16 %v1953, %v1949
        %v1986 = vpack.c.b16 %v1954, %v1950
        %2019 = vmatpush.bf16.msra.mxu0 %v1983
        %2020 = vmatpush.bf16.msra.mxu0 %v1979
        %2021 = vmatpush.bf16.msra.mxu0 %v1975
        %2022 = vmatpush.bf16.msra.mxu0 %v1971
        %2023 = vmatpush.bf16.msra.mxu0 %v1967
        %2024 = vmatpush.bf16.msra.mxu0 %v1963
        %2025 = vmatpush.bf16.msra.mxu0 %v1959
        %2026 = vmatpush.bf16.msra.mxu0 %v1955
        %2027 = vmatmul.bf16.gmra.mxu0 %v1169
        %v2028 = vpop.f32.mrf.mxu0
        %v2029 = vadd.f32 %v1851, %v2028
        %v2030 = vpop.f32.mrf.mxu0
        %v2031 = vadd.f32 %v1851, %v2030
        %2032 = vmatmul.bf16.gmra.mxu0 %v1170
        %v2033 = vpop.f32.mrf.mxu0
        %v2034 = vadd.f32 %v1851, %v2033
        %v2035 = vpop.f32.mrf.mxu0
        %v2036 = vadd.f32 %v1851, %v2035
        %2037 = vdwg.mxu0
        %2038 = vmatpush.bf16.msra.mxu0 %v1984
        %2039 = vmatpush.bf16.msra.mxu0 %v1980
        %2040 = vmatpush.bf16.msra.mxu0 %v1976
        %2041 = vmatpush.bf16.msra.mxu0 %v1972
        %2042 = vmatpush.bf16.msra.mxu0 %v1968
        %2043 = vmatpush.bf16.msra.mxu0 %v1964
        %2044 = vmatpush.bf16.msra.mxu0 %v1960
        %2045 = vmatpush.bf16.msra.mxu0 %v1956
        %2046 = vmatmul.bf16.gmra.mxu0 %v1169
        %v2047 = vpop.f32.mrf.mxu0
        %v2048 = vadd.f32 %v1852, %v2047
        %v2049 = vpop.f32.mrf.mxu0
        %v2050 = vadd.f32 %v1852, %v2049
        %2051 = vmatmul.bf16.gmra.mxu0 %v1170
        %v2052 = vpop.f32.mrf.mxu0
        %v2053 = vadd.f32 %v1852, %v2052
        %v2054 = vpop.f32.mrf.mxu0
        %v2055 = vadd.f32 %v1852, %v2054
        %2056 = vdwg.mxu0
        %2057 = vmatpush.bf16.msra.mxu0 %v1985
        %2058 = vmatpush.bf16.msra.mxu0 %v1981
        %2059 = vmatpush.bf16.msra.mxu0 %v1977
        %2060 = vmatpush.bf16.msra.mxu0 %v1973
        %2061 = vmatpush.bf16.msra.mxu0 %v1969
        %2062 = vmatpush.bf16.msra.mxu0 %v1965
        %2063 = vmatpush.bf16.msra.mxu0 %v1961
        %2064 = vmatpush.bf16.msra.mxu0 %v1957
        %2065 = vmatmul.bf16.gmra.mxu0 %v1169
        %v2066 = vpop.f32.mrf.mxu0
        %v2067 = vadd.f32 %v1853, %v2066
        %v2068 = vpop.f32.mrf.mxu0
        %v2069 = vadd.f32 %v1853, %v2068
        %2070 = vmatmul.bf16.gmra.mxu0 %v1170
        %v2071 = vpop.f32.mrf.mxu0
        %v2072 = vadd.f32 %v1853, %v2071
        %v2073 = vpop.f32.mrf.mxu0
        %v2074 = vadd.f32 %v1853, %v2073
        %2075 = vdwg.mxu0
        %2076 = vmatpush.bf16.msra.mxu0 %v1986
        %2077 = vmatpush.bf16.msra.mxu0 %v1982
        %2078 = vmatpush.bf16.msra.mxu0 %v1978
        %2079 = vmatpush.bf16.msra.mxu0 %v1974
        %2080 = vmatpush.bf16.msra.mxu0 %v1970
        %2081 = vmatpush.bf16.msra.mxu0 %v1966
        %2082 = vmatpush.bf16.msra.mxu0 %v1962
        %2083 = vmatpush.bf16.msra.mxu0 %v1958
        %2084 = vmatmul.bf16.gmra.mxu0 %v1169
        %v2085 = vpop.f32.mrf.mxu0
        %v2086 = vadd.f32 %v1854, %v2085
        %v2087 = vpop.f32.mrf.mxu0
        %v2088 = vadd.f32 %v1854, %v2087
        %2089 = vmatmul.bf16.gmra.mxu0 %v1170
        %v2090 = vpop.f32.mrf.mxu0
        %v2091 = vadd.f32 %v1854, %v2090
        %v2092 = vpop.f32.mrf.mxu0
        %v2093 = vadd.f32 %v1854, %v2092
        %2094 = vdwg.mxu0
        %v2095 = vmax.f32 %v2029, 0.0
        %v2096 = vmax.f32 %v2048, 0.0
        %v2097 = vmax.f32 %v2067, 0.0
        %v2098 = vmax.f32 %v2086, 0.0
        %v2099 = vmax.f32 %v2031, 0.0
        %v2100 = vmax.f32 %v2050, 0.0
        %v2101 = vmax.f32 %v2069, 0.0
        %v2102 = vmax.f32 %v2088, 0.0
        %v2103 = vmax.f32 %v2034, 0.0
        %v2104 = vmax.f32 %v2053, 0.0
        %v2105 = vmax.f32 %v2072, 0.0
        %v2106 = vmax.f32 %v2091, 0.0
        %v2107 = vmax.f32 %v2036, 0.0
        %v2108 = vmax.f32 %v2055, 0.0
        %v2109 = vmax.f32 %v2074, 0.0
        %v2110 = vmax.f32 %v2093, 0.0
        %v2111 = vpack.c.bf16 %v2099, %v2095
        %v2112 = vpack.c.bf16 %v2100, %v2096
        %v2113 = vpack.c.bf16 %v2101, %v2097
        %v2114 = vpack.c.bf16 %v2102, %v2098
        %v2115 = vpack.c.bf16 %v2107, %v2103
        %v2116 = vpack.c.bf16 %v2108, %v2104
        %v2117 = vpack.c.bf16 %v2109, %v2105
        %v2118 = vpack.c.bf16 %v2110, %v2106
        %v2119 = vld [vmem:[#allocation5 + $0x100] sm:$0xf]
        %v2120 = vld [vmem:[#allocation5 + $0x104] sm:$0xf]
        %v2121 = vld [vmem:[#allocation5 + $0x108] sm:$0xf]
        %v2122 = vld [vmem:[#allocation5 + $0x10c] sm:$0xf]
        %v2123 = vld [vmem:[#allocation5 + $0x110] sm:$0xf]
        %v2124 = vld [vmem:[#allocation5 + $0x114] sm:$0xf]
        %v2125 = vld [vmem:[#allocation5 + $0x118] sm:$0xf]
        %v2126 = vld [vmem:[#allocation5 + $0x11c] sm:$0xf]
        %v2127 = vld [vmem:[#allocation5 + $0x120] sm:$0xf]
        %v2128 = vld [vmem:[#allocation5 + $0x124] sm:$0xf]
        %v2129 = vld [vmem:[#allocation5 + $0x128] sm:$0xf]
        %v2130 = vld [vmem:[#allocation5 + $0x12c] sm:$0xf]
        %v2131 = vld [vmem:[#allocation5 + $0x130] sm:$0xf]
        %v2132 = vld [vmem:[#allocation5 + $0x134] sm:$0xf]
        %v2133 = vld [vmem:[#allocation5 + $0x138] sm:$0xf]
        %v2134 = vld [vmem:[#allocation5 + $0x13c] sm:$0xf]
        %v2135 = vld [vmem:[#allocation5 + $0x140] sm:$0xf]
        %v2136 = vld [vmem:[#allocation5 + $0x144] sm:$0xf]
        %v2137 = vld [vmem:[#allocation5 + $0x148] sm:$0xf]
        %v2138 = vld [vmem:[#allocation5 + $0x14c] sm:$0xf]
        %v2139 = vld [vmem:[#allocation5 + $0x150] sm:$0xf]
        %v2140 = vld [vmem:[#allocation5 + $0x154] sm:$0xf]
        %v2141 = vld [vmem:[#allocation5 + $0x158] sm:$0xf]
        %v2142 = vld [vmem:[#allocation5 + $0x15c] sm:$0xf]
        %v2143 = vld [vmem:[#allocation5 + $0x160] sm:$0xf]
        %v2144 = vld [vmem:[#allocation5 + $0x164] sm:$0xf]
        %v2145 = vld [vmem:[#allocation5 + $0x168] sm:$0xf]
        %v2146 = vld [vmem:[#allocation5 + $0x16c] sm:$0xf]
        %v2147 = vld [vmem:[#allocation5 + $0x170] sm:$0xf]
        %v2148 = vld [vmem:[#allocation5 + $0x174] sm:$0xf]
        %v2149 = vld [vmem:[#allocation5 + $0x178] sm:$0xf]
        %v2150 = vld [vmem:[#allocation5 + $0x17c] sm:$0xf]
        %v2151 = vld [vmem:[#allocation5 + $0x180] sm:$0xf]
        %v2152 = vld [vmem:[#allocation5 + $0x184] sm:$0xf]
        %v2153 = vld [vmem:[#allocation5 + $0x188] sm:$0xf]
        %v2154 = vld [vmem:[#allocation5 + $0x18c] sm:$0xf]
        %v2155 = vld [vmem:[#allocation5 + $0x190] sm:$0xf]
        %v2156 = vld [vmem:[#allocation5 + $0x194] sm:$0xf]
        %v2157 = vld [vmem:[#allocation5 + $0x198] sm:$0xf]
        %v2158 = vld [vmem:[#allocation5 + $0x19c] sm:$0xf]
        %v2159 = vld [vmem:[#allocation5 + $0x1a0] sm:$0xf]
        %v2160 = vld [vmem:[#allocation5 + $0x1a4] sm:$0xf]
        %v2161 = vld [vmem:[#allocation5 + $0x1a8] sm:$0xf]
        %v2162 = vld [vmem:[#allocation5 + $0x1ac] sm:$0xf]
        %v2163 = vld [vmem:[#allocation5 + $0x1b0] sm:$0xf]
        %v2164 = vld [vmem:[#allocation5 + $0x1b4] sm:$0xf]
        %v2165 = vld [vmem:[#allocation5 + $0x1b8] sm:$0xf]
        %v2166 = vld [vmem:[#allocation5 + $0x1bc] sm:$0xf]
        %v2167 = vld [vmem:[#allocation5 + $0x1c0] sm:$0xf]
        %v2168 = vld [vmem:[#allocation5 + $0x1c4] sm:$0xf]
        %v2169 = vld [vmem:[#allocation5 + $0x1c8] sm:$0xf]
        %v2170 = vld [vmem:[#allocation5 + $0x1cc] sm:$0xf]
        %v2171 = vld [vmem:[#allocation5 + $0x1d0] sm:$0xf]
        %v2172 = vld [vmem:[#allocation5 + $0x1d4] sm:$0xf]
        %v2173 = vld [vmem:[#allocation5 + $0x1d8] sm:$0xf]
        %v2174 = vld [vmem:[#allocation5 + $0x1dc] sm:$0xf]
        %v2175 = vld [vmem:[#allocation5 + $0x1e0] sm:$0xf]
        %v2176 = vld [vmem:[#allocation5 + $0x1e4] sm:$0xf]
        %v2177 = vld [vmem:[#allocation5 + $0x1e8] sm:$0xf]
        %v2178 = vld [vmem:[#allocation5 + $0x1ec] sm:$0xf]
        %v2179 = vld [vmem:[#allocation5 + $0x1f0] sm:$0xf]
        %v2180 = vld [vmem:[#allocation5 + $0x1f4] sm:$0xf]
        %v2181 = vld [vmem:[#allocation5 + $0x1f8] sm:$0xf]
        %v2182 = vld [vmem:[#allocation5 + $0x1fc] sm:$0xf]
        %v2247 = vunpack.c.l.b16 %v2119
        %v2248 = vunpack.c.l.b16 %v2120
        %v2249 = vunpack.c.l.b16 %v2121
        %v2250 = vunpack.c.l.b16 %v2122
        %v2251 = vunpack.c.l.b16 %v2123
        %v2252 = vunpack.c.l.b16 %v2124
        %v2253 = vunpack.c.l.b16 %v2125
        %v2254 = vunpack.c.l.b16 %v2126
        %v2255 = vunpack.c.l.b16 %v2127
        %v2256 = vunpack.c.l.b16 %v2128
        %v2257 = vunpack.c.l.b16 %v2129
        %v2258 = vunpack.c.l.b16 %v2130
        %v2259 = vunpack.c.l.b16 %v2131
        %v2260 = vunpack.c.l.b16 %v2132
        %v2261 = vunpack.c.l.b16 %v2133
        %v2262 = vunpack.c.l.b16 %v2134
        %v2263 = vunpack.c.l.b16 %v2135
        %v2264 = vunpack.c.l.b16 %v2136
        %v2265 = vunpack.c.l.b16 %v2137
        %v2266 = vunpack.c.l.b16 %v2138
        %v2267 = vunpack.c.l.b16 %v2139
        %v2268 = vunpack.c.l.b16 %v2140
        %v2269 = vunpack.c.l.b16 %v2141
        %v2270 = vunpack.c.l.b16 %v2142
        %v2271 = vunpack.c.l.b16 %v2143
        %v2272 = vunpack.c.l.b16 %v2144
        %v2273 = vunpack.c.l.b16 %v2145
        %v2274 = vunpack.c.l.b16 %v2146
        %v2275 = vunpack.c.l.b16 %v2147
        %v2276 = vunpack.c.l.b16 %v2148
        %v2277 = vunpack.c.l.b16 %v2149
        %v2278 = vunpack.c.l.b16 %v2150
        %v2279 = vunpack.c.l.b16 %v2151
        %v2280 = vunpack.c.l.b16 %v2152
        %v2281 = vunpack.c.l.b16 %v2153
        %v2282 = vunpack.c.l.b16 %v2154
        %v2283 = vunpack.c.l.b16 %v2155
        %v2284 = vunpack.c.l.b16 %v2156
        %v2285 = vunpack.c.l.b16 %v2157
        %v2286 = vunpack.c.l.b16 %v2158
        %v2287 = vunpack.c.l.b16 %v2159
        %v2288 = vunpack.c.l.b16 %v2160
        %v2289 = vunpack.c.l.b16 %v2161
        %v2290 = vunpack.c.l.b16 %v2162
        %v2291 = vunpack.c.l.b16 %v2163
        %v2292 = vunpack.c.l.b16 %v2164
        %v2293 = vunpack.c.l.b16 %v2165
        %v2294 = vunpack.c.l.b16 %v2166
        %v2295 = vunpack.c.l.b16 %v2167
        %v2296 = vunpack.c.l.b16 %v2168
        %v2297 = vunpack.c.l.b16 %v2169
        %v2298 = vunpack.c.l.b16 %v2170
        %v2299 = vunpack.c.l.b16 %v2171
        %v2300 = vunpack.c.l.b16 %v2172
        %v2301 = vunpack.c.l.b16 %v2173
        %v2302 = vunpack.c.l.b16 %v2174
        %v2303 = vunpack.c.l.b16 %v2175
        %v2304 = vunpack.c.l.b16 %v2176
        %v2305 = vunpack.c.l.b16 %v2177
        %v2306 = vunpack.c.l.b16 %v2178
        %v2307 = vunpack.c.l.b16 %v2179
        %v2308 = vunpack.c.l.b16 %v2180
        %v2309 = vunpack.c.l.b16 %v2181
        %v2310 = vunpack.c.l.b16 %v2182
        %v2311 = vpack.c.b16 %v2248, %v2247
        %v2312 = vpack.c.b16 %v2250, %v2249
        %v2313 = vpack.c.b16 %v2252, %v2251
        %v2314 = vpack.c.b16 %v2254, %v2253
        %v2315 = vpack.c.b16 %v2256, %v2255
        %v2316 = vpack.c.b16 %v2258, %v2257
        %v2317 = vpack.c.b16 %v2260, %v2259
        %v2318 = vpack.c.b16 %v2262, %v2261
        %v2319 = vpack.c.b16 %v2264, %v2263
        %v2320 = vpack.c.b16 %v2266, %v2265
        %v2321 = vpack.c.b16 %v2268, %v2267
        %v2322 = vpack.c.b16 %v2270, %v2269
        %v2323 = vpack.c.b16 %v2272, %v2271
        %v2324 = vpack.c.b16 %v2274, %v2273
        %v2325 = vpack.c.b16 %v2276, %v2275
        %v2326 = vpack.c.b16 %v2278, %v2277
        %v2327 = vpack.c.b16 %v2280, %v2279
        %v2328 = vpack.c.b16 %v2282, %v2281
        %v2329 = vpack.c.b16 %v2284, %v2283
        %v2330 = vpack.c.b16 %v2286, %v2285
        %v2331 = vpack.c.b16 %v2288, %v2287
        %v2332 = vpack.c.b16 %v2290, %v2289
        %v2333 = vpack.c.b16 %v2292, %v2291
        %v2334 = vpack.c.b16 %v2294, %v2293
        %v2335 = vpack.c.b16 %v2296, %v2295
        %v2336 = vpack.c.b16 %v2298, %v2297
        %v2337 = vpack.c.b16 %v2300, %v2299
        %v2338 = vpack.c.b16 %v2302, %v2301
        %v2339 = vpack.c.b16 %v2304, %v2303
        %v2340 = vpack.c.b16 %v2306, %v2305
        %v2341 = vpack.c.b16 %v2308, %v2307
        %v2342 = vpack.c.b16 %v2310, %v2309
        %2375 = vmatpush.bf16.msra.mxu0 %v2318
        %2376 = vmatpush.bf16.msra.mxu0 %v2317
        %2377 = vmatpush.bf16.msra.mxu0 %v2316
        %2378 = vmatpush.bf16.msra.mxu0 %v2315
        %2379 = vmatpush.bf16.msra.mxu0 %v2314
        %2380 = vmatpush.bf16.msra.mxu0 %v2313
        %2381 = vmatpush.bf16.msra.mxu0 %v2312
        %2382 = vmatpush.bf16.msra.mxu0 %v2311
        %2383 = vmatmul.bf16.gmra.mxu0 %v2111
        %v2384 = vpop.f32.mrf.mxu0
        %v2385 = vadd.f32 0.0, %v2384
        %v2386 = vpop.f32.mrf.mxu0
        %v2387 = vadd.f32 0.0, %v2386
        %2388 = vmatmul.bf16.gmra.mxu0 %v2115
        %v2389 = vpop.f32.mrf.mxu0
        %v2390 = vadd.f32 0.0, %v2389
        %v2391 = vpop.f32.mrf.mxu0
        %v2392 = vadd.f32 0.0, %v2391
        %2393 = vdwg.mxu0
        %2394 = vmatpush.bf16.msra.mxu0 %v2326
        %2395 = vmatpush.bf16.msra.mxu0 %v2325
        %2396 = vmatpush.bf16.msra.mxu0 %v2324
        %2397 = vmatpush.bf16.msra.mxu0 %v2323
        %2398 = vmatpush.bf16.msra.mxu0 %v2322
        %2399 = vmatpush.bf16.msra.mxu0 %v2321
        %2400 = vmatpush.bf16.msra.mxu0 %v2320
        %2401 = vmatpush.bf16.msra.mxu0 %v2319
        %2402 = vmatmul.bf16.gmra.mxu0 %v2112
        %v2403 = vpop.f32.mrf.mxu0
        %v2404 = vadd.f32 %v2385, %v2403
        %v2405 = vpop.f32.mrf.mxu0
        %v2406 = vadd.f32 %v2387, %v2405
        %2407 = vmatmul.bf16.gmra.mxu0 %v2116
        %v2408 = vpop.f32.mrf.mxu0
        %v2409 = vadd.f32 %v2390, %v2408
        %v2410 = vpop.f32.mrf.mxu0
        %v2411 = vadd.f32 %v2392, %v2410
        %2412 = vdwg.mxu0
        %2413 = vmatpush.bf16.msra.mxu0 %v2334
        %2414 = vmatpush.bf16.msra.mxu0 %v2333
        %2415 = vmatpush.bf16.msra.mxu0 %v2332
        %2416 = vmatpush.bf16.msra.mxu0 %v2331
        %2417 = vmatpush.bf16.msra.mxu0 %v2330
        %2418 = vmatpush.bf16.msra.mxu0 %v2329
        %2419 = vmatpush.bf16.msra.mxu0 %v2328
        %2420 = vmatpush.bf16.msra.mxu0 %v2327
        %2421 = vmatmul.bf16.gmra.mxu0 %v2113
        %v2422 = vpop.f32.mrf.mxu0
        %v2423 = vadd.f32 %v2404, %v2422
        %v2424 = vpop.f32.mrf.mxu0
        %v2425 = vadd.f32 %v2406, %v2424
        %2426 = vmatmul.bf16.gmra.mxu0 %v2117
        %v2427 = vpop.f32.mrf.mxu0
        %v2428 = vadd.f32 %v2409, %v2427
        %v2429 = vpop.f32.mrf.mxu0
        %v2430 = vadd.f32 %v2411, %v2429
        %2431 = vdwg.mxu0
        %2432 = vmatpush.bf16.msra.mxu0 %v2342
        %2433 = vmatpush.bf16.msra.mxu0 %v2341
        %2434 = vmatpush.bf16.msra.mxu0 %v2340
        %2435 = vmatpush.bf16.msra.mxu0 %v2339
        %2436 = vmatpush.bf16.msra.mxu0 %v2338
        %2437 = vmatpush.bf16.msra.mxu0 %v2337
        %2438 = vmatpush.bf16.msra.mxu0 %v2336
        %2439 = vmatpush.bf16.msra.mxu0 %v2335
        %2440 = vmatmul.bf16.gmra.mxu0 %v2114
        %v2441 = vpop.f32.mrf.mxu0
        %v2442 = vadd.f32 %v2423, %v2441
        %v2443 = vpop.f32.mrf.mxu0
        %v2444 = vadd.f32 %v2425, %v2443
        %2445 = vmatmul.bf16.gmra.mxu0 %v2118
        %v2446 = vpop.f32.mrf.mxu0
        %v2447 = vadd.f32 %v2428, %v2446
        %v2448 = vpop.f32.mrf.mxu0
        %v2449 = vadd.f32 %v2430, %v2448
        %2450 = vdwg.mxu0
        %v2451 = vadd.f32 %v1813, %v2442
        %v2452 = vadd.f32 %v1814, %v2444
        %v2453 = vadd.f32 %v1815, %v2447
        %v2454 = vadd.f32 %v1816, %v2449
        %v2455 = vld [vmem:[#allocation3 + $0x20] sm:$0xff]
        %v2456 = vld [vmem:[#allocation3 + $0x28] sm:$0xff]
        %v2457 = vld [vmem:[#allocation3 + $0x60] sm:$0xff]
        %v2458 = vld [vmem:[#allocation3 + $0x68] sm:$0xff]
        %v2459 = vld [vmem:[#allocation3 + $0xa0] sm:$0xff]
        %v2460 = vld [vmem:[#allocation3 + $0xa8] sm:$0xff]
        %v2461 = vld [vmem:[#allocation3 + $0xe0] sm:$0xff]
        %v2462 = vld [vmem:[#allocation3 + $0xe8] sm:$0xff]
        %v2463 = vld [vmem:[#allocation3 + $0x120] sm:$0xff]
        %v2464 = vld [vmem:[#allocation3 + $0x128] sm:$0xff]
        %v2465 = vld [vmem:[#allocation3 + $0x160] sm:$0xff]
        %v2466 = vld [vmem:[#allocation3 + $0x168] sm:$0xff]
        %v2467 = vld [vmem:[#allocation3 + $0x1a0] sm:$0xff]
        %v2468 = vld [vmem:[#allocation3 + $0x1a8] sm:$0xff]
        %v2469 = vld [vmem:[#allocation3 + $0x1e0] sm:$0xff]
        %v2470 = vld [vmem:[#allocation3 + $0x1e8] sm:$0xff]
        %v2471 = vld [vmem:[#allocation3 + $0x220] sm:$0xff]
        %v2472 = vld [vmem:[#allocation3 + $0x228] sm:$0xff]
        %v2473 = vld [vmem:[#allocation3 + $0x260] sm:$0xff]
        %v2474 = vld [vmem:[#allocation3 + $0x268] sm:$0xff]
        %v2475 = vld [vmem:[#allocation3 + $0x2a0] sm:$0xff]
        %v2476 = vld [vmem:[#allocation3 + $0x2a8] sm:$0xff]
        %v2477 = vld [vmem:[#allocation3 + $0x2e0] sm:$0xff]
        %v2478 = vld [vmem:[#allocation3 + $0x2e8] sm:$0xff]
        %v2479 = vld [vmem:[#allocation3 + $0x320] sm:$0xff]
        %v2480 = vld [vmem:[#allocation3 + $0x328] sm:$0xff]
        %v2481 = vld [vmem:[#allocation3 + $0x360] sm:$0xff]
        %v2482 = vld [vmem:[#allocation3 + $0x368] sm:$0xff]
        %v2483 = vld [vmem:[#allocation3 + $0x3a0] sm:$0xff]
        %v2484 = vld [vmem:[#allocation3 + $0x3a8] sm:$0xff]
        %v2485 = vld [vmem:[#allocation3 + $0x3e0] sm:$0xff]
        %v2486 = vld [vmem:[#allocation3 + $0x3e8] sm:$0xff]
        %v2487 = vld [vmem:[%s9 + $0x8] sm:$0xf]
        %v2489 = vperm.slane %v2487, 0
        %v2490 = vperm.slane %v2487, 1
        %v2491 = vperm.slane %v2487, 2
        %v2492 = vperm.slane %v2487, 3
        %v2529 = vunpack.c.l.b16 %v2455
        %v2530 = vunpack.c.h.b16 %v2455
        %v2531 = vunpack.c.l.b16 %v2456
        %v2532 = vunpack.c.h.b16 %v2456
        %v2533 = vunpack.c.l.b16 %v2457
        %v2534 = vunpack.c.h.b16 %v2457
        %v2535 = vunpack.c.l.b16 %v2458
        %v2536 = vunpack.c.h.b16 %v2458
        %v2537 = vunpack.c.l.b16 %v2459
        %v2538 = vunpack.c.h.b16 %v2459
        %v2539 = vunpack.c.l.b16 %v2460
        %v2540 = vunpack.c.h.b16 %v2460
        %v2541 = vunpack.c.l.b16 %v2461
        %v2542 = vunpack.c.h.b16 %v2461
        %v2543 = vunpack.c.l.b16 %v2462
        %v2544 = vunpack.c.h.b16 %v2462
        %v2545 = vunpack.c.l.b16 %v2463
        %v2546 = vunpack.c.h.b16 %v2463
        %v2547 = vunpack.c.l.b16 %v2464
        %v2548 = vunpack.c.h.b16 %v2464
        %v2549 = vunpack.c.l.b16 %v2465
        %v2550 = vunpack.c.h.b16 %v2465
        %v2551 = vunpack.c.l.b16 %v2466
        %v2552 = vunpack.c.h.b16 %v2466
        %v2553 = vunpack.c.l.b16 %v2467
        %v2554 = vunpack.c.h.b16 %v2467
        %v2555 = vunpack.c.l.b16 %v2468
        %v2556 = vunpack.c.h.b16 %v2468
        %v2557 = vunpack.c.l.b16 %v2469
        %v2558 = vunpack.c.h.b16 %v2469
        %v2559 = vunpack.c.l.b16 %v2470
        %v2560 = vunpack.c.h.b16 %v2470
        %v2561 = vunpack.c.l.b16 %v2471
        %v2562 = vunpack.c.h.b16 %v2471
        %v2563 = vunpack.c.l.b16 %v2472
        %v2564 = vunpack.c.h.b16 %v2472
        %v2565 = vunpack.c.l.b16 %v2473
        %v2566 = vunpack.c.h.b16 %v2473
        %v2567 = vunpack.c.l.b16 %v2474
        %v2568 = vunpack.c.h.b16 %v2474
        %v2569 = vunpack.c.l.b16 %v2475
        %v2570 = vunpack.c.h.b16 %v2475
        %v2571 = vunpack.c.l.b16 %v2476
        %v2572 = vunpack.c.h.b16 %v2476
        %v2573 = vunpack.c.l.b16 %v2477
        %v2574 = vunpack.c.h.b16 %v2477
        %v2575 = vunpack.c.l.b16 %v2478
        %v2576 = vunpack.c.h.b16 %v2478
        %v2577 = vunpack.c.l.b16 %v2479
        %v2578 = vunpack.c.h.b16 %v2479
        %v2579 = vunpack.c.l.b16 %v2480
        %v2580 = vunpack.c.h.b16 %v2480
        %v2581 = vunpack.c.l.b16 %v2481
        %v2582 = vunpack.c.h.b16 %v2481
        %v2583 = vunpack.c.l.b16 %v2482
        %v2584 = vunpack.c.h.b16 %v2482
        %v2585 = vunpack.c.l.b16 %v2483
        %v2586 = vunpack.c.h.b16 %v2483
        %v2587 = vunpack.c.l.b16 %v2484
        %v2588 = vunpack.c.h.b16 %v2484
        %v2589 = vunpack.c.l.b16 %v2485
        %v2590 = vunpack.c.h.b16 %v2485
        %v2591 = vunpack.c.l.b16 %v2486
        %v2592 = vunpack.c.h.b16 %v2486
        %v2593 = vpack.c.b16 %v2533, %v2529
        %v2594 = vpack.c.b16 %v2534, %v2530
        %v2595 = vpack.c.b16 %v2535, %v2531
        %v2596 = vpack.c.b16 %v2536, %v2532
        %v2597 = vpack.c.b16 %v2541, %v2537
        %v2598 = vpack.c.b16 %v2542, %v2538
        %v2599 = vpack.c.b16 %v2543, %v2539
        %v2600 = vpack.c.b16 %v2544, %v2540
        %v2601 = vpack.c.b16 %v2549, %v2545
        %v2602 = vpack.c.b16 %v2550, %v2546
        %v2603 = vpack.c.b16 %v2551, %v2547
        %v2604 = vpack.c.b16 %v2552, %v2548
        %v2605 = vpack.c.b16 %v2557, %v2553
        %v2606 = vpack.c.b16 %v2558, %v2554
        %v2607 = vpack.c.b16 %v2559, %v2555
        %v2608 = vpack.c.b16 %v2560, %v2556
        %v2609 = vpack.c.b16 %v2565, %v2561
        %v2610 = vpack.c.b16 %v2566, %v2562
        %v2611 = vpack.c.b16 %v2567, %v2563
        %v2612 = vpack.c.b16 %v2568, %v2564
        %v2613 = vpack.c.b16 %v2573, %v2569
        %v2614 = vpack.c.b16 %v2574, %v2570
        %v2615 = vpack.c.b16 %v2575, %v2571
        %v2616 = vpack.c.b16 %v2576, %v2572
        %v2617 = vpack.c.b16 %v2581, %v2577
        %v2618 = vpack.c.b16 %v2582, %v2578
        %v2619 = vpack.c.b16 %v2583, %v2579
        %v2620 = vpack.c.b16 %v2584, %v2580
        %v2621 = vpack.c.b16 %v2589, %v2585
        %v2622 = vpack.c.b16 %v2590, %v2586
        %v2623 = vpack.c.b16 %v2591, %v2587
        %v2624 = vpack.c.b16 %v2592, %v2588
        %2657 = vmatpush.bf16.msra.mxu0 %v2621
        %2658 = vmatpush.bf16.msra.mxu0 %v2617
        %2659 = vmatpush.bf16.msra.mxu0 %v2613
        %2660 = vmatpush.bf16.msra.mxu0 %v2609
        %2661 = vmatpush.bf16.msra.mxu0 %v2605
        %2662 = vmatpush.bf16.msra.mxu0 %v2601
        %2663 = vmatpush.bf16.msra.mxu0 %v2597
        %2664 = vmatpush.bf16.msra.mxu0 %v2593
        %2665 = vmatmul.bf16.gmra.mxu0 %v1169
        %v2666 = vpop.f32.mrf.mxu0
        %v2667 = vadd.f32 %v2489, %v2666
        %v2668 = vpop.f32.mrf.mxu0
        %v2669 = vadd.f32 %v2489, %v2668
        %2670 = vmatmul.bf16.gmra.mxu0 %v1170
        %v2671 = vpop.f32.mrf.mxu0
        %v2672 = vadd.f32 %v2489, %v2671
        %v2673 = vpop.f32.mrf.mxu0
        %v2674 = vadd.f32 %v2489, %v2673
        %2675 = vdwg.mxu0
        %2676 = vmatpush.bf16.msra.mxu0 %v2622
        %2677 = vmatpush.bf16.msra.mxu0 %v2618
        %2678 = vmatpush.bf16.msra.mxu0 %v2614
        %2679 = vmatpush.bf16.msra.mxu0 %v2610
        %2680 = vmatpush.bf16.msra.mxu0 %v2606
        %2681 = vmatpush.bf16.msra.mxu0 %v2602
        %2682 = vmatpush.bf16.msra.mxu0 %v2598
        %2683 = vmatpush.bf16.msra.mxu0 %v2594
        %2684 = vmatmul.bf16.gmra.mxu0 %v1169
        %v2685 = vpop.f32.mrf.mxu0
        %v2686 = vadd.f32 %v2490, %v2685
        %v2687 = vpop.f32.mrf.mxu0
        %v2688 = vadd.f32 %v2490, %v2687
        %2689 = vmatmul.bf16.gmra.mxu0 %v1170
        %v2690 = vpop.f32.mrf.mxu0
        %v2691 = vadd.f32 %v2490, %v2690
        %v2692 = vpop.f32.mrf.mxu0
        %v2693 = vadd.f32 %v2490, %v2692
        %2694 = vdwg.mxu0
        %2695 = vmatpush.bf16.msra.mxu0 %v2623
        %2696 = vmatpush.bf16.msra.mxu0 %v2619
        %2697 = vmatpush.bf16.msra.mxu0 %v2615
        %2698 = vmatpush.bf16.msra.mxu0 %v2611
        %2699 = vmatpush.bf16.msra.mxu0 %v2607
        %2700 = vmatpush.bf16.msra.mxu0 %v2603
        %2701 = vmatpush.bf16.msra.mxu0 %v2599
        %2702 = vmatpush.bf16.msra.mxu0 %v2595
        %2703 = vmatmul.bf16.gmra.mxu0 %v1169
        %v2704 = vpop.f32.mrf.mxu0
        %v2705 = vadd.f32 %v2491, %v2704
        %v2706 = vpop.f32.mrf.mxu0
        %v2707 = vadd.f32 %v2491, %v2706
        %2708 = vmatmul.bf16.gmra.mxu0 %v1170
        %v2709 = vpop.f32.mrf.mxu0
        %v2710 = vadd.f32 %v2491, %v2709
        %v2711 = vpop.f32.mrf.mxu0
        %v2712 = vadd.f32 %v2491, %v2711
        %2713 = vdwg.mxu0
        %2714 = vmatpush.bf16.msra.mxu0 %v2624
        %2715 = vmatpush.bf16.msra.mxu0 %v2620
        %2716 = vmatpush.bf16.msra.mxu0 %v2616
        %2717 = vmatpush.bf16.msra.mxu0 %v2612
        %2718 = vmatpush.bf16.msra.mxu0 %v2608
        %2719 = vmatpush.bf16.msra.mxu0 %v2604
        %2720 = vmatpush.bf16.msra.mxu0 %v2600
        %2721 = vmatpush.bf16.msra.mxu0 %v2596
        %2722 = vmatmul.bf16.gmra.mxu0 %v1169
        %v2723 = vpop.f32.mrf.mxu0
        %v2724 = vadd.f32 %v2492, %v2723
        %v2725 = vpop.f32.mrf.mxu0
        %v2726 = vadd.f32 %v2492, %v2725
        %2727 = vmatmul.bf16.gmra.mxu0 %v1170
        %v2728 = vpop.f32.mrf.mxu0
        %v2729 = vadd.f32 %v2492, %v2728
        %v2730 = vpop.f32.mrf.mxu0
        %v2731 = vadd.f32 %v2492, %v2730
        %2732 = vdwg.mxu0
        %v2733 = vmax.f32 %v2667, 0.0
        %v2734 = vmax.f32 %v2686, 0.0
        %v2735 = vmax.f32 %v2705, 0.0
        %v2736 = vmax.f32 %v2724, 0.0
        %v2737 = vmax.f32 %v2669, 0.0
        %v2738 = vmax.f32 %v2688, 0.0
        %v2739 = vmax.f32 %v2707, 0.0
        %v2740 = vmax.f32 %v2726, 0.0
        %v2741 = vmax.f32 %v2672, 0.0
        %v2742 = vmax.f32 %v2691, 0.0
        %v2743 = vmax.f32 %v2710, 0.0
        %v2744 = vmax.f32 %v2729, 0.0
        %v2745 = vmax.f32 %v2674, 0.0
        %v2746 = vmax.f32 %v2693, 0.0
        %v2747 = vmax.f32 %v2712, 0.0
        %v2748 = vmax.f32 %v2731, 0.0
        %v2749 = vpack.c.bf16 %v2737, %v2733
        %v2750 = vpack.c.bf16 %v2738, %v2734
        %v2751 = vpack.c.bf16 %v2739, %v2735
        %v2752 = vpack.c.bf16 %v2740, %v2736
        %v2753 = vpack.c.bf16 %v2745, %v2741
        %v2754 = vpack.c.bf16 %v2746, %v2742
        %v2755 = vpack.c.bf16 %v2747, %v2743
        %v2756 = vpack.c.bf16 %v2748, %v2744
        %v2757 = vld [vmem:[#allocation5 + $0x200] sm:$0xf]
        %v2758 = vld [vmem:[#allocation5 + $0x204] sm:$0xf]
        %v2759 = vld [vmem:[#allocation5 + $0x208] sm:$0xf]
        %v2760 = vld [vmem:[#allocation5 + $0x20c] sm:$0xf]
        %v2761 = vld [vmem:[#allocation5 + $0x210] sm:$0xf]
        %v2762 = vld [vmem:[#allocation5 + $0x214] sm:$0xf]
        %v2763 = vld [vmem:[#allocation5 + $0x218] sm:$0xf]
        %v2764 = vld [vmem:[#allocation5 + $0x21c] sm:$0xf]
        %v2765 = vld [vmem:[#allocation5 + $0x220] sm:$0xf]
        %v2766 = vld [vmem:[#allocation5 + $0x224] sm:$0xf]
        %v2767 = vld [vmem:[#allocation5 + $0x228] sm:$0xf]
        %v2768 = vld [vmem:[#allocation5 + $0x22c] sm:$0xf]
        %v2769 = vld [vmem:[#allocation5 + $0x230] sm:$0xf]
        %v2770 = vld [vmem:[#allocation5 + $0x234] sm:$0xf]
        %v2771 = vld [vmem:[#allocation5 + $0x238] sm:$0xf]
        %v2772 = vld [vmem:[#allocation5 + $0x23c] sm:$0xf]
        %v2773 = vld [vmem:[#allocation5 + $0x240] sm:$0xf]
        %v2774 = vld [vmem:[#allocation5 + $0x244] sm:$0xf]
        %v2775 = vld [vmem:[#allocation5 + $0x248] sm:$0xf]
        %v2776 = vld [vmem:[#allocation5 + $0x24c] sm:$0xf]
        %v2777 = vld [vmem:[#allocation5 + $0x250] sm:$0xf]
        %v2778 = vld [vmem:[#allocation5 + $0x254] sm:$0xf]
        %v2779 = vld [vmem:[#allocation5 + $0x258] sm:$0xf]
        %v2780 = vld [vmem:[#allocation5 + $0x25c] sm:$0xf]
        %v2781 = vld [vmem:[#allocation5 + $0x260] sm:$0xf]
        %v2782 = vld [vmem:[#allocation5 + $0x264] sm:$0xf]
        %v2783 = vld [vmem:[#allocation5 + $0x268] sm:$0xf]
        %v2784 = vld [vmem:[#allocation5 + $0x26c] sm:$0xf]
        %v2785 = vld [vmem:[#allocation5 + $0x270] sm:$0xf]
        %v2786 = vld [vmem:[#allocation5 + $0x274] sm:$0xf]
        %v2787 = vld [vmem:[#allocation5 + $0x278] sm:$0xf]
        %v2788 = vld [vmem:[#allocation5 + $0x27c] sm:$0xf]
        %v2789 = vld [vmem:[#allocation5 + $0x280] sm:$0xf]
        %v2790 = vld [vmem:[#allocation5 + $0x284] sm:$0xf]
        %v2791 = vld [vmem:[#allocation5 + $0x288] sm:$0xf]
        %v2792 = vld [vmem:[#allocation5 + $0x28c] sm:$0xf]
        %v2793 = vld [vmem:[#allocation5 + $0x290] sm:$0xf]
        %v2794 = vld [vmem:[#allocation5 + $0x294] sm:$0xf]
        %v2795 = vld [vmem:[#allocation5 + $0x298] sm:$0xf]
        %v2796 = vld [vmem:[#allocation5 + $0x29c] sm:$0xf]
        %v2797 = vld [vmem:[#allocation5 + $0x2a0] sm:$0xf]
        %v2798 = vld [vmem:[#allocation5 + $0x2a4] sm:$0xf]
        %v2799 = vld [vmem:[#allocation5 + $0x2a8] sm:$0xf]
        %v2800 = vld [vmem:[#allocation5 + $0x2ac] sm:$0xf]
        %v2801 = vld [vmem:[#allocation5 + $0x2b0] sm:$0xf]
        %v2802 = vld [vmem:[#allocation5 + $0x2b4] sm:$0xf]
        %v2803 = vld [vmem:[#allocation5 + $0x2b8] sm:$0xf]
        %v2804 = vld [vmem:[#allocation5 + $0x2bc] sm:$0xf]
        %v2805 = vld [vmem:[#allocation5 + $0x2c0] sm:$0xf]
        %v2806 = vld [vmem:[#allocation5 + $0x2c4] sm:$0xf]
        %v2807 = vld [vmem:[#allocation5 + $0x2c8] sm:$0xf]
        %v2808 = vld [vmem:[#allocation5 + $0x2cc] sm:$0xf]
        %v2809 = vld [vmem:[#allocation5 + $0x2d0] sm:$0xf]
        %v2810 = vld [vmem:[#allocation5 + $0x2d4] sm:$0xf]
        %v2811 = vld [vmem:[#allocation5 + $0x2d8] sm:$0xf]
        %v2812 = vld [vmem:[#allocation5 + $0x2dc] sm:$0xf]
        %v2813 = vld [vmem:[#allocation5 + $0x2e0] sm:$0xf]
        %v2814 = vld [vmem:[#allocation5 + $0x2e4] sm:$0xf]
        %v2815 = vld [vmem:[#allocation5 + $0x2e8] sm:$0xf]
        %v2816 = vld [vmem:[#allocation5 + $0x2ec] sm:$0xf]
        %v2817 = vld [vmem:[#allocation5 + $0x2f0] sm:$0xf]
        %v2818 = vld [vmem:[#allocation5 + $0x2f4] sm:$0xf]
        %v2819 = vld [vmem:[#allocation5 + $0x2f8] sm:$0xf]
        %v2820 = vld [vmem:[#allocation5 + $0x2fc] sm:$0xf]
        %v2885 = vunpack.c.l.b16 %v2757
        %v2886 = vunpack.c.l.b16 %v2758
        %v2887 = vunpack.c.l.b16 %v2759
        %v2888 = vunpack.c.l.b16 %v2760
        %v2889 = vunpack.c.l.b16 %v2761
        %v2890 = vunpack.c.l.b16 %v2762
        %v2891 = vunpack.c.l.b16 %v2763
        %v2892 = vunpack.c.l.b16 %v2764
        %v2893 = vunpack.c.l.b16 %v2765
        %v2894 = vunpack.c.l.b16 %v2766
        %v2895 = vunpack.c.l.b16 %v2767
        %v2896 = vunpack.c.l.b16 %v2768
        %v2897 = vunpack.c.l.b16 %v2769
        %v2898 = vunpack.c.l.b16 %v2770
        %v2899 = vunpack.c.l.b16 %v2771
        %v2900 = vunpack.c.l.b16 %v2772
        %v2901 = vunpack.c.l.b16 %v2773
        %v2902 = vunpack.c.l.b16 %v2774
        %v2903 = vunpack.c.l.b16 %v2775
        %v2904 = vunpack.c.l.b16 %v2776
        %v2905 = vunpack.c.l.b16 %v2777
        %v2906 = vunpack.c.l.b16 %v2778
        %v2907 = vunpack.c.l.b16 %v2779
        %v2908 = vunpack.c.l.b16 %v2780
        %v2909 = vunpack.c.l.b16 %v2781
        %v2910 = vunpack.c.l.b16 %v2782
        %v2911 = vunpack.c.l.b16 %v2783
        %v2912 = vunpack.c.l.b16 %v2784
        %v2913 = vunpack.c.l.b16 %v2785
        %v2914 = vunpack.c.l.b16 %v2786
        %v2915 = vunpack.c.l.b16 %v2787
        %v2916 = vunpack.c.l.b16 %v2788
        %v2917 = vunpack.c.l.b16 %v2789
        %v2918 = vunpack.c.l.b16 %v2790
        %v2919 = vunpack.c.l.b16 %v2791
        %v2920 = vunpack.c.l.b16 %v2792
        %v2921 = vunpack.c.l.b16 %v2793
        %v2922 = vunpack.c.l.b16 %v2794
        %v2923 = vunpack.c.l.b16 %v2795
        %v2924 = vunpack.c.l.b16 %v2796
        %v2925 = vunpack.c.l.b16 %v2797
        %v2926 = vunpack.c.l.b16 %v2798
        %v2927 = vunpack.c.l.b16 %v2799
        %v2928 = vunpack.c.l.b16 %v2800
        %v2929 = vunpack.c.l.b16 %v2801
        %v2930 = vunpack.c.l.b16 %v2802
        %v2931 = vunpack.c.l.b16 %v2803
        %v2932 = vunpack.c.l.b16 %v2804
        %v2933 = vunpack.c.l.b16 %v2805
        %v2934 = vunpack.c.l.b16 %v2806
        %v2935 = vunpack.c.l.b16 %v2807
        %v2936 = vunpack.c.l.b16 %v2808
        %v2937 = vunpack.c.l.b16 %v2809
        %v2938 = vunpack.c.l.b16 %v2810
        %v2939 = vunpack.c.l.b16 %v2811
        %v2940 = vunpack.c.l.b16 %v2812
        %v2941 = vunpack.c.l.b16 %v2813
        %v2942 = vunpack.c.l.b16 %v2814
        %v2943 = vunpack.c.l.b16 %v2815
        %v2944 = vunpack.c.l.b16 %v2816
        %v2945 = vunpack.c.l.b16 %v2817
        %v2946 = vunpack.c.l.b16 %v2818
        %v2947 = vunpack.c.l.b16 %v2819
        %v2948 = vunpack.c.l.b16 %v2820
        %v2949 = vpack.c.b16 %v2886, %v2885
        %v2950 = vpack.c.b16 %v2888, %v2887
        %v2951 = vpack.c.b16 %v2890, %v2889
        %v2952 = vpack.c.b16 %v2892, %v2891
        %v2953 = vpack.c.b16 %v2894, %v2893
        %v2954 = vpack.c.b16 %v2896, %v2895
        %v2955 = vpack.c.b16 %v2898, %v2897
        %v2956 = vpack.c.b16 %v2900, %v2899
        %v2957 = vpack.c.b16 %v2902, %v2901
        %v2958 = vpack.c.b16 %v2904, %v2903
        %v2959 = vpack.c.b16 %v2906, %v2905
        %v2960 = vpack.c.b16 %v2908, %v2907
        %v2961 = vpack.c.b16 %v2910, %v2909
        %v2962 = vpack.c.b16 %v2912, %v2911
        %v2963 = vpack.c.b16 %v2914, %v2913
        %v2964 = vpack.c.b16 %v2916, %v2915
        %v2965 = vpack.c.b16 %v2918, %v2917
        %v2966 = vpack.c.b16 %v2920, %v2919
        %v2967 = vpack.c.b16 %v2922, %v2921
        %v2968 = vpack.c.b16 %v2924, %v2923
        %v2969 = vpack.c.b16 %v2926, %v2925
        %v2970 = vpack.c.b16 %v2928, %v2927
        %v2971 = vpack.c.b16 %v2930, %v2929
        %v2972 = vpack.c.b16 %v2932, %v2931
        %v2973 = vpack.c.b16 %v2934, %v2933
        %v2974 = vpack.c.b16 %v2936, %v2935
        %v2975 = vpack.c.b16 %v2938, %v2937
        %v2976 = vpack.c.b16 %v2940, %v2939
        %v2977 = vpack.c.b16 %v2942, %v2941
        %v2978 = vpack.c.b16 %v2944, %v2943
        %v2979 = vpack.c.b16 %v2946, %v2945
        %v2980 = vpack.c.b16 %v2948, %v2947
        %3013 = vmatpush.bf16.msra.mxu0 %v2956
        %3014 = vmatpush.bf16.msra.mxu0 %v2955
        %3015 = vmatpush.bf16.msra.mxu0 %v2954
        %3016 = vmatpush.bf16.msra.mxu0 %v2953
        %3017 = vmatpush.bf16.msra.mxu0 %v2952
        %3018 = vmatpush.bf16.msra.mxu0 %v2951
        %3019 = vmatpush.bf16.msra.mxu0 %v2950
        %3020 = vmatpush.bf16.msra.mxu0 %v2949
        %3021 = vmatmul.bf16.gmra.mxu0 %v2749
        %v3022 = vpop.f32.mrf.mxu0
        %v3023 = vadd.f32 0.0, %v3022
        %v3024 = vpop.f32.mrf.mxu0
        %v3025 = vadd.f32 0.0, %v3024
        %3026 = vmatmul.bf16.gmra.mxu0 %v2753
        %v3027 = vpop.f32.mrf.mxu0
        %v3028 = vadd.f32 0.0, %v3027
        %v3029 = vpop.f32.mrf.mxu0
        %v3030 = vadd.f32 0.0, %v3029
        %3031 = vdwg.mxu0
        %3032 = vmatpush.bf16.msra.mxu0 %v2964
        %3033 = vmatpush.bf16.msra.mxu0 %v2963
        %3034 = vmatpush.bf16.msra.mxu0 %v2962
        %3035 = vmatpush.bf16.msra.mxu0 %v2961
        %3036 = vmatpush.bf16.msra.mxu0 %v2960
        %3037 = vmatpush.bf16.msra.mxu0 %v2959
        %3038 = vmatpush.bf16.msra.mxu0 %v2958
        %3039 = vmatpush.bf16.msra.mxu0 %v2957
        %3040 = vmatmul.bf16.gmra.mxu0 %v2750
        %v3041 = vpop.f32.mrf.mxu0
        %v3042 = vadd.f32 %v3023, %v3041
        %v3043 = vpop.f32.mrf.mxu0
        %v3044 = vadd.f32 %v3025, %v3043
        %3045 = vmatmul.bf16.gmra.mxu0 %v2754
        %v3046 = vpop.f32.mrf.mxu0
        %v3047 = vadd.f32 %v3028, %v3046
        %v3048 = vpop.f32.mrf.mxu0
        %v3049 = vadd.f32 %v3030, %v3048
        %3050 = vdwg.mxu0
        %3051 = vmatpush.bf16.msra.mxu0 %v2972
        %3052 = vmatpush.bf16.msra.mxu0 %v2971
        %3053 = vmatpush.bf16.msra.mxu0 %v2970
        %3054 = vmatpush.bf16.msra.mxu0 %v2969
        %3055 = vmatpush.bf16.msra.mxu0 %v2968
        %3056 = vmatpush.bf16.msra.mxu0 %v2967
        %3057 = vmatpush.bf16.msra.mxu0 %v2966
        %3058 = vmatpush.bf16.msra.mxu0 %v2965
        %3059 = vmatmul.bf16.gmra.mxu0 %v2751
        %v3060 = vpop.f32.mrf.mxu0
        %v3061 = vadd.f32 %v3042, %v3060
        %v3062 = vpop.f32.mrf.mxu0
        %v3063 = vadd.f32 %v3044, %v3062
        %3064 = vmatmul.bf16.gmra.mxu0 %v2755
        %v3065 = vpop.f32.mrf.mxu0
        %v3066 = vadd.f32 %v3047, %v3065
        %v3067 = vpop.f32.mrf.mxu0
        %v3068 = vadd.f32 %v3049, %v3067
        %3069 = vdwg.mxu0
        %3070 = vmatpush.bf16.msra.mxu0 %v2980
        %3071 = vmatpush.bf16.msra.mxu0 %v2979
        %3072 = vmatpush.bf16.msra.mxu0 %v2978
        %3073 = vmatpush.bf16.msra.mxu0 %v2977
        %3074 = vmatpush.bf16.msra.mxu0 %v2976
        %3075 = vmatpush.bf16.msra.mxu0 %v2975
        %3076 = vmatpush.bf16.msra.mxu0 %v2974
        %3077 = vmatpush.bf16.msra.mxu0 %v2973
        %3078 = vmatmul.bf16.gmra.mxu0 %v2752
        %v3079 = vpop.f32.mrf.mxu0
        %v3080 = vadd.f32 %v3061, %v3079
        %v3081 = vpop.f32.mrf.mxu0
        %v3082 = vadd.f32 %v3063, %v3081
        %3083 = vmatmul.bf16.gmra.mxu0 %v2756
        %v3084 = vpop.f32.mrf.mxu0
        %v3085 = vadd.f32 %v3066, %v3084
        %v3086 = vpop.f32.mrf.mxu0
        %v3087 = vadd.f32 %v3068, %v3086
        %3088 = vdwg.mxu0
        %v3089 = vadd.f32 %v2451, %v3080
        %v3090 = vadd.f32 %v2452, %v3082
        %v3091 = vadd.f32 %v2453, %v3085
        %v3092 = vadd.f32 %v2454, %v3087
        %v3093 = vld [vmem:[#allocation3 + $0x30] sm:$0xff]
        %v3094 = vld [vmem:[#allocation3 + $0x38] sm:$0xff]
        %v3095 = vld [vmem:[#allocation3 + $0x70] sm:$0xff]
        %v3096 = vld [vmem:[#allocation3 + $0x78] sm:$0xff]
        %v3097 = vld [vmem:[#allocation3 + $0xb0] sm:$0xff]
        %v3098 = vld [vmem:[#allocation3 + $0xb8] sm:$0xff]
        %v3099 = vld [vmem:[#allocation3 + $0xf0] sm:$0xff]
        %v3100 = vld [vmem:[#allocation3 + $0xf8] sm:$0xff]
        %v3101 = vld [vmem:[#allocation3 + $0x130] sm:$0xff]
        %v3102 = vld [vmem:[#allocation3 + $0x138] sm:$0xff]
        %v3103 = vld [vmem:[#allocation3 + $0x170] sm:$0xff]
        %v3104 = vld [vmem:[#allocation3 + $0x178] sm:$0xff]
        %v3105 = vld [vmem:[#allocation3 + $0x1b0] sm:$0xff]
        %v3106 = vld [vmem:[#allocation3 + $0x1b8] sm:$0xff]
        %v3107 = vld [vmem:[#allocation3 + $0x1f0] sm:$0xff]
        %v3108 = vld [vmem:[#allocation3 + $0x1f8] sm:$0xff]
        %v3109 = vld [vmem:[#allocation3 + $0x230] sm:$0xff]
        %v3110 = vld [vmem:[#allocation3 + $0x238] sm:$0xff]
        %v3111 = vld [vmem:[#allocation3 + $0x270] sm:$0xff]
        %v3112 = vld [vmem:[#allocation3 + $0x278] sm:$0xff]
        %v3113 = vld [vmem:[#allocation3 + $0x2b0] sm:$0xff]
        %v3114 = vld [vmem:[#allocation3 + $0x2b8] sm:$0xff]
        %v3115 = vld [vmem:[#allocation3 + $0x2f0] sm:$0xff]
        %v3116 = vld [vmem:[#allocation3 + $0x2f8] sm:$0xff]
        %v3117 = vld [vmem:[#allocation3 + $0x330] sm:$0xff]
        %v3118 = vld [vmem:[#allocation3 + $0x338] sm:$0xff]
        %v3119 = vld [vmem:[#allocation3 + $0x370] sm:$0xff]
        %v3120 = vld [vmem:[#allocation3 + $0x378] sm:$0xff]
        %v3121 = vld [vmem:[#allocation3 + $0x3b0] sm:$0xff]
        %v3122 = vld [vmem:[#allocation3 + $0x3b8] sm:$0xff]
        %v3123 = vld [vmem:[#allocation3 + $0x3f0] sm:$0xff]
        %v3124 = vld [vmem:[#allocation3 + $0x3f8] sm:$0xff]
        %v3125 = vld [vmem:[%s9 + $0xc] sm:$0xf]
        %v3127 = vperm.slane %v3125, 0
        %v3128 = vperm.slane %v3125, 1
        %v3129 = vperm.slane %v3125, 2
        %v3130 = vperm.slane %v3125, 3
        %v3167 = vunpack.c.l.b16 %v3093
        %v3168 = vunpack.c.h.b16 %v3093
        %v3169 = vunpack.c.l.b16 %v3094
        %v3170 = vunpack.c.h.b16 %v3094
        %v3171 = vunpack.c.l.b16 %v3095
        %v3172 = vunpack.c.h.b16 %v3095
        %v3173 = vunpack.c.l.b16 %v3096
        %v3174 = vunpack.c.h.b16 %v3096
        %v3175 = vunpack.c.l.b16 %v3097
        %v3176 = vunpack.c.h.b16 %v3097
        %v3177 = vunpack.c.l.b16 %v3098
        %v3178 = vunpack.c.h.b16 %v3098
        %v3179 = vunpack.c.l.b16 %v3099
        %v3180 = vunpack.c.h.b16 %v3099
        %v3181 = vunpack.c.l.b16 %v3100
        %v3182 = vunpack.c.h.b16 %v3100
        %v3183 = vunpack.c.l.b16 %v3101
        %v3184 = vunpack.c.h.b16 %v3101
        %v3185 = vunpack.c.l.b16 %v3102
        %v3186 = vunpack.c.h.b16 %v3102
        %v3187 = vunpack.c.l.b16 %v3103
        %v3188 = vunpack.c.h.b16 %v3103
        %v3189 = vunpack.c.l.b16 %v3104
        %v3190 = vunpack.c.h.b16 %v3104
        %v3191 = vunpack.c.l.b16 %v3105
        %v3192 = vunpack.c.h.b16 %v3105
        %v3193 = vunpack.c.l.b16 %v3106
        %v3194 = vunpack.c.h.b16 %v3106
        %v3195 = vunpack.c.l.b16 %v3107
        %v3196 = vunpack.c.h.b16 %v3107
        %v3197 = vunpack.c.l.b16 %v3108
        %v3198 = vunpack.c.h.b16 %v3108
        %v3199 = vunpack.c.l.b16 %v3109
        %v3200 = vunpack.c.h.b16 %v3109
        %v3201 = vunpack.c.l.b16 %v3110
        %v3202 = vunpack.c.h.b16 %v3110
        %v3203 = vunpack.c.l.b16 %v3111
        %v3204 = vunpack.c.h.b16 %v3111
        %v3205 = vunpack.c.l.b16 %v3112
        %v3206 = vunpack.c.h.b16 %v3112
        %v3207 = vunpack.c.l.b16 %v3113
        %v3208 = vunpack.c.h.b16 %v3113
        %v3209 = vunpack.c.l.b16 %v3114
        %v3210 = vunpack.c.h.b16 %v3114
        %v3211 = vunpack.c.l.b16 %v3115
        %v3212 = vunpack.c.h.b16 %v3115
        %v3213 = vunpack.c.l.b16 %v3116
        %v3214 = vunpack.c.h.b16 %v3116
        %v3215 = vunpack.c.l.b16 %v3117
        %v3216 = vunpack.c.h.b16 %v3117
        %v3217 = vunpack.c.l.b16 %v3118
        %v3218 = vunpack.c.h.b16 %v3118
        %v3219 = vunpack.c.l.b16 %v3119
        %v3220 = vunpack.c.h.b16 %v3119
        %v3221 = vunpack.c.l.b16 %v3120
        %v3222 = vunpack.c.h.b16 %v3120
        %v3223 = vunpack.c.l.b16 %v3121
        %v3224 = vunpack.c.h.b16 %v3121
        %v3225 = vunpack.c.l.b16 %v3122
        %v3226 = vunpack.c.h.b16 %v3122
        %v3227 = vunpack.c.l.b16 %v3123
        %v3228 = vunpack.c.h.b16 %v3123
        %v3229 = vunpack.c.l.b16 %v3124
        %v3230 = vunpack.c.h.b16 %v3124
        %v3231 = vpack.c.b16 %v3171, %v3167
        %v3232 = vpack.c.b16 %v3172, %v3168
        %v3233 = vpack.c.b16 %v3173, %v3169
        %v3234 = vpack.c.b16 %v3174, %v3170
        %v3235 = vpack.c.b16 %v3179, %v3175
        %v3236 = vpack.c.b16 %v3180, %v3176
        %v3237 = vpack.c.b16 %v3181, %v3177
        %v3238 = vpack.c.b16 %v3182, %v3178
        %v3239 = vpack.c.b16 %v3187, %v3183
        %v3240 = vpack.c.b16 %v3188, %v3184
        %v3241 = vpack.c.b16 %v3189, %v3185
        %v3242 = vpack.c.b16 %v3190, %v3186
        %v3243 = vpack.c.b16 %v3195, %v3191
        %v3244 = vpack.c.b16 %v3196, %v3192
        %v3245 = vpack.c.b16 %v3197, %v3193
        %v3246 = vpack.c.b16 %v3198, %v3194
        %v3247 = vpack.c.b16 %v3203, %v3199
        %v3248 = vpack.c.b16 %v3204, %v3200
        %v3249 = vpack.c.b16 %v3205, %v3201
        %v3250 = vpack.c.b16 %v3206, %v3202
        %v3251 = vpack.c.b16 %v3211, %v3207
        %v3252 = vpack.c.b16 %v3212, %v3208
        %v3253 = vpack.c.b16 %v3213, %v3209
        %v3254 = vpack.c.b16 %v3214, %v3210
        %v3255 = vpack.c.b16 %v3219, %v3215
        %v3256 = vpack.c.b16 %v3220, %v3216
        %v3257 = vpack.c.b16 %v3221, %v3217
        %v3258 = vpack.c.b16 %v3222, %v3218
        %v3259 = vpack.c.b16 %v3227, %v3223
        %v3260 = vpack.c.b16 %v3228, %v3224
        %v3261 = vpack.c.b16 %v3229, %v3225
        %v3262 = vpack.c.b16 %v3230, %v3226
        %3295 = vmatpush.bf16.msra.mxu0 %v3259
        %3296 = vmatpush.bf16.msra.mxu0 %v3255
        %3297 = vmatpush.bf16.msra.mxu0 %v3251
        %3298 = vmatpush.bf16.msra.mxu0 %v3247
        %3299 = vmatpush.bf16.msra.mxu0 %v3243
        %3300 = vmatpush.bf16.msra.mxu0 %v3239
        %3301 = vmatpush.bf16.msra.mxu0 %v3235
        %3302 = vmatpush.bf16.msra.mxu0 %v3231
        %3303 = vmatmul.bf16.gmra.mxu0 %v1169
        %v3304 = vpop.f32.mrf.mxu0
        %v3305 = vadd.f32 %v3127, %v3304
        %v3306 = vpop.f32.mrf.mxu0
        %v3307 = vadd.f32 %v3127, %v3306
        %3308 = vmatmul.bf16.gmra.mxu0 %v1170
        %v3309 = vpop.f32.mrf.mxu0
        %v3310 = vadd.f32 %v3127, %v3309
        %v3311 = vpop.f32.mrf.mxu0
        %v3312 = vadd.f32 %v3127, %v3311
        %3313 = vdwg.mxu0
        %3314 = vmatpush.bf16.msra.mxu0 %v3260
        %3315 = vmatpush.bf16.msra.mxu0 %v3256
        %3316 = vmatpush.bf16.msra.mxu0 %v3252
        %3317 = vmatpush.bf16.msra.mxu0 %v3248
        %3318 = vmatpush.bf16.msra.mxu0 %v3244
        %3319 = vmatpush.bf16.msra.mxu0 %v3240
        %3320 = vmatpush.bf16.msra.mxu0 %v3236
        %3321 = vmatpush.bf16.msra.mxu0 %v3232
        %3322 = vmatmul.bf16.gmra.mxu0 %v1169
        %v3323 = vpop.f32.mrf.mxu0
        %v3324 = vadd.f32 %v3128, %v3323
        %v3325 = vpop.f32.mrf.mxu0
        %v3326 = vadd.f32 %v3128, %v3325
        %3327 = vmatmul.bf16.gmra.mxu0 %v1170
        %v3328 = vpop.f32.mrf.mxu0
        %v3329 = vadd.f32 %v3128, %v3328
        %v3330 = vpop.f32.mrf.mxu0
        %v3331 = vadd.f32 %v3128, %v3330
        %3332 = vdwg.mxu0
        %3333 = vmatpush.bf16.msra.mxu0 %v3261
        %3334 = vmatpush.bf16.msra.mxu0 %v3257
        %3335 = vmatpush.bf16.msra.mxu0 %v3253
        %3336 = vmatpush.bf16.msra.mxu0 %v3249
        %3337 = vmatpush.bf16.msra.mxu0 %v3245
        %3338 = vmatpush.bf16.msra.mxu0 %v3241
        %3339 = vmatpush.bf16.msra.mxu0 %v3237
        %3340 = vmatpush.bf16.msra.mxu0 %v3233
        %3341 = vmatmul.bf16.gmra.mxu0 %v1169
        %v3342 = vpop.f32.mrf.mxu0
        %v3343 = vadd.f32 %v3129, %v3342
        %v3344 = vpop.f32.mrf.mxu0
        %v3345 = vadd.f32 %v3129, %v3344
        %3346 = vmatmul.bf16.gmra.mxu0 %v1170
        %v3347 = vpop.f32.mrf.mxu0
        %v3348 = vadd.f32 %v3129, %v3347
        %v3349 = vpop.f32.mrf.mxu0
        %v3350 = vadd.f32 %v3129, %v3349
        %3351 = vdwg.mxu0
        %3352 = vmatpush.bf16.msra.mxu0 %v3262
        %3353 = vmatpush.bf16.msra.mxu0 %v3258
        %3354 = vmatpush.bf16.msra.mxu0 %v3254
        %3355 = vmatpush.bf16.msra.mxu0 %v3250
        %3356 = vmatpush.bf16.msra.mxu0 %v3246
        %3357 = vmatpush.bf16.msra.mxu0 %v3242
        %3358 = vmatpush.bf16.msra.mxu0 %v3238
        %3359 = vmatpush.bf16.msra.mxu0 %v3234
        %3360 = vmatmul.bf16.gmra.mxu0 %v1169
        %v3361 = vpop.f32.mrf.mxu0
        %v3362 = vadd.f32 %v3130, %v3361
        %v3363 = vpop.f32.mrf.mxu0
        %v3364 = vadd.f32 %v3130, %v3363
        %3365 = vmatmul.bf16.gmra.mxu0 %v1170
        %v3366 = vpop.f32.mrf.mxu0
        %v3367 = vadd.f32 %v3130, %v3366
        %v3368 = vpop.f32.mrf.mxu0
        %v3369 = vadd.f32 %v3130, %v3368
        %3370 = vdwg.mxu0
        %v3371 = vmax.f32 %v3305, 0.0
        %v3372 = vmax.f32 %v3324, 0.0
        %v3373 = vmax.f32 %v3343, 0.0
        %v3374 = vmax.f32 %v3362, 0.0
        %v3375 = vmax.f32 %v3307, 0.0
        %v3376 = vmax.f32 %v3326, 0.0
        %v3377 = vmax.f32 %v3345, 0.0
        %v3378 = vmax.f32 %v3364, 0.0
        %v3379 = vmax.f32 %v3310, 0.0
        %v3380 = vmax.f32 %v3329, 0.0
        %v3381 = vmax.f32 %v3348, 0.0
        %v3382 = vmax.f32 %v3367, 0.0
        %v3383 = vmax.f32 %v3312, 0.0
        %v3384 = vmax.f32 %v3331, 0.0
        %v3385 = vmax.f32 %v3350, 0.0
        %v3386 = vmax.f32 %v3369, 0.0
        %v3387 = vpack.c.bf16 %v3375, %v3371
        %v3388 = vpack.c.bf16 %v3376, %v3372
        %v3389 = vpack.c.bf16 %v3377, %v3373
        %v3390 = vpack.c.bf16 %v3378, %v3374
        %v3391 = vpack.c.bf16 %v3383, %v3379
        %v3392 = vpack.c.bf16 %v3384, %v3380
        %v3393 = vpack.c.bf16 %v3385, %v3381
        %v3394 = vpack.c.bf16 %v3386, %v3382
        %v3395 = vld [vmem:[#allocation5 + $0x300] sm:$0xf]
        %v3396 = vld [vmem:[#allocation5 + $0x304] sm:$0xf]
        %v3397 = vld [vmem:[#allocation5 + $0x308] sm:$0xf]
        %v3398 = vld [vmem:[#allocation5 + $0x30c] sm:$0xf]
        %v3399 = vld [vmem:[#allocation5 + $0x310] sm:$0xf]
        %v3400 = vld [vmem:[#allocation5 + $0x314] sm:$0xf]
        %v3401 = vld [vmem:[#allocation5 + $0x318] sm:$0xf]
        %v3402 = vld [vmem:[#allocation5 + $0x31c] sm:$0xf]
        %v3403 = vld [vmem:[#allocation5 + $0x320] sm:$0xf]
        %v3404 = vld [vmem:[#allocation5 + $0x324] sm:$0xf]
        %v3405 = vld [vmem:[#allocation5 + $0x328] sm:$0xf]
        %v3406 = vld [vmem:[#allocation5 + $0x32c] sm:$0xf]
        %v3407 = vld [vmem:[#allocation5 + $0x330] sm:$0xf]
        %v3408 = vld [vmem:[#allocation5 + $0x334] sm:$0xf]
        %v3409 = vld [vmem:[#allocation5 + $0x338] sm:$0xf]
        %v3410 = vld [vmem:[#allocation5 + $0x33c] sm:$0xf]
        %v3411 = vld [vmem:[#allocation5 + $0x340] sm:$0xf]
        %v3412 = vld [vmem:[#allocation5 + $0x344] sm:$0xf]
        %v3413 = vld [vmem:[#allocation5 + $0x348] sm:$0xf]
        %v3414 = vld [vmem:[#allocation5 + $0x34c] sm:$0xf]
        %v3415 = vld [vmem:[#allocation5 + $0x350] sm:$0xf]
        %v3416 = vld [vmem:[#allocation5 + $0x354] sm:$0xf]
        %v3417 = vld [vmem:[#allocation5 + $0x358] sm:$0xf]
        %v3418 = vld [vmem:[#allocation5 + $0x35c] sm:$0xf]
        %v3419 = vld [vmem:[#allocation5 + $0x360] sm:$0xf]
        %v3420 = vld [vmem:[#allocation5 + $0x364] sm:$0xf]
        %v3421 = vld [vmem:[#allocation5 + $0x368] sm:$0xf]
        %v3422 = vld [vmem:[#allocation5 + $0x36c] sm:$0xf]
        %v3423 = vld [vmem:[#allocation5 + $0x370] sm:$0xf]
        %v3424 = vld [vmem:[#allocation5 + $0x374] sm:$0xf]
        %v3425 = vld [vmem:[#allocation5 + $0x378] sm:$0xf]
        %v3426 = vld [vmem:[#allocation5 + $0x37c] sm:$0xf]
        %v3427 = vld [vmem:[#allocation5 + $0x380] sm:$0xf]
        %v3428 = vld [vmem:[#allocation5 + $0x384] sm:$0xf]
        %v3429 = vld [vmem:[#allocation5 + $0x388] sm:$0xf]
        %v3430 = vld [vmem:[#allocation5 + $0x38c] sm:$0xf]
        %v3431 = vld [vmem:[#allocation5 + $0x390] sm:$0xf]
        %v3432 = vld [vmem:[#allocation5 + $0x394] sm:$0xf]
        %v3433 = vld [vmem:[#allocation5 + $0x398] sm:$0xf]
        %v3434 = vld [vmem:[#allocation5 + $0x39c] sm:$0xf]
        %v3435 = vld [vmem:[#allocation5 + $0x3a0] sm:$0xf]
        %v3436 = vld [vmem:[#allocation5 + $0x3a4] sm:$0xf]
        %v3437 = vld [vmem:[#allocation5 + $0x3a8] sm:$0xf]
        %v3438 = vld [vmem:[#allocation5 + $0x3ac] sm:$0xf]
        %v3439 = vld [vmem:[#allocation5 + $0x3b0] sm:$0xf]
        %v3440 = vld [vmem:[#allocation5 + $0x3b4] sm:$0xf]
        %v3441 = vld [vmem:[#allocation5 + $0x3b8] sm:$0xf]
        %v3442 = vld [vmem:[#allocation5 + $0x3bc] sm:$0xf]
        %v3443 = vld [vmem:[#allocation5 + $0x3c0] sm:$0xf]
        %v3444 = vld [vmem:[#allocation5 + $0x3c4] sm:$0xf]
        %v3445 = vld [vmem:[#allocation5 + $0x3c8] sm:$0xf]
        %v3446 = vld [vmem:[#allocation5 + $0x3cc] sm:$0xf]
        %v3447 = vld [vmem:[#allocation5 + $0x3d0] sm:$0xf]
        %v3448 = vld [vmem:[#allocation5 + $0x3d4] sm:$0xf]
        %v3449 = vld [vmem:[#allocation5 + $0x3d8] sm:$0xf]
        %v3450 = vld [vmem:[#allocation5 + $0x3dc] sm:$0xf]
        %v3451 = vld [vmem:[#allocation5 + $0x3e0] sm:$0xf]
        %v3452 = vld [vmem:[#allocation5 + $0x3e4] sm:$0xf]
        %v3453 = vld [vmem:[#allocation5 + $0x3e8] sm:$0xf]
        %v3454 = vld [vmem:[#allocation5 + $0x3ec] sm:$0xf]
        %v3455 = vld [vmem:[#allocation5 + $0x3f0] sm:$0xf]
        %v3456 = vld [vmem:[#allocation5 + $0x3f4] sm:$0xf]
        %v3457 = vld [vmem:[#allocation5 + $0x3f8] sm:$0xf]
        %v3458 = vld [vmem:[#allocation5 + $0x3fc] sm:$0xf]
        %v3523 = vunpack.c.l.b16 %v3395
        %v3524 = vunpack.c.l.b16 %v3396
        %v3525 = vunpack.c.l.b16 %v3397
        %v3526 = vunpack.c.l.b16 %v3398
        %v3527 = vunpack.c.l.b16 %v3399
        %v3528 = vunpack.c.l.b16 %v3400
        %v3529 = vunpack.c.l.b16 %v3401
        %v3530 = vunpack.c.l.b16 %v3402
        %v3531 = vunpack.c.l.b16 %v3403
        %v3532 = vunpack.c.l.b16 %v3404
        %v3533 = vunpack.c.l.b16 %v3405
        %v3534 = vunpack.c.l.b16 %v3406
        %v3535 = vunpack.c.l.b16 %v3407
        %v3536 = vunpack.c.l.b16 %v3408
        %v3537 = vunpack.c.l.b16 %v3409
        %v3538 = vunpack.c.l.b16 %v3410
        %v3539 = vunpack.c.l.b16 %v3411
        %v3540 = vunpack.c.l.b16 %v3412
        %v3541 = vunpack.c.l.b16 %v3413
        %v3542 = vunpack.c.l.b16 %v3414
        %v3543 = vunpack.c.l.b16 %v3415
        %v3544 = vunpack.c.l.b16 %v3416
        %v3545 = vunpack.c.l.b16 %v3417
        %v3546 = vunpack.c.l.b16 %v3418
        %v3547 = vunpack.c.l.b16 %v3419
        %v3548 = vunpack.c.l.b16 %v3420
        %v3549 = vunpack.c.l.b16 %v3421
        %v3550 = vunpack.c.l.b16 %v3422
        %v3551 = vunpack.c.l.b16 %v3423
        %v3552 = vunpack.c.l.b16 %v3424
        %v3553 = vunpack.c.l.b16 %v3425
        %v3554 = vunpack.c.l.b16 %v3426
        %v3555 = vunpack.c.l.b16 %v3427
        %v3556 = vunpack.c.l.b16 %v3428
        %v3557 = vunpack.c.l.b16 %v3429
        %v3558 = vunpack.c.l.b16 %v3430
        %v3559 = vunpack.c.l.b16 %v3431
        %v3560 = vunpack.c.l.b16 %v3432
        %v3561 = vunpack.c.l.b16 %v3433
        %v3562 = vunpack.c.l.b16 %v3434
        %v3563 = vunpack.c.l.b16 %v3435
        %v3564 = vunpack.c.l.b16 %v3436
        %v3565 = vunpack.c.l.b16 %v3437
        %v3566 = vunpack.c.l.b16 %v3438
        %v3567 = vunpack.c.l.b16 %v3439
        %v3568 = vunpack.c.l.b16 %v3440
        %v3569 = vunpack.c.l.b16 %v3441
        %v3570 = vunpack.c.l.b16 %v3442
        %v3571 = vunpack.c.l.b16 %v3443
        %v3572 = vunpack.c.l.b16 %v3444
        %v3573 = vunpack.c.l.b16 %v3445
        %v3574 = vunpack.c.l.b16 %v3446
        %v3575 = vunpack.c.l.b16 %v3447
        %v3576 = vunpack.c.l.b16 %v3448
        %v3577 = vunpack.c.l.b16 %v3449
        %v3578 = vunpack.c.l.b16 %v3450
        %v3579 = vunpack.c.l.b16 %v3451
        %v3580 = vunpack.c.l.b16 %v3452
        %v3581 = vunpack.c.l.b16 %v3453
        %v3582 = vunpack.c.l.b16 %v3454
        %v3583 = vunpack.c.l.b16 %v3455
        %v3584 = vunpack.c.l.b16 %v3456
        %v3585 = vunpack.c.l.b16 %v3457
        %v3586 = vunpack.c.l.b16 %v3458
        %v3587 = vpack.c.b16 %v3524, %v3523
        %v3588 = vpack.c.b16 %v3526, %v3525
        %v3589 = vpack.c.b16 %v3528, %v3527
        %v3590 = vpack.c.b16 %v3530, %v3529
        %v3591 = vpack.c.b16 %v3532, %v3531
        %v3592 = vpack.c.b16 %v3534, %v3533
        %v3593 = vpack.c.b16 %v3536, %v3535
        %v3594 = vpack.c.b16 %v3538, %v3537
        %v3595 = vpack.c.b16 %v3540, %v3539
        %v3596 = vpack.c.b16 %v3542, %v3541
        %v3597 = vpack.c.b16 %v3544, %v3543
        %v3598 = vpack.c.b16 %v3546, %v3545
        %v3599 = vpack.c.b16 %v3548, %v3547
        %v3600 = vpack.c.b16 %v3550, %v3549
        %v3601 = vpack.c.b16 %v3552, %v3551
        %v3602 = vpack.c.b16 %v3554, %v3553
        %v3603 = vpack.c.b16 %v3556, %v3555
        %v3604 = vpack.c.b16 %v3558, %v3557
        %v3605 = vpack.c.b16 %v3560, %v3559
        %v3606 = vpack.c.b16 %v3562, %v3561
        %v3607 = vpack.c.b16 %v3564, %v3563
        %v3608 = vpack.c.b16 %v3566, %v3565
        %v3609 = vpack.c.b16 %v3568, %v3567
        %v3610 = vpack.c.b16 %v3570, %v3569
        %v3611 = vpack.c.b16 %v3572, %v3571
        %v3612 = vpack.c.b16 %v3574, %v3573
        %v3613 = vpack.c.b16 %v3576, %v3575
        %v3614 = vpack.c.b16 %v3578, %v3577
        %v3615 = vpack.c.b16 %v3580, %v3579
        %v3616 = vpack.c.b16 %v3582, %v3581
        %v3617 = vpack.c.b16 %v3584, %v3583
        %v3618 = vpack.c.b16 %v3586, %v3585
        %3651 = vmatpush.bf16.msra.mxu0 %v3594
        %3652 = vmatpush.bf16.msra.mxu0 %v3593
        %3653 = vmatpush.bf16.msra.mxu0 %v3592
        %3654 = vmatpush.bf16.msra.mxu0 %v3591
        %3655 = vmatpush.bf16.msra.mxu0 %v3590
        %3656 = vmatpush.bf16.msra.mxu0 %v3589
        %3657 = vmatpush.bf16.msra.mxu0 %v3588
        %3658 = vmatpush.bf16.msra.mxu0 %v3587
        %3659 = vmatmul.bf16.gmra.mxu0 %v3387
        %v3660 = vpop.f32.mrf.mxu0
        %v3661 = vadd.f32 0.0, %v3660
        %v3662 = vpop.f32.mrf.mxu0
        %v3663 = vadd.f32 0.0, %v3662
        %3664 = vmatmul.bf16.gmra.mxu0 %v3391
        %v3665 = vpop.f32.mrf.mxu0
        %v3666 = vadd.f32 0.0, %v3665
        %v3667 = vpop.f32.mrf.mxu0
        %v3668 = vadd.f32 0.0, %v3667
        %3669 = vdwg.mxu0
        %3670 = vmatpush.bf16.msra.mxu0 %v3602
        %3671 = vmatpush.bf16.msra.mxu0 %v3601
        %3672 = vmatpush.bf16.msra.mxu0 %v3600
        %3673 = vmatpush.bf16.msra.mxu0 %v3599
        %3674 = vmatpush.bf16.msra.mxu0 %v3598
        %3675 = vmatpush.bf16.msra.mxu0 %v3597
        %3676 = vmatpush.bf16.msra.mxu0 %v3596
        %3677 = vmatpush.bf16.msra.mxu0 %v3595
        %3678 = vmatmul.bf16.gmra.mxu0 %v3388
        %v3679 = vpop.f32.mrf.mxu0
        %v3680 = vadd.f32 %v3661, %v3679
        %v3681 = vpop.f32.mrf.mxu0
        %v3682 = vadd.f32 %v3663, %v3681
        %3683 = vmatmul.bf16.gmra.mxu0 %v3392
        %v3684 = vpop.f32.mrf.mxu0
        %v3685 = vadd.f32 %v3666, %v3684
        %v3686 = vpop.f32.mrf.mxu0
        %v3687 = vadd.f32 %v3668, %v3686
        %3688 = vdwg.mxu0
        %3689 = vmatpush.bf16.msra.mxu0 %v3610
        %3690 = vmatpush.bf16.msra.mxu0 %v3609
        %3691 = vmatpush.bf16.msra.mxu0 %v3608
        %3692 = vmatpush.bf16.msra.mxu0 %v3607
        %3693 = vmatpush.bf16.msra.mxu0 %v3606
        %3694 = vmatpush.bf16.msra.mxu0 %v3605
        %3695 = vmatpush.bf16.msra.mxu0 %v3604
        %3696 = vmatpush.bf16.msra.mxu0 %v3603
        %3697 = vmatmul.bf16.gmra.mxu0 %v3389
        %v3698 = vpop.f32.mrf.mxu0
        %v3699 = vadd.f32 %v3680, %v3698
        %v3700 = vpop.f32.mrf.mxu0
        %v3701 = vadd.f32 %v3682, %v3700
        %3702 = vmatmul.bf16.gmra.mxu0 %v3393
        %v3703 = vpop.f32.mrf.mxu0
        %v3704 = vadd.f32 %v3685, %v3703
        %v3705 = vpop.f32.mrf.mxu0
        %v3706 = vadd.f32 %v3687, %v3705
        %3707 = vdwg.mxu0
        %3708 = vmatpush.bf16.msra.mxu0 %v3618
        %3709 = vmatpush.bf16.msra.mxu0 %v3617
        %3710 = vmatpush.bf16.msra.mxu0 %v3616
        %3711 = vmatpush.bf16.msra.mxu0 %v3615
        %3712 = vmatpush.bf16.msra.mxu0 %v3614
        %3713 = vmatpush.bf16.msra.mxu0 %v3613
        %3714 = vmatpush.bf16.msra.mxu0 %v3612
        %3715 = vmatpush.bf16.msra.mxu0 %v3611
        %3716 = vmatmul.bf16.gmra.mxu0 %v3390
        %v3717 = vpop.f32.mrf.mxu0
        %v3718 = vadd.f32 %v3699, %v3717
        %v3719 = vpop.f32.mrf.mxu0
        %v3720 = vadd.f32 %v3701, %v3719
        %3721 = vmatmul.bf16.gmra.mxu0 %v3394
        %v3722 = vpop.f32.mrf.mxu0
        %v3723 = vadd.f32 %v3704, %v3722
        %v3724 = vpop.f32.mrf.mxu0
        %v3725 = vadd.f32 %v3706, %v3724
        %3726 = vdwg.mxu0
        %v3727 = vadd.f32 %v3089, %v3718
        %v3728 = vadd.f32 %v3090, %v3720
        %v3729 = vadd.f32 %v3091, %v3723
        %v3730 = vadd.f32 %v3092, %v3725
        %v3731 = vld [vmem:[%s12] sm:$0x1]
        %v3732 = vld [vmem:[%s13] sm:$0x1]
        %v3733 = vsel %vm1066, %v3727, 0.0
        %v3734 = vsel %vm1066, %v3728, 0.0
        %v3735 = vsel %vm1066, %v3729, 0.0
        %v3736 = vsel %vm1066, %v3730, 0.0
        %3737 = vadd.xlane.f32.xlu0 %v3733
        %v3738 = vpop.xlane.xlu0 %3737
        %3739 = vadd.xlane.f32.xlu0 %v3734
        %v3740 = vpop.xlane.xlu0 %3739
        %3741 = vadd.xlane.f32.xlu0 %v3735
        %v3742 = vpop.xlane.xlu0 %3741
        %3743 = vadd.xlane.f32.xlu0 %v3736
        %v3744 = vpop.xlane.xlu0 %3743
        %v3745 = vmul.f32 %v3738, 0.03125
        %v3746 = vmul.f32 %v3740, 0.03125
        %v3747 = vmul.f32 %v3742, 0.03125
        %v3748 = vmul.f32 %v3744, 0.03125
        %v3749 = vsub.f32 %v3727, %v3745
        %v3750 = vsub.f32 %v3728, %v3746
        %v3751 = vsub.f32 %v3729, %v3747
        %v3752 = vsub.f32 %v3730, %v3748
        %v3753 = vsel %vm1066, %v3749, 0.0
        %v3754 = vsel %vm1066, %v3750, 0.0
        %v3755 = vsel %vm1066, %v3751, 0.0
        %v3756 = vsel %vm1066, %v3752, 0.0
        %v3757 = vmul.f32 %v3753, %v3753
        %v3758 = vmul.f32 %v3754, %v3754
        %v3759 = vmul.f32 %v3755, %v3755
        %v3760 = vmul.f32 %v3756, %v3756
        %3761 = vadd.xlane.f32.xlu0 %v3757
        %v3762 = vpop.xlane.xlu0 %3761
        %3763 = vadd.xlane.f32.xlu0 %v3758
        %v3764 = vpop.xlane.xlu0 %3763
        %3765 = vadd.xlane.f32.xlu0 %v3759
        %v3766 = vpop.xlane.xlu0 %3765
        %3767 = vadd.xlane.f32.xlu0 %v3760
        %v3768 = vpop.xlane.xlu0 %3767
        %v3769 = vmul.f32 %v3762, 0.03125
        %v3770 = vmul.f32 %v3764, 0.03125
        %v3771 = vmul.f32 %v3766, 0.03125
        %v3772 = vmul.f32 %v3768, 0.03125
        %v3773 = vadd.f32 %v3769, 1e-05
        %v3774 = vadd.f32 %v3770, 1e-05
        %v3775 = vadd.f32 %v3771, 1e-05
        %v3776 = vadd.f32 %v3772, 1e-05
        %v3777 = vrsqrt.pop %v3773
        %v3778 = vmul.f32 %v3777, %v3773
        %v3779 = vmul.f32 %v3778, %v3777
        %v3780 = vmul.f32 0.5, %v3779
        %v3781 = vsub.f32 1.5, %v3780
        %v3782 = vmul.f32 %v3777, %v3781
        %vm3783 = vweird.f32 %v3773
        %vm3784 = vweird.f32 %v3777
        %vm3785 = vmor %vm3783, %vm3784
        %v3786 = vsel %vm3785, %v3777, %v3782
        %v3787 = vrsqrt.pop %v3774
        %v3788 = vmul.f32 %v3787, %v3774
        %v3789 = vmul.f32 %v3788, %v3787
        %v3790 = vmul.f32 0.5, %v3789
        %v3791 = vsub.f32 1.5, %v3790
        %v3792 = vmul.f32 %v3787, %v3791
        %vm3793 = vweird.f32 %v3774
        %vm3794 = vweird.f32 %v3787
        %vm3795 = vmor %vm3793, %vm3794
        %v3796 = vsel %vm3795, %v3787, %v3792
        %v3797 = vrsqrt.pop %v3775
        %v3798 = vmul.f32 %v3797, %v3775
        %v3799 = vmul.f32 %v3798, %v3797
        %v3800 = vmul.f32 0.5, %v3799
        %v3801 = vsub.f32 1.5, %v3800
        %v3802 = vmul.f32 %v3797, %v3801
        %vm3803 = vweird.f32 %v3775
        %vm3804 = vweird.f32 %v3797
        %vm3805 = vmor %vm3803, %vm3804
        %v3806 = vsel %vm3805, %v3797, %v3802
        %v3807 = vrsqrt.pop %v3776
        %v3808 = vmul.f32 %v3807, %v3776
        %v3809 = vmul.f32 %v3808, %v3807
        %v3810 = vmul.f32 0.5, %v3809
        %v3811 = vsub.f32 1.5, %v3810
        %v3812 = vmul.f32 %v3807, %v3811
        %vm3813 = vweird.f32 %v3776
        %vm3814 = vweird.f32 %v3807
        %vm3815 = vmor %vm3813, %vm3814
        %v3816 = vsel %vm3815, %v3807, %v3812
        %v3817 = vmul.f32 %v3753, %v3786
        %v3818 = vmul.f32 %v3754, %v3796
        %v3819 = vmul.f32 %v3755, %v3806
        %v3820 = vmul.f32 %v3756, %v3816
        %v3822 = vperm.slane %v3731, 0
        %v3824 = vmul.f32 %v3817, %v3822
        %v3825 = vmul.f32 %v3818, %v3822
        %v3826 = vmul.f32 %v3819, %v3822
        %v3827 = vmul.f32 %v3820, %v3822
        %v3829 = vperm.slane %v3732, 0
        %v3831 = vadd.f32 %v3824, %v3829
        %v3832 = vadd.f32 %v3825, %v3829
        %v3833 = vadd.f32 %v3826, %v3829
        %v3834 = vadd.f32 %v3827, %v3829
        %v3835 = vpack.c.bf16 %v3832, %v3831
        %v3836 = vpack.c.bf16 %v3834, %v3833
        %s3837 = scalar_lea.vmem %s2, 192
        %v3838 = vld [vmem:[%s3837] sm:$0xff]
        %v3839 = vld [vmem:[%s3837 + $0x8] sm:$0xf]
        %v3840 = vld [vmem:[%s3837 + $0xc] sm:$0xff]
        %v3841 = vld [vmem:[%s3837 + $0x14] sm:$0xf]
        %v3842 = vld [vmem:[%s3837 + $0x18] sm:$0xff]
        %v3843 = vld [vmem:[%s3837 + $0x20] sm:$0xf]
        %v3844 = vld [vmem:[%s3837 + $0x24] sm:$0xff]
        %v3845 = vld [vmem:[%s3837 + $0x2c] sm:$0xf]
        %v3846 = vld [vmem:[%s3837 + $0x30] sm:$0xff]
        %v3847 = vld [vmem:[%s3837 + $0x38] sm:$0xf]
        %v3848 = vld [vmem:[%s3837 + $0x3c] sm:$0xff]
        %v3849 = vld [vmem:[%s3837 + $0x44] sm:$0xf]
        %v3850 = vld [vmem:[%s3837 + $0x48] sm:$0xff]
        %v3851 = vld [vmem:[%s3837 + $0x50] sm:$0xf]
        %v3852 = vld [vmem:[%s3837 + $0x54] sm:$0xff]
        %v3853 = vld [vmem:[%s3837 + $0x5c] sm:$0xf]
        %v3854 = vld [vmem:[%s3837 + $0x60] sm:$0xff]
        %v3855 = vld [vmem:[%s3837 + $0x68] sm:$0xf]
        %v3856 = vld [vmem:[%s3837 + $0x6c] sm:$0xff]
        %v3857 = vld [vmem:[%s3837 + $0x74] sm:$0xf]
        %v3858 = vld [vmem:[%s3837 + $0x78] sm:$0xff]
        %v3859 = vld [vmem:[%s3837 + $0x80] sm:$0xf]
        %v3860 = vld [vmem:[%s3837 + $0x84] sm:$0xff]
        %v3861 = vld [vmem:[%s3837 + $0x8c] sm:$0xf]
        %v3862 = vld [vmem:[%s3837 + $0x90] sm:$0xff]
        %v3863 = vld [vmem:[%s3837 + $0x98] sm:$0xf]
        %v3864 = vld [vmem:[%s3837 + $0x9c] sm:$0xff]
        %v3865 = vld [vmem:[%s3837 + $0xa4] sm:$0xf]
        %v3866 = vld [vmem:[%s3837 + $0xa8] sm:$0xff]
        %v3867 = vld [vmem:[%s3837 + $0xb0] sm:$0xf]
        %v3868 = vld [vmem:[%s3837 + $0xb4] sm:$0xff]
        %v3869 = vld [vmem:[%s3837 + $0xbc] sm:$0xf]
        %s3870 = scalar_lea.vmem %s3, 3
        %v3871 = vld [vmem:[%s3870] sm:$0x7]
        %v3873 = vperm.slane %v3871, 0
        %v3874 = vperm.slane %v3871, 1
        %v3875 = vperm.slane %v3871, 2
        %v3911 = vunpack.c.l.b16 %v3838
        %v3912 = vunpack.c.h.b16 %v3838
        %v3913 = vunpack.c.l.b16 %v3839
        %v3914 = vunpack.c.l.b16 %v3840
        %v3915 = vunpack.c.h.b16 %v3840
        %v3916 = vunpack.c.l.b16 %v3841
        %v3917 = vunpack.c.l.b16 %v3842
        %v3918 = vunpack.c.h.b16 %v3842
        %v3919 = vunpack.c.l.b16 %v3843
        %v3920 = vunpack.c.l.b16 %v3844
        %v3921 = vunpack.c.h.b16 %v3844
        %v3922 = vunpack.c.l.b16 %v3845
        %v3923 = vunpack.c.l.b16 %v3846
        %v3924 = vunpack.c.h.b16 %v3846
        %v3925 = vunpack.c.l.b16 %v3847
        %v3926 = vunpack.c.l.b16 %v3848
        %v3927 = vunpack.c.h.b16 %v3848
        %v3928 = vunpack.c.l.b16 %v3849
        %v3929 = vunpack.c.l.b16 %v3850
        %v3930 = vunpack.c.h.b16 %v3850
        %v3931 = vunpack.c.l.b16 %v3851
        %v3932 = vunpack.c.l.b16 %v3852
        %v3933 = vunpack.c.h.b16 %v3852
        %v3934 = vunpack.c.l.b16 %v3853
        %v3935 = vunpack.c.l.b16 %v3854
        %v3936 = vunpack.c.h.b16 %v3854
        %v3937 = vunpack.c.l.b16 %v3855
        %v3938 = vunpack.c.l.b16 %v3856
        %v3939 = vunpack.c.h.b16 %v3856
        %v3940 = vunpack.c.l.b16 %v3857
        %v3941 = vunpack.c.l.b16 %v3858
        %v3942 = vunpack.c.h.b16 %v3858
        %v3943 = vunpack.c.l.b16 %v3859
        %v3944 = vunpack.c.l.b16 %v3860
        %v3945 = vunpack.c.h.b16 %v3860
        %v3946 = vunpack.c.l.b16 %v3861
        %v3947 = vunpack.c.l.b16 %v3862
        %v3948 = vunpack.c.h.b16 %v3862
        %v3949 = vunpack.c.l.b16 %v3863
        %v3950 = vunpack.c.l.b16 %v3864
        %v3951 = vunpack.c.h.b16 %v3864
        %v3952 = vunpack.c.l.b16 %v3865
        %v3953 = vunpack.c.l.b16 %v3866
        %v3954 = vunpack.c.h.b16 %v3866
        %v3955 = vunpack.c.l.b16 %v3867
        %v3956 = vunpack.c.l.b16 %v3868
        %v3957 = vunpack.c.h.b16 %v3868
        %v3958 = vunpack.c.l.b16 %v3869
        %v3959 = vpack.c.b16 %v3914, %v3911
        %v3960 = vpack.c.b16 %v3915, %v3912
        %v3961 = vpack.c.b16 %v3916, %v3913
        %v3962 = vpack.c.b16 %v3920, %v3917
        %v3963 = vpack.c.b16 %v3921, %v3918
        %v3964 = vpack.c.b16 %v3922, %v3919
        %v3965 = vpack.c.b16 %v3926, %v3923
        %v3966 = vpack.c.b16 %v3927, %v3924
        %v3967 = vpack.c.b16 %v3928, %v3925
        %v3968 = vpack.c.b16 %v3932, %v3929
        %v3969 = vpack.c.b16 %v3933, %v3930
        %v3970 = vpack.c.b16 %v3934, %v3931
        %v3971 = vpack.c.b16 %v3938, %v3935
        %v3972 = vpack.c.b16 %v3939, %v3936
        %v3973 = vpack.c.b16 %v3940, %v3937
        %v3974 = vpack.c.b16 %v3944, %v3941
        %v3975 = vpack.c.b16 %v3945, %v3942
        %v3976 = vpack.c.b16 %v3946, %v3943
        %v3977 = vpack.c.b16 %v3950, %v3947
        %v3978 = vpack.c.b16 %v3951, %v3948
        %v3979 = vpack.c.b16 %v3952, %v3949
        %v3980 = vpack.c.b16 %v3956, %v3953
        %v3981 = vpack.c.b16 %v3957, %v3954
        %v3982 = vpack.c.b16 %v3958, %v3955
        %4007 = vmatpush.bf16.msra.mxu0 %v3980
        %4008 = vmatpush.bf16.msra.mxu0 %v3977
        %4009 = vmatpush.bf16.msra.mxu0 %v3974
        %4010 = vmatpush.bf16.msra.mxu0 %v3971
        %4011 = vmatpush.bf16.msra.mxu0 %v3968
        %4012 = vmatpush.bf16.msra.mxu0 %v3965
        %4013 = vmatpush.bf16.msra.mxu0 %v3962
        %4014 = vmatpush.bf16.msra.mxu0 %v3959
        %4015 = vmatmul.bf16.gmra.mxu0 %v3835
        %v4016 = vpop.f32.mrf.mxu0
        %v4017 = vadd.f32 %v3873, %v4016
        %v4018 = vpop.f32.mrf.mxu0
        %v4019 = vadd.f32 %v3873, %v4018
        %4020 = vmatmul.bf16.gmra.mxu0 %v3836
        %v4021 = vpop.f32.mrf.mxu0
        %v4022 = vadd.f32 %v3873, %v4021
        %v4023 = vpop.f32.mrf.mxu0
        %v4024 = vadd.f32 %v3873, %v4023
        %4025 = vdwg.mxu0
        %4026 = vmatpush.bf16.msra.mxu0 %v3981
        %4027 = vmatpush.bf16.msra.mxu0 %v3978
        %4028 = vmatpush.bf16.msra.mxu0 %v3975
        %4029 = vmatpush.bf16.msra.mxu0 %v3972
        %4030 = vmatpush.bf16.msra.mxu0 %v3969
        %4031 = vmatpush.bf16.msra.mxu0 %v3966
        %4032 = vmatpush.bf16.msra.mxu0 %v3963
        %4033 = vmatpush.bf16.msra.mxu0 %v3960
        %4034 = vmatmul.bf16.gmra.mxu0 %v3835
        %v4035 = vpop.f32.mrf.mxu0
        %v4036 = vadd.f32 %v3874, %v4035
        %v4037 = vpop.f32.mrf.mxu0
        %v4038 = vadd.f32 %v3874, %v4037
        %4039 = vmatmul.bf16.gmra.mxu0 %v3836
        %v4040 = vpop.f32.mrf.mxu0
        %v4041 = vadd.f32 %v3874, %v4040
        %v4042 = vpop.f32.mrf.mxu0
        %v4043 = vadd.f32 %v3874, %v4042
        %4044 = vdwg.mxu0
        %4045 = vmatpush.bf16.msra.mxu0 %v3982
        %4046 = vmatpush.bf16.msra.mxu0 %v3979
        %4047 = vmatpush.bf16.msra.mxu0 %v3976
        %4048 = vmatpush.bf16.msra.mxu0 %v3973
        %4049 = vmatpush.bf16.msra.mxu0 %v3970
        %4050 = vmatpush.bf16.msra.mxu0 %v3967
        %4051 = vmatpush.bf16.msra.mxu0 %v3964
        %4052 = vmatpush.bf16.msra.mxu0 %v3961
        %4053 = vmatmul.bf16.gmra.mxu0 %v3835
        %v4054 = vpop.f32.mrf.mxu0
        %v4055 = vadd.f32 %v3875, %v4054
        %v4056 = vpop.f32.mrf.mxu0
        %v4057 = vadd.f32 %v3875, %v4056
        %4058 = vmatmul.bf16.gmra.mxu0 %v3836
        %v4059 = vpop.f32.mrf.mxu0
        %v4060 = vadd.f32 %v3875, %v4059
        %v4061 = vpop.f32.mrf.mxu0
        %v4062 = vadd.f32 %v3875, %v4061
        %4063 = vdwg.mxu0
        %v4064 = vmul.f32 %v4017, 0.35355338
        %v4065 = vmul.f32 %v4019, 0.35355338
        %v4066 = vmul.f32 %v4022, 0.35355338
        %v4067 = vmul.f32 %v4024, 0.35355338
        %v4068 = vmul.f32 %v4064, %v4036
        %v4069 = vmul.f32 %v4065, %v4038
        %v4070 = vpack.c.bf16 %v4068, %v4068
        %v4071 = vpack.c.bf16 %v4069, %v4069
        %v4072 = vmul.f32 %v4064, %v4041
        %v4073 = vmul.f32 %v4065, %v4043
        %v4074 = vpack.c.bf16 %v4072, %v4072
        %v4075 = vpack.c.bf16 %v4073, %v4073
        %v4076 = vmul.f32 %v4066, %v4036
        %v4077 = vmul.f32 %v4067, %v4038
        %v4078 = vpack.c.bf16 %v4076, %v4076
        %v4079 = vpack.c.bf16 %v4077, %v4077
        %v4080 = vmul.f32 %v4066, %v4041
        %v4081 = vmul.f32 %v4067, %v4043
        %v4082 = vpack.c.bf16 %v4080, %v4080
        %v4083 = vpack.c.bf16 %v4081, %v4081
        %v4086 = vunpack.c.l.b16 %v4070
        %v4087 = vunpack.c.l.b16 %v4071
        %v4088 = vpack.c.b16 %v4087, %v4086
        %v4092 = vunpack.c.l.b16 %v4074
        %v4093 = vunpack.c.l.b16 %v4075
        %v4094 = vpack.c.b16 %v4093, %v4092
        %v4098 = vunpack.c.l.b16 %v4078
        %v4099 = vunpack.c.l.b16 %v4079
        %v4100 = vpack.c.b16 %v4099, %v4098
        %v4104 = vunpack.c.l.b16 %v4082
        %v4105 = vunpack.c.l.b16 %v4083
        %v4106 = vpack.c.b16 %v4105, %v4104
        %4108 = vmatpush.bf16.msra.mxu0 %v880
        %4109 = vmatpush.bf16.msra.mxu0 %v879
        %4110 = vmatpush.bf16.msra.mxu0 %v878
        %4111 = vmatpush.bf16.msra.mxu0 %v877
        %4112 = vmatpush.bf16.msra.mxu0 %v876
        %4113 = vmatpush.bf16.msra.mxu0 %v875
        %4114 = vmatpush.bf16.msra.mxu0 %v874
        %4115 = vmatpush.bf16.msra.mxu0 %v873
        %4116 = vmatmul.bf16.gmra.mxu0 %v4088
        %v4117 = vpop.f32.mrf.mxu0
        %v4118 = vadd.f32 0.0, %v4117
        %v4119 = vpop.f32.mrf.mxu0
        %v4120 = vadd.f32 0.0, %v4119
        %4121 = vmatmul.bf16.gmra.mxu0 %v4094
        %v4122 = vpop.f32.mrf.mxu0
        %v4123 = vadd.f32 0.0, %v4122
        %v4124 = vpop.f32.mrf.mxu0
        %v4125 = vadd.f32 0.0, %v4124
        %4126 = vmatmul.bf16.gmra.mxu0 %v4100
        %v4127 = vpop.f32.mrf.mxu0
        %v4128 = vadd.f32 0.0, %v4127
        %v4129 = vpop.f32.mrf.mxu0
        %v4130 = vadd.f32 0.0, %v4129
        %4131 = vmatmul.bf16.gmra.mxu0 %v4106
        %v4132 = vpop.f32.mrf.mxu0
        %v4133 = vadd.f32 0.0, %v4132
        %v4134 = vpop.f32.mrf.mxu0
        %v4135 = vadd.f32 0.0, %v4134
        %4136 = vdwg.mxu0
        %v4137 = vmax.f32 %v4118, %v4123
        %v4138 = vmax.f32 %v4120, %v4125
        %v4139 = vsub.f32 %v4118, %v4137
        %v4140 = vsub.f32 %v4120, %v4138
        %v4141 = vmul.f32 %v4139, 1.442695
        %v4142 = vpow.pop %v4141
        %v4143 = vmul.f32 %v4140, 1.442695
        %v4144 = vpow.pop %v4143
        %v4145 = vsub.f32 %v4123, %v4137
        %v4146 = vsub.f32 %v4125, %v4138
        %v4147 = vmul.f32 %v4145, 1.442695
        %v4148 = vpow.pop %v4147
        %v4149 = vmul.f32 %v4146, 1.442695
        %v4150 = vpow.pop %v4149
        %v4151 = vadd.f32 %v4142, %v4148
        %v4152 = vadd.f32 %v4144, %v4150
        %v4153 = vmul.f32 %v4142, %v4055
        %v4154 = vmul.f32 %v4144, %v4057
        %v4155 = vmul.f32 %v4148, %v4060
        %v4156 = vmul.f32 %v4150, %v4062
        %v4157 = vadd.f32 %v4153, %v4155
        %v4158 = vadd.f32 %v4154, %v4156
        %v4159 = vrcp.pop %v4151
        %v4160 = vrcp.pop %v4152
        %v4161 = vmul.f32 %v4157, %v4159
        %v4162 = vmul.f32 %v4158, %v4160
        %v4163 = vmax.f32 %v4128, %v4133
        %v4164 = vmax.f32 %v4130, %v4135
        %v4165 = vsub.f32 %v4128, %v4163
        %v4166 = vsub.f32 %v4130, %v4164
        %v4167 = vmul.f32 %v4165, 1.442695
        %v4168 = vpow.pop %v4167
        %v4169 = vmul.f32 %v4166, 1.442695
        %v4170 = vpow.pop %v4169
        %v4171 = vsub.f32 %v4133, %v4163
        %v4172 = vsub.f32 %v4135, %v4164
        %v4173 = vmul.f32 %v4171, 1.442695
        %v4174 = vpow.pop %v4173
        %v4175 = vmul.f32 %v4172, 1.442695
        %v4176 = vpow.pop %v4175
        %v4177 = vadd.f32 %v4168, %v4174
        %v4178 = vadd.f32 %v4170, %v4176
        %v4179 = vmul.f32 %v4168, %v4055
        %v4180 = vmul.f32 %v4170, %v4057
        %v4181 = vmul.f32 %v4174, %v4060
        %v4182 = vmul.f32 %v4176, %v4062
        %v4183 = vadd.f32 %v4179, %v4181
        %v4184 = vadd.f32 %v4180, %v4182
        %v4185 = vrcp.pop %v4177
        %v4186 = vrcp.pop %v4178
        %v4187 = vmul.f32 %v4183, %v4185
        %v4188 = vmul.f32 %v4184, %v4186
        %v4189 = vpack.c.bf16 %v4162, %v4161
        %v4190 = vpack.c.bf16 %v4188, %v4187
        %s4191 = scalar_lea.vmem %s4, 64
        %v4192 = vld [vmem:[%s4191] sm:$0xf]
        %v4193 = vld [vmem:[%s4191 + $0x4] sm:$0xf]
        %v4194 = vld [vmem:[%s4191 + $0x8] sm:$0xf]
        %v4195 = vld [vmem:[%s4191 + $0xc] sm:$0xf]
        %v4196 = vld [vmem:[%s4191 + $0x10] sm:$0xf]
        %v4197 = vld [vmem:[%s4191 + $0x14] sm:$0xf]
        %v4198 = vld [vmem:[%s4191 + $0x18] sm:$0xf]
        %v4199 = vld [vmem:[%s4191 + $0x1c] sm:$0xf]
        %v4200 = vld [vmem:[%s4191 + $0x20] sm:$0xf]
        %v4201 = vld [vmem:[%s4191 + $0x24] sm:$0xf]
        %v4202 = vld [vmem:[%s4191 + $0x28] sm:$0xf]
        %v4203 = vld [vmem:[%s4191 + $0x2c] sm:$0xf]
        %v4204 = vld [vmem:[%s4191 + $0x30] sm:$0xf]
        %v4205 = vld [vmem:[%s4191 + $0x34] sm:$0xf]
        %v4206 = vld [vmem:[%s4191 + $0x38] sm:$0xf]
        %v4207 = vld [vmem:[%s4191 + $0x3c] sm:$0xf]
        %s4208 = scalar_lea.vmem %s5, 1
        %v4209 = vld [vmem:[%s4208] sm:$0x1]
        %v4211 = vperm.slane %v4209, 0
        %v4229 = vunpack.c.l.b16 %v4192
        %v4230 = vunpack.c.l.b16 %v4193
        %v4231 = vunpack.c.l.b16 %v4194
        %v4232 = vunpack.c.l.b16 %v4195
        %v4233 = vunpack.c.l.b16 %v4196
        %v4234 = vunpack.c.l.b16 %v4197
        %v4235 = vunpack.c.l.b16 %v4198
        %v4236 = vunpack.c.l.b16 %v4199
        %v4237 = vunpack.c.l.b16 %v4200
        %v4238 = vunpack.c.l.b16 %v4201
        %v4239 = vunpack.c.l.b16 %v4202
        %v4240 = vunpack.c.l.b16 %v4203
        %v4241 = vunpack.c.l.b16 %v4204
        %v4242 = vunpack.c.l.b16 %v4205
        %v4243 = vunpack.c.l.b16 %v4206
        %v4244 = vunpack.c.l.b16 %v4207
        %v4245 = vpack.c.b16 %v4230, %v4229
        %v4246 = vpack.c.b16 %v4232, %v4231
        %v4247 = vpack.c.b16 %v4234, %v4233
        %v4248 = vpack.c.b16 %v4236, %v4235
        %v4249 = vpack.c.b16 %v4238, %v4237
        %v4250 = vpack.c.b16 %v4240, %v4239
        %v4251 = vpack.c.b16 %v4242, %v4241
        %v4252 = vpack.c.b16 %v4244, %v4243
        %4261 = vmatpush.bf16.msra.mxu0 %v4252
        %4262 = vmatpush.bf16.msra.mxu0 %v4251
        %4263 = vmatpush.bf16.msra.mxu0 %v4250
        %4264 = vmatpush.bf16.msra.mxu0 %v4249
        %4265 = vmatpush.bf16.msra.mxu0 %v4248
        %4266 = vmatpush.bf16.msra.mxu0 %v4247
        %4267 = vmatpush.bf16.msra.mxu0 %v4246
        %4268 = vmatpush.bf16.msra.mxu0 %v4245
        %4269 = vmatmul.bf16.gmra.mxu0 %v4189
        %v4270 = vpop.f32.mrf.mxu0
        %v4271 = vadd.f32 %v4211, %v4270
        %v4272 = vpop.f32.mrf.mxu0
        %v4273 = vadd.f32 %v4211, %v4272
        %4274 = vmatmul.bf16.gmra.mxu0 %v4190
        %v4275 = vpop.f32.mrf.mxu0
        %v4276 = vadd.f32 %v4211, %v4275
        %v4277 = vpop.f32.mrf.mxu0
        %v4278 = vadd.f32 %v4211, %v4277
        %4279 = vdwg.mxu0
        %v4280 = vadd.f32 %v4271, %v3831
        %v4281 = vadd.f32 %v4273, %v3832
        %v4282 = vadd.f32 %v4276, %v3833
        %v4283 = vadd.f32 %v4278, %v3834
        %s4284 = scalar_lea.vmem %s6, 1
        %v4285 = vld [vmem:[%s4284] sm:$0x1]
        %s4286 = scalar_lea.vmem %s7, 1
        %v4287 = vld [vmem:[%s4286] sm:$0x1]
        %v4288 = vsel %vm1066, %v4280, 0.0
        %v4289 = vsel %vm1066, %v4281, 0.0
        %v4290 = vsel %vm1066, %v4282, 0.0
        %v4291 = vsel %vm1066, %v4283, 0.0
        %4292 = vadd.xlane.f32.xlu0 %v4288
        %v4293 = vpop.xlane.xlu0 %4292
        %4294 = vadd.xlane.f32.xlu0 %v4289
        %v4295 = vpop.xlane.xlu0 %4294
        %4296 = vadd.xlane.f32.xlu0 %v4290
        %v4297 = vpop.xlane.xlu0 %4296
        %4298 = vadd.xlane.f32.xlu0 %v4291
        %v4299 = vpop.xlane.xlu0 %4298
        %v4300 = vmul.f32 %v4293, 0.03125
        %v4301 = vmul.f32 %v4295, 0.03125
        %v4302 = vmul.f32 %v4297, 0.03125
        %v4303 = vmul.f32 %v4299, 0.03125
        %v4304 = vsub.f32 %v4280, %v4300
        %v4305 = vsub.f32 %v4281, %v4301
        %v4306 = vsub.f32 %v4282, %v4302
        %v4307 = vsub.f32 %v4283, %v4303
        %v4308 = vsel %vm1066, %v4304, 0.0
        %v4309 = vsel %vm1066, %v4305, 0.0
        %v4310 = vsel %vm1066, %v4306, 0.0
        %v4311 = vsel %vm1066, %v4307, 0.0
        %v4312 = vmul.f32 %v4308, %v4308
        %v4313 = vmul.f32 %v4309, %v4309
        %v4314 = vmul.f32 %v4310, %v4310
        %v4315 = vmul.f32 %v4311, %v4311
        %4316 = vadd.xlane.f32.xlu0 %v4312
        %v4317 = vpop.xlane.xlu0 %4316
        %4318 = vadd.xlane.f32.xlu0 %v4313
        %v4319 = vpop.xlane.xlu0 %4318
        %4320 = vadd.xlane.f32.xlu0 %v4314
        %v4321 = vpop.xlane.xlu0 %4320
        %4322 = vadd.xlane.f32.xlu0 %v4315
        %v4323 = vpop.xlane.xlu0 %4322
        %v4324 = vmul.f32 %v4317, 0.03125
        %v4325 = vmul.f32 %v4319, 0.03125
        %v4326 = vmul.f32 %v4321, 0.03125
        %v4327 = vmul.f32 %v4323, 0.03125
        %v4328 = vadd.f32 %v4324, 1e-05
        %v4329 = vadd.f32 %v4325, 1e-05
        %v4330 = vadd.f32 %v4326, 1e-05
        %v4331 = vadd.f32 %v4327, 1e-05
        %v4332 = vrsqrt.pop %v4328
        %v4333 = vmul.f32 %v4332, %v4328
        %v4334 = vmul.f32 %v4333, %v4332
        %v4335 = vmul.f32 0.5, %v4334
        %v4336 = vsub.f32 1.5, %v4335
        %v4337 = vmul.f32 %v4332, %v4336
        %vm4338 = vweird.f32 %v4328
        %vm4339 = vweird.f32 %v4332
        %vm4340 = vmor %vm4338, %vm4339
        %v4341 = vsel %vm4340, %v4332, %v4337
        %v4342 = vrsqrt.pop %v4329
        %v4343 = vmul.f32 %v4342, %v4329
        %v4344 = vmul.f32 %v4343, %v4342
        %v4345 = vmul.f32 0.5, %v4344
        %v4346 = vsub.f32 1.5, %v4345
        %v4347 = vmul.f32 %v4342, %v4346
        %vm4348 = vweird.f32 %v4329
        %vm4349 = vweird.f32 %v4342
        %vm4350 = vmor %vm4348, %vm4349
        %v4351 = vsel %vm4350, %v4342, %v4347
        %v4352 = vrsqrt.pop %v4330
        %v4353 = vmul.f32 %v4352, %v4330
        %v4354 = vmul.f32 %v4353, %v4352
        %v4355 = vmul.f32 0.5, %v4354
        %v4356 = vsub.f32 1.5, %v4355
        %v4357 = vmul.f32 %v4352, %v4356
        %vm4358 = vweird.f32 %v4330
        %vm4359 = vweird.f32 %v4352
        %vm4360 = vmor %vm4358, %vm4359
        %v4361 = vsel %vm4360, %v4352, %v4357
        %v4362 = vrsqrt.pop %v4331
        %v4363 = vmul.f32 %v4362, %v4331
        %v4364 = vmul.f32 %v4363, %v4362
        %v4365 = vmul.f32 0.5, %v4364
        %v4366 = vsub.f32 1.5, %v4365
        %v4367 = vmul.f32 %v4362, %v4366
        %vm4368 = vweird.f32 %v4331
        %vm4369 = vweird.f32 %v4362
        %vm4370 = vmor %vm4368, %vm4369
        %v4371 = vsel %vm4370, %v4362, %v4367
        %v4372 = vmul.f32 %v4308, %v4341
        %v4373 = vmul.f32 %v4309, %v4351
        %v4374 = vmul.f32 %v4310, %v4361
        %v4375 = vmul.f32 %v4311, %v4371
        %v4377 = vperm.slane %v4285, 0
        %v4379 = vmul.f32 %v4372, %v4377
        %v4380 = vmul.f32 %v4373, %v4377
        %v4381 = vmul.f32 %v4374, %v4377
        %v4382 = vmul.f32 %v4375, %v4377
        %v4384 = vperm.slane %v4287, 0
        %v4386 = vadd.f32 %v4379, %v4384
        %v4387 = vadd.f32 %v4380, %v4384
        %v4388 = vadd.f32 %v4381, %v4384
        %v4389 = vadd.f32 %v4382, %v4384
        %v4390 = vpack.c.bf16 %v4387, %v4386
        %v4391 = vpack.c.bf16 %v4389, %v4388
        %s4392 = scalar_lea.vmem %s11, 1
        %v4393 = vld [vmem:[%s4392] sm:$0x1]
        %v4395 = vperm.slane %v4393, 0
        %v4397 = vadd.f32 %v4386, %v4395
        %v4398 = vadd.f32 %v4387, %v4395
        %v4399 = vadd.f32 %v4388, %v4395
        %v4400 = vadd.f32 %v4389, %v4395
        %s4401 = scalar_lea.vmem [#allocation3], 1024
        %v4402 = vld [vmem:[%s4401] sm:$0xff]
        %v4403 = vld [vmem:[%s4401 + $0x8] sm:$0xff]
        %v4404 = vld [vmem:[%s4401 + $0x40] sm:$0xff]
        %v4405 = vld [vmem:[%s4401 + $0x48] sm:$0xff]
        %v4406 = vld [vmem:[%s4401 + $0x80] sm:$0xff]
        %v4407 = vld [vmem:[%s4401 + $0x88] sm:$0xff]
        %v4408 = vld [vmem:[%s4401 + $0xc0] sm:$0xff]
        %v4409 = vld [vmem:[%s4401 + $0xc8] sm:$0xff]
        %v4410 = vld [vmem:[%s4401 + $0x100] sm:$0xff]
        %v4411 = vld [vmem:[%s4401 + $0x108] sm:$0xff]
        %v4412 = vld [vmem:[%s4401 + $0x140] sm:$0xff]
        %v4413 = vld [vmem:[%s4401 + $0x148] sm:$0xff]
        %v4414 = vld [vmem:[%s4401 + $0x180] sm:$0xff]
        %v4415 = vld [vmem:[%s4401 + $0x188] sm:$0xff]
        %v4416 = vld [vmem:[%s4401 + $0x1c0] sm:$0xff]
        %v4417 = vld [vmem:[%s4401 + $0x1c8] sm:$0xff]
        %v4418 = vld [vmem:[%s4401 + $0x200] sm:$0xff]
        %v4419 = vld [vmem:[%s4401 + $0x208] sm:$0xff]
        %v4420 = vld [vmem:[%s4401 + $0x240] sm:$0xff]
        %v4421 = vld [vmem:[%s4401 + $0x248] sm:$0xff]
        %v4422 = vld [vmem:[%s4401 + $0x280] sm:$0xff]
        %v4423 = vld [vmem:[%s4401 + $0x288] sm:$0xff]
        %v4424 = vld [vmem:[%s4401 + $0x2c0] sm:$0xff]
        %v4425 = vld [vmem:[%s4401 + $0x2c8] sm:$0xff]
        %v4426 = vld [vmem:[%s4401 + $0x300] sm:$0xff]
        %v4427 = vld [vmem:[%s4401 + $0x308] sm:$0xff]
        %v4428 = vld [vmem:[%s4401 + $0x340] sm:$0xff]
        %v4429 = vld [vmem:[%s4401 + $0x348] sm:$0xff]
        %v4430 = vld [vmem:[%s4401 + $0x380] sm:$0xff]
        %v4431 = vld [vmem:[%s4401 + $0x388] sm:$0xff]
        %v4432 = vld [vmem:[%s4401 + $0x3c0] sm:$0xff]
        %v4433 = vld [vmem:[%s4401 + $0x3c8] sm:$0xff]
        %s4434 = scalar_lea.vmem %s9, 16
        %v4435 = vld [vmem:[%s4434] sm:$0xf]
        %v4437 = vperm.slane %v4435, 0
        %v4438 = vperm.slane %v4435, 1
        %v4439 = vperm.slane %v4435, 2
        %v4440 = vperm.slane %v4435, 3
        %v4477 = vunpack.c.l.b16 %v4402
        %v4478 = vunpack.c.h.b16 %v4402
        %v4479 = vunpack.c.l.b16 %v4403
        %v4480 = vunpack.c.h.b16 %v4403
        %v4481 = vunpack.c.l.b16 %v4404
        %v4482 = vunpack.c.h.b16 %v4404
        %v4483 = vunpack.c.l.b16 %v4405
        %v4484 = vunpack.c.h.b16 %v4405
        %v4485 = vunpack.c.l.b16 %v4406
        %v4486 = vunpack.c.h.b16 %v4406
        %v4487 = vunpack.c.l.b16 %v4407
        %v4488 = vunpack.c.h.b16 %v4407
        %v4489 = vunpack.c.l.b16 %v4408
        %v4490 = vunpack.c.h.b16 %v4408
        %v4491 = vunpack.c.l.b16 %v4409
        %v4492 = vunpack.c.h.b16 %v4409
        %v4493 = vunpack.c.l.b16 %v4410
        %v4494 = vunpack.c.h.b16 %v4410
        %v4495 = vunpack.c.l.b16 %v4411
        %v4496 = vunpack.c.h.b16 %v4411
        %v4497 = vunpack.c.l.b16 %v4412
        %v4498 = vunpack.c.h.b16 %v4412
        %v4499 = vunpack.c.l.b16 %v4413
        %v4500 = vunpack.c.h.b16 %v4413
        %v4501 = vunpack.c.l.b16 %v4414
        %v4502 = vunpack.c.h.b16 %v4414
        %v4503 = vunpack.c.l.b16 %v4415
        %v4504 = vunpack.c.h.b16 %v4415
        %v4505 = vunpack.c.l.b16 %v4416
        %v4506 = vunpack.c.h.b16 %v4416
        %v4507 = vunpack.c.l.b16 %v4417
        %v4508 = vunpack.c.h.b16 %v4417
        %v4509 = vunpack.c.l.b16 %v4418
        %v4510 = vunpack.c.h.b16 %v4418
        %v4511 = vunpack.c.l.b16 %v4419
        %v4512 = vunpack.c.h.b16 %v4419
        %v4513 = vunpack.c.l.b16 %v4420
        %v4514 = vunpack.c.h.b16 %v4420
        %v4515 = vunpack.c.l.b16 %v4421
        %v4516 = vunpack.c.h.b16 %v4421
        %v4517 = vunpack.c.l.b16 %v4422
        %v4518 = vunpack.c.h.b16 %v4422
        %v4519 = vunpack.c.l.b16 %v4423
        %v4520 = vunpack.c.h.b16 %v4423
        %v4521 = vunpack.c.l.b16 %v4424
        %v4522 = vunpack.c.h.b16 %v4424
        %v4523 = vunpack.c.l.b16 %v4425
        %v4524 = vunpack.c.h.b16 %v4425
        %v4525 = vunpack.c.l.b16 %v4426
        %v4526 = vunpack.c.h.b16 %v4426
        %v4527 = vunpack.c.l.b16 %v4427
        %v4528 = vunpack.c.h.b16 %v4427
        %v4529 = vunpack.c.l.b16 %v4428
        %v4530 = vunpack.c.h.b16 %v4428
        %v4531 = vunpack.c.l.b16 %v4429
        %v4532 = vunpack.c.h.b16 %v4429
        %v4533 = vunpack.c.l.b16 %v4430
        %v4534 = vunpack.c.h.b16 %v4430
        %v4535 = vunpack.c.l.b16 %v4431
        %v4536 = vunpack.c.h.b16 %v4431
        %v4537 = vunpack.c.l.b16 %v4432
        %v4538 = vunpack.c.h.b16 %v4432
        %v4539 = vunpack.c.l.b16 %v4433
        %v4540 = vunpack.c.h.b16 %v4433
        %v4541 = vpack.c.b16 %v4481, %v4477
        %v4542 = vpack.c.b16 %v4482, %v4478
        %v4543 = vpack.c.b16 %v4483, %v4479
        %v4544 = vpack.c.b16 %v4484, %v4480
        %v4545 = vpack.c.b16 %v4489, %v4485
        %v4546 = vpack.c.b16 %v4490, %v4486
        %v4547 = vpack.c.b16 %v4491, %v4487
        %v4548 = vpack.c.b16 %v4492, %v4488
        %v4549 = vpack.c.b16 %v4497, %v4493
        %v4550 = vpack.c.b16 %v4498, %v4494
        %v4551 = vpack.c.b16 %v4499, %v4495
        %v4552 = vpack.c.b16 %v4500, %v4496
        %v4553 = vpack.c.b16 %v4505, %v4501
        %v4554 = vpack.c.b16 %v4506, %v4502
        %v4555 = vpack.c.b16 %v4507, %v4503
        %v4556 = vpack.c.b16 %v4508, %v4504
        %v4557 = vpack.c.b16 %v4513, %v4509
        %v4558 = vpack.c.b16 %v4514, %v4510
        %v4559 = vpack.c.b16 %v4515, %v4511
        %v4560 = vpack.c.b16 %v4516, %v4512
        %v4561 = vpack.c.b16 %v4521, %v4517
        %v4562 = vpack.c.b16 %v4522, %v4518
        %v4563 = vpack.c.b16 %v4523, %v4519
        %v4564 = vpack.c.b16 %v4524, %v4520
        %v4565 = vpack.c.b16 %v4529, %v4525
        %v4566 = vpack.c.b16 %v4530, %v4526
        %v4567 = vpack.c.b16 %v4531, %v4527
        %v4568 = vpack.c.b16 %v4532, %v4528
        %v4569 = vpack.c.b16 %v4537, %v4533
        %v4570 = vpack.c.b16 %v4538, %v4534
        %v4571 = vpack.c.b16 %v4539, %v4535
        %v4572 = vpack.c.b16 %v4540, %v4536
        %4605 = vmatpush.bf16.msra.mxu0 %v4569
        %4606 = vmatpush.bf16.msra.mxu0 %v4565
        %4607 = vmatpush.bf16.msra.mxu0 %v4561
        %4608 = vmatpush.bf16.msra.mxu0 %v4557
        %4609 = vmatpush.bf16.msra.mxu0 %v4553
        %4610 = vmatpush.bf16.msra.mxu0 %v4549
        %4611 = vmatpush.bf16.msra.mxu0 %v4545
        %4612 = vmatpush.bf16.msra.mxu0 %v4541
        %4613 = vmatmul.bf16.gmra.mxu0 %v4390
        %v4614 = vpop.f32.mrf.mxu0
        %v4615 = vadd.f32 %v4437, %v4614
        %v4616 = vpop.f32.mrf.mxu0
        %v4617 = vadd.f32 %v4437, %v4616
        %4618 = vmatmul.bf16.gmra.mxu0 %v4391
        %v4619 = vpop.f32.mrf.mxu0
        %v4620 = vadd.f32 %v4437, %v4619
        %v4621 = vpop.f32.mrf.mxu0
        %v4622 = vadd.f32 %v4437, %v4621
        %4623 = vdwg.mxu0
        %4624 = vmatpush.bf16.msra.mxu0 %v4570
        %4625 = vmatpush.bf16.msra.mxu0 %v4566
        %4626 = vmatpush.bf16.msra.mxu0 %v4562
        %4627 = vmatpush.bf16.msra.mxu0 %v4558
        %4628 = vmatpush.bf16.msra.mxu0 %v4554
        %4629 = vmatpush.bf16.msra.mxu0 %v4550
        %4630 = vmatpush.bf16.msra.mxu0 %v4546
        %4631 = vmatpush.bf16.msra.mxu0 %v4542
        %4632 = vmatmul.bf16.gmra.mxu0 %v4390
        %v4633 = vpop.f32.mrf.mxu0
        %v4634 = vadd.f32 %v4438, %v4633
        %v4635 = vpop.f32.mrf.mxu0
        %v4636 = vadd.f32 %v4438, %v4635
        %4637 = vmatmul.bf16.gmra.mxu0 %v4391
        %v4638 = vpop.f32.mrf.mxu0
        %v4639 = vadd.f32 %v4438, %v4638
        %v4640 = vpop.f32.mrf.mxu0
        %v4641 = vadd.f32 %v4438, %v4640
        %4642 = vdwg.mxu0
        %4643 = vmatpush.bf16.msra.mxu0 %v4571
        %4644 = vmatpush.bf16.msra.mxu0 %v4567
        %4645 = vmatpush.bf16.msra.mxu0 %v4563
        %4646 = vmatpush.bf16.msra.mxu0 %v4559
        %4647 = vmatpush.bf16.msra.mxu0 %v4555
        %4648 = vmatpush.bf16.msra.mxu0 %v4551
        %4649 = vmatpush.bf16.msra.mxu0 %v4547
        %4650 = vmatpush.bf16.msra.mxu0 %v4543
        %4651 = vmatmul.bf16.gmra.mxu0 %v4390
        %v4652 = vpop.f32.mrf.mxu0
        %v4653 = vadd.f32 %v4439, %v4652
        %v4654 = vpop.f32.mrf.mxu0
        %v4655 = vadd.f32 %v4439, %v4654
        %4656 = vmatmul.bf16.gmra.mxu0 %v4391
        %v4657 = vpop.f32.mrf.mxu0
        %v4658 = vadd.f32 %v4439, %v4657
        %v4659 = vpop.f32.mrf.mxu0
        %v4660 = vadd.f32 %v4439, %v4659
        %4661 = vdwg.mxu0
        %4662 = vmatpush.bf16.msra.mxu0 %v4572
        %4663 = vmatpush.bf16.msra.mxu0 %v4568
        %4664 = vmatpush.bf16.msra.mxu0 %v4564
        %4665 = vmatpush.bf16.msra.mxu0 %v4560
        %4666 = vmatpush.bf16.msra.mxu0 %v4556
        %4667 = vmatpush.bf16.msra.mxu0 %v4552
        %4668 = vmatpush.bf16.msra.mxu0 %v4548
        %4669 = vmatpush.bf16.msra.mxu0 %v4544
        %4670 = vmatmul.bf16.gmra.mxu0 %v4390
        %v4671 = vpop.f32.mrf.mxu0
        %v4672 = vadd.f32 %v4440, %v4671
        %v4673 = vpop.f32.mrf.mxu0
        %v4674 = vadd.f32 %v4440, %v4673
        %4675 = vmatmul.bf16.gmra.mxu0 %v4391
        %v4676 = vpop.f32.mrf.mxu0
        %v4677 = vadd.f32 %v4440, %v4676
        %v4678 = vpop.f32.mrf.mxu0
        %v4679 = vadd.f32 %v4440, %v4678
        %4680 = vdwg.mxu0
        %v4681 = vmax.f32 %v4615, 0.0
        %v4682 = vmax.f32 %v4634, 0.0
        %v4683 = vmax.f32 %v4653, 0.0
        %v4684 = vmax.f32 %v4672, 0.0
        %v4685 = vmax.f32 %v4617, 0.0
        %v4686 = vmax.f32 %v4636, 0.0
        %v4687 = vmax.f32 %v4655, 0.0
        %v4688 = vmax.f32 %v4674, 0.0
        %v4689 = vmax.f32 %v4620, 0.0
        %v4690 = vmax.f32 %v4639, 0.0
        %v4691 = vmax.f32 %v4658, 0.0
        %v4692 = vmax.f32 %v4677, 0.0
        %v4693 = vmax.f32 %v4622, 0.0
        %v4694 = vmax.f32 %v4641, 0.0
        %v4695 = vmax.f32 %v4660, 0.0
        %v4696 = vmax.f32 %v4679, 0.0
        %v4697 = vpack.c.bf16 %v4685, %v4681
        %v4698 = vpack.c.bf16 %v4686, %v4682
        %v4699 = vpack.c.bf16 %v4687, %v4683
        %v4700 = vpack.c.bf16 %v4688, %v4684
        %v4701 = vpack.c.bf16 %v4693, %v4689
        %v4702 = vpack.c.bf16 %v4694, %v4690
        %v4703 = vpack.c.bf16 %v4695, %v4691
        %v4704 = vpack.c.bf16 %v4696, %v4692
        %s4705 = scalar_lea.vmem [#allocation5], 1024
        %v4706 = vld [vmem:[%s4705] sm:$0xf]
        %v4707 = vld [vmem:[%s4705 + $0x4] sm:$0xf]
        %v4708 = vld [vmem:[%s4705 + $0x8] sm:$0xf]
        %v4709 = vld [vmem:[%s4705 + $0xc] sm:$0xf]
        %v4710 = vld [vmem:[%s4705 + $0x10] sm:$0xf]
        %v4711 = vld [vmem:[%s4705 + $0x14] sm:$0xf]
        %v4712 = vld [vmem:[%s4705 + $0x18] sm:$0xf]
        %v4713 = vld [vmem:[%s4705 + $0x1c] sm:$0xf]
        %v4714 = vld [vmem:[%s4705 + $0x20] sm:$0xf]
        %v4715 = vld [vmem:[%s4705 + $0x24] sm:$0xf]
        %v4716 = vld [vmem:[%s4705 + $0x28] sm:$0xf]
        %v4717 = vld [vmem:[%s4705 + $0x2c] sm:$0xf]
        %v4718 = vld [vmem:[%s4705 + $0x30] sm:$0xf]
        %v4719 = vld [vmem:[%s4705 + $0x34] sm:$0xf]
        %v4720 = vld [vmem:[%s4705 + $0x38] sm:$0xf]
        %v4721 = vld [vmem:[%s4705 + $0x3c] sm:$0xf]
        %v4722 = vld [vmem:[%s4705 + $0x40] sm:$0xf]
        %v4723 = vld [vmem:[%s4705 + $0x44] sm:$0xf]
        %v4724 = vld [vmem:[%s4705 + $0x48] sm:$0xf]
        %v4725 = vld [vmem:[%s4705 + $0x4c] sm:$0xf]
        %v4726 = vld [vmem:[%s4705 + $0x50] sm:$0xf]
        %v4727 = vld [vmem:[%s4705 + $0x54] sm:$0xf]
        %v4728 = vld [vmem:[%s4705 + $0x58] sm:$0xf]
        %v4729 = vld [vmem:[%s4705 + $0x5c] sm:$0xf]
        %v4730 = vld [vmem:[%s4705 + $0x60] sm:$0xf]
        %v4731 = vld [vmem:[%s4705 + $0x64] sm:$0xf]
        %v4732 = vld [vmem:[%s4705 + $0x68] sm:$0xf]
        %v4733 = vld [vmem:[%s4705 + $0x6c] sm:$0xf]
        %v4734 = vld [vmem:[%s4705 + $0x70] sm:$0xf]
        %v4735 = vld [vmem:[%s4705 + $0x74] sm:$0xf]
        %v4736 = vld [vmem:[%s4705 + $0x78] sm:$0xf]
        %v4737 = vld [vmem:[%s4705 + $0x7c] sm:$0xf]
        %v4738 = vld [vmem:[%s4705 + $0x80] sm:$0xf]
        %v4739 = vld [vmem:[%s4705 + $0x84] sm:$0xf]
        %v4740 = vld [vmem:[%s4705 + $0x88] sm:$0xf]
        %v4741 = vld [vmem:[%s4705 + $0x8c] sm:$0xf]
        %v4742 = vld [vmem:[%s4705 + $0x90] sm:$0xf]
        %v4743 = vld [vmem:[%s4705 + $0x94] sm:$0xf]
        %v4744 = vld [vmem:[%s4705 + $0x98] sm:$0xf]
        %v4745 = vld [vmem:[%s4705 + $0x9c] sm:$0xf]
        %v4746 = vld [vmem:[%s4705 + $0xa0] sm:$0xf]
        %v4747 = vld [vmem:[%s4705 + $0xa4] sm:$0xf]
        %v4748 = vld [vmem:[%s4705 + $0xa8] sm:$0xf]
        %v4749 = vld [vmem:[%s4705 + $0xac] sm:$0xf]
        %v4750 = vld [vmem:[%s4705 + $0xb0] sm:$0xf]
        %v4751 = vld [vmem:[%s4705 + $0xb4] sm:$0xf]
        %v4752 = vld [vmem:[%s4705 + $0xb8] sm:$0xf]
        %v4753 = vld [vmem:[%s4705 + $0xbc] sm:$0xf]
        %v4754 = vld [vmem:[%s4705 + $0xc0] sm:$0xf]
        %v4755 = vld [vmem:[%s4705 + $0xc4] sm:$0xf]
        %v4756 = vld [vmem:[%s4705 + $0xc8] sm:$0xf]
        %v4757 = vld [vmem:[%s4705 + $0xcc] sm:$0xf]
        %v4758 = vld [vmem:[%s4705 + $0xd0] sm:$0xf]
        %v4759 = vld [vmem:[%s4705 + $0xd4] sm:$0xf]
        %v4760 = vld [vmem:[%s4705 + $0xd8] sm:$0xf]
        %v4761 = vld [vmem:[%s4705 + $0xdc] sm:$0xf]
        %v4762 = vld [vmem:[%s4705 + $0xe0] sm:$0xf]
        %v4763 = vld [vmem:[%s4705 + $0xe4] sm:$0xf]
        %v4764 = vld [vmem:[%s4705 + $0xe8] sm:$0xf]
        %v4765 = vld [vmem:[%s4705 + $0xec] sm:$0xf]
        %v4766 = vld [vmem:[%s4705 + $0xf0] sm:$0xf]
        %v4767 = vld [vmem:[%s4705 + $0xf4] sm:$0xf]
        %v4768 = vld [vmem:[%s4705 + $0xf8] sm:$0xf]
        %v4769 = vld [vmem:[%s4705 + $0xfc] sm:$0xf]
        %v4834 = vunpack.c.l.b16 %v4706
        %v4835 = vunpack.c.l.b16 %v4707
        %v4836 = vunpack.c.l.b16 %v4708
        %v4837 = vunpack.c.l.b16 %v4709
        %v4838 = vunpack.c.l.b16 %v4710
        %v4839 = vunpack.c.l.b16 %v4711
        %v4840 = vunpack.c.l.b16 %v4712
        %v4841 = vunpack.c.l.b16 %v4713
        %v4842 = vunpack.c.l.b16 %v4714
        %v4843 = vunpack.c.l.b16 %v4715
        %v4844 = vunpack.c.l.b16 %v4716
        %v4845 = vunpack.c.l.b16 %v4717
        %v4846 = vunpack.c.l.b16 %v4718
        %v4847 = vunpack.c.l.b16 %v4719
        %v4848 = vunpack.c.l.b16 %v4720
        %v4849 = vunpack.c.l.b16 %v4721
        %v4850 = vunpack.c.l.b16 %v4722
        %v4851 = vunpack.c.l.b16 %v4723
        %v4852 = vunpack.c.l.b16 %v4724
        %v4853 = vunpack.c.l.b16 %v4725
        %v4854 = vunpack.c.l.b16 %v4726
        %v4855 = vunpack.c.l.b16 %v4727
        %v4856 = vunpack.c.l.b16 %v4728
        %v4857 = vunpack.c.l.b16 %v4729
        %v4858 = vunpack.c.l.b16 %v4730
        %v4859 = vunpack.c.l.b16 %v4731
        %v4860 = vunpack.c.l.b16 %v4732
        %v4861 = vunpack.c.l.b16 %v4733
        %v4862 = vunpack.c.l.b16 %v4734
        %v4863 = vunpack.c.l.b16 %v4735
        %v4864 = vunpack.c.l.b16 %v4736
        %v4865 = vunpack.c.l.b16 %v4737
        %v4866 = vunpack.c.l.b16 %v4738
        %v4867 = vunpack.c.l.b16 %v4739
        %v4868 = vunpack.c.l.b16 %v4740
        %v4869 = vunpack.c.l.b16 %v4741
        %v4870 = vunpack.c.l.b16 %v4742
        %v4871 = vunpack.c.l.b16 %v4743
        %v4872 = vunpack.c.l.b16 %v4744
        %v4873 = vunpack.c.l.b16 %v4745
        %v4874 = vunpack.c.l.b16 %v4746
        %v4875 = vunpack.c.l.b16 %v4747
        %v4876 = vunpack.c.l.b16 %v4748
        %v4877 = vunpack.c.l.b16 %v4749
        %v4878 = vunpack.c.l.b16 %v4750
        %v4879 = vunpack.c.l.b16 %v4751
        %v4880 = vunpack.c.l.b16 %v4752
        %v4881 = vunpack.c.l.b16 %v4753
        %v4882 = vunpack.c.l.b16 %v4754
        %v4883 = vunpack.c.l.b16 %v4755
        %v4884 = vunpack.c.l.b16 %v4756
        %v4885 = vunpack.c.l.b16 %v4757
        %v4886 = vunpack.c.l.b16 %v4758
        %v4887 = vunpack.c.l.b16 %v4759
        %v4888 = vunpack.c.l.b16 %v4760
        %v4889 = vunpack.c.l.b16 %v4761
        %v4890 = vunpack.c.l.b16 %v4762
        %v4891 = vunpack.c.l.b16 %v4763
        %v4892 = vunpack.c.l.b16 %v4764
        %v4893 = vunpack.c.l.b16 %v4765
        %v4894 = vunpack.c.l.b16 %v4766
        %v4895 = vunpack.c.l.b16 %v4767
        %v4896 = vunpack.c.l.b16 %v4768
        %v4897 = vunpack.c.l.b16 %v4769
        %v4898 = vpack.c.b16 %v4835, %v4834
        %v4899 = vpack.c.b16 %v4837, %v4836
        %v4900 = vpack.c.b16 %v4839, %v4838
        %v4901 = vpack.c.b16 %v4841, %v4840
        %v4902 = vpack.c.b16 %v4843, %v4842
        %v4903 = vpack.c.b16 %v4845, %v4844
        %v4904 = vpack.c.b16 %v4847, %v4846
        %v4905 = vpack.c.b16 %v4849, %v4848
        %v4906 = vpack.c.b16 %v4851, %v4850
        %v4907 = vpack.c.b16 %v4853, %v4852
        %v4908 = vpack.c.b16 %v4855, %v4854
        %v4909 = vpack.c.b16 %v4857, %v4856
        %v4910 = vpack.c.b16 %v4859, %v4858
        %v4911 = vpack.c.b16 %v4861, %v4860
        %v4912 = vpack.c.b16 %v4863, %v4862
        %v4913 = vpack.c.b16 %v4865, %v4864
        %v4914 = vpack.c.b16 %v4867, %v4866
        %v4915 = vpack.c.b16 %v4869, %v4868
        %v4916 = vpack.c.b16 %v4871, %v4870
        %v4917 = vpack.c.b16 %v4873, %v4872
        %v4918 = vpack.c.b16 %v4875, %v4874
        %v4919 = vpack.c.b16 %v4877, %v4876
        %v4920 = vpack.c.b16 %v4879, %v4878
        %v4921 = vpack.c.b16 %v4881, %v4880
        %v4922 = vpack.c.b16 %v4883, %v4882
        %v4923 = vpack.c.b16 %v4885, %v4884
        %v4924 = vpack.c.b16 %v4887, %v4886
        %v4925 = vpack.c.b16 %v4889, %v4888
        %v4926 = vpack.c.b16 %v4891, %v4890
        %v4927 = vpack.c.b16 %v4893, %v4892
        %v4928 = vpack.c.b16 %v4895, %v4894
        %v4929 = vpack.c.b16 %v4897, %v4896
        %4962 = vmatpush.bf16.msra.mxu0 %v4905
        %4963 = vmatpush.bf16.msra.mxu0 %v4904
        %4964 = vmatpush.bf16.msra.mxu0 %v4903
        %4965 = vmatpush.bf16.msra.mxu0 %v4902
        %4966 = vmatpush.bf16.msra.mxu0 %v4901
        %4967 = vmatpush.bf16.msra.mxu0 %v4900
        %4968 = vmatpush.bf16.msra.mxu0 %v4899
        %4969 = vmatpush.bf16.msra.mxu0 %v4898
        %4970 = vmatmul.bf16.gmra.mxu0 %v4697
        %v4971 = vpop.f32.mrf.mxu0
        %v4972 = vadd.f32 0.0, %v4971
        %v4973 = vpop.f32.mrf.mxu0
        %v4974 = vadd.f32 0.0, %v4973
        %4975 = vmatmul.bf16.gmra.mxu0 %v4701
        %v4976 = vpop.f32.mrf.mxu0
        %v4977 = vadd.f32 0.0, %v4976
        %v4978 = vpop.f32.mrf.mxu0
        %v4979 = vadd.f32 0.0, %v4978
        %4980 = vdwg.mxu0
        %4981 = vmatpush.bf16.msra.mxu0 %v4913
        %4982 = vmatpush.bf16.msra.mxu0 %v4912
        %4983 = vmatpush.bf16.msra.mxu0 %v4911
        %4984 = vmatpush.bf16.msra.mxu0 %v4910
        %4985 = vmatpush.bf16.msra.mxu0 %v4909
        %4986 = vmatpush.bf16.msra.mxu0 %v4908
        %4987 = vmatpush.bf16.msra.mxu0 %v4907
        %4988 = vmatpush.bf16.msra.mxu0 %v4906
        %4989 = vmatmul.bf16.gmra.mxu0 %v4698
        %v4990 = vpop.f32.mrf.mxu0
        %v4991 = vadd.f32 %v4972, %v4990
        %v4992 = vpop.f32.mrf.mxu0
        %v4993 = vadd.f32 %v4974, %v4992
        %4994 = vmatmul.bf16.gmra.mxu0 %v4702
        %v4995 = vpop.f32.mrf.mxu0
        %v4996 = vadd.f32 %v4977, %v4995
        %v4997 = vpop.f32.mrf.mxu0
        %v4998 = vadd.f32 %v4979, %v4997
        %4999 = vdwg.mxu0
        %5000 = vmatpush.bf16.msra.mxu0 %v4921
        %5001 = vmatpush.bf16.msra.mxu0 %v4920
        %5002 = vmatpush.bf16.msra.mxu0 %v4919
        %5003 = vmatpush.bf16.msra.mxu0 %v4918
        %5004 = vmatpush.bf16.msra.mxu0 %v4917
        %5005 = vmatpush.bf16.msra.mxu0 %v4916
        %5006 = vmatpush.bf16.msra.mxu0 %v4915
        %5007 = vmatpush.bf16.msra.mxu0 %v4914
        %5008 = vmatmul.bf16.gmra.mxu0 %v4699
        %v5009 = vpop.f32.mrf.mxu0
        %v5010 = vadd.f32 %v4991, %v5009
        %v5011 = vpop.f32.mrf.mxu0
        %v5012 = vadd.f32 %v4993, %v5011
        %5013 = vmatmul.bf16.gmra.mxu0 %v4703
        %v5014 = vpop.f32.mrf.mxu0
        %v5015 = vadd.f32 %v4996, %v5014
        %v5016 = vpop.f32.mrf.mxu0
        %v5017 = vadd.f32 %v4998, %v5016
        %5018 = vdwg.mxu0
        %5019 = vmatpush.bf16.msra.mxu0 %v4929
        %5020 = vmatpush.bf16.msra.mxu0 %v4928
        %5021 = vmatpush.bf16.msra.mxu0 %v4927
        %5022 = vmatpush.bf16.msra.mxu0 %v4926
        %5023 = vmatpush.bf16.msra.mxu0 %v4925
        %5024 = vmatpush.bf16.msra.mxu0 %v4924
        %5025 = vmatpush.bf16.msra.mxu0 %v4923
        %5026 = vmatpush.bf16.msra.mxu0 %v4922
        %5027 = vmatmul.bf16.gmra.mxu0 %v4700
        %v5028 = vpop.f32.mrf.mxu0
        %v5029 = vadd.f32 %v5010, %v5028
        %v5030 = vpop.f32.mrf.mxu0
        %v5031 = vadd.f32 %v5012, %v5030
        %5032 = vmatmul.bf16.gmra.mxu0 %v4704
        %v5033 = vpop.f32.mrf.mxu0
        %v5034 = vadd.f32 %v5015, %v5033
        %v5035 = vpop.f32.mrf.mxu0
        %v5036 = vadd.f32 %v5017, %v5035
        %5037 = vdwg.mxu0
        %v5038 = vadd.f32 %v4397, %v5029
        %v5039 = vadd.f32 %v4398, %v5031
        %v5040 = vadd.f32 %v4399, %v5034
        %v5041 = vadd.f32 %v4400, %v5036
        %v5042 = vld [vmem:[%s4401 + $0x10] sm:$0xff]
        %v5043 = vld [vmem:[%s4401 + $0x18] sm:$0xff]
        %v5044 = vld [vmem:[%s4401 + $0x50] sm:$0xff]
        %v5045 = vld [vmem:[%s4401 + $0x58] sm:$0xff]
        %v5046 = vld [vmem:[%s4401 + $0x90] sm:$0xff]
        %v5047 = vld [vmem:[%s4401 + $0x98] sm:$0xff]
        %v5048 = vld [vmem:[%s4401 + $0xd0] sm:$0xff]
        %v5049 = vld [vmem:[%s4401 + $0xd8] sm:$0xff]
        %v5050 = vld [vmem:[%s4401 + $0x110] sm:$0xff]
        %v5051 = vld [vmem:[%s4401 + $0x118] sm:$0xff]
        %v5052 = vld [vmem:[%s4401 + $0x150] sm:$0xff]
        %v5053 = vld [vmem:[%s4401 + $0x158] sm:$0xff]
        %v5054 = vld [vmem:[%s4401 + $0x190] sm:$0xff]
        %v5055 = vld [vmem:[%s4401 + $0x198] sm:$0xff]
        %v5056 = vld [vmem:[%s4401 + $0x1d0] sm:$0xff]
        %v5057 = vld [vmem:[%s4401 + $0x1d8] sm:$0xff]
        %v5058 = vld [vmem:[%s4401 + $0x210] sm:$0xff]
        %v5059 = vld [vmem:[%s4401 + $0x218] sm:$0xff]
        %v5060 = vld [vmem:[%s4401 + $0x250] sm:$0xff]
        %v5061 = vld [vmem:[%s4401 + $0x258] sm:$0xff]
        %v5062 = vld [vmem:[%s4401 + $0x290] sm:$0xff]
        %v5063 = vld [vmem:[%s4401 + $0x298] sm:$0xff]
        %v5064 = vld [vmem:[%s4401 + $0x2d0] sm:$0xff]
        %v5065 = vld [vmem:[%s4401 + $0x2d8] sm:$0xff]
        %v5066 = vld [vmem:[%s4401 + $0x310] sm:$0xff]
        %v5067 = vld [vmem:[%s4401 + $0x318] sm:$0xff]
        %v5068 = vld [vmem:[%s4401 + $0x350] sm:$0xff]
        %v5069 = vld [vmem:[%s4401 + $0x358] sm:$0xff]
        %v5070 = vld [vmem:[%s4401 + $0x390] sm:$0xff]
        %v5071 = vld [vmem:[%s4401 + $0x398] sm:$0xff]
        %v5072 = vld [vmem:[%s4401 + $0x3d0] sm:$0xff]
        %v5073 = vld [vmem:[%s4401 + $0x3d8] sm:$0xff]
        %v5074 = vld [vmem:[%s4434 + $0x4] sm:$0xf]
        %v5076 = vperm.slane %v5074, 0
        %v5077 = vperm.slane %v5074, 1
        %v5078 = vperm.slane %v5074, 2
        %v5079 = vperm.slane %v5074, 3
        %v5116 = vunpack.c.l.b16 %v5042
        %v5117 = vunpack.c.h.b16 %v5042
        %v5118 = vunpack.c.l.b16 %v5043
        %v5119 = vunpack.c.h.b16 %v5043
        %v5120 = vunpack.c.l.b16 %v5044
        %v5121 = vunpack.c.h.b16 %v5044
        %v5122 = vunpack.c.l.b16 %v5045
        %v5123 = vunpack.c.h.b16 %v5045
        %v5124 = vunpack.c.l.b16 %v5046
        %v5125 = vunpack.c.h.b16 %v5046
        %v5126 = vunpack.c.l.b16 %v5047
        %v5127 = vunpack.c.h.b16 %v5047
        %v5128 = vunpack.c.l.b16 %v5048
        %v5129 = vunpack.c.h.b16 %v5048
        %v5130 = vunpack.c.l.b16 %v5049
        %v5131 = vunpack.c.h.b16 %v5049
        %v5132 = vunpack.c.l.b16 %v5050
        %v5133 = vunpack.c.h.b16 %v5050
        %v5134 = vunpack.c.l.b16 %v5051
        %v5135 = vunpack.c.h.b16 %v5051
        %v5136 = vunpack.c.l.b16 %v5052
        %v5137 = vunpack.c.h.b16 %v5052
        %v5138 = vunpack.c.l.b16 %v5053
        %v5139 = vunpack.c.h.b16 %v5053
        %v5140 = vunpack.c.l.b16 %v5054
        %v5141 = vunpack.c.h.b16 %v5054
        %v5142 = vunpack.c.l.b16 %v5055
        %v5143 = vunpack.c.h.b16 %v5055
        %v5144 = vunpack.c.l.b16 %v5056
        %v5145 = vunpack.c.h.b16 %v5056
        %v5146 = vunpack.c.l.b16 %v5057
        %v5147 = vunpack.c.h.b16 %v5057
        %v5148 = vunpack.c.l.b16 %v5058
        %v5149 = vunpack.c.h.b16 %v5058
        %v5150 = vunpack.c.l.b16 %v5059
        %v5151 = vunpack.c.h.b16 %v5059
        %v5152 = vunpack.c.l.b16 %v5060
        %v5153 = vunpack.c.h.b16 %v5060
        %v5154 = vunpack.c.l.b16 %v5061
        %v5155 = vunpack.c.h.b16 %v5061
        %v5156 = vunpack.c.l.b16 %v5062
        %v5157 = vunpack.c.h.b16 %v5062
        %v5158 = vunpack.c.l.b16 %v5063
        %v5159 = vunpack.c.h.b16 %v5063
        %v5160 = vunpack.c.l.b16 %v5064
        %v5161 = vunpack.c.h.b16 %v5064
        %v5162 = vunpack.c.l.b16 %v5065
        %v5163 = vunpack.c.h.b16 %v5065
        %v5164 = vunpack.c.l.b16 %v5066
        %v5165 = vunpack.c.h.b16 %v5066
        %v5166 = vunpack.c.l.b16 %v5067
        %v5167 = vunpack.c.h.b16 %v5067
        %v5168 = vunpack.c.l.b16 %v5068
        %v5169 = vunpack.c.h.b16 %v5068
        %v5170 = vunpack.c.l.b16 %v5069
        %v5171 = vunpack.c.h.b16 %v5069
        %v5172 = vunpack.c.l.b16 %v5070
        %v5173 = vunpack.c.h.b16 %v5070
        %v5174 = vunpack.c.l.b16 %v5071
        %v5175 = vunpack.c.h.b16 %v5071
        %v5176 = vunpack.c.l.b16 %v5072
        %v5177 = vunpack.c.h.b16 %v5072
        %v5178 = vunpack.c.l.b16 %v5073
        %v5179 = vunpack.c.h.b16 %v5073
        %v5180 = vpack.c.b16 %v5120, %v5116
        %v5181 = vpack.c.b16 %v5121, %v5117
        %v5182 = vpack.c.b16 %v5122, %v5118
        %v5183 = vpack.c.b16 %v5123, %v5119
        %v5184 = vpack.c.b16 %v5128, %v5124
        %v5185 = vpack.c.b16 %v5129, %v5125
        %v5186 = vpack.c.b16 %v5130, %v5126
        %v5187 = vpack.c.b16 %v5131, %v5127
        %v5188 = vpack.c.b16 %v5136, %v5132
        %v5189 = vpack.c.b16 %v5137, %v5133
        %v5190 = vpack.c.b16 %v5138, %v5134
        %v5191 = vpack.c.b16 %v5139, %v5135
        %v5192 = vpack.c.b16 %v5144, %v5140
        %v5193 = vpack.c.b16 %v5145, %v5141
        %v5194 = vpack.c.b16 %v5146, %v5142
        %v5195 = vpack.c.b16 %v5147, %v5143
        %v5196 = vpack.c.b16 %v5152, %v5148
        %v5197 = vpack.c.b16 %v5153, %v5149
        %v5198 = vpack.c.b16 %v5154, %v5150
        %v5199 = vpack.c.b16 %v5155, %v5151
        %v5200 = vpack.c.b16 %v5160, %v5156
        %v5201 = vpack.c.b16 %v5161, %v5157
        %v5202 = vpack.c.b16 %v5162, %v5158
        %v5203 = vpack.c.b16 %v5163, %v5159
        %v5204 = vpack.c.b16 %v5168, %v5164
        %v5205 = vpack.c.b16 %v5169, %v5165
        %v5206 = vpack.c.b16 %v5170, %v5166
        %v5207 = vpack.c.b16 %v5171, %v5167
        %v5208 = vpack.c.b16 %v5176, %v5172
        %v5209 = vpack.c.b16 %v5177, %v5173
        %v5210 = vpack.c.b16 %v5178, %v5174
        %v5211 = vpack.c.b16 %v5179, %v5175
        %5244 = vmatpush.bf16.msra.mxu0 %v5208
        %5245 = vmatpush.bf16.msra.mxu0 %v5204
        %5246 = vmatpush.bf16.msra.mxu0 %v5200
        %5247 = vmatpush.bf16.msra.mxu0 %v5196
        %5248 = vmatpush.bf16.msra.mxu0 %v5192
        %5249 = vmatpush.bf16.msra.mxu0 %v5188
        %5250 = vmatpush.bf16.msra.mxu0 %v5184
        %5251 = vmatpush.bf16.msra.mxu0 %v5180
        %5252 = vmatmul.bf16.gmra.mxu0 %v4390
        %v5253 = vpop.f32.mrf.mxu0
        %v5254 = vadd.f32 %v5076, %v5253
        %v5255 = vpop.f32.mrf.mxu0
        %v5256 = vadd.f32 %v5076, %v5255
        %5257 = vmatmul.bf16.gmra.mxu0 %v4391
        %v5258 = vpop.f32.mrf.mxu0
        %v5259 = vadd.f32 %v5076, %v5258
        %v5260 = vpop.f32.mrf.mxu0
        %v5261 = vadd.f32 %v5076, %v5260
        %5262 = vdwg.mxu0
        %5263 = vmatpush.bf16.msra.mxu0 %v5209
        %5264 = vmatpush.bf16.msra.mxu0 %v5205
        %5265 = vmatpush.bf16.msra.mxu0 %v5201
        %5266 = vmatpush.bf16.msra.mxu0 %v5197
        %5267 = vmatpush.bf16.msra.mxu0 %v5193
        %5268 = vmatpush.bf16.msra.mxu0 %v5189
        %5269 = vmatpush.bf16.msra.mxu0 %v5185
        %5270 = vmatpush.bf16.msra.mxu0 %v5181
        %5271 = vmatmul.bf16.gmra.mxu0 %v4390
        %v5272 = vpop.f32.mrf.mxu0
        %v5273 = vadd.f32 %v5077, %v5272
        %v5274 = vpop.f32.mrf.mxu0
        %v5275 = vadd.f32 %v5077, %v5274
        %5276 = vmatmul.bf16.gmra.mxu0 %v4391
        %v5277 = vpop.f32.mrf.mxu0
        %v5278 = vadd.f32 %v5077, %v5277
        %v5279 = vpop.f32.mrf.mxu0
        %v5280 = vadd.f32 %v5077, %v5279
        %5281 = vdwg.mxu0
        %5282 = vmatpush.bf16.msra.mxu0 %v5210
        %5283 = vmatpush.bf16.msra.mxu0 %v5206
        %5284 = vmatpush.bf16.msra.mxu0 %v5202
        %5285 = vmatpush.bf16.msra.mxu0 %v5198
        %5286 = vmatpush.bf16.msra.mxu0 %v5194
        %5287 = vmatpush.bf16.msra.mxu0 %v5190
        %5288 = vmatpush.bf16.msra.mxu0 %v5186
        %5289 = vmatpush.bf16.msra.mxu0 %v5182
        %5290 = vmatmul.bf16.gmra.mxu0 %v4390
        %v5291 = vpop.f32.mrf.mxu0
        %v5292 = vadd.f32 %v5078, %v5291
        %v5293 = vpop.f32.mrf.mxu0
        %v5294 = vadd.f32 %v5078, %v5293
        %5295 = vmatmul.bf16.gmra.mxu0 %v4391
        %v5296 = vpop.f32.mrf.mxu0
        %v5297 = vadd.f32 %v5078, %v5296
        %v5298 = vpop.f32.mrf.mxu0
        %v5299 = vadd.f32 %v5078, %v5298
        %5300 = vdwg.mxu0
        %5301 = vmatpush.bf16.msra.mxu0 %v5211
        %5302 = vmatpush.bf16.msra.mxu0 %v5207
        %5303 = vmatpush.bf16.msra.mxu0 %v5203
        %5304 = vmatpush.bf16.msra.mxu0 %v5199
        %5305 = vmatpush.bf16.msra.mxu0 %v5195
        %5306 = vmatpush.bf16.msra.mxu0 %v5191
        %5307 = vmatpush.bf16.msra.mxu0 %v5187
        %5308 = vmatpush.bf16.msra.mxu0 %v5183
        %5309 = vmatmul.bf16.gmra.mxu0 %v4390
        %v5310 = vpop.f32.mrf.mxu0
        %v5311 = vadd.f32 %v5079, %v5310
        %v5312 = vpop.f32.mrf.mxu0
        %v5313 = vadd.f32 %v5079, %v5312
        %5314 = vmatmul.bf16.gmra.mxu0 %v4391
        %v5315 = vpop.f32.mrf.mxu0
        %v5316 = vadd.f32 %v5079, %v5315
        %v5317 = vpop.f32.mrf.mxu0
        %v5318 = vadd.f32 %v5079, %v5317
        %5319 = vdwg.mxu0
        %v5320 = vmax.f32 %v5254, 0.0
        %v5321 = vmax.f32 %v5273, 0.0
        %v5322 = vmax.f32 %v5292, 0.0
        %v5323 = vmax.f32 %v5311, 0.0
        %v5324 = vmax.f32 %v5256, 0.0
        %v5325 = vmax.f32 %v5275, 0.0
        %v5326 = vmax.f32 %v5294, 0.0
        %v5327 = vmax.f32 %v5313, 0.0
        %v5328 = vmax.f32 %v5259, 0.0
        %v5329 = vmax.f32 %v5278, 0.0
        %v5330 = vmax.f32 %v5297, 0.0
        %v5331 = vmax.f32 %v5316, 0.0
        %v5332 = vmax.f32 %v5261, 0.0
        %v5333 = vmax.f32 %v5280, 0.0
        %v5334 = vmax.f32 %v5299, 0.0
        %v5335 = vmax.f32 %v5318, 0.0
        %v5336 = vpack.c.bf16 %v5324, %v5320
        %v5337 = vpack.c.bf16 %v5325, %v5321
        %v5338 = vpack.c.bf16 %v5326, %v5322
        %v5339 = vpack.c.bf16 %v5327, %v5323
        %v5340 = vpack.c.bf16 %v5332, %v5328
        %v5341 = vpack.c.bf16 %v5333, %v5329
        %v5342 = vpack.c.bf16 %v5334, %v5330
        %v5343 = vpack.c.bf16 %v5335, %v5331
        %v5344 = vld [vmem:[%s4705 + $0x100] sm:$0xf]
        %v5345 = vld [vmem:[%s4705 + $0x104] sm:$0xf]
        %v5346 = vld [vmem:[%s4705 + $0x108] sm:$0xf]
        %v5347 = vld [vmem:[%s4705 + $0x10c] sm:$0xf]
        %v5348 = vld [vmem:[%s4705 + $0x110] sm:$0xf]
        %v5349 = vld [vmem:[%s4705 + $0x114] sm:$0xf]
        %v5350 = vld [vmem:[%s4705 + $0x118] sm:$0xf]
        %v5351 = vld [vmem:[%s4705 + $0x11c] sm:$0xf]
        %v5352 = vld [vmem:[%s4705 + $0x120] sm:$0xf]
        %v5353 = vld [vmem:[%s4705 + $0x124] sm:$0xf]
        %v5354 = vld [vmem:[%s4705 + $0x128] sm:$0xf]
        %v5355 = vld [vmem:[%s4705 + $0x12c] sm:$0xf]
        %v5356 = vld [vmem:[%s4705 + $0x130] sm:$0xf]
        %v5357 = vld [vmem:[%s4705 + $0x134] sm:$0xf]
        %v5358 = vld [vmem:[%s4705 + $0x138] sm:$0xf]
        %v5359 = vld [vmem:[%s4705 + $0x13c] sm:$0xf]
        %v5360 = vld [vmem:[%s4705 + $0x140] sm:$0xf]
        %v5361 = vld [vmem:[%s4705 + $0x144] sm:$0xf]
        %v5362 = vld [vmem:[%s4705 + $0x148] sm:$0xf]
        %v5363 = vld [vmem:[%s4705 + $0x14c] sm:$0xf]
        %v5364 = vld [vmem:[%s4705 + $0x150] sm:$0xf]
        %v5365 = vld [vmem:[%s4705 + $0x154] sm:$0xf]
        %v5366 = vld [vmem:[%s4705 + $0x158] sm:$0xf]
        %v5367 = vld [vmem:[%s4705 + $0x15c] sm:$0xf]
        %v5368 = vld [vmem:[%s4705 + $0x160] sm:$0xf]
        %v5369 = vld [vmem:[%s4705 + $0x164] sm:$0xf]
        %v5370 = vld [vmem:[%s4705 + $0x168] sm:$0xf]
        %v5371 = vld [vmem:[%s4705 + $0x16c] sm:$0xf]
        %v5372 = vld [vmem:[%s4705 + $0x170] sm:$0xf]
        %v5373 = vld [vmem:[%s4705 + $0x174] sm:$0xf]
        %v5374 = vld [vmem:[%s4705 + $0x178] sm:$0xf]
        %v5375 = vld [vmem:[%s4705 + $0x17c] sm:$0xf]
        %v5376 = vld [vmem:[%s4705 + $0x180] sm:$0xf]
        %v5377 = vld [vmem:[%s4705 + $0x184] sm:$0xf]
        %v5378 = vld [vmem:[%s4705 + $0x188] sm:$0xf]
        %v5379 = vld [vmem:[%s4705 + $0x18c] sm:$0xf]
        %v5380 = vld [vmem:[%s4705 + $0x190] sm:$0xf]
        %v5381 = vld [vmem:[%s4705 + $0x194] sm:$0xf]
        %v5382 = vld [vmem:[%s4705 + $0x198] sm:$0xf]
        %v5383 = vld [vmem:[%s4705 + $0x19c] sm:$0xf]
        %v5384 = vld [vmem:[%s4705 + $0x1a0] sm:$0xf]
        %v5385 = vld [vmem:[%s4705 + $0x1a4] sm:$0xf]
        %v5386 = vld [vmem:[%s4705 + $0x1a8] sm:$0xf]
        %v5387 = vld [vmem:[%s4705 + $0x1ac] sm:$0xf]
        %v5388 = vld [vmem:[%s4705 + $0x1b0] sm:$0xf]
        %v5389 = vld [vmem:[%s4705 + $0x1b4] sm:$0xf]
        %v5390 = vld [vmem:[%s4705 + $0x1b8] sm:$0xf]
        %v5391 = vld [vmem:[%s4705 + $0x1bc] sm:$0xf]
        %v5392 = vld [vmem:[%s4705 + $0x1c0] sm:$0xf]
        %v5393 = vld [vmem:[%s4705 + $0x1c4] sm:$0xf]
        %v5394 = vld [vmem:[%s4705 + $0x1c8] sm:$0xf]
        %v5395 = vld [vmem:[%s4705 + $0x1cc] sm:$0xf]
        %v5396 = vld [vmem:[%s4705 + $0x1d0] sm:$0xf]
        %v5397 = vld [vmem:[%s4705 + $0x1d4] sm:$0xf]
        %v5398 = vld [vmem:[%s4705 + $0x1d8] sm:$0xf]
        %v5399 = vld [vmem:[%s4705 + $0x1dc] sm:$0xf]
        %v5400 = vld [vmem:[%s4705 + $0x1e0] sm:$0xf]
        %v5401 = vld [vmem:[%s4705 + $0x1e4] sm:$0xf]
        %v5402 = vld [vmem:[%s4705 + $0x1e8] sm:$0xf]
        %v5403 = vld [vmem:[%s4705 + $0x1ec] sm:$0xf]
        %v5404 = vld [vmem:[%s4705 + $0x1f0] sm:$0xf]
        %v5405 = vld [vmem:[%s4705 + $0x1f4] sm:$0xf]
        %v5406 = vld [vmem:[%s4705 + $0x1f8] sm:$0xf]
        %v5407 = vld [vmem:[%s4705 + $0x1fc] sm:$0xf]
        %v5472 = vunpack.c.l.b16 %v5344
        %v5473 = vunpack.c.l.b16 %v5345
        %v5474 = vunpack.c.l.b16 %v5346
        %v5475 = vunpack.c.l.b16 %v5347
        %v5476 = vunpack.c.l.b16 %v5348
        %v5477 = vunpack.c.l.b16 %v5349
        %v5478 = vunpack.c.l.b16 %v5350
        %v5479 = vunpack.c.l.b16 %v5351
        %v5480 = vunpack.c.l.b16 %v5352
        %v5481 = vunpack.c.l.b16 %v5353
        %v5482 = vunpack.c.l.b16 %v5354
        %v5483 = vunpack.c.l.b16 %v5355
        %v5484 = vunpack.c.l.b16 %v5356
        %v5485 = vunpack.c.l.b16 %v5357
        %v5486 = vunpack.c.l.b16 %v5358
        %v5487 = vunpack.c.l.b16 %v5359
        %v5488 = vunpack.c.l.b16 %v5360
        %v5489 = vunpack.c.l.b16 %v5361
        %v5490 = vunpack.c.l.b16 %v5362
        %v5491 = vunpack.c.l.b16 %v5363
        %v5492 = vunpack.c.l.b16 %v5364
        %v5493 = vunpack.c.l.b16 %v5365
        %v5494 = vunpack.c.l.b16 %v5366
        %v5495 = vunpack.c.l.b16 %v5367
        %v5496 = vunpack.c.l.b16 %v5368
        %v5497 = vunpack.c.l.b16 %v5369
        %v5498 = vunpack.c.l.b16 %v5370
        %v5499 = vunpack.c.l.b16 %v5371
        %v5500 = vunpack.c.l.b16 %v5372
        %v5501 = vunpack.c.l.b16 %v5373
        %v5502 = vunpack.c.l.b16 %v5374
        %v5503 = vunpack.c.l.b16 %v5375
        %v5504 = vunpack.c.l.b16 %v5376
        %v5505 = vunpack.c.l.b16 %v5377
        %v5506 = vunpack.c.l.b16 %v5378
        %v5507 = vunpack.c.l.b16 %v5379
        %v5508 = vunpack.c.l.b16 %v5380
        %v5509 = vunpack.c.l.b16 %v5381
        %v5510 = vunpack.c.l.b16 %v5382
        %v5511 = vunpack.c.l.b16 %v5383
        %v5512 = vunpack.c.l.b16 %v5384
        %v5513 = vunpack.c.l.b16 %v5385
        %v5514 = vunpack.c.l.b16 %v5386
        %v5515 = vunpack.c.l.b16 %v5387
        %v5516 = vunpack.c.l.b16 %v5388
        %v5517 = vunpack.c.l.b16 %v5389
        %v5518 = vunpack.c.l.b16 %v5390
        %v5519 = vunpack.c.l.b16 %v5391
        %v5520 = vunpack.c.l.b16 %v5392
        %v5521 = vunpack.c.l.b16 %v5393
        %v5522 = vunpack.c.l.b16 %v5394
        %v5523 = vunpack.c.l.b16 %v5395
        %v5524 = vunpack.c.l.b16 %v5396
        %v5525 = vunpack.c.l.b16 %v5397
        %v5526 = vunpack.c.l.b16 %v5398
        %v5527 = vunpack.c.l.b16 %v5399
        %v5528 = vunpack.c.l.b16 %v5400
        %v5529 = vunpack.c.l.b16 %v5401
        %v5530 = vunpack.c.l.b16 %v5402
        %v5531 = vunpack.c.l.b16 %v5403
        %v5532 = vunpack.c.l.b16 %v5404
        %v5533 = vunpack.c.l.b16 %v5405
        %v5534 = vunpack.c.l.b16 %v5406
        %v5535 = vunpack.c.l.b16 %v5407
        %v5536 = vpack.c.b16 %v5473, %v5472
        %v5537 = vpack.c.b16 %v5475, %v5474
        %v5538 = vpack.c.b16 %v5477, %v5476
        %v5539 = vpack.c.b16 %v5479, %v5478
        %v5540 = vpack.c.b16 %v5481, %v5480
        %v5541 = vpack.c.b16 %v5483, %v5482
        %v5542 = vpack.c.b16 %v5485, %v5484
        %v5543 = vpack.c.b16 %v5487, %v5486
        %v5544 = vpack.c.b16 %v5489, %v5488
        %v5545 = vpack.c.b16 %v5491, %v5490
        %v5546 = vpack.c.b16 %v5493, %v5492
        %v5547 = vpack.c.b16 %v5495, %v5494
        %v5548 = vpack.c.b16 %v5497, %v5496
        %v5549 = vpack.c.b16 %v5499, %v5498
        %v5550 = vpack.c.b16 %v5501, %v5500
        %v5551 = vpack.c.b16 %v5503, %v5502
        %v5552 = vpack.c.b16 %v5505, %v5504
        %v5553 = vpack.c.b16 %v5507, %v5506
        %v5554 = vpack.c.b16 %v5509, %v5508
        %v5555 = vpack.c.b16 %v5511, %v5510
        %v5556 = vpack.c.b16 %v5513, %v5512
        %v5557 = vpack.c.b16 %v5515, %v5514
        %v5558 = vpack.c.b16 %v5517, %v5516
        %v5559 = vpack.c.b16 %v5519, %v5518
        %v5560 = vpack.c.b16 %v5521, %v5520
        %v5561 = vpack.c.b16 %v5523, %v5522
        %v5562 = vpack.c.b16 %v5525, %v5524
        %v5563 = vpack.c.b16 %v5527, %v5526
        %v5564 = vpack.c.b16 %v5529, %v5528
        %v5565 = vpack.c.b16 %v5531, %v5530
        %v5566 = vpack.c.b16 %v5533, %v5532
        %v5567 = vpack.c.b16 %v5535, %v5534
        %5600 = vmatpush.bf16.msra.mxu0 %v5543
        %5601 = vmatpush.bf16.msra.mxu0 %v5542
        %5602 = vmatpush.bf16.msra.mxu0 %v5541
        %5603 = vmatpush.bf16.msra.mxu0 %v5540
        %5604 = vmatpush.bf16.msra.mxu0 %v5539
        %5605 = vmatpush.bf16.msra.mxu0 %v5538
        %5606 = vmatpush.bf16.msra.mxu0 %v5537
        %5607 = vmatpush.bf16.msra.mxu0 %v5536
        %5608 = vmatmul.bf16.gmra.mxu0 %v5336
        %v5609 = vpop.f32.mrf.mxu0
        %v5610 = vadd.f32 0.0, %v5609
        %v5611 = vpop.f32.mrf.mxu0
        %v5612 = vadd.f32 0.0, %v5611
        %5613 = vmatmul.bf16.gmra.mxu0 %v5340
        %v5614 = vpop.f32.mrf.mxu0
        %v5615 = vadd.f32 0.0, %v5614
        %v5616 = vpop.f32.mrf.mxu0
        %v5617 = vadd.f32 0.0, %v5616
        %5618 = vdwg.mxu0
        %5619 = vmatpush.bf16.msra.mxu0 %v5551
        %5620 = vmatpush.bf16.msra.mxu0 %v5550
        %5621 = vmatpush.bf16.msra.mxu0 %v5549
        %5622 = vmatpush.bf16.msra.mxu0 %v5548
        %5623 = vmatpush.bf16.msra.mxu0 %v5547
        %5624 = vmatpush.bf16.msra.mxu0 %v5546
        %5625 = vmatpush.bf16.msra.mxu0 %v5545
        %5626 = vmatpush.bf16.msra.mxu0 %v5544
        %5627 = vmatmul.bf16.gmra.mxu0 %v5337
        %v5628 = vpop.f32.mrf.mxu0
        %v5629 = vadd.f32 %v5610, %v5628
        %v5630 = vpop.f32.mrf.mxu0
        %v5631 = vadd.f32 %v5612, %v5630
        %5632 = vmatmul.bf16.gmra.mxu0 %v5341
        %v5633 = vpop.f32.mrf.mxu0
        %v5634 = vadd.f32 %v5615, %v5633
        %v5635 = vpop.f32.mrf.mxu0
        %v5636 = vadd.f32 %v5617, %v5635
        %5637 = vdwg.mxu0
        %5638 = vmatpush.bf16.msra.mxu0 %v5559
        %5639 = vmatpush.bf16.msra.mxu0 %v5558
        %5640 = vmatpush.bf16.msra.mxu0 %v5557
        %5641 = vmatpush.bf16.msra.mxu0 %v5556
        %5642 = vmatpush.bf16.msra.mxu0 %v5555
        %5643 = vmatpush.bf16.msra.mxu0 %v5554
        %5644 = vmatpush.bf16.msra.mxu0 %v5553
        %5645 = vmatpush.bf16.msra.mxu0 %v5552
        %5646 = vmatmul.bf16.gmra.mxu0 %v5338
        %v5647 = vpop.f32.mrf.mxu0
        %v5648 = vadd.f32 %v5629, %v5647
        %v5649 = vpop.f32.mrf.mxu0
        %v5650 = vadd.f32 %v5631, %v5649
        %5651 = vmatmul.bf16.gmra.mxu0 %v5342
        %v5652 = vpop.f32.mrf.mxu0
        %v5653 = vadd.f32 %v5634, %v5652
        %v5654 = vpop.f32.mrf.mxu0
        %v5655 = vadd.f32 %v5636, %v5654
        %5656 = vdwg.mxu0
        %5657 = vmatpush.bf16.msra.mxu0 %v5567
        %5658 = vmatpush.bf16.msra.mxu0 %v5566
        %5659 = vmatpush.bf16.msra.mxu0 %v5565
        %5660 = vmatpush.bf16.msra.mxu0 %v5564
        %5661 = vmatpush.bf16.msra.mxu0 %v5563
        %5662 = vmatpush.bf16.msra.mxu0 %v5562
        %5663 = vmatpush.bf16.msra.mxu0 %v5561
        %5664 = vmatpush.bf16.msra.mxu0 %v5560
        %5665 = vmatmul.bf16.gmra.mxu0 %v5339
        %v5666 = vpop.f32.mrf.mxu0
        %v5667 = vadd.f32 %v5648, %v5666
        %v5668 = vpop.f32.mrf.mxu0
        %v5669 = vadd.f32 %v5650, %v5668
        %5670 = vmatmul.bf16.gmra.mxu0 %v5343
        %v5671 = vpop.f32.mrf.mxu0
        %v5672 = vadd.f32 %v5653, %v5671
        %v5673 = vpop.f32.mrf.mxu0
        %v5674 = vadd.f32 %v5655, %v5673
        %5675 = vdwg.mxu0
        %v5676 = vadd.f32 %v5038, %v5667
        %v5677 = vadd.f32 %v5039, %v5669
        %v5678 = vadd.f32 %v5040, %v5672
        %v5679 = vadd.f32 %v5041, %v5674
        %v5680 = vld [vmem:[%s4401 + $0x20] sm:$0xff]
        %v5681 = vld [vmem:[%s4401 + $0x28] sm:$0xff]
        %v5682 = vld [vmem:[%s4401 + $0x60] sm:$0xff]
        %v5683 = vld [vmem:[%s4401 + $0x68] sm:$0xff]
        %v5684 = vld [vmem:[%s4401 + $0xa0] sm:$0xff]
        %v5685 = vld [vmem:[%s4401 + $0xa8] sm:$0xff]
        %v5686 = vld [vmem:[%s4401 + $0xe0] sm:$0xff]
        %v5687 = vld [vmem:[%s4401 + $0xe8] sm:$0xff]
        %v5688 = vld [vmem:[%s4401 + $0x120] sm:$0xff]
        %v5689 = vld [vmem:[%s4401 + $0x128] sm:$0xff]
        %v5690 = vld [vmem:[%s4401 + $0x160] sm:$0xff]
        %v5691 = vld [vmem:[%s4401 + $0x168] sm:$0xff]
        %v5692 = vld [vmem:[%s4401 + $0x1a0] sm:$0xff]
        %v5693 = vld [vmem:[%s4401 + $0x1a8] sm:$0xff]
        %v5694 = vld [vmem:[%s4401 + $0x1e0] sm:$0xff]
        %v5695 = vld [vmem:[%s4401 + $0x1e8] sm:$0xff]
        %v5696 = vld [vmem:[%s4401 + $0x220] sm:$0xff]
        %v5697 = vld [vmem:[%s4401 + $0x228] sm:$0xff]
        %v5698 = vld [vmem:[%s4401 + $0x260] sm:$0xff]
        %v5699 = vld [vmem:[%s4401 + $0x268] sm:$0xff]
        %v5700 = vld [vmem:[%s4401 + $0x2a0] sm:$0xff]
        %v5701 = vld [vmem:[%s4401 + $0x2a8] sm:$0xff]
        %v5702 = vld [vmem:[%s4401 + $0x2e0] sm:$0xff]
        %v5703 = vld [vmem:[%s4401 + $0x2e8] sm:$0xff]
        %v5704 = vld [vmem:[%s4401 + $0x320] sm:$0xff]
        %v5705 = vld [vmem:[%s4401 + $0x328] sm:$0xff]
        %v5706 = vld [vmem:[%s4401 + $0x360] sm:$0xff]
        %v5707 = vld [vmem:[%s4401 + $0x368] sm:$0xff]
        %v5708 = vld [vmem:[%s4401 + $0x3a0] sm:$0xff]
        %v5709 = vld [vmem:[%s4401 + $0x3a8] sm:$0xff]
        %v5710 = vld [vmem:[%s4401 + $0x3e0] sm:$0xff]
        %v5711 = vld [vmem:[%s4401 + $0x3e8] sm:$0xff]
        %v5712 = vld [vmem:[%s4434 + $0x8] sm:$0xf]
        %v5714 = vperm.slane %v5712, 0
        %v5715 = vperm.slane %v5712, 1
        %v5716 = vperm.slane %v5712, 2
        %v5717 = vperm.slane %v5712, 3
        %v5754 = vunpack.c.l.b16 %v5680
        %v5755 = vunpack.c.h.b16 %v5680
        %v5756 = vunpack.c.l.b16 %v5681
        %v5757 = vunpack.c.h.b16 %v5681
        %v5758 = vunpack.c.l.b16 %v5682
        %v5759 = vunpack.c.h.b16 %v5682
        %v5760 = vunpack.c.l.b16 %v5683
        %v5761 = vunpack.c.h.b16 %v5683
        %v5762 = vunpack.c.l.b16 %v5684
        %v5763 = vunpack.c.h.b16 %v5684
        %v5764 = vunpack.c.l.b16 %v5685
        %v5765 = vunpack.c.h.b16 %v5685
        %v5766 = vunpack.c.l.b16 %v5686
        %v5767 = vunpack.c.h.b16 %v5686
        %v5768 = vunpack.c.l.b16 %v5687
        %v5769 = vunpack.c.h.b16 %v5687
        %v5770 = vunpack.c.l.b16 %v5688
        %v5771 = vunpack.c.h.b16 %v5688
        %v5772 = vunpack.c.l.b16 %v5689
        %v5773 = vunpack.c.h.b16 %v5689
        %v5774 = vunpack.c.l.b16 %v5690
        %v5775 = vunpack.c.h.b16 %v5690
        %v5776 = vunpack.c.l.b16 %v5691
        %v5777 = vunpack.c.h.b16 %v5691
        %v5778 = vunpack.c.l.b16 %v5692
        %v5779 = vunpack.c.h.b16 %v5692
        %v5780 = vunpack.c.l.b16 %v5693
        %v5781 = vunpack.c.h.b16 %v5693
        %v5782 = vunpack.c.l.b16 %v5694
        %v5783 = vunpack.c.h.b16 %v5694
        %v5784 = vunpack.c.l.b16 %v5695
        %v5785 = vunpack.c.h.b16 %v5695
        %v5786 = vunpack.c.l.b16 %v5696
        %v5787 = vunpack.c.h.b16 %v5696
        %v5788 = vunpack.c.l.b16 %v5697
        %v5789 = vunpack.c.h.b16 %v5697
        %v5790 = vunpack.c.l.b16 %v5698
        %v5791 = vunpack.c.h.b16 %v5698
        %v5792 = vunpack.c.l.b16 %v5699
        %v5793 = vunpack.c.h.b16 %v5699
        %v5794 = vunpack.c.l.b16 %v5700
        %v5795 = vunpack.c.h.b16 %v5700
        %v5796 = vunpack.c.l.b16 %v5701
        %v5797 = vunpack.c.h.b16 %v5701
        %v5798 = vunpack.c.l.b16 %v5702
        %v5799 = vunpack.c.h.b16 %v5702
        %v5800 = vunpack.c.l.b16 %v5703
        %v5801 = vunpack.c.h.b16 %v5703
        %v5802 = vunpack.c.l.b16 %v5704
        %v5803 = vunpack.c.h.b16 %v5704
        %v5804 = vunpack.c.l.b16 %v5705
        %v5805 = vunpack.c.h.b16 %v5705
        %v5806 = vunpack.c.l.b16 %v5706
        %v5807 = vunpack.c.h.b16 %v5706
        %v5808 = vunpack.c.l.b16 %v5707
        %v5809 = vunpack.c.h.b16 %v5707
        %v5810 = vunpack.c.l.b16 %v5708
        %v5811 = vunpack.c.h.b16 %v5708
        %v5812 = vunpack.c.l.b16 %v5709
        %v5813 = vunpack.c.h.b16 %v5709
        %v5814 = vunpack.c.l.b16 %v5710
        %v5815 = vunpack.c.h.b16 %v5710
        %v5816 = vunpack.c.l.b16 %v5711
        %v5817 = vunpack.c.h.b16 %v5711
        %v5818 = vpack.c.b16 %v5758, %v5754
        %v5819 = vpack.c.b16 %v5759, %v5755
        %v5820 = vpack.c.b16 %v5760, %v5756
        %v5821 = vpack.c.b16 %v5761, %v5757
        %v5822 = vpack.c.b16 %v5766, %v5762
        %v5823 = vpack.c.b16 %v5767, %v5763
        %v5824 = vpack.c.b16 %v5768, %v5764
        %v5825 = vpack.c.b16 %v5769, %v5765
        %v5826 = vpack.c.b16 %v5774, %v5770
        %v5827 = vpack.c.b16 %v5775, %v5771
        %v5828 = vpack.c.b16 %v5776, %v5772
        %v5829 = vpack.c.b16 %v5777, %v5773
        %v5830 = vpack.c.b16 %v5782, %v5778
        %v5831 = vpack.c.b16 %v5783, %v5779
        %v5832 = vpack.c.b16 %v5784, %v5780
        %v5833 = vpack.c.b16 %v5785, %v5781
        %v5834 = vpack.c.b16 %v5790, %v5786
        %v5835 = vpack.c.b16 %v5791, %v5787
        %v5836 = vpack.c.b16 %v5792, %v5788
        %v5837 = vpack.c.b16 %v5793, %v5789
        %v5838 = vpack.c.b16 %v5798, %v5794
        %v5839 = vpack.c.b16 %v5799, %v5795
        %v5840 = vpack.c.b16 %v5800, %v5796
        %v5841 = vpack.c.b16 %v5801, %v5797
        %v5842 = vpack.c.b16 %v5806, %v5802
        %v5843 = vpack.c.b16 %v5807, %v5803
        %v5844 = vpack.c.b16 %v5808, %v5804
        %v5845 = vpack.c.b16 %v5809, %v5805
        %v5846 = vpack.c.b16 %v5814, %v5810
        %v5847 = vpack.c.b16 %v5815, %v5811
        %v5848 = vpack.c.b16 %v5816, %v5812
        %v5849 = vpack.c.b16 %v5817, %v5813
        %5882 = vmatpush.bf16.msra.mxu0 %v5846
        %5883 = vmatpush.bf16.msra.mxu0 %v5842
        %5884 = vmatpush.bf16.msra.mxu0 %v5838
        %5885 = vmatpush.bf16.msra.mxu0 %v5834
        %5886 = vmatpush.bf16.msra.mxu0 %v5830
        %5887 = vmatpush.bf16.msra.mxu0 %v5826
        %5888 = vmatpush.bf16.msra.mxu0 %v5822
        %5889 = vmatpush.bf16.msra.mxu0 %v5818
        %5890 = vmatmul.bf16.gmra.mxu0 %v4390
        %v5891 = vpop.f32.mrf.mxu0
        %v5892 = vadd.f32 %v5714, %v5891
        %v5893 = vpop.f32.mrf.mxu0
        %v5894 = vadd.f32 %v5714, %v5893
        %5895 = vmatmul.bf16.gmra.mxu0 %v4391
        %v5896 = vpop.f32.mrf.mxu0
        %v5897 = vadd.f32 %v5714, %v5896
        %v5898 = vpop.f32.mrf.mxu0
        %v5899 = vadd.f32 %v5714, %v5898
        %5900 = vdwg.mxu0
        %5901 = vmatpush.bf16.msra.mxu0 %v5847
        %5902 = vmatpush.bf16.msra.mxu0 %v5843
        %5903 = vmatpush.bf16.msra.mxu0 %v5839
        %5904 = vmatpush.bf16.msra.mxu0 %v5835
        %5905 = vmatpush.bf16.msra.mxu0 %v5831
        %5906 = vmatpush.bf16.msra.mxu0 %v5827
        %5907 = vmatpush.bf16.msra.mxu0 %v5823
        %5908 = vmatpush.bf16.msra.mxu0 %v5819
        %5909 = vmatmul.bf16.gmra.mxu0 %v4390
        %v5910 = vpop.f32.mrf.mxu0
        %v5911 = vadd.f32 %v5715, %v5910
        %v5912 = vpop.f32.mrf.mxu0
        %v5913 = vadd.f32 %v5715, %v5912
        %5914 = vmatmul.bf16.gmra.mxu0 %v4391
        %v5915 = vpop.f32.mrf.mxu0
        %v5916 = vadd.f32 %v5715, %v5915
        %v5917 = vpop.f32.mrf.mxu0
        %v5918 = vadd.f32 %v5715, %v5917
        %5919 = vdwg.mxu0
        %5920 = vmatpush.bf16.msra.mxu0 %v5848
        %5921 = vmatpush.bf16.msra.mxu0 %v5844
        %5922 = vmatpush.bf16.msra.mxu0 %v5840
        %5923 = vmatpush.bf16.msra.mxu0 %v5836
        %5924 = vmatpush.bf16.msra.mxu0 %v5832
        %5925 = vmatpush.bf16.msra.mxu0 %v5828
        %5926 = vmatpush.bf16.msra.mxu0 %v5824
        %5927 = vmatpush.bf16.msra.mxu0 %v5820
        %5928 = vmatmul.bf16.gmra.mxu0 %v4390
        %v5929 = vpop.f32.mrf.mxu0
        %v5930 = vadd.f32 %v5716, %v5929
        %v5931 = vpop.f32.mrf.mxu0
        %v5932 = vadd.f32 %v5716, %v5931
        %5933 = vmatmul.bf16.gmra.mxu0 %v4391
        %v5934 = vpop.f32.mrf.mxu0
        %v5935 = vadd.f32 %v5716, %v5934
        %v5936 = vpop.f32.mrf.mxu0
        %v5937 = vadd.f32 %v5716, %v5936
        %5938 = vdwg.mxu0
        %5939 = vmatpush.bf16.msra.mxu0 %v5849
        %5940 = vmatpush.bf16.msra.mxu0 %v5845
        %5941 = vmatpush.bf16.msra.mxu0 %v5841
        %5942 = vmatpush.bf16.msra.mxu0 %v5837
        %5943 = vmatpush.bf16.msra.mxu0 %v5833
        %5944 = vmatpush.bf16.msra.mxu0 %v5829
        %5945 = vmatpush.bf16.msra.mxu0 %v5825
        %5946 = vmatpush.bf16.msra.mxu0 %v5821
        %5947 = vmatmul.bf16.gmra.mxu0 %v4390
        %v5948 = vpop.f32.mrf.mxu0
        %v5949 = vadd.f32 %v5717, %v5948
        %v5950 = vpop.f32.mrf.mxu0
        %v5951 = vadd.f32 %v5717, %v5950
        %5952 = vmatmul.bf16.gmra.mxu0 %v4391
        %v5953 = vpop.f32.mrf.mxu0
        %v5954 = vadd.f32 %v5717, %v5953
        %v5955 = vpop.f32.mrf.mxu0
        %v5956 = vadd.f32 %v5717, %v5955
        %5957 = vdwg.mxu0
        %v5958 = vmax.f32 %v5892, 0.0
        %v5959 = vmax.f32 %v5911, 0.0
        %v5960 = vmax.f32 %v5930, 0.0
        %v5961 = vmax.f32 %v5949, 0.0
        %v5962 = vmax.f32 %v5894, 0.0
        %v5963 = vmax.f32 %v5913, 0.0
        %v5964 = vmax.f32 %v5932, 0.0
        %v5965 = vmax.f32 %v5951, 0.0
        %v5966 = vmax.f32 %v5897, 0.0
        %v5967 = vmax.f32 %v5916, 0.0
        %v5968 = vmax.f32 %v5935, 0.0
        %v5969 = vmax.f32 %v5954, 0.0
        %v5970 = vmax.f32 %v5899, 0.0
        %v5971 = vmax.f32 %v5918, 0.0
        %v5972 = vmax.f32 %v5937, 0.0
        %v5973 = vmax.f32 %v5956, 0.0
        %v5974 = vpack.c.bf16 %v5962, %v5958
        %v5975 = vpack.c.bf16 %v5963, %v5959
        %v5976 = vpack.c.bf16 %v5964, %v5960
        %v5977 = vpack.c.bf16 %v5965, %v5961
        %v5978 = vpack.c.bf16 %v5970, %v5966
        %v5979 = vpack.c.bf16 %v5971, %v5967
        %v5980 = vpack.c.bf16 %v5972, %v5968
        %v5981 = vpack.c.bf16 %v5973, %v5969
        %v5982 = vld [vmem:[%s4705 + $0x200] sm:$0xf]
        %v5983 = vld [vmem:[%s4705 + $0x204] sm:$0xf]
        %v5984 = vld [vmem:[%s4705 + $0x208] sm:$0xf]
        %v5985 = vld [vmem:[%s4705 + $0x20c] sm:$0xf]
        %v5986 = vld [vmem:[%s4705 + $0x210] sm:$0xf]
        %v5987 = vld [vmem:[%s4705 + $0x214] sm:$0xf]
        %v5988 = vld [vmem:[%s4705 + $0x218] sm:$0xf]
        %v5989 = vld [vmem:[%s4705 + $0x21c] sm:$0xf]
        %v5990 = vld [vmem:[%s4705 + $0x220] sm:$0xf]
        %v5991 = vld [vmem:[%s4705 + $0x224] sm:$0xf]
        %v5992 = vld [vmem:[%s4705 + $0x228] sm:$0xf]
        %v5993 = vld [vmem:[%s4705 + $0x22c] sm:$0xf]
        %v5994 = vld [vmem:[%s4705 + $0x230] sm:$0xf]
        %v5995 = vld [vmem:[%s4705 + $0x234] sm:$0xf]
        %v5996 = vld [vmem:[%s4705 + $0x238] sm:$0xf]
        %v5997 = vld [vmem:[%s4705 + $0x23c] sm:$0xf]
        %v5998 = vld [vmem:[%s4705 + $0x240] sm:$0xf]
        %v5999 = vld [vmem:[%s4705 + $0x244] sm:$0xf]
        %v6000 = vld [vmem:[%s4705 + $0x248] sm:$0xf]
        %v6001 = vld [vmem:[%s4705 + $0x24c] sm:$0xf]
        %v6002 = vld [vmem:[%s4705 + $0x250] sm:$0xf]
        %v6003 = vld [vmem:[%s4705 + $0x254] sm:$0xf]
        %v6004 = vld [vmem:[%s4705 + $0x258] sm:$0xf]
        %v6005 = vld [vmem:[%s4705 + $0x25c] sm:$0xf]
        %v6006 = vld [vmem:[%s4705 + $0x260] sm:$0xf]
        %v6007 = vld [vmem:[%s4705 + $0x264] sm:$0xf]
        %v6008 = vld [vmem:[%s4705 + $0x268] sm:$0xf]
        %v6009 = vld [vmem:[%s4705 + $0x26c] sm:$0xf]
        %v6010 = vld [vmem:[%s4705 + $0x270] sm:$0xf]
        %v6011 = vld [vmem:[%s4705 + $0x274] sm:$0xf]
        %v6012 = vld [vmem:[%s4705 + $0x278] sm:$0xf]
        %v6013 = vld [vmem:[%s4705 + $0x27c] sm:$0xf]
        %v6014 = vld [vmem:[%s4705 + $0x280] sm:$0xf]
        %v6015 = vld [vmem:[%s4705 + $0x284] sm:$0xf]
        %v6016 = vld [vmem:[%s4705 + $0x288] sm:$0xf]
        %v6017 = vld [vmem:[%s4705 + $0x28c] sm:$0xf]
        %v6018 = vld [vmem:[%s4705 + $0x290] sm:$0xf]
        %v6019 = vld [vmem:[%s4705 + $0x294] sm:$0xf]
        %v6020 = vld [vmem:[%s4705 + $0x298] sm:$0xf]
        %v6021 = vld [vmem:[%s4705 + $0x29c] sm:$0xf]
        %v6022 = vld [vmem:[%s4705 + $0x2a0] sm:$0xf]
        %v6023 = vld [vmem:[%s4705 + $0x2a4] sm:$0xf]
        %v6024 = vld [vmem:[%s4705 + $0x2a8] sm:$0xf]
        %v6025 = vld [vmem:[%s4705 + $0x2ac] sm:$0xf]
        %v6026 = vld [vmem:[%s4705 + $0x2b0] sm:$0xf]
        %v6027 = vld [vmem:[%s4705 + $0x2b4] sm:$0xf]
        %v6028 = vld [vmem:[%s4705 + $0x2b8] sm:$0xf]
        %v6029 = vld [vmem:[%s4705 + $0x2bc] sm:$0xf]
        %v6030 = vld [vmem:[%s4705 + $0x2c0] sm:$0xf]
        %v6031 = vld [vmem:[%s4705 + $0x2c4] sm:$0xf]
        %v6032 = vld [vmem:[%s4705 + $0x2c8] sm:$0xf]
        %v6033 = vld [vmem:[%s4705 + $0x2cc] sm:$0xf]
        %v6034 = vld [vmem:[%s4705 + $0x2d0] sm:$0xf]
        %v6035 = vld [vmem:[%s4705 + $0x2d4] sm:$0xf]
        %v6036 = vld [vmem:[%s4705 + $0x2d8] sm:$0xf]
        %v6037 = vld [vmem:[%s4705 + $0x2dc] sm:$0xf]
        %v6038 = vld [vmem:[%s4705 + $0x2e0] sm:$0xf]
        %v6039 = vld [vmem:[%s4705 + $0x2e4] sm:$0xf]
        %v6040 = vld [vmem:[%s4705 + $0x2e8] sm:$0xf]
        %v6041 = vld [vmem:[%s4705 + $0x2ec] sm:$0xf]
        %v6042 = vld [vmem:[%s4705 + $0x2f0] sm:$0xf]
        %v6043 = vld [vmem:[%s4705 + $0x2f4] sm:$0xf]
        %v6044 = vld [vmem:[%s4705 + $0x2f8] sm:$0xf]
        %v6045 = vld [vmem:[%s4705 + $0x2fc] sm:$0xf]
        %v6110 = vunpack.c.l.b16 %v5982
        %v6111 = vunpack.c.l.b16 %v5983
        %v6112 = vunpack.c.l.b16 %v5984
        %v6113 = vunpack.c.l.b16 %v5985
        %v6114 = vunpack.c.l.b16 %v5986
        %v6115 = vunpack.c.l.b16 %v5987
        %v6116 = vunpack.c.l.b16 %v5988
        %v6117 = vunpack.c.l.b16 %v5989
        %v6118 = vunpack.c.l.b16 %v5990
        %v6119 = vunpack.c.l.b16 %v5991
        %v6120 = vunpack.c.l.b16 %v5992
        %v6121 = vunpack.c.l.b16 %v5993
        %v6122 = vunpack.c.l.b16 %v5994
        %v6123 = vunpack.c.l.b16 %v5995
        %v6124 = vunpack.c.l.b16 %v5996
        %v6125 = vunpack.c.l.b16 %v5997
        %v6126 = vunpack.c.l.b16 %v5998
        %v6127 = vunpack.c.l.b16 %v5999
        %v6128 = vunpack.c.l.b16 %v6000
        %v6129 = vunpack.c.l.b16 %v6001
        %v6130 = vunpack.c.l.b16 %v6002
        %v6131 = vunpack.c.l.b16 %v6003
        %v6132 = vunpack.c.l.b16 %v6004
        %v6133 = vunpack.c.l.b16 %v6005
        %v6134 = vunpack.c.l.b16 %v6006
        %v6135 = vunpack.c.l.b16 %v6007
        %v6136 = vunpack.c.l.b16 %v6008
        %v6137 = vunpack.c.l.b16 %v6009
        %v6138 = vunpack.c.l.b16 %v6010
        %v6139 = vunpack.c.l.b16 %v6011
        %v6140 = vunpack.c.l.b16 %v6012
        %v6141 = vunpack.c.l.b16 %v6013
        %v6142 = vunpack.c.l.b16 %v6014
        %v6143 = vunpack.c.l.b16 %v6015
        %v6144 = vunpack.c.l.b16 %v6016
        %v6145 = vunpack.c.l.b16 %v6017
        %v6146 = vunpack.c.l.b16 %v6018
        %v6147 = vunpack.c.l.b16 %v6019
        %v6148 = vunpack.c.l.b16 %v6020
        %v6149 = vunpack.c.l.b16 %v6021
        %v6150 = vunpack.c.l.b16 %v6022
        %v6151 = vunpack.c.l.b16 %v6023
        %v6152 = vunpack.c.l.b16 %v6024
        %v6153 = vunpack.c.l.b16 %v6025
        %v6154 = vunpack.c.l.b16 %v6026
        %v6155 = vunpack.c.l.b16 %v6027
        %v6156 = vunpack.c.l.b16 %v6028
        %v6157 = vunpack.c.l.b16 %v6029
        %v6158 = vunpack.c.l.b16 %v6030
        %v6159 = vunpack.c.l.b16 %v6031
        %v6160 = vunpack.c.l.b16 %v6032
        %v6161 = vunpack.c.l.b16 %v6033
        %v6162 = vunpack.c.l.b16 %v6034
        %v6163 = vunpack.c.l.b16 %v6035
        %v6164 = vunpack.c.l.b16 %v6036
        %v6165 = vunpack.c.l.b16 %v6037
        %v6166 = vunpack.c.l.b16 %v6038
        %v6167 = vunpack.c.l.b16 %v6039
        %v6168 = vunpack.c.l.b16 %v6040
        %v6169 = vunpack.c.l.b16 %v6041
        %v6170 = vunpack.c.l.b16 %v6042
        %v6171 = vunpack.c.l.b16 %v6043
        %v6172 = vunpack.c.l.b16 %v6044
        %v6173 = vunpack.c.l.b16 %v6045
        %v6174 = vpack.c.b16 %v6111, %v6110
        %v6175 = vpack.c.b16 %v6113, %v6112
        %v6176 = vpack.c.b16 %v6115, %v6114
        %v6177 = vpack.c.b16 %v6117, %v6116
        %v6178 = vpack.c.b16 %v6119, %v6118
        %v6179 = vpack.c.b16 %v6121, %v6120
        %v6180 = vpack.c.b16 %v6123, %v6122
        %v6181 = vpack.c.b16 %v6125, %v6124
        %v6182 = vpack.c.b16 %v6127, %v6126
        %v6183 = vpack.c.b16 %v6129, %v6128
        %v6184 = vpack.c.b16 %v6131, %v6130
        %v6185 = vpack.c.b16 %v6133, %v6132
        %v6186 = vpack.c.b16 %v6135, %v6134
        %v6187 = vpack.c.b16 %v6137, %v6136
        %v6188 = vpack.c.b16 %v6139, %v6138
        %v6189 = vpack.c.b16 %v6141, %v6140
        %v6190 = vpack.c.b16 %v6143, %v6142
        %v6191 = vpack.c.b16 %v6145, %v6144
        %v6192 = vpack.c.b16 %v6147, %v6146
        %v6193 = vpack.c.b16 %v6149, %v6148
        %v6194 = vpack.c.b16 %v6151, %v6150
        %v6195 = vpack.c.b16 %v6153, %v6152
        %v6196 = vpack.c.b16 %v6155, %v6154
        %v6197 = vpack.c.b16 %v6157, %v6156
        %v6198 = vpack.c.b16 %v6159, %v6158
        %v6199 = vpack.c.b16 %v6161, %v6160
        %v6200 = vpack.c.b16 %v6163, %v6162
        %v6201 = vpack.c.b16 %v6165, %v6164
        %v6202 = vpack.c.b16 %v6167, %v6166
        %v6203 = vpack.c.b16 %v6169, %v6168
        %v6204 = vpack.c.b16 %v6171, %v6170
        %v6205 = vpack.c.b16 %v6173, %v6172
        %6238 = vmatpush.bf16.msra.mxu0 %v6181
        %6239 = vmatpush.bf16.msra.mxu0 %v6180
        %6240 = vmatpush.bf16.msra.mxu0 %v6179
        %6241 = vmatpush.bf16.msra.mxu0 %v6178
        %6242 = vmatpush.bf16.msra.mxu0 %v6177
        %6243 = vmatpush.bf16.msra.mxu0 %v6176
        %6244 = vmatpush.bf16.msra.mxu0 %v6175
        %6245 = vmatpush.bf16.msra.mxu0 %v6174
        %6246 = vmatmul.bf16.gmra.mxu0 %v5974
        %v6247 = vpop.f32.mrf.mxu0
        %v6248 = vadd.f32 0.0, %v6247
        %v6249 = vpop.f32.mrf.mxu0
        %v6250 = vadd.f32 0.0, %v6249
        %6251 = vmatmul.bf16.gmra.mxu0 %v5978
        %v6252 = vpop.f32.mrf.mxu0
        %v6253 = vadd.f32 0.0, %v6252
        %v6254 = vpop.f32.mrf.mxu0
        %v6255 = vadd.f32 0.0, %v6254
        %6256 = vdwg.mxu0
        %6257 = vmatpush.bf16.msra.mxu0 %v6189
        %6258 = vmatpush.bf16.msra.mxu0 %v6188
        %6259 = vmatpush.bf16.msra.mxu0 %v6187
        %6260 = vmatpush.bf16.msra.mxu0 %v6186
        %6261 = vmatpush.bf16.msra.mxu0 %v6185
        %6262 = vmatpush.bf16.msra.mxu0 %v6184
        %6263 = vmatpush.bf16.msra.mxu0 %v6183
        %6264 = vmatpush.bf16.msra.mxu0 %v6182
        %6265 = vmatmul.bf16.gmra.mxu0 %v5975
        %v6266 = vpop.f32.mrf.mxu0
        %v6267 = vadd.f32 %v6248, %v6266
        %v6268 = vpop.f32.mrf.mxu0
        %v6269 = vadd.f32 %v6250, %v6268
        %6270 = vmatmul.bf16.gmra.mxu0 %v5979
        %v6271 = vpop.f32.mrf.mxu0
        %v6272 = vadd.f32 %v6253, %v6271
        %v6273 = vpop.f32.mrf.mxu0
        %v6274 = vadd.f32 %v6255, %v6273
        %6275 = vdwg.mxu0
        %6276 = vmatpush.bf16.msra.mxu0 %v6197
        %6277 = vmatpush.bf16.msra.mxu0 %v6196
        %6278 = vmatpush.bf16.msra.mxu0 %v6195
        %6279 = vmatpush.bf16.msra.mxu0 %v6194
        %6280 = vmatpush.bf16.msra.mxu0 %v6193
        %6281 = vmatpush.bf16.msra.mxu0 %v6192
        %6282 = vmatpush.bf16.msra.mxu0 %v6191
        %6283 = vmatpush.bf16.msra.mxu0 %v6190
        %6284 = vmatmul.bf16.gmra.mxu0 %v5976
        %v6285 = vpop.f32.mrf.mxu0
        %v6286 = vadd.f32 %v6267, %v6285
        %v6287 = vpop.f32.mrf.mxu0
        %v6288 = vadd.f32 %v6269, %v6287
        %6289 = vmatmul.bf16.gmra.mxu0 %v5980
        %v6290 = vpop.f32.mrf.mxu0
        %v6291 = vadd.f32 %v6272, %v6290
        %v6292 = vpop.f32.mrf.mxu0
        %v6293 = vadd.f32 %v6274, %v6292
        %6294 = vdwg.mxu0
        %6295 = vmatpush.bf16.msra.mxu0 %v6205
        %6296 = vmatpush.bf16.msra.mxu0 %v6204
        %6297 = vmatpush.bf16.msra.mxu0 %v6203
        %6298 = vmatpush.bf16.msra.mxu0 %v6202
        %6299 = vmatpush.bf16.msra.mxu0 %v6201
        %6300 = vmatpush.bf16.msra.mxu0 %v6200
        %6301 = vmatpush.bf16.msra.mxu0 %v6199
        %6302 = vmatpush.bf16.msra.mxu0 %v6198
        %6303 = vmatmul.bf16.gmra.mxu0 %v5977
        %v6304 = vpop.f32.mrf.mxu0
        %v6305 = vadd.f32 %v6286, %v6304
        %v6306 = vpop.f32.mrf.mxu0
        %v6307 = vadd.f32 %v6288, %v6306
        %6308 = vmatmul.bf16.gmra.mxu0 %v5981
        %v6309 = vpop.f32.mrf.mxu0
        %v6310 = vadd.f32 %v6291, %v6309
        %v6311 = vpop.f32.mrf.mxu0
        %v6312 = vadd.f32 %v6293, %v6311
        %6313 = vdwg.mxu0
        %v6314 = vadd.f32 %v5676, %v6305
        %v6315 = vadd.f32 %v5677, %v6307
        %v6316 = vadd.f32 %v5678, %v6310
        %v6317 = vadd.f32 %v5679, %v6312
        %v6318 = vld [vmem:[%s4401 + $0x30] sm:$0xff]
        %v6319 = vld [vmem:[%s4401 + $0x38] sm:$0xff]
        %v6320 = vld [vmem:[%s4401 + $0x70] sm:$0xff]
        %v6321 = vld [vmem:[%s4401 + $0x78] sm:$0xff]
        %v6322 = vld [vmem:[%s4401 + $0xb0] sm:$0xff]
        %v6323 = vld [vmem:[%s4401 + $0xb8] sm:$0xff]
        %v6324 = vld [vmem:[%s4401 + $0xf0] sm:$0xff]
        %v6325 = vld [vmem:[%s4401 + $0xf8] sm:$0xff]
        %v6326 = vld [vmem:[%s4401 + $0x130] sm:$0xff]
        %v6327 = vld [vmem:[%s4401 + $0x138] sm:$0xff]
        %v6328 = vld [vmem:[%s4401 + $0x170] sm:$0xff]
        %v6329 = vld [vmem:[%s4401 + $0x178] sm:$0xff]
        %v6330 = vld [vmem:[%s4401 + $0x1b0] sm:$0xff]
        %v6331 = vld [vmem:[%s4401 + $0x1b8] sm:$0xff]
        %v6332 = vld [vmem:[%s4401 + $0x1f0] sm:$0xff]
        %v6333 = vld [vmem:[%s4401 + $0x1f8] sm:$0xff]
        %v6334 = vld [vmem:[%s4401 + $0x230] sm:$0xff]
        %v6335 = vld [vmem:[%s4401 + $0x238] sm:$0xff]
        %v6336 = vld [vmem:[%s4401 + $0x270] sm:$0xff]
        %v6337 = vld [vmem:[%s4401 + $0x278] sm:$0xff]
        %v6338 = vld [vmem:[%s4401 + $0x2b0] sm:$0xff]
        %v6339 = vld [vmem:[%s4401 + $0x2b8] sm:$0xff]
        %v6340 = vld [vmem:[%s4401 + $0x2f0] sm:$0xff]
        %v6341 = vld [vmem:[%s4401 + $0x2f8] sm:$0xff]
        %v6342 = vld [vmem:[%s4401 + $0x330] sm:$0xff]
        %v6343 = vld [vmem:[%s4401 + $0x338] sm:$0xff]
        %v6344 = vld [vmem:[%s4401 + $0x370] sm:$0xff]
        %v6345 = vld [vmem:[%s4401 + $0x378] sm:$0xff]
        %v6346 = vld [vmem:[%s4401 + $0x3b0] sm:$0xff]
        %v6347 = vld [vmem:[%s4401 + $0x3b8] sm:$0xff]
        %v6348 = vld [vmem:[%s4401 + $0x3f0] sm:$0xff]
        %v6349 = vld [vmem:[%s4401 + $0x3f8] sm:$0xff]
        %v6350 = vld [vmem:[%s4434 + $0xc] sm:$0xf]
        %v6352 = vperm.slane %v6350, 0
        %v6353 = vperm.slane %v6350, 1
        %v6354 = vperm.slane %v6350, 2
        %v6355 = vperm.slane %v6350, 3
        %v6392 = vunpack.c.l.b16 %v6318
        %v6393 = vunpack.c.h.b16 %v6318
        %v6394 = vunpack.c.l.b16 %v6319
        %v6395 = vunpack.c.h.b16 %v6319
        %v6396 = vunpack.c.l.b16 %v6320
        %v6397 = vunpack.c.h.b16 %v6320
        %v6398 = vunpack.c.l.b16 %v6321
        %v6399 = vunpack.c.h.b16 %v6321
        %v6400 = vunpack.c.l.b16 %v6322
        %v6401 = vunpack.c.h.b16 %v6322
        %v6402 = vunpack.c.l.b16 %v6323
        %v6403 = vunpack.c.h.b16 %v6323
        %v6404 = vunpack.c.l.b16 %v6324
        %v6405 = vunpack.c.h.b16 %v6324
        %v6406 = vunpack.c.l.b16 %v6325
        %v6407 = vunpack.c.h.b16 %v6325
        %v6408 = vunpack.c.l.b16 %v6326
        %v6409 = vunpack.c.h.b16 %v6326
        %v6410 = vunpack.c.l.b16 %v6327
        %v6411 = vunpack.c.h.b16 %v6327
        %v6412 = vunpack.c.l.b16 %v6328
        %v6413 = vunpack.c.h.b16 %v6328
        %v6414 = vunpack.c.l.b16 %v6329
        %v6415 = vunpack.c.h.b16 %v6329
        %v6416 = vunpack.c.l.b16 %v6330
        %v6417 = vunpack.c.h.b16 %v6330
        %v6418 = vunpack.c.l.b16 %v6331
        %v6419 = vunpack.c.h.b16 %v6331
        %v6420 = vunpack.c.l.b16 %v6332
        %v6421 = vunpack.c.h.b16 %v6332
        %v6422 = vunpack.c.l.b16 %v6333
        %v6423 = vunpack.c.h.b16 %v6333
        %v6424 = vunpack.c.l.b16 %v6334
        %v6425 = vunpack.c.h.b16 %v6334
        %v6426 = vunpack.c.l.b16 %v6335
        %v6427 = vunpack.c.h.b16 %v6335
        %v6428 = vunpack.c.l.b16 %v6336
        %v6429 = vunpack.c.h.b16 %v6336
        %v6430 = vunpack.c.l.b16 %v6337
        %v6431 = vunpack.c.h.b16 %v6337
        %v6432 = vunpack.c.l.b16 %v6338
        %v6433 = vunpack.c.h.b16 %v6338
        %v6434 = vunpack.c.l.b16 %v6339
        %v6435 = vunpack.c.h.b16 %v6339
        %v6436 = vunpack.c.l.b16 %v6340
        %v6437 = vunpack.c.h.b16 %v6340
        %v6438 = vunpack.c.l.b16 %v6341
        %v6439 = vunpack.c.h.b16 %v6341
        %v6440 = vunpack.c.l.b16 %v6342
        %v6441 = vunpack.c.h.b16 %v6342
        %v6442 = vunpack.c.l.b16 %v6343
        %v6443 = vunpack.c.h.b16 %v6343
        %v6444 = vunpack.c.l.b16 %v6344
        %v6445 = vunpack.c.h.b16 %v6344
        %v6446 = vunpack.c.l.b16 %v6345
        %v6447 = vunpack.c.h.b16 %v6345
        %v6448 = vunpack.c.l.b16 %v6346
        %v6449 = vunpack.c.h.b16 %v6346
        %v6450 = vunpack.c.l.b16 %v6347
        %v6451 = vunpack.c.h.b16 %v6347
        %v6452 = vunpack.c.l.b16 %v6348
        %v6453 = vunpack.c.h.b16 %v6348
        %v6454 = vunpack.c.l.b16 %v6349
        %v6455 = vunpack.c.h.b16 %v6349
        %v6456 = vpack.c.b16 %v6396, %v6392
        %v6457 = vpack.c.b16 %v6397, %v6393
        %v6458 = vpack.c.b16 %v6398, %v6394
        %v6459 = vpack.c.b16 %v6399, %v6395
        %v6460 = vpack.c.b16 %v6404, %v6400
        %v6461 = vpack.c.b16 %v6405, %v6401
        %v6462 = vpack.c.b16 %v6406, %v6402
        %v6463 = vpack.c.b16 %v6407, %v6403
        %v6464 = vpack.c.b16 %v6412, %v6408
        %v6465 = vpack.c.b16 %v6413, %v6409
        %v6466 = vpack.c.b16 %v6414, %v6410
        %v6467 = vpack.c.b16 %v6415, %v6411
        %v6468 = vpack.c.b16 %v6420, %v6416
        %v6469 = vpack.c.b16 %v6421, %v6417
        %v6470 = vpack.c.b16 %v6422, %v6418
        %v6471 = vpack.c.b16 %v6423, %v6419
        %v6472 = vpack.c.b16 %v6428, %v6424
        %v6473 = vpack.c.b16 %v6429, %v6425
        %v6474 = vpack.c.b16 %v6430, %v6426
        %v6475 = vpack.c.b16 %v6431, %v6427
        %v6476 = vpack.c.b16 %v6436, %v6432
        %v6477 = vpack.c.b16 %v6437, %v6433
        %v6478 = vpack.c.b16 %v6438, %v6434
        %v6479 = vpack.c.b16 %v6439, %v6435
        %v6480 = vpack.c.b16 %v6444, %v6440
        %v6481 = vpack.c.b16 %v6445, %v6441
        %v6482 = vpack.c.b16 %v6446, %v6442
        %v6483 = vpack.c.b16 %v6447, %v6443
        %v6484 = vpack.c.b16 %v6452, %v6448
        %v6485 = vpack.c.b16 %v6453, %v6449
        %v6486 = vpack.c.b16 %v6454, %v6450
        %v6487 = vpack.c.b16 %v6455, %v6451
        %6520 = vmatpush.bf16.msra.mxu0 %v6484
        %6521 = vmatpush.bf16.msra.mxu0 %v6480
        %6522 = vmatpush.bf16.msra.mxu0 %v6476
        %6523 = vmatpush.bf16.msra.mxu0 %v6472
        %6524 = vmatpush.bf16.msra.mxu0 %v6468
        %6525 = vmatpush.bf16.msra.mxu0 %v6464
        %6526 = vmatpush.bf16.msra.mxu0 %v6460
        %6527 = vmatpush.bf16.msra.mxu0 %v6456
        %6528 = vmatmul.bf16.gmra.mxu0 %v4390
        %v6529 = vpop.f32.mrf.mxu0
        %v6530 = vadd.f32 %v6352, %v6529
        %v6531 = vpop.f32.mrf.mxu0
        %v6532 = vadd.f32 %v6352, %v6531
        %6533 = vmatmul.bf16.gmra.mxu0 %v4391
        %v6534 = vpop.f32.mrf.mxu0
        %v6535 = vadd.f32 %v6352, %v6534
        %v6536 = vpop.f32.mrf.mxu0
        %v6537 = vadd.f32 %v6352, %v6536
        %6538 = vdwg.mxu0
        %6539 = vmatpush.bf16.msra.mxu0 %v6485
        %6540 = vmatpush.bf16.msra.mxu0 %v6481
        %6541 = vmatpush.bf16.msra.mxu0 %v6477
        %6542 = vmatpush.bf16.msra.mxu0 %v6473
        %6543 = vmatpush.bf16.msra.mxu0 %v6469
        %6544 = vmatpush.bf16.msra.mxu0 %v6465
        %6545 = vmatpush.bf16.msra.mxu0 %v6461
        %6546 = vmatpush.bf16.msra.mxu0 %v6457
        %6547 = vmatmul.bf16.gmra.mxu0 %v4390
        %v6548 = vpop.f32.mrf.mxu0
        %v6549 = vadd.f32 %v6353, %v6548
        %v6550 = vpop.f32.mrf.mxu0
        %v6551 = vadd.f32 %v6353, %v6550
        %6552 = vmatmul.bf16.gmra.mxu0 %v4391
        %v6553 = vpop.f32.mrf.mxu0
        %v6554 = vadd.f32 %v6353, %v6553
        %v6555 = vpop.f32.mrf.mxu0
        %v6556 = vadd.f32 %v6353, %v6555
        %6557 = vdwg.mxu0
        %6558 = vmatpush.bf16.msra.mxu0 %v6486
        %6559 = vmatpush.bf16.msra.mxu0 %v6482
        %6560 = vmatpush.bf16.msra.mxu0 %v6478
        %6561 = vmatpush.bf16.msra.mxu0 %v6474
        %6562 = vmatpush.bf16.msra.mxu0 %v6470
        %6563 = vmatpush.bf16.msra.mxu0 %v6466
        %6564 = vmatpush.bf16.msra.mxu0 %v6462
        %6565 = vmatpush.bf16.msra.mxu0 %v6458
        %6566 = vmatmul.bf16.gmra.mxu0 %v4390
        %v6567 = vpop.f32.mrf.mxu0
        %v6568 = vadd.f32 %v6354, %v6567
        %v6569 = vpop.f32.mrf.mxu0
        %v6570 = vadd.f32 %v6354, %v6569
        %6571 = vmatmul.bf16.gmra.mxu0 %v4391
        %v6572 = vpop.f32.mrf.mxu0
        %v6573 = vadd.f32 %v6354, %v6572
        %v6574 = vpop.f32.mrf.mxu0
        %v6575 = vadd.f32 %v6354, %v6574
        %6576 = vdwg.mxu0
        %6577 = vmatpush.bf16.msra.mxu0 %v6487
        %6578 = vmatpush.bf16.msra.mxu0 %v6483
        %6579 = vmatpush.bf16.msra.mxu0 %v6479
        %6580 = vmatpush.bf16.msra.mxu0 %v6475
        %6581 = vmatpush.bf16.msra.mxu0 %v6471
        %6582 = vmatpush.bf16.msra.mxu0 %v6467
        %6583 = vmatpush.bf16.msra.mxu0 %v6463
        %6584 = vmatpush.bf16.msra.mxu0 %v6459
        %6585 = vmatmul.bf16.gmra.mxu0 %v4390
        %v6586 = vpop.f32.mrf.mxu0
        %v6587 = vadd.f32 %v6355, %v6586
        %v6588 = vpop.f32.mrf.mxu0
        %v6589 = vadd.f32 %v6355, %v6588
        %6590 = vmatmul.bf16.gmra.mxu0 %v4391
        %v6591 = vpop.f32.mrf.mxu0
        %v6592 = vadd.f32 %v6355, %v6591
        %v6593 = vpop.f32.mrf.mxu0
        %v6594 = vadd.f32 %v6355, %v6593
        %6595 = vdwg.mxu0
        %v6596 = vmax.f32 %v6530, 0.0
        %v6597 = vmax.f32 %v6549, 0.0
        %v6598 = vmax.f32 %v6568, 0.0
        %v6599 = vmax.f32 %v6587, 0.0
        %v6600 = vmax.f32 %v6532, 0.0
        %v6601 = vmax.f32 %v6551, 0.0
        %v6602 = vmax.f32 %v6570, 0.0
        %v6603 = vmax.f32 %v6589, 0.0
        %v6604 = vmax.f32 %v6535, 0.0
        %v6605 = vmax.f32 %v6554, 0.0
        %v6606 = vmax.f32 %v6573, 0.0
        %v6607 = vmax.f32 %v6592, 0.0
        %v6608 = vmax.f32 %v6537, 0.0
        %v6609 = vmax.f32 %v6556, 0.0
        %v6610 = vmax.f32 %v6575, 0.0
        %v6611 = vmax.f32 %v6594, 0.0
        %v6612 = vpack.c.bf16 %v6600, %v6596
        %v6613 = vpack.c.bf16 %v6601, %v6597
        %v6614 = vpack.c.bf16 %v6602, %v6598
        %v6615 = vpack.c.bf16 %v6603, %v6599
        %v6616 = vpack.c.bf16 %v6608, %v6604
        %v6617 = vpack.c.bf16 %v6609, %v6605
        %v6618 = vpack.c.bf16 %v6610, %v6606
        %v6619 = vpack.c.bf16 %v6611, %v6607
        %v6620 = vld [vmem:[%s4705 + $0x300] sm:$0xf]
        %v6621 = vld [vmem:[%s4705 + $0x304] sm:$0xf]
        %v6622 = vld [vmem:[%s4705 + $0x308] sm:$0xf]
        %v6623 = vld [vmem:[%s4705 + $0x30c] sm:$0xf]
        %v6624 = vld [vmem:[%s4705 + $0x310] sm:$0xf]
        %v6625 = vld [vmem:[%s4705 + $0x314] sm:$0xf]
        %v6626 = vld [vmem:[%s4705 + $0x318] sm:$0xf]
        %v6627 = vld [vmem:[%s4705 + $0x31c] sm:$0xf]
        %v6628 = vld [vmem:[%s4705 + $0x320] sm:$0xf]
        %v6629 = vld [vmem:[%s4705 + $0x324] sm:$0xf]
        %v6630 = vld [vmem:[%s4705 + $0x328] sm:$0xf]
        %v6631 = vld [vmem:[%s4705 + $0x32c] sm:$0xf]
        %v6632 = vld [vmem:[%s4705 + $0x330] sm:$0xf]
        %v6633 = vld [vmem:[%s4705 + $0x334] sm:$0xf]
        %v6634 = vld [vmem:[%s4705 + $0x338] sm:$0xf]
        %v6635 = vld [vmem:[%s4705 + $0x33c] sm:$0xf]
        %v6636 = vld [vmem:[%s4705 + $0x340] sm:$0xf]
        %v6637 = vld [vmem:[%s4705 + $0x344] sm:$0xf]
        %v6638 = vld [vmem:[%s4705 + $0x348] sm:$0xf]
        %v6639 = vld [vmem:[%s4705 + $0x34c] sm:$0xf]
        %v6640 = vld [vmem:[%s4705 + $0x350] sm:$0xf]
        %v6641 = vld [vmem:[%s4705 + $0x354] sm:$0xf]
        %v6642 = vld [vmem:[%s4705 + $0x358] sm:$0xf]
        %v6643 = vld [vmem:[%s4705 + $0x35c] sm:$0xf]
        %v6644 = vld [vmem:[%s4705 + $0x360] sm:$0xf]
        %v6645 = vld [vmem:[%s4705 + $0x364] sm:$0xf]
        %v6646 = vld [vmem:[%s4705 + $0x368] sm:$0xf]
        %v6647 = vld [vmem:[%s4705 + $0x36c] sm:$0xf]
        %v6648 = vld [vmem:[%s4705 + $0x370] sm:$0xf]
        %v6649 = vld [vmem:[%s4705 + $0x374] sm:$0xf]
        %v6650 = vld [vmem:[%s4705 + $0x378] sm:$0xf]
        %v6651 = vld [vmem:[%s4705 + $0x37c] sm:$0xf]
        %v6652 = vld [vmem:[%s4705 + $0x380] sm:$0xf]
        %v6653 = vld [vmem:[%s4705 + $0x384] sm:$0xf]
        %v6654 = vld [vmem:[%s4705 + $0x388] sm:$0xf]
        %v6655 = vld [vmem:[%s4705 + $0x38c] sm:$0xf]
        %v6656 = vld [vmem:[%s4705 + $0x390] sm:$0xf]
        %v6657 = vld [vmem:[%s4705 + $0x394] sm:$0xf]
        %v6658 = vld [vmem:[%s4705 + $0x398] sm:$0xf]
        %v6659 = vld [vmem:[%s4705 + $0x39c] sm:$0xf]
        %v6660 = vld [vmem:[%s4705 + $0x3a0] sm:$0xf]
        %v6661 = vld [vmem:[%s4705 + $0x3a4] sm:$0xf]
        %v6662 = vld [vmem:[%s4705 + $0x3a8] sm:$0xf]
        %v6663 = vld [vmem:[%s4705 + $0x3ac] sm:$0xf]
        %v6664 = vld [vmem:[%s4705 + $0x3b0] sm:$0xf]
        %v6665 = vld [vmem:[%s4705 + $0x3b4] sm:$0xf]
        %v6666 = vld [vmem:[%s4705 + $0x3b8] sm:$0xf]
        %v6667 = vld [vmem:[%s4705 + $0x3bc] sm:$0xf]
        %v6668 = vld [vmem:[%s4705 + $0x3c0] sm:$0xf]
        %v6669 = vld [vmem:[%s4705 + $0x3c4] sm:$0xf]
        %v6670 = vld [vmem:[%s4705 + $0x3c8] sm:$0xf]
        %v6671 = vld [vmem:[%s4705 + $0x3cc] sm:$0xf]
        %v6672 = vld [vmem:[%s4705 + $0x3d0] sm:$0xf]
        %v6673 = vld [vmem:[%s4705 + $0x3d4] sm:$0xf]
        %v6674 = vld [vmem:[%s4705 + $0x3d8] sm:$0xf]
        %v6675 = vld [vmem:[%s4705 + $0x3dc] sm:$0xf]
        %v6676 = vld [vmem:[%s4705 + $0x3e0] sm:$0xf]
        %v6677 = vld [vmem:[%s4705 + $0x3e4] sm:$0xf]
        %v6678 = vld [vmem:[%s4705 + $0x3e8] sm:$0xf]
        %v6679 = vld [vmem:[%s4705 + $0x3ec] sm:$0xf]
        %v6680 = vld [vmem:[%s4705 + $0x3f0] sm:$0xf]
        %v6681 = vld [vmem:[%s4705 + $0x3f4] sm:$0xf]
        %v6682 = vld [vmem:[%s4705 + $0x3f8] sm:$0xf]
        %v6683 = vld [vmem:[%s4705 + $0x3fc] sm:$0xf]
        %v6748 = vunpack.c.l.b16 %v6620
        %v6749 = vunpack.c.l.b16 %v6621
        %v6750 = vunpack.c.l.b16 %v6622
        %v6751 = vunpack.c.l.b16 %v6623
        %v6752 = vunpack.c.l.b16 %v6624
        %v6753 = vunpack.c.l.b16 %v6625
        %v6754 = vunpack.c.l.b16 %v6626
        %v6755 = vunpack.c.l.b16 %v6627
        %v6756 = vunpack.c.l.b16 %v6628
        %v6757 = vunpack.c.l.b16 %v6629
        %v6758 = vunpack.c.l.b16 %v6630
        %v6759 = vunpack.c.l.b16 %v6631
        %v6760 = vunpack.c.l.b16 %v6632
        %v6761 = vunpack.c.l.b16 %v6633
        %v6762 = vunpack.c.l.b16 %v6634
        %v6763 = vunpack.c.l.b16 %v6635
        %v6764 = vunpack.c.l.b16 %v6636
        %v6765 = vunpack.c.l.b16 %v6637
        %v6766 = vunpack.c.l.b16 %v6638
        %v6767 = vunpack.c.l.b16 %v6639
        %v6768 = vunpack.c.l.b16 %v6640
        %v6769 = vunpack.c.l.b16 %v6641
        %v6770 = vunpack.c.l.b16 %v6642
        %v6771 = vunpack.c.l.b16 %v6643
        %v6772 = vunpack.c.l.b16 %v6644
        %v6773 = vunpack.c.l.b16 %v6645
        %v6774 = vunpack.c.l.b16 %v6646
        %v6775 = vunpack.c.l.b16 %v6647
        %v6776 = vunpack.c.l.b16 %v6648
        %v6777 = vunpack.c.l.b16 %v6649
        %v6778 = vunpack.c.l.b16 %v6650
        %v6779 = vunpack.c.l.b16 %v6651
        %v6780 = vunpack.c.l.b16 %v6652
        %v6781 = vunpack.c.l.b16 %v6653
        %v6782 = vunpack.c.l.b16 %v6654
        %v6783 = vunpack.c.l.b16 %v6655
        %v6784 = vunpack.c.l.b16 %v6656
        %v6785 = vunpack.c.l.b16 %v6657
        %v6786 = vunpack.c.l.b16 %v6658
        %v6787 = vunpack.c.l.b16 %v6659
        %v6788 = vunpack.c.l.b16 %v6660
        %v6789 = vunpack.c.l.b16 %v6661
        %v6790 = vunpack.c.l.b16 %v6662
        %v6791 = vunpack.c.l.b16 %v6663
        %v6792 = vunpack.c.l.b16 %v6664
        %v6793 = vunpack.c.l.b16 %v6665
        %v6794 = vunpack.c.l.b16 %v6666
        %v6795 = vunpack.c.l.b16 %v6667
        %v6796 = vunpack.c.l.b16 %v6668
        %v6797 = vunpack.c.l.b16 %v6669
        %v6798 = vunpack.c.l.b16 %v6670
        %v6799 = vunpack.c.l.b16 %v6671
        %v6800 = vunpack.c.l.b16 %v6672
        %v6801 = vunpack.c.l.b16 %v6673
        %v6802 = vunpack.c.l.b16 %v6674
        %v6803 = vunpack.c.l.b16 %v6675
        %v6804 = vunpack.c.l.b16 %v6676
        %v6805 = vunpack.c.l.b16 %v6677
        %v6806 = vunpack.c.l.b16 %v6678
        %v6807 = vunpack.c.l.b16 %v6679
        %v6808 = vunpack.c.l.b16 %v6680
        %v6809 = vunpack.c.l.b16 %v6681
        %v6810 = vunpack.c.l.b16 %v6682
        %v6811 = vunpack.c.l.b16 %v6683
        %v6812 = vpack.c.b16 %v6749, %v6748
        %v6813 = vpack.c.b16 %v6751, %v6750
        %v6814 = vpack.c.b16 %v6753, %v6752
        %v6815 = vpack.c.b16 %v6755, %v6754
        %v6816 = vpack.c.b16 %v6757, %v6756
        %v6817 = vpack.c.b16 %v6759, %v6758
        %v6818 = vpack.c.b16 %v6761, %v6760
        %v6819 = vpack.c.b16 %v6763, %v6762
        %v6820 = vpack.c.b16 %v6765, %v6764
        %v6821 = vpack.c.b16 %v6767, %v6766
        %v6822 = vpack.c.b16 %v6769, %v6768
        %v6823 = vpack.c.b16 %v6771, %v6770
        %v6824 = vpack.c.b16 %v6773, %v6772
        %v6825 = vpack.c.b16 %v6775, %v6774
        %v6826 = vpack.c.b16 %v6777, %v6776
        %v6827 = vpack.c.b16 %v6779, %v6778
        %v6828 = vpack.c.b16 %v6781, %v6780
        %v6829 = vpack.c.b16 %v6783, %v6782
        %v6830 = vpack.c.b16 %v6785, %v6784
        %v6831 = vpack.c.b16 %v6787, %v6786
        %v6832 = vpack.c.b16 %v6789, %v6788
        %v6833 = vpack.c.b16 %v6791, %v6790
        %v6834 = vpack.c.b16 %v6793, %v6792
        %v6835 = vpack.c.b16 %v6795, %v6794
        %v6836 = vpack.c.b16 %v6797, %v6796
        %v6837 = vpack.c.b16 %v6799, %v6798
        %v6838 = vpack.c.b16 %v6801, %v6800
        %v6839 = vpack.c.b16 %v6803, %v6802
        %v6840 = vpack.c.b16 %v6805, %v6804
        %v6841 = vpack.c.b16 %v6807, %v6806
        %v6842 = vpack.c.b16 %v6809, %v6808
        %v6843 = vpack.c.b16 %v6811, %v6810
        %6876 = vmatpush.bf16.msra.mxu0 %v6819
        %6877 = vmatpush.bf16.msra.mxu0 %v6818
        %6878 = vmatpush.bf16.msra.mxu0 %v6817
        %6879 = vmatpush.bf16.msra.mxu0 %v6816
        %6880 = vmatpush.bf16.msra.mxu0 %v6815
        %6881 = vmatpush.bf16.msra.mxu0 %v6814
        %6882 = vmatpush.bf16.msra.mxu0 %v6813
        %6883 = vmatpush.bf16.msra.mxu0 %v6812
        %6884 = vmatmul.bf16.gmra.mxu0 %v6612
        %v6885 = vpop.f32.mrf.mxu0
        %v6886 = vadd.f32 0.0, %v6885
        %v6887 = vpop.f32.mrf.mxu0
        %v6888 = vadd.f32 0.0, %v6887
        %6889 = vmatmul.bf16.gmra.mxu0 %v6616
        %v6890 = vpop.f32.mrf.mxu0
        %v6891 = vadd.f32 0.0, %v6890
        %v6892 = vpop.f32.mrf.mxu0
        %v6893 = vadd.f32 0.0, %v6892
        %6894 = vdwg.mxu0
        %6895 = vmatpush.bf16.msra.mxu0 %v6827
        %6896 = vmatpush.bf16.msra.mxu0 %v6826
        %6897 = vmatpush.bf16.msra.mxu0 %v6825
        %6898 = vmatpush.bf16.msra.mxu0 %v6824
        %6899 = vmatpush.bf16.msra.mxu0 %v6823
        %6900 = vmatpush.bf16.msra.mxu0 %v6822
        %6901 = vmatpush.bf16.msra.mxu0 %v6821
        %6902 = vmatpush.bf16.msra.mxu0 %v6820
        %6903 = vmatmul.bf16.gmra.mxu0 %v6613
        %v6904 = vpop.f32.mrf.mxu0
        %v6905 = vadd.f32 %v6886, %v6904
        %v6906 = vpop.f32.mrf.mxu0
        %v6907 = vadd.f32 %v6888, %v6906
        %6908 = vmatmul.bf16.gmra.mxu0 %v6617
        %v6909 = vpop.f32.mrf.mxu0
        %v6910 = vadd.f32 %v6891, %v6909
        %v6911 = vpop.f32.mrf.mxu0
        %v6912 = vadd.f32 %v6893, %v6911
        %6913 = vdwg.mxu0
        %6914 = vmatpush.bf16.msra.mxu0 %v6835
        %6915 = vmatpush.bf16.msra.mxu0 %v6834
        %6916 = vmatpush.bf16.msra.mxu0 %v6833
        %6917 = vmatpush.bf16.msra.mxu0 %v6832
        %6918 = vmatpush.bf16.msra.mxu0 %v6831
        %6919 = vmatpush.bf16.msra.mxu0 %v6830
        %6920 = vmatpush.bf16.msra.mxu0 %v6829
        %6921 = vmatpush.bf16.msra.mxu0 %v6828
        %6922 = vmatmul.bf16.gmra.mxu0 %v6614
        %v6923 = vpop.f32.mrf.mxu0
        %v6924 = vadd.f32 %v6905, %v6923
        %v6925 = vpop.f32.mrf.mxu0
        %v6926 = vadd.f32 %v6907, %v6925
        %6927 = vmatmul.bf16.gmra.mxu0 %v6618
        %v6928 = vpop.f32.mrf.mxu0
        %v6929 = vadd.f32 %v6910, %v6928
        %v6930 = vpop.f32.mrf.mxu0
        %v6931 = vadd.f32 %v6912, %v6930
        %6932 = vdwg.mxu0
        %6933 = vmatpush.bf16.msra.mxu0 %v6843
        %6934 = vmatpush.bf16.msra.mxu0 %v6842
        %6935 = vmatpush.bf16.msra.mxu0 %v6841
        %6936 = vmatpush.bf16.msra.mxu0 %v6840
        %6937 = vmatpush.bf16.msra.mxu0 %v6839
        %6938 = vmatpush.bf16.msra.mxu0 %v6838
        %6939 = vmatpush.bf16.msra.mxu0 %v6837
        %6940 = vmatpush.bf16.msra.mxu0 %v6836
        %6941 = vmatmul.bf16.gmra.mxu0 %v6615
        %v6942 = vpop.f32.mrf.mxu0
        %v6943 = vadd.f32 %v6924, %v6942
        %v6944 = vpop.f32.mrf.mxu0
        %v6945 = vadd.f32 %v6926, %v6944
        %6946 = vmatmul.bf16.gmra.mxu0 %v6619
        %v6947 = vpop.f32.mrf.mxu0
        %v6948 = vadd.f32 %v6929, %v6947
        %v6949 = vpop.f32.mrf.mxu0
        %v6950 = vadd.f32 %v6931, %v6949
        %6951 = vdwg.mxu0
        %v6952 = vadd.f32 %v6314, %v6943
        %v6953 = vadd.f32 %v6315, %v6945
        %v6954 = vadd.f32 %v6316, %v6948
        %v6955 = vadd.f32 %v6317, %v6950
        %s6956 = scalar_lea.vmem %s12, 1
        %v6957 = vld [vmem:[%s6956] sm:$0x1]
        %s6958 = scalar_lea.vmem %s13, 1
        %v6959 = vld [vmem:[%s6958] sm:$0x1]
        %v6960 = vsel %vm1066, %v6952, 0.0
        %v6961 = vsel %vm1066, %v6953, 0.0
        %v6962 = vsel %vm1066, %v6954, 0.0
        %v6963 = vsel %vm1066, %v6955, 0.0
        %6964 = vadd.xlane.f32.xlu0 %v6960
        %v6965 = vpop.xlane.xlu0 %6964
        %6966 = vadd.xlane.f32.xlu0 %v6961
        %v6967 = vpop.xlane.xlu0 %6966
        %6968 = vadd.xlane.f32.xlu0 %v6962
        %v6969 = vpop.xlane.xlu0 %6968
        %6970 = vadd.xlane.f32.xlu0 %v6963
        %v6971 = vpop.xlane.xlu0 %6970
        %v6972 = vmul.f32 %v6965, 0.03125
        %v6973 = vmul.f32 %v6967, 0.03125
        %v6974 = vmul.f32 %v6969, 0.03125
        %v6975 = vmul.f32 %v6971, 0.03125
        %v6976 = vsub.f32 %v6952, %v6972
        %v6977 = vsub.f32 %v6953, %v6973
        %v6978 = vsub.f32 %v6954, %v6974
        %v6979 = vsub.f32 %v6955, %v6975
        %v6980 = vsel %vm1066, %v6976, 0.0
        %v6981 = vsel %vm1066, %v6977, 0.0
        %v6982 = vsel %vm1066, %v6978, 0.0
        %v6983 = vsel %vm1066, %v6979, 0.0
        %v6984 = vmul.f32 %v6980, %v6980
        %v6985 = vmul.f32 %v6981, %v6981
        %v6986 = vmul.f32 %v6982, %v6982
        %v6987 = vmul.f32 %v6983, %v6983
        %6988 = vadd.xlane.f32.xlu0 %v6984
        %v6989 = vpop.xlane.xlu0 %6988
        %6990 = vadd.xlane.f32.xlu0 %v6985
        %v6991 = vpop.xlane.xlu0 %6990
        %6992 = vadd.xlane.f32.xlu0 %v6986
        %v6993 = vpop.xlane.xlu0 %6992
        %6994 = vadd.xlane.f32.xlu0 %v6987
        %v6995 = vpop.xlane.xlu0 %6994
        %v6996 = vmul.f32 %v6989, 0.03125
        %v6997 = vmul.f32 %v6991, 0.03125
        %v6998 = vmul.f32 %v6993, 0.03125
        %v6999 = vmul.f32 %v6995, 0.03125
        %v7000 = vadd.f32 %v6996, 1e-05
        %v7001 = vadd.f32 %v6997, 1e-05
        %v7002 = vadd.f32 %v6998, 1e-05
        %v7003 = vadd.f32 %v6999, 1e-05
        %v7004 = vrsqrt.pop %v7000
        %v7005 = vmul.f32 %v7004, %v7000
        %v7006 = vmul.f32 %v7005, %v7004
        %v7007 = vmul.f32 0.5, %v7006
        %v7008 = vsub.f32 1.5, %v7007
        %v7009 = vmul.f32 %v7004, %v7008
        %vm7010 = vweird.f32 %v7000
        %vm7011 = vweird.f32 %v7004
        %vm7012 = vmor %vm7010, %vm7011
        %v7013 = vsel %vm7012, %v7004, %v7009
        %v7014 = vrsqrt.pop %v7001
        %v7015 = vmul.f32 %v7014, %v7001
        %v7016 = vmul.f32 %v7015, %v7014
        %v7017 = vmul.f32 0.5, %v7016
        %v7018 = vsub.f32 1.5, %v7017
        %v7019 = vmul.f32 %v7014, %v7018
        %vm7020 = vweird.f32 %v7001
        %vm7021 = vweird.f32 %v7014
        %vm7022 = vmor %vm7020, %vm7021
        %v7023 = vsel %vm7022, %v7014, %v7019
        %v7024 = vrsqrt.pop %v7002
        %v7025 = vmul.f32 %v7024, %v7002
        %v7026 = vmul.f32 %v7025, %v7024
        %v7027 = vmul.f32 0.5, %v7026
        %v7028 = vsub.f32 1.5, %v7027
        %v7029 = vmul.f32 %v7024, %v7028
        %vm7030 = vweird.f32 %v7002
        %vm7031 = vweird.f32 %v7024
        %vm7032 = vmor %vm7030, %vm7031
        %v7033 = vsel %vm7032, %v7024, %v7029
        %v7034 = vrsqrt.pop %v7003
        %v7035 = vmul.f32 %v7034, %v7003
        %v7036 = vmul.f32 %v7035, %v7034
        %v7037 = vmul.f32 0.5, %v7036
        %v7038 = vsub.f32 1.5, %v7037
        %v7039 = vmul.f32 %v7034, %v7038
        %vm7040 = vweird.f32 %v7003
        %vm7041 = vweird.f32 %v7034
        %vm7042 = vmor %vm7040, %vm7041
        %v7043 = vsel %vm7042, %v7034, %v7039
        %v7044 = vmul.f32 %v6980, %v7013
        %v7045 = vmul.f32 %v6981, %v7023
        %v7046 = vmul.f32 %v6982, %v7033
        %v7047 = vmul.f32 %v6983, %v7043
        %v7049 = vperm.slane %v6957, 0
        %v7051 = vmul.f32 %v7044, %v7049
        %v7052 = vmul.f32 %v7045, %v7049
        %v7053 = vmul.f32 %v7046, %v7049
        %v7054 = vmul.f32 %v7047, %v7049
        %v7056 = vperm.slane %v6959, 0
        %v7058 = vadd.f32 %v7051, %v7056
        %v7059 = vadd.f32 %v7052, %v7056
        %v7060 = vadd.f32 %v7053, %v7056
        %v7061 = vadd.f32 %v7054, %v7056
        %7062 = vst [vmem:[%s543] sm:$0xff] %v7058
        %7063 = vst [vmem:[%s543 + $0x8] sm:$0xff] %v7059
        %s7064 = scalar_lea.vmem %s543, 16 [#allocation7]
        %7065 = vst [vmem:[%s7064] sm:$0xff] %v7060
        %7066 = vst [vmem:[%s7064 + $0x8] sm:$0xff] %v7061
        %s7067 = sand.u32 %s334, 1
        %s7068 = sand.u32 %s334, 1
        %s7069 = smul.addr %s7068, 32
        %s7070 = scalar_lea.vmem [#allocation7], %s7069
        // Predicated region
        $region123: #{vision_permutator_forward.1} parent=109 // pred_check
          %p7071 = pneg %p344
        $region124: #{vision_permutator_forward.1} parent=109 // pred_check_branch
          %7073 = sbr.rel (%p7071) target = $region126
        $region125: #{vision_permutator_forward.1} parent=109 // pred_region
          %s7074 = smul.u32 2, %s27
          %s7075 = smul.addr %s7074, 8
          %s7076 = scalar_lea.vmem %s14, %s7075
          // Predicated region
          $region127: #{vision_permutator_forward.1} parent=125 // pred_check
            _
          $region128: #{vision_permutator_forward.1} parent=125 // pred_check_branch
            %7078 = sbr.rel (0) target = $region130
          $region129: #{vision_permutator_forward.1} parent=125 // pred_region
            // Predicated region
            $region131: #{vision_permutator_forward.1} parent=129 // pred_check
              _
            $region132: #{vision_permutator_forward.1} parent=129 // pred_check_branch
              %7080 = sbr.rel (0) target = $region134
            $region133: #{vision_permutator_forward.1} parent=129 // pred_region
              // Predicated region
              $region146: #{vision_permutator_forward.1} parent=133 // pred_check
                _
              $region147: #{vision_permutator_forward.1} parent=133 // pred_check_branch
                %7102 = sbr.rel (0) target = $region149
              $region148: #{vision_permutator_forward.1} parent=133 // pred_region
                loop: start=0, step=1, limit=1
                $region150: #{vision_permutator_forward.1} parent=148 // loop_pre_header
                  _
                $region151: #{vision_permutator_forward.1} parent=148 // loop_header
                  %s7104 = sphi 0, %s7108
                  %p7105 = scmp.ge.s32.totalorder %s7104, 1
                  %s7109 = sphi %s7070, %s7070
                  %s7110 = sphi %s7076, %s7076
                $region152: #{vision_permutator_forward.1} parent=148 // loop_header_branch
                  %7107 = sbr.rel (%p7105) target = $region156
                $region153: #{vision_permutator_forward.1} parent=148 // loop_body
                  %v7111 = vld [vmem:[%s7109] sm:$0xff]
                  %7112 = vst [vmem:[%s7110] sm:$0xff] %v7111
                  %v7113 = vld [vmem:[%s7109 + $0x8] sm:$0xff]
                  %7114 = vst [vmem:[%s7110 + $0x8] sm:$0xff] %v7113
                  %v7115 = vld [vmem:[%s7109 + $0x10] sm:$0xff]
                  %7116 = vst [vmem:[%s7110 + $0x20] sm:$0xff] %v7115
                  %v7117 = vld [vmem:[%s7109 + $0x18] sm:$0xff]
                  %7118 = vst [vmem:[%s7110 + $0x28] sm:$0xff] %v7117
                $region154: #{vision_permutator_forward.1} parent=148 // loop_footer
                  %s7108 = sadd.s32 1, %s7104
                $region155: #{vision_permutator_forward.1} parent=148 // loop_footer_branch
                  %7103 = sbr.rel target = $region151
                $region156: #{vision_permutator_forward.1} parent=148 // loop_exit
                  _
              $region149: #{vision_permutator_forward.1} parent=133 // pred_fallthru
                _
              // Predicated region
              $region157: #{vision_permutator_forward.1} parent=133 // pred_check
                _
              $region158: #{vision_permutator_forward.1} parent=133 // pred_check_branch
                %7120 = sbr.rel target = $region160
              $region159: #{vision_permutator_forward.1} parent=133 // pred_region
                _
              $region160: #{vision_permutator_forward.1} parent=133 // pred_fallthru
                _
            $region134: #{vision_permutator_forward.1} parent=129 // pred_fallthru
              _
            // Predicated region
            $region135: #{vision_permutator_forward.1} parent=129 // pred_check
              _
            $region136: #{vision_permutator_forward.1} parent=129 // pred_check_branch
              %7082 = sbr.rel target = $region138
            $region137: #{vision_permutator_forward.1} parent=129 // pred_region
              %s7084 = ssub.s32 256, 1
              loop: start=0, step=1, limit=1
              $region139: #{vision_permutator_forward.1} parent=137 // loop_pre_header
                _
              $region140: #{vision_permutator_forward.1} parent=137 // loop_header
                %s7086 = sphi 0, %s7090
                %p7087 = scmp.ge.s32.totalorder %s7086, 1
                %s7091 = sphi %s7070, %s7070
                %s7092 = sphi %s7076, %s7076
              $region141: #{vision_permutator_forward.1} parent=137 // loop_header_branch
                %7089 = sbr.rel (%p7087) target = $region145
              $region142: #{vision_permutator_forward.1} parent=137 // loop_body
                %v7093 = vld [vmem:[%s7091] sm:%s7084]
                %7094 = vst [vmem:[%s7092] sm:%s7084] %v7093
                %v7095 = vld [vmem:[%s7091 + $0x8] sm:%s7084]
                %7096 = vst [vmem:[%s7092 + $0x8] sm:%s7084] %v7095
                %v7097 = vld [vmem:[%s7091 + $0x10] sm:%s7084]
                %7098 = vst [vmem:[%s7092 + $0x20] sm:%s7084] %v7097
                %v7099 = vld [vmem:[%s7091 + $0x18] sm:%s7084]
                %7100 = vst [vmem:[%s7092 + $0x28] sm:%s7084] %v7099
              $region143: #{vision_permutator_forward.1} parent=137 // loop_footer
                %s7090 = sadd.s32 1, %s7086
              $region144: #{vision_permutator_forward.1} parent=137 // loop_footer_branch
                %7085 = sbr.rel target = $region140
              $region145: #{vision_permutator_forward.1} parent=137 // loop_exit
                _
            $region138: #{vision_permutator_forward.1} parent=129 // pred_fallthru
              _
          $region130: #{vision_permutator_forward.1} parent=125 // pred_fallthru
            _
          %7121 = vnop
        $region126: #{vision_permutator_forward.1} parent=109 // pred_fallthru
          _
      $region110: #{vision_permutator_forward.1} parent=5 // pred_fallthru
        _
      %p7122 = scmp.le.s32.totalorder 2, %s22
      // Predicated region
      $region161: #{vision_permutator_forward.1} parent=5 // pred_check
        %p7123 = pneg %p7122
      $region162: #{vision_permutator_forward.1} parent=5 // pred_check_branch
        %7125 = sbr.rel (%p7123) target = $region164
      $region163: #{vision_permutator_forward.1} parent=5 // pred_region
        %s7126 = ssub.s32 %s22, 2
        // Predicated region
        $region165: #{vision_permutator_forward.1} parent=163 // pred_check
          %p7127 = pneg %p350
        $region166: #{vision_permutator_forward.1} parent=163 // pred_check_branch
          %7129 = sbr.rel (%p7127) target = $region168
        $region167: #{vision_permutator_forward.1} parent=163 // pred_region
          %s7130 = sand.u32 %s335, 1
          %s7131 = sand.u32 %s335, 1
          %s7132 = smul.addr %s7131, 32
          %s7133 = scalar_lea.vmem [#allocation7], %s7132
        $region168: #{vision_permutator_forward.1} parent=163 // pred_fallthru
          _
      $region164: #{vision_permutator_forward.1} parent=5 // pred_fallthru
        _
    $region6: #{vision_permutator_forward.1} parent=1 // loop_footer
      %s26 = sadd.s32 1, %s22
    $region7: #{vision_permutator_forward.1} parent=1 // loop_footer_branch
      %21 = sbr.rel target = $region3
    $region8: #{vision_permutator_forward.1} parent=1 // loop_exit
      _
    %7134 = vsyncpa [#allocation4], 1
    %s7135 = scalar_lea.sflag [#allocation4], 1
    %7136 = vsyncpa %s7135, 1
    %7137 = vsyncpa [#allocation6], 1

</llo_original>
